<compile_context>
chip_gen: v7x
topology: tpu7x:2x2x1
jax: 0.10.0
libtpu: 0.0.40
codegen_flags: <defaults>
</compile_context>

<pallas_src>
import numpy as np

import jax
import jax.numpy as jnp
from jax.experimental import pallas as pl
from jax.experimental.pallas import tpu as pltpu

# ---------------------------------------------------------------------------
# Static network geometry (DigitNet requires 14x14 single-channel input).
# ---------------------------------------------------------------------------
TB = 128          # images per grid step = lane dimension of every slab
H = W = 14        # input spatial size
P_IN = H * W      # 196 input pixels per image
NCLS = 10


# ---------------------------------------------------------------------------
# Fused Pallas kernel: whole DigitNet forward for one TB-image tile.
# ---------------------------------------------------------------------------
def _digitnet_kernel(x_ref,
                     m1_ref, s1_ref, m2_ref, s2_ref, m3_ref, s3_ref,
                     wf1_ref, sf1_ref, wf2_ref, sf2_ref, wf3_ref, bf3_ref,
                     a_ref, o_ref):
    """Forward pass for one (TB images) tile; batch lives in the lane dim."""

    def layer(w_ref, act_f32, shift_ref, slope):
        # One lane-dense bf16 MXU matmul (out, in) @ (in, TB) with f32
        # accumulation, then fused BN-shift + PReLU on the VPU.
        y = jnp.dot(w_ref[...], act_f32.astype(jnp.bfloat16),
                    preferred_element_type=jnp.float32) + shift_ref[...]
        return jnp.where(y >= 0.0, y, slope * y)

    x = x_ref[...]                                    # (196, TB) f32
    a1 = layer(m1_ref, x, s1_ref, a_ref[0])           # conv1+bn1+prelu1 -> (400, TB)
    a2 = layer(m2_ref, a1, s2_ref, a_ref[1])          # conv2+bn2+prelu2 -> (512, TB)
    a3 = layer(m3_ref, a2, s3_ref, a_ref[2])          # conv3+bn3+prelu3 -> (576, TB)
    # a3 row order = c*36 + oh*6 + ow == torch's .view(-1, 576) order.
    h1 = layer(wf1_ref, a3, sf1_ref, a_ref[3])        # fc1+bn4+prelu4   -> (256, TB)
    h2 = layer(wf2_ref, h1, sf2_ref, a_ref[4])        # fc2+bn5+prelu5   -> (64, TB)
    logits = jnp.dot(wf3_ref[...], h2.astype(jnp.bfloat16),
                     preferred_element_type=jnp.float32) + bf3_ref[...]   # (10, TB)

    # Softmax over the class axis (sublanes).  Exact reciprocal keeps row sums
    # accurate to ~1e-7 (approx=True would relax that to ~1e-3).
    m = jnp.max(logits, axis=0, keepdims=True)
    e = jnp.exp(logits - m)
    o_ref[...] = e * pl.reciprocal(jnp.sum(e, axis=0, keepdims=True), approx=False)


# ---------------------------------------------------------------------------
# Trace-time parameter folding helpers.
# ---------------------------------------------------------------------------
def _fold_bn(linear_bias, gamma, beta, rmean, rvar, eps=1e-5):
    scale = gamma / jnp.sqrt(rvar + eps)
    shift = (linear_bias - rmean) * scale + beta
    return scale, shift


def _conv_unrolled_matrix(w, in_h, in_w):
    """Dense unrolled valid-conv matrix M with out_flat = M @ in_flat.

    w: (Cout, Cin, kh, kw).  in_flat index = cin*in_h*in_w + h*in_w + w_;
    out row index = cout*OH*OW + oh*OW + ow (torch NCHW flatten order).
    """
    cout, cin, kh, kw = w.shape
    oh_n, ow_n = in_h - kh + 1, in_w - kw + 1
    idx_shape = (cout, oh_n, ow_n, cin, kh, kw)
    co, oh, ow, ci, ky, kx = np.meshgrid(
        np.arange(cout), np.arange(oh_n), np.arange(ow_n),
        np.arange(cin), np.arange(kh), np.arange(kw), indexing="ij")
    rows = (co * (oh_n * ow_n) + oh * ow_n + ow).ravel()
    cols = (ci * (in_h * in_w) + (oh + ky) * in_w + (ow + kx)).ravel()
    vals = jnp.broadcast_to(w[:, None, None, :, :, :], idx_shape).ravel()
    m = jnp.zeros((cout * oh_n * ow_n, cin * in_h * in_w), jnp.float32)
    return m.at[rows, cols].set(vals), (oh_n, ow_n)


# ---------------------------------------------------------------------------
# JAX wrapper: param folding + batch-in-lanes layout + pallas_call.
# ---------------------------------------------------------------------------
def digitnet_forward(x_nchw, p):
    """PyTorch-equivalent DigitNet forward (eval-mode BN). x_nchw: (B, 1, 14, 14)."""
    B = x_nchw.shape[0]
    assert x_nchw.shape[1:] == (1, H, W), x_nchw.shape
    num_tiles = -(-B // TB)
    b_pad = num_tiles * TB

    # ---- fold params into kernel operands (constants; done once under jit) ----
    ops = []
    in_hw = (H, W)
    for cname, bn in [("conv1", "bn1"), ("conv2", "bn2"), ("conv3", "bn3")]:
        scale, shift = _fold_bn(p[f"{cname}_b"], p[f"{bn}_g"], p[f"{bn}_b"],
                                p[f"{bn}_m"], p[f"{bn}_v"])
        m, (oh_n, ow_n) = _conv_unrolled_matrix(p[f"{cname}_w"], *in_hw)
        row_scale = jnp.repeat(scale, oh_n * ow_n)
        row_shift = jnp.repeat(shift, oh_n * ow_n)
        ops += [(m * row_scale[:, None]).astype(jnp.bfloat16),
                row_shift.reshape(-1, 1).astype(jnp.float32)]
        in_hw = (oh_n, ow_n)

    scale, shift = _fold_bn(p["fc1_b"], p["bn4_g"], p["bn4_b"], p["bn4_m"], p["bn4_v"])
    ops += [(p["fc1_w"] * scale[:, None]).astype(jnp.bfloat16),
            shift.reshape(-1, 1).astype(jnp.float32)]
    scale, shift = _fold_bn(p["fc2_b"], p["bn5_g"], p["bn5_b"], p["bn5_m"], p["bn5_v"])
    ops += [(p["fc2_w"] * scale[:, None]).astype(jnp.bfloat16),
            shift.reshape(-1, 1).astype(jnp.float32)]
    ops += [p["fc3_w"].astype(jnp.bfloat16),
            p["fc3_b"].reshape(-1, 1).astype(jnp.float32)]

    prelu_a = jnp.concatenate([p["prelu1_a"], p["prelu2_a"], p["prelu3_a"],
                               p["prelu4_a"], p["prelu5_a"]]).astype(jnp.float32)  # (5,)

    # ---- batch-in-lanes input layout: (B,1,14,14) -> (num_tiles, 196, TB) ----
    x2 = x_nchw[:, 0].reshape(B, P_IN).astype(jnp.float32)
    x2 = jnp.pad(x2, ((0, b_pad - B), (0, 0)))
    x2 = x2.reshape(num_tiles, TB, P_IN).transpose(0, 2, 1)     # (tiles, 196, TB)

    # MACs actually pushed through the MXU per image (dense unrolled matrices).
    macs_per_img = (400 * 196 + 512 * 400 + 576 * 512
                    + 256 * 576 + 64 * 256 + 10 * 64)
    cost = pl.CostEstimate(
        flops=2 * macs_per_img * b_pad,
        transcendentals=NCLS * b_pad,
        bytes_accessed=(4 * int(x2.size)
                        + sum(int(o.size) * o.dtype.itemsize for o in ops)
                        + 4 * 5 + 4 * b_pad * NCLS))

    out = pl.pallas_call(
        _digitnet_kernel,
        out_shape=jax.ShapeDtypeStruct((num_tiles, NCLS, TB), jnp.float32),
        grid=(num_tiles,),
        in_specs=(
            [pl.BlockSpec((None, P_IN, TB), lambda i: (i, 0, 0))]        # x batch tile
            + [pl.BlockSpec(o.shape, lambda i: (0, 0)) for o in ops]     # resident weights
            + [pl.BlockSpec(memory_space=pltpu.MemorySpace.SMEM)]        # PReLU scalars
        ),
        out_specs=pl.BlockSpec((None, NCLS, TB), lambda i: (i, 0, 0)),
        compiler_params=pltpu.CompilerParams(
            dimension_semantics=("parallel",),
            # Per-tile footprint is ~6 MiB; 32 MiB gives headroom on v5e's 16 MiB
            # default and stays well inside v7x's 64 MiB physical VMEM.
            vmem_limit_bytes=32 * 1024 * 1024),
        cost_estimate=cost,
    )(x2, *ops, prelu_a)

    # (tiles, 10, TB) -> (B, 10)
    return out.transpose(0, 2, 1).reshape(b_pad, NCLS)[:B]


# ---------------------------------------------------------------------------
# Parameter init (PyTorch-style defaults).
# ---------------------------------------------------------------------------
def init_params(key):
    ks = jax.random.split(key, 12)

    def u(k, shape, fan_in):
        bound = 1.0 / float(fan_in) ** 0.5
        return jax.random.uniform(k, shape, jnp.float32, -bound, bound)

    p = {}
    # Conv weights, PyTorch layout (Cout, Cin, kh, kw)
    p["conv1_w"] = u(ks[0], (4, 1, 5, 5), 1 * 5 * 5)
    p["conv1_b"] = u(ks[1], (4,), 1 * 5 * 5)
    p["conv2_w"] = u(ks[2], (8, 4, 3, 3), 4 * 3 * 3)
    p["conv2_b"] = u(ks[3], (8,), 4 * 3 * 3)
    p["conv3_w"] = u(ks[4], (16, 8, 3, 3), 8 * 3 * 3)
    p["conv3_b"] = u(ks[5], (16,), 8 * 3 * 3)
    # Linear weights, PyTorch layout (out, in)
    p["fc1_w"] = u(ks[6], (256, 16 * 6 * 6), 16 * 6 * 6)
    p["fc1_b"] = u(ks[7], (256,), 16 * 6 * 6)
    p["fc2_w"] = u(ks[8], (64, 256), 256)
    p["fc2_b"] = u(ks[9], (64,), 256)
    p["fc3_w"] = u(ks[10], (10, 64), 64)
    p["fc3_b"] = u(ks[11], (10,), 64)
    # BatchNorm (PyTorch default: gamma=1, beta=0, running_mean=0, running_var=1)
    for name, n in [("bn1", 4), ("bn2", 8), ("bn3", 16), ("bn4", 256), ("bn5", 64)]:
        p[f"{name}_g"] = jnp.ones((n,), jnp.float32)
        p[f"{name}_b"] = jnp.zeros((n,), jnp.float32)
        p[f"{name}_m"] = jnp.zeros((n,), jnp.float32)
        p[f"{name}_v"] = jnp.ones((n,), jnp.float32)
    # PReLU (PyTorch default: single parameter, init 0.25)
    for name in ["prelu1", "prelu2", "prelu3", "prelu4", "prelu5"]:
        p[f"{name}_a"] = jnp.full((1,), 0.25, jnp.float32)
    return p


if __name__ == "__main__":
    key = jax.random.PRNGKey(0)
    pkey, xkey = jax.random.split(key)
    params = init_params(pkey)
    # Input must be 14x14 so that three valid convs (5,3,3) give 6x6 -> 16*6*6 feats.
    x = jax.random.normal(xkey, (2, 1, 14, 14), jnp.float32)

    fwd = jax.jit(digitnet_forward)
    out = jax.block_until_ready(fwd(x, params))

    assert out.shape == (2, 10), out.shape
    assert bool(jnp.all(jnp.isfinite(out)))
    row_sums = jnp.sum(out, axis=1)
    assert bool(jnp.all(jnp.abs(row_sums - 1.0) < 1e-4)), row_sums
    print("KERNEL_OK")
</pallas_src>

<mosaic_0001>
module attributes {stable_mosaic.version = 11 : i64} {
  func.func @_digitnet_kernel(%arg0: i32, %arg1: memref<1x196x128xf32, #tpu.memory_space<vmem>>, %arg2: memref<400x196xbf16, #tpu.memory_space<vmem>>, %arg3: memref<400x1xf32, #tpu.memory_space<vmem>>, %arg4: memref<512x400xbf16, #tpu.memory_space<vmem>>, %arg5: memref<512x1xf32, #tpu.memory_space<vmem>>, %arg6: memref<576x512xbf16, #tpu.memory_space<vmem>>, %arg7: memref<576x1xf32, #tpu.memory_space<vmem>>, %arg8: memref<256x576xbf16, #tpu.memory_space<vmem>>, %arg9: memref<256x1xf32, #tpu.memory_space<vmem>>, %arg10: memref<64x256xbf16, #tpu.memory_space<vmem>>, %arg11: memref<64x1xf32, #tpu.memory_space<vmem>>, %arg12: memref<10x64xbf16, #tpu.memory_space<vmem>>, %arg13: memref<10x1xf32, #tpu.memory_space<vmem>>, %arg14: memref<5xf32, #tpu.memory_space<smem>>, %arg15: memref<1x10x128xf32, #tpu.memory_space<vmem>>) attributes {dimension_semantics = [#tpu.dimension_semantics<parallel>], iteration_bounds = array<i64: 1>, scalar_prefetch = 0 : i64, scratch_operands = 0 : i64, tpu.core_type = #tpu.core_type<tc>, window_params = [{transform_indices = @transform_0, window_bounds = array<i64: 1, 196, 128>}, {pipeline_mode = #tpu.pipeline_mode<synchronous>, transform_indices = @transform_1, window_bounds = array<i64: 400, 196>}, {pipeline_mode = #tpu.pipeline_mode<synchronous>, transform_indices = @transform_2, window_bounds = array<i64: 400, 1>}, {pipeline_mode = #tpu.pipeline_mode<synchronous>, transform_indices = @transform_3, window_bounds = array<i64: 512, 400>}, {pipeline_mode = #tpu.pipeline_mode<synchronous>, transform_indices = @transform_4, window_bounds = array<i64: 512, 1>}, {pipeline_mode = #tpu.pipeline_mode<synchronous>, transform_indices = @transform_5, window_bounds = array<i64: 576, 512>}, {pipeline_mode = #tpu.pipeline_mode<synchronous>, transform_indices = @transform_6, window_bounds = array<i64: 576, 1>}, {pipeline_mode = #tpu.pipeline_mode<synchronous>, transform_indices = @transform_7, window_bounds = array<i64: 256, 576>}, {pipeline_mode = #tpu.pipeline_mode<synchronous>, transform_indices = @transform_8, window_bounds = array<i64: 256, 1>}, {pipeline_mode = #tpu.pipeline_mode<synchronous>, transform_indices = @transform_9, window_bounds = array<i64: 64, 256>}, {pipeline_mode = #tpu.pipeline_mode<synchronous>, transform_indices = @transform_10, window_bounds = array<i64: 64, 1>}, {pipeline_mode = #tpu.pipeline_mode<synchronous>, transform_indices = @transform_11, window_bounds = array<i64: 10, 64>}, {pipeline_mode = #tpu.pipeline_mode<synchronous>, transform_indices = @transform_12, window_bounds = array<i64: 10, 1>}, {transform_indices = @transform_13, window_bounds = array<i64: 5>}, {transform_indices = @transform_14, window_bounds = array<i64: 1, 10, 128>}]} {
    %c0 = arith.constant 0 : index
    %c0_0 = arith.constant 0 : index
    %c0_1 = arith.constant 0 : index
    %0 = vector.load %arg1[%c0, %c0_0, %c0_1] : memref<1x196x128xf32, #tpu.memory_space<vmem>>, vector<1x196x128xf32>
    %1 = vector.shape_cast %0 : vector<1x196x128xf32> to vector<196x128xf32>
    %c0_2 = arith.constant 0 : index
    %2 = memref.load %arg14[%c0_2] : memref<5xf32, #tpu.memory_space<smem>>
    %c0_3 = arith.constant 0 : index
    %c0_4 = arith.constant 0 : index
    %3 = vector.load %arg2[%c0_3, %c0_4] : memref<400x196xbf16, #tpu.memory_space<vmem>>, vector<400x196xbf16>
    %4 = arith.truncf %1 : vector<196x128xf32> to vector<196x128xbf16>
    %cst = arith.constant dense<0.000000e+00> : vector<400x128xf32>
    %5 = tpu.matmul %3, %4, %cst {dimension_numbers = #tpu.dot_dimension_numbers<[1], [0], [0], [1], [0, 0, 1, 1], [], []>} : vector<400x196xbf16>, vector<196x128xbf16>, vector<400x128xf32> -> vector<400x128xf32>
    %c0_5 = arith.constant 0 : index
    %c0_6 = arith.constant 0 : index
    %6 = vector.load %arg3[%c0_5, %c0_6] : memref<400x1xf32, #tpu.memory_space<vmem>>, vector<400x1xf32>
    %7 = vector.broadcast %6 : vector<400x1xf32> to vector<400x128xf32>
    %8 = arith.addf %5, %7 : vector<400x128xf32>
    %cst_7 = arith.constant 0.000000e+00 : f32
    %9 = vector.broadcast %cst_7 : f32 to vector<400x128xf32>
    %10 = arith.cmpf oge, %8, %9 : vector<400x128xf32>
    %11 = vector.broadcast %2 : f32 to vector<400x128xf32>
    %12 = arith.mulf %11, %8 : vector<400x128xf32>
    %13 = arith.select %10, %8, %12 : vector<400x128xi1>, vector<400x128xf32>
    %c1 = arith.constant 1 : index
    %14 = memref.load %arg14[%c1] : memref<5xf32, #tpu.memory_space<smem>>
    %c0_8 = arith.constant 0 : index
    %c0_9 = arith.constant 0 : index
    %15 = vector.load %arg4[%c0_8, %c0_9] : memref<512x400xbf16, #tpu.memory_space<vmem>>, vector<512x400xbf16>
    %16 = arith.truncf %13 : vector<400x128xf32> to vector<400x128xbf16>
    %cst_10 = arith.constant dense<0.000000e+00> : vector<512x128xf32>
    %17 = tpu.matmul %15, %16, %cst_10 {dimension_numbers = #tpu.dot_dimension_numbers<[1], [0], [0], [1], [0, 0, 1, 1], [], []>} : vector<512x400xbf16>, vector<400x128xbf16>, vector<512x128xf32> -> vector<512x128xf32>
    %c0_11 = arith.constant 0 : index
    %c0_12 = arith.constant 0 : index
    %18 = vector.load %arg5[%c0_11, %c0_12] : memref<512x1xf32, #tpu.memory_space<vmem>>, vector<512x1xf32>
    %19 = vector.broadcast %18 : vector<512x1xf32> to vector<512x128xf32>
    %20 = arith.addf %17, %19 : vector<512x128xf32>
    %cst_13 = arith.constant 0.000000e+00 : f32
    %21 = vector.broadcast %cst_13 : f32 to vector<512x128xf32>
    %22 = arith.cmpf oge, %20, %21 : vector<512x128xf32>
    %23 = vector.broadcast %14 : f32 to vector<512x128xf32>
    %24 = arith.mulf %23, %20 : vector<512x128xf32>
    %25 = arith.select %22, %20, %24 : vector<512x128xi1>, vector<512x128xf32>
    %c2 = arith.constant 2 : index
    %26 = memref.load %arg14[%c2] : memref<5xf32, #tpu.memory_space<smem>>
    %c0_14 = arith.constant 0 : index
    %c0_15 = arith.constant 0 : index
    %27 = vector.load %arg6[%c0_14, %c0_15] : memref<576x512xbf16, #tpu.memory_space<vmem>>, vector<576x512xbf16>
    %28 = arith.truncf %25 : vector<512x128xf32> to vector<512x128xbf16>
    %cst_16 = arith.constant dense<0.000000e+00> : vector<576x128xf32>
    %29 = tpu.matmul %27, %28, %cst_16 {dimension_numbers = #tpu.dot_dimension_numbers<[1], [0], [0], [1], [0, 0, 1, 1], [], []>} : vector<576x512xbf16>, vector<512x128xbf16>, vector<576x128xf32> -> vector<576x128xf32>
    %c0_17 = arith.constant 0 : index
    %c0_18 = arith.constant 0 : index
    %30 = vector.load %arg7[%c0_17, %c0_18] : memref<576x1xf32, #tpu.memory_space<vmem>>, vector<576x1xf32>
    %31 = vector.broadcast %30 : vector<576x1xf32> to vector<576x128xf32>
    %32 = arith.addf %29, %31 : vector<576x128xf32>
    %cst_19 = arith.constant 0.000000e+00 : f32
    %33 = vector.broadcast %cst_19 : f32 to vector<576x128xf32>
    %34 = arith.cmpf oge, %32, %33 : vector<576x128xf32>
    %35 = vector.broadcast %26 : f32 to vector<576x128xf32>
    %36 = arith.mulf %35, %32 : vector<576x128xf32>
    %37 = arith.select %34, %32, %36 : vector<576x128xi1>, vector<576x128xf32>
    %c3 = arith.constant 3 : index
    %38 = memref.load %arg14[%c3] : memref<5xf32, #tpu.memory_space<smem>>
    %c0_20 = arith.constant 0 : index
    %c0_21 = arith.constant 0 : index
    %39 = vector.load %arg8[%c0_20, %c0_21] : memref<256x576xbf16, #tpu.memory_space<vmem>>, vector<256x576xbf16>
    %40 = arith.truncf %37 : vector<576x128xf32> to vector<576x128xbf16>
    %cst_22 = arith.constant dense<0.000000e+00> : vector<256x128xf32>
    %41 = tpu.matmul %39, %40, %cst_22 {dimension_numbers = #tpu.dot_dimension_numbers<[1], [0], [0], [1], [0, 0, 1, 1], [], []>} : vector<256x576xbf16>, vector<576x128xbf16>, vector<256x128xf32> -> vector<256x128xf32>
    %c0_23 = arith.constant 0 : index
    %c0_24 = arith.constant 0 : index
    %42 = vector.load %arg9[%c0_23, %c0_24] : memref<256x1xf32, #tpu.memory_space<vmem>>, vector<256x1xf32>
    %43 = vector.broadcast %42 : vector<256x1xf32> to vector<256x128xf32>
    %44 = arith.addf %41, %43 : vector<256x128xf32>
    %cst_25 = arith.constant 0.000000e+00 : f32
    %45 = vector.broadcast %cst_25 : f32 to vector<256x128xf32>
    %46 = arith.cmpf oge, %44, %45 : vector<256x128xf32>
    %47 = vector.broadcast %38 : f32 to vector<256x128xf32>
    %48 = arith.mulf %47, %44 : vector<256x128xf32>
    %49 = arith.select %46, %44, %48 : vector<256x128xi1>, vector<256x128xf32>
    %c4 = arith.constant 4 : index
    %50 = memref.load %arg14[%c4] : memref<5xf32, #tpu.memory_space<smem>>
    %c0_26 = arith.constant 0 : index
    %c0_27 = arith.constant 0 : index
    %51 = vector.load %arg10[%c0_26, %c0_27] : memref<64x256xbf16, #tpu.memory_space<vmem>>, vector<64x256xbf16>
    %52 = arith.truncf %49 : vector<256x128xf32> to vector<256x128xbf16>
    %cst_28 = arith.constant dense<0.000000e+00> : vector<64x128xf32>
    %53 = tpu.matmul %51, %52, %cst_28 {dimension_numbers = #tpu.dot_dimension_numbers<[1], [0], [0], [1], [0, 0, 1, 1], [], []>} : vector<64x256xbf16>, vector<256x128xbf16>, vector<64x128xf32> -> vector<64x128xf32>
    %c0_29 = arith.constant 0 : index
    %c0_30 = arith.constant 0 : index
    %54 = vector.load %arg11[%c0_29, %c0_30] : memref<64x1xf32, #tpu.memory_space<vmem>>, vector<64x1xf32>
    %55 = vector.broadcast %54 : vector<64x1xf32> to vector<64x128xf32>
    %56 = arith.addf %53, %55 : vector<64x128xf32>
    %cst_31 = arith.constant 0.000000e+00 : f32
    %57 = vector.broadcast %cst_31 : f32 to vector<64x128xf32>
    %58 = arith.cmpf oge, %56, %57 : vector<64x128xf32>
    %59 = vector.broadcast %50 : f32 to vector<64x128xf32>
    %60 = arith.mulf %59, %56 : vector<64x128xf32>
    %61 = arith.select %58, %56, %60 : vector<64x128xi1>, vector<64x128xf32>
    %c0_32 = arith.constant 0 : index
    %c0_33 = arith.constant 0 : index
    %62 = vector.load %arg12[%c0_32, %c0_33] : memref<10x64xbf16, #tpu.memory_space<vmem>>, vector<10x64xbf16>
    %63 = arith.truncf %61 : vector<64x128xf32> to vector<64x128xbf16>
    %cst_34 = arith.constant dense<0.000000e+00> : vector<10x128xf32>
    %64 = tpu.matmul %62, %63, %cst_34 {dimension_numbers = #tpu.dot_dimension_numbers<[1], [0], [0], [1], [0, 0, 1, 1], [], []>} : vector<10x64xbf16>, vector<64x128xbf16>, vector<10x128xf32> -> vector<10x128xf32>
    %c0_35 = arith.constant 0 : index
    %c0_36 = arith.constant 0 : index
    %65 = vector.load %arg13[%c0_35, %c0_36] : memref<10x1xf32, #tpu.memory_space<vmem>>, vector<10x1xf32>
    %66 = vector.broadcast %65 : vector<10x1xf32> to vector<10x128xf32>
    %67 = arith.addf %64, %66 : vector<10x128xf32>
    %cst_37 = arith.constant dense<0xFF800000> : vector<128xf32>
    %68 = vector.multi_reduction <maximumf>, %67, %cst_37 [0] : vector<10x128xf32> to vector<128xf32>
    %69 = vector.shape_cast %68 : vector<128xf32> to vector<1x128xf32>
    %70 = vector.broadcast %69 : vector<1x128xf32> to vector<10x128xf32>
    %71 = arith.subf %67, %70 : vector<10x128xf32>
    %72 = math.exp %71 : vector<10x128xf32>
    %cst_38 = arith.constant dense<0.000000e+00> : vector<128xf32>
    %73 = vector.multi_reduction <add>, %72, %cst_38 [0] : vector<10x128xf32> to vector<128xf32>
    %74 = vector.shape_cast %73 : vector<128xf32> to vector<1x128xf32>
    %75 = tpu.reciprocal %74 : vector<1x128xf32> -> vector<1x128xf32>
    %76 = vector.broadcast %75 : vector<1x128xf32> to vector<10x128xf32>
    %77 = arith.mulf %72, %76 : vector<10x128xf32>
    %c0_39 = arith.constant 0 : index
    %c0_40 = arith.constant 0 : index
    %c0_41 = arith.constant 0 : index
    %78 = vector.load %arg15[%c0_39, %c0_40, %c0_41] : memref<1x10x128xf32, #tpu.memory_space<vmem>>, vector<1x10x128xf32>
    %79 = vector.shape_cast %78 : vector<1x10x128xf32> to vector<10x128xf32>
    %80 = vector.shape_cast %77 : vector<10x128xf32> to vector<1x10x128xf32>
    tpu.vector_store %arg15[%c0_39, %c0_40, %c0_41], %80 {strides = array<i32>} : memref<1x10x128xf32, #tpu.memory_space<vmem>>, vector<1x10x128xf32>,
    return
  }
  func.func @transform_0(%arg0: i32) -> (i32, i32, i32) {
    %c0_i32 = arith.constant 0 : i32
    %c0_i32_0 = arith.constant 0 : i32
    %c0_i32_1 = arith.constant 0 : i32
    return %arg0, %c0_i32, %c0_i32_0 : i32, i32, i32
  }
  func.func @transform_1(%arg0: i32) -> (i32, i32) {
    %c0_i32 = arith.constant 0 : i32
    %c0_i32_0 = arith.constant 0 : i32
    %c0_i32_1 = arith.constant 0 : i32
    return %c0_i32, %c0_i32_0 : i32, i32
  }
  func.func @transform_2(%arg0: i32) -> (i32, i32) {
    %c0_i32 = arith.constant 0 : i32
    %c0_i32_0 = arith.constant 0 : i32
    %c0_i32_1 = arith.constant 0 : i32
    return %c0_i32, %c0_i32_0 : i32, i32
  }
  func.func @transform_3(%arg0: i32) -> (i32, i32) {
    %c0_i32 = arith.constant 0 : i32
    %c0_i32_0 = arith.constant 0 : i32
    %c0_i32_1 = arith.constant 0 : i32
    return %c0_i32, %c0_i32_0 : i32, i32
  }
  func.func @transform_4(%arg0: i32) -> (i32, i32) {
    %c0_i32 = arith.constant 0 : i32
    %c0_i32_0 = arith.constant 0 : i32
    %c0_i32_1 = arith.constant 0 : i32
    return %c0_i32, %c0_i32_0 : i32, i32
  }
  func.func @transform_5(%arg0: i32) -> (i32, i32) {
    %c0_i32 = arith.constant 0 : i32
    %c0_i32_0 = arith.constant 0 : i32
    %c0_i32_1 = arith.constant 0 : i32
    return %c0_i32, %c0_i32_0 : i32, i32
  }
  func.func @transform_6(%arg0: i32) -> (i32, i32) {
    %c0_i32 = arith.constant 0 : i32
    %c0_i32_0 = arith.constant 0 : i32
    %c0_i32_1 = arith.constant 0 : i32
    return %c0_i32, %c0_i32_0 : i32, i32
  }
  func.func @transform_7(%arg0: i32) -> (i32, i32) {
    %c0_i32 = arith.constant 0 : i32
    %c0_i32_0 = arith.constant 0 : i32
    %c0_i32_1 = arith.constant 0 : i32
    return %c0_i32, %c0_i32_0 : i32, i32
  }
  func.func @transform_8(%arg0: i32) -> (i32, i32) {
    %c0_i32 = arith.constant 0 : i32
    %c0_i32_0 = arith.constant 0 : i32
    %c0_i32_1 = arith.constant 0 : i32
    return %c0_i32, %c0_i32_0 : i32, i32
  }
  func.func @transform_9(%arg0: i32) -> (i32, i32) {
    %c0_i32 = arith.constant 0 : i32
    %c0_i32_0 = arith.constant 0 : i32
    %c0_i32_1 = arith.constant 0 : i32
    return %c0_i32, %c0_i32_0 : i32, i32
  }
  func.func @transform_10(%arg0: i32) -> (i32, i32) {
    %c0_i32 = arith.constant 0 : i32
    %c0_i32_0 = arith.constant 0 : i32
    %c0_i32_1 = arith.constant 0 : i32
    return %c0_i32, %c0_i32_0 : i32, i32
  }
  func.func @transform_11(%arg0: i32) -> (i32, i32) {
    %c0_i32 = arith.constant 0 : i32
    %c0_i32_0 = arith.constant 0 : i32
    %c0_i32_1 = arith.constant 0 : i32
    return %c0_i32, %c0_i32_0 : i32, i32
  }
  func.func @transform_12(%arg0: i32) -> (i32, i32) {
    %c0_i32 = arith.constant 0 : i32
    %c0_i32_0 = arith.constant 0 : i32
    %c0_i32_1 = arith.constant 0 : i32
    return %c0_i32, %c0_i32_0 : i32, i32
  }
  func.func @transform_13(%arg0: i32) -> i32 {
    %c0_i32 = arith.constant 0 : i32
    %c0_i32_0 = arith.constant 0 : i32
    return %c0_i32 : i32
  }
  func.func @transform_14(%arg0: i32) -> (i32, i32, i32) {
    %c0_i32 = arith.constant 0 : i32
    %c0_i32_0 = arith.constant 0 : i32
    %c0_i32_1 = arith.constant 0 : i32
    return %arg0, %c0_i32, %c0_i32_0 : i32, i32, i32
  }
}

</mosaic_0001>

<llo_original>
// kernel: mul.37
$region0: #{mul.37}
  %s0 = inlined_call_operand.vmem [shape: f32[16,36], index: 0, kind: input, shape index: {}]
  %s1 = inlined_call_operand.vmem [shape: f32[576], index: 1, kind: output, shape index: {}]
  %v2 = vld [vmem:[%s0] sm:$0x1]
  %vm3 = vcmask 293888
  %4 = vst.msk [vmem:[%s1] sm:$0x1] %vm3, %v2
  %s5 = scalar_lea.vmem %s0, 7
  %v6 = vld [vmem:[%s5] sm:$0x1]
  %s7 = scalar_lea.vmem %s0, 7
  %v8 = vld [vmem:[%s7] sm:$0x1]
  %vm9 = vcmask 31744
  %v10 = vsel %vm9, %v8, %v6
  %11 = vrot.lane.b32.xlu0 %v10, 124
  %v12 = vpop.permute.xlu0 %11
  %vm13 = vcmask 261120
  %s14 = scalar_lea.vmem %s1, 2
  %15 = vst.msk [vmem:[%s14] sm:$0x1] %vm13, %v12
  %vm16 = vcmask 1048544
  %s17 = scalar_lea.vmem %s1, 1
  %18 = vst.msk [vmem:[%s17] sm:$0x1] %vm16, %v12
  %s19 = scalar_lea.vmem %s0, 14
  %v20 = vld [vmem:[%s19] sm:$0x1]
  %s21 = scalar_lea.vmem %s0, 14
  %v22 = vld [vmem:[%s21] sm:$0x1]
  %vm23 = vcmask 64512
  %v24 = vsel %vm23, %v22, %v20
  %25 = vrot.lane.b32.xlu0 %v24, 120
  %v26 = vpop.permute.xlu0 %25
  %vm27 = vcmask 228352
  %s28 = scalar_lea.vmem %s1, 4
  %29 = vst.msk [vmem:[%s28] sm:$0x1] %vm27, %v26
  %vm30 = vcmask 1048512
  %s31 = scalar_lea.vmem %s1, 3
  %32 = vst.msk [vmem:[%s31] sm:$0x1] %vm30, %v26
  %s33 = scalar_lea.vmem %s0, 3
  %v34 = vld [vmem:[%s33] sm:$0x1]
  %s35 = scalar_lea.vmem %s0, 3
  %v36 = vld [vmem:[%s35] sm:$0x1]
  %vm37 = vcmask 162816
  %v38 = vsel %vm37, %v36, %v34
  %39 = vrot.lane.b32.xlu0 %v38, 108
  %v40 = vpop.permute.xlu0 %39
  %vm41 = vcmask 130048
  %s42 = scalar_lea.vmem %s1, 1
  %43 = vst.msk [vmem:[%s42] sm:$0x1] %vm41, %v40
  %vm44 = vcmask 1048416
  %45 = vst.msk [vmem:[%s1] sm:$0x1] %vm44, %v40
  %s46 = scalar_lea.vmem %s0, 10
  %v47 = vld [vmem:[%s46] sm:$0x1]
  %s48 = scalar_lea.vmem %s0, 10
  %v49 = vld [vmem:[%s48] sm:$0x1]
  %vm50 = vcmask 195584
  %v51 = vsel %vm50, %v49, %v47
  %52 = vrot.lane.b32.xlu0 %v51, 104
  %v53 = vpop.permute.xlu0 %52
  %vm54 = vcmask 97280
  %s55 = scalar_lea.vmem %s1, 3
  %56 = vst.msk [vmem:[%s55] sm:$0x1] %vm54, %v53
  %vm57 = vcmask 1048384
  %s58 = scalar_lea.vmem %s1, 2
  %59 = vst.msk [vmem:[%s58] sm:$0x1] %vm57, %v53
  %s60 = scalar_lea.vmem %s0, 6
  %v61 = vld [vmem:[%s60] sm:$0x1]
  %62 = vrot.lane.b32.xlu0 %v61, 88
  %v63 = vpop.permute.xlu0 %62
  %vm64 = vcmask 1015488
  %s65 = scalar_lea.vmem %s1, 1
  %66 = vst.msk [vmem:[%s65] sm:$0x1] %vm64, %v63
  %s67 = scalar_lea.vmem %s0, 13
  %v68 = vld [vmem:[%s67] sm:$0x1]
  %69 = vrot.lane.b32.xlu0 %v68, 84
  %v70 = vpop.permute.xlu0 %69
  %vm71 = vcmask 982688
  %s72 = scalar_lea.vmem %s1, 3
  %73 = vst.msk [vmem:[%s72] sm:$0x1] %vm71, %v70
  %s74 = scalar_lea.vmem %s0, 2
  %v75 = vld [vmem:[%s74] sm:$0x1]
  %76 = vrot.lane.b32.xlu0 %v75, 72
  %v77 = vpop.permute.xlu0 %76
  %vm78 = vcmask 884288
  %79 = vst.msk [vmem:[%s1] sm:$0x1] %vm78, %v77
  %s80 = scalar_lea.vmem %s0, 9
  %v81 = vld [vmem:[%s80] sm:$0x1]
  %82 = vrot.lane.b32.xlu0 %v81, 68
  %v83 = vpop.permute.xlu0 %82
  %vm84 = vcmask 851488
  %s85 = scalar_lea.vmem %s1, 2
  %86 = vst.msk [vmem:[%s85] sm:$0x1] %vm84, %v83
  %s87 = scalar_lea.vmem %s0, 5
  %v88 = vld [vmem:[%s87] sm:$0x1]
  %89 = vrot.lane.b32.xlu0 %v88, 52
  %v90 = vpop.permute.xlu0 %89
  %vm91 = vcmask 720288
  %s92 = scalar_lea.vmem %s1, 1
  %93 = vst.msk [vmem:[%s92] sm:$0x1] %vm91, %v90
  %s94 = scalar_lea.vmem %s0, 12
  %v95 = vld [vmem:[%s94] sm:$0x1]
  %96 = vrot.lane.b32.xlu0 %v95, 48
  %v97 = vpop.permute.xlu0 %96
  %vm98 = vcmask 687488
  %s99 = scalar_lea.vmem %s1, 3
  %100 = vst.msk [vmem:[%s99] sm:$0x1] %vm98, %v97
  %s101 = scalar_lea.vmem %s0, 1
  %v102 = vld [vmem:[%s101] sm:$0x1]
  %103 = vrot.lane.b32.xlu0 %v102, 36
  %v104 = vpop.permute.xlu0 %103
  %vm105 = vcmask 589088
  %106 = vst.msk [vmem:[%s1] sm:$0x1] %vm105, %v104
  %s107 = scalar_lea.vmem %s0, 8
  %v108 = vld [vmem:[%s107] sm:$0x1]
  %109 = vrot.lane.b32.xlu0 %v108, 32
  %v110 = vpop.permute.xlu0 %109
  %vm111 = vcmask 556288
  %s112 = scalar_lea.vmem %s1, 2
  %113 = vst.msk [vmem:[%s112] sm:$0x1] %vm111, %v110
  %s114 = scalar_lea.vmem %s0, 15
  %v115 = vld [vmem:[%s114] sm:$0x1]
  %116 = vrot.lane.b32.xlu0 %v115, 28
  %v117 = vpop.permute.xlu0 %116
  %vm118 = vcmask 523488
  %s119 = scalar_lea.vmem %s1, 4
  %120 = vst.msk [vmem:[%s119] sm:$0x1] %vm118, %v117
  %s121 = scalar_lea.vmem %s0, 4
  %v122 = vld [vmem:[%s121] sm:$0x1]
  %123 = vrot.lane.b32.xlu0 %v122, 16
  %v124 = vpop.permute.xlu0 %123
  %vm125 = vcmask 425088
  %s126 = scalar_lea.vmem %s1, 1
  %127 = vst.msk [vmem:[%s126] sm:$0x1] %vm125, %v124
  %s128 = scalar_lea.vmem %s0, 11
  %v129 = vld [vmem:[%s128] sm:$0x1]
  %130 = vrot.lane.b32.xlu0 %v129, 12
  %v131 = vpop.permute.xlu0 %130
  %vm132 = vcmask 392288
  %s133 = scalar_lea.vmem %s1, 3
  %134 = vst.msk [vmem:[%s133] sm:$0x1] %vm132, %v131

// kernel: mul.32
$region0: #{mul.32}
  %s0 = inlined_call_operand.vmem [shape: f32[8,64], index: 0, kind: input, shape index: {}]
  %s1 = inlined_call_operand.vmem [shape: f32[512], index: 1, kind: output, shape index: {}]
  $region1: #{mul.32} parent=0
    #allocation0 [shape = 'u8[4096]{0}', space=vmem, size = 0x1000, scoped, tag = 'scoped mem for output reshape']
    %v2 = vld [vmem:[%s0] ss:$2 sm:$0xf]
    %vm3 = vcmask 523264
    %4 = vst.msk [vmem:[#allocation0] sm:$0xf] %vm3, %v2
    %s5 = scalar_lea.vmem %s0, 1
    %v6 = vld [vmem:[%s5] ss:$2 sm:$0xf]
    %7 = vrot.lane.b32.xlu0 %v6, 64
    %v8 = vpop.permute.xlu0 %7
    %vm9 = vcmask 1048064
    %10 = vst.msk [vmem:[#allocation0] sm:$0xf] %vm9, %v8
    %s12 = sshllo.u32 0, 4
    %v14 = vld [vmem:[#allocation0] sm:%s12]
    %s15 = sshllo.u32 0, 4
    %16 = vst [vmem:[%s1] sm:%s15] %v14

// kernel: mul.27
$region0: #{mul.27}
  %s0 = inlined_call_operand.vmem [shape: f32[4,100], index: 0, kind: input, shape index: {}]
  %s1 = inlined_call_operand.vmem [shape: f32[400], index: 1, kind: output, shape index: {}]
  $region1: #{mul.27} parent=0
    #allocation0 [shape = 'u8[4096]{0}', space=vmem, size = 0x1000, scoped, tag = 'scoped mem for output reshape']
    #allocation1 [shape = 'u8[4096]{0}', space=vmem, size = 0x1000, scoped, tag = 'scoped mem for input reshape']
    %s3 = sshllo.u32 0, 4
    %v4 = vld [vmem:[%s0] sm:%s3]
    %5 = vst [vmem:[#allocation1] sm:%s3] %v4
    %v6 = vld [vmem:[#allocation1] sm:$0x1]
    %vm7 = vcmask 818176
    %8 = vst.msk [vmem:[#allocation0] sm:$0x1] %vm7, %v6
    %s9 = scalar_lea.vmem [#allocation1], 1
    %v10 = vld [vmem:[%s9] sm:$0x1]
    %s11 = scalar_lea.vmem [#allocation1], 1
    %v12 = vld [vmem:[%s11] sm:$0x1]
    %vm13 = vcmask 228352
    %v14 = vsel %vm13, %v12, %v10
    %15 = vrot.lane.b32.xlu0 %v14, 100
    %v16 = vpop.permute.xlu0 %15
    %vm17 = vcmask 588800
    %s18 = scalar_lea.vmem [#allocation0], 1
    %19 = vst.msk [vmem:[%s18] sm:$0x1] %vm17, %v16
    %vm20 = vcmask 1048352
    %21 = vst.msk [vmem:[#allocation0] sm:$0x1] %vm20, %v16
    %s22 = scalar_lea.vmem [#allocation1], 2
    %v23 = vld [vmem:[%s22] sm:$0x1]
    %s24 = scalar_lea.vmem [#allocation1], 2
    %v25 = vld [vmem:[%s24] sm:$0x1]
    %vm26 = vcmask 457728
    %v27 = vsel %vm26, %v25, %v23
    %28 = vrot.lane.b32.xlu0 %v27, 72
    %v29 = vpop.permute.xlu0 %28
    %vm30 = vcmask 359424
    %s31 = scalar_lea.vmem [#allocation0], 2
    %32 = vst.msk [vmem:[%s31] sm:$0x1] %vm30, %v29
    %vm33 = vcmask 1048128
    %s34 = scalar_lea.vmem [#allocation0], 1
    %35 = vst.msk [vmem:[%s34] sm:$0x1] %vm33, %v29
    %s36 = scalar_lea.vmem [#allocation1], 3
    %v37 = vld [vmem:[%s36] sm:$0x1]
    %s38 = scalar_lea.vmem [#allocation1], 3
    %v39 = vld [vmem:[%s38] sm:$0x1]
    %vm40 = vcmask 687104
    %v41 = vsel %vm40, %v39, %v37
    %42 = vrot.lane.b32.xlu0 %v41, 44
    %v43 = vpop.permute.xlu0 %42
    %vm44 = vcmask 130048
    %s45 = scalar_lea.vmem [#allocation0], 3
    %46 = vst.msk [vmem:[%s45] sm:$0x1] %vm44, %v43
    %vm47 = vcmask 1047904
    %s48 = scalar_lea.vmem [#allocation0], 2
    %49 = vst.msk [vmem:[%s48] sm:$0x1] %vm47, %v43
    %s51 = sshllo.u32 0, 4
    %v53 = vld [vmem:[#allocation0] sm:%s51]
    %s54 = sshllo.u32 0, 4
    %55 = vst [vmem:[%s1] sm:%s54] %v53

// kernel: squeeze.1
$region0: #{squeeze.1}
  %s0 = inlined_call_operand.vmem [shape: f32[2,14,14], index: 0, kind: input, shape index: {}]
  %s1 = inlined_call_operand.vmem [shape: f32[2,196], index: 1, kind: output, shape index: {}]
  $region1: #{squeeze.1} parent=0
    #allocation0 [shape = 'u8[8192]{0}', space=vmem, size = 0x2000, scoped, tag = 'scoped mem for output reshape']
    %s2 = smov 3
    %v3 = vld [vmem:[%s0] ss:$16 sm:%s2]
    %vm4 = vcmask 113664
    %5 = vst.msk [vmem:[#allocation0] sm:$0x3] %vm4, %v3
    %s6 = scalar_lea.vmem %s0, 9
    %s7 = smov 3
    %v8 = vld [vmem:[%s6] ss:$16 sm:%s7]
    %s9 = scalar_lea.vmem %s0, 9
    %s10 = smov 3
    %v11 = vld [vmem:[%s9] ss:$16 sm:%s10]
    %vm12 = vcmask 15360
    %v13 = vsel %vm12, %v11, %v8
    %14 = vrot.lane.b32.xlu0 %v13, 126
    %v15 = vpop.permute.xlu0 %14
    %vm16 = vcmask 97280
    %s17 = scalar_lea.vmem [#allocation0], 8
    %18 = vst.msk [vmem:[%s17] sm:$0x3] %vm16, %v15
    %vm19 = vcmask 1048560
    %20 = vst.msk [vmem:[#allocation0] sm:$0x3] %vm19, %v15
    %s21 = scalar_lea.vmem %s0, 8
    %s22 = smov 3
    %v23 = vld [vmem:[%s21] ss:$16 sm:%s22]
    %24 = vrot.lane.b32.xlu0 %v23, 112
    %v25 = vpop.permute.xlu0 %24
    %vm26 = vcmask 1032064
    %27 = vst.msk [vmem:[#allocation0] sm:$0x3] %vm26, %v25
    %s28 = scalar_lea.vmem %s0, 7
    %s29 = smov 3
    %v30 = vld [vmem:[%s28] ss:$16 sm:%s29]
    %31 = vrot.lane.b32.xlu0 %v30, 98
    %v32 = vpop.permute.xlu0 %31
    %vm33 = vcmask 917264
    %34 = vst.msk [vmem:[#allocation0] sm:$0x3] %vm33, %v32
    %s35 = scalar_lea.vmem %s0, 6
    %s36 = smov 3
    %v37 = vld [vmem:[%s35] ss:$16 sm:%s36]
    %38 = vrot.lane.b32.xlu0 %v37, 84
    %v39 = vpop.permute.xlu0 %38
    %vm40 = vcmask 802464
    %41 = vst.msk [vmem:[#allocation0] sm:$0x3] %vm40, %v39
    %s42 = scalar_lea.vmem %s0, 5
    %s43 = smov 3
    %v44 = vld [vmem:[%s42] ss:$16 sm:%s43]
    %45 = vrot.lane.b32.xlu0 %v44, 70
    %v46 = vpop.permute.xlu0 %45
    %vm47 = vcmask 687664
    %48 = vst.msk [vmem:[#allocation0] sm:$0x3] %vm47, %v46
    %s49 = scalar_lea.vmem %s0, 4
    %s50 = smov 3
    %v51 = vld [vmem:[%s49] ss:$16 sm:%s50]
    %52 = vrot.lane.b32.xlu0 %v51, 56
    %v53 = vpop.permute.xlu0 %52
    %vm54 = vcmask 572864
    %55 = vst.msk [vmem:[#allocation0] sm:$0x3] %vm54, %v53
    %s56 = scalar_lea.vmem %s0, 13
    %s57 = smov 3
    %v58 = vld [vmem:[%s56] ss:$16 sm:%s57]
    %59 = vrot.lane.b32.xlu0 %v58, 54
    %v60 = vpop.permute.xlu0 %59
    %vm61 = vcmask 556464
    %s62 = scalar_lea.vmem [#allocation0], 8
    %63 = vst.msk [vmem:[%s62] sm:$0x3] %vm61, %v60
    %s64 = scalar_lea.vmem %s0, 3
    %s65 = smov 3
    %v66 = vld [vmem:[%s64] ss:$16 sm:%s65]
    %67 = vrot.lane.b32.xlu0 %v66, 42
    %v68 = vpop.permute.xlu0 %67
    %vm69 = vcmask 458064
    %70 = vst.msk [vmem:[#allocation0] sm:$0x3] %vm69, %v68
    %s71 = scalar_lea.vmem %s0, 12
    %s72 = smov 3
    %v73 = vld [vmem:[%s71] ss:$16 sm:%s72]
    %74 = vrot.lane.b32.xlu0 %v73, 40
    %v75 = vpop.permute.xlu0 %74
    %vm76 = vcmask 441664
    %s77 = scalar_lea.vmem [#allocation0], 8
    %78 = vst.msk [vmem:[%s77] sm:$0x3] %vm76, %v75
    %s79 = scalar_lea.vmem %s0, 2
    %s80 = smov 3
    %v81 = vld [vmem:[%s79] ss:$16 sm:%s80]
    %82 = vrot.lane.b32.xlu0 %v81, 28
    %v83 = vpop.permute.xlu0 %82
    %vm84 = vcmask 343264
    %85 = vst.msk [vmem:[#allocation0] sm:$0x3] %vm84, %v83
    %s86 = scalar_lea.vmem %s0, 11
    %s87 = smov 3
    %v88 = vld [vmem:[%s86] ss:$16 sm:%s87]
    %89 = vrot.lane.b32.xlu0 %v88, 26
    %v90 = vpop.permute.xlu0 %89
    %vm91 = vcmask 326864
    %s92 = scalar_lea.vmem [#allocation0], 8
    %93 = vst.msk [vmem:[%s92] sm:$0x3] %vm91, %v90
    %s94 = scalar_lea.vmem %s0, 1
    %s95 = smov 3
    %v96 = vld [vmem:[%s94] ss:$16 sm:%s95]
    %97 = vrot.lane.b32.xlu0 %v96, 14
    %v98 = vpop.permute.xlu0 %97
    %vm99 = vcmask 228464
    %100 = vst.msk [vmem:[#allocation0] sm:$0x3] %vm99, %v98
    %s101 = scalar_lea.vmem %s0, 10
    %s102 = smov 3
    %v103 = vld [vmem:[%s101] ss:$16 sm:%s102]
    %104 = vrot.lane.b32.xlu0 %v103, 12
    %v105 = vpop.permute.xlu0 %104
    %vm106 = vcmask 212064
    %s107 = scalar_lea.vmem [#allocation0], 8
    %108 = vst.msk [vmem:[%s107] sm:$0x3] %vm106, %v105
    %s110 = sshllo.u32 0, 2
    %v112 = vld [vmem:[#allocation0] sm:%s110]
    %s113 = sshllo.u32 0, 2
    %114 = vst [vmem:[%s1] sm:%s113] %v112
    %s115 = scalar_lea.vmem [#allocation0], 8
    %v116 = vld [vmem:[%s115] sm:%s110]
    %s117 = sshllo.u32 0, 2
    %s118 = scalar_lea.vmem %s1, 2
    %119 = vst [vmem:[%s118] sm:%s117] %v116

// kernel: digitnet_forward.1
$region0: #{digitnet_forward.1}
  #allocation0 [shape = 'u32[]', space=smem, size = 0x4, offset = 0x4, fixed_abs, tag = 'smem constant byte address 0x4 - core index']
  #allocation1 [shape = 'u32[144,128]{1,0:T(1,128)}', space=vmem, size = 0x12000, scoped, tag = 'internal scratch']
  %s0 = inlined_call_operand.vmem [shape: f32[1,196,128], index: 0, kind: input, shape index: {}]
  %s1 = inlined_call_operand.vmem [shape: bf16[400,196], index: 1, kind: input, shape index: {}]
  %s2 = inlined_call_operand.vmem [shape: f32[400,1], index: 2, kind: input, shape index: {}]
  %s3 = inlined_call_operand.vmem [shape: bf16[512,400], index: 3, kind: input, shape index: {}]
  %s4 = inlined_call_operand.vmem [shape: f32[512,1], index: 4, kind: input, shape index: {}]
  %s5 = inlined_call_operand.vmem [shape: bf16[576,512], index: 5, kind: input, shape index: {}]
  %s6 = inlined_call_operand.vmem [shape: f32[576,1], index: 6, kind: input, shape index: {}]
  %s7 = inlined_call_operand.vmem [shape: bf16[256,576], index: 7, kind: input, shape index: {}]
  %s8 = inlined_call_operand.vmem [shape: f32[256,1], index: 8, kind: input, shape index: {}]
  %s9 = inlined_call_operand.vmem [shape: bf16[64,256], index: 9, kind: input, shape index: {}]
  %s10 = inlined_call_operand.vmem [shape: f32[64,1], index: 10, kind: input, shape index: {}]
  %s11 = inlined_call_operand.vmem [shape: bf16[10,64], index: 11, kind: input, shape index: {}]
  %s12 = inlined_call_operand.vmem [shape: f32[10,1], index: 12, kind: input, shape index: {}]
  %s13 = inlined_call_operand.vmem [shape: f32[5], index: 13, kind: input, shape index: {}]
  %s14 = inlined_call_operand.vmem [shape: f32[1,10,128], index: 14, kind: output, shape index: {}]
  %s15 = sld [smem:[#allocation0]]
  $region70: #{digitnet_forward.1} parent=0
    _
  %s17 = ssub.s32 1, %s15
  %s18 = scalar_select 0, %s17, %s15
  $region1: #{digitnet_forward.1} parent=0
    #allocation2 [shape = 'u8[512]{0}', space=smem, size = 0x200, scoped, tag = 'input window, operand 13, single buffered']
    #allocation3 [shape = 's32[1]{0}', space=sflag, size = 0x4, scoped, tag = 'scoped memory for digitnet_forward.1']
    %19 = vsyncpa [#allocation3], 0
    // Predicated region
    $region2: #{digitnet_forward.1} parent=1 // pred_check
      _
    $region3: #{digitnet_forward.1} parent=1 // pred_check_branch
      %21 = sbr.rel (0) target = $region5
    $region4: #{digitnet_forward.1} parent=1 // pred_region
      _
    $region5: #{digitnet_forward.1} parent=1 // pred_fallthru
      _
    // Predicated region
    $region6: #{digitnet_forward.1} parent=1 // pred_check
      _
    $region7: #{digitnet_forward.1} parent=1 // pred_check_branch
      %23 = sbr.rel (0) target = $region9
    $region8: #{digitnet_forward.1} parent=1 // pred_region
      _
    $region9: #{digitnet_forward.1} parent=1 // pred_fallthru
      _
    // Predicated region
    $region10: #{digitnet_forward.1} parent=1 // pred_check
      _
    $region11: #{digitnet_forward.1} parent=1 // pred_check_branch
      %25 = sbr.rel (0) target = $region13
    $region12: #{digitnet_forward.1} parent=1 // pred_region
      _
    $region13: #{digitnet_forward.1} parent=1 // pred_fallthru
      _
    // Predicated region
    $region14: #{digitnet_forward.1} parent=1 // pred_check
      _
    $region15: #{digitnet_forward.1} parent=1 // pred_check_branch
      %27 = sbr.rel (0) target = $region17
    $region16: #{digitnet_forward.1} parent=1 // pred_region
      _
    $region17: #{digitnet_forward.1} parent=1 // pred_fallthru
      _
    // Predicated region
    $region18: #{digitnet_forward.1} parent=1 // pred_check
      _
    $region19: #{digitnet_forward.1} parent=1 // pred_check_branch
      %29 = sbr.rel (0) target = $region21
    $region20: #{digitnet_forward.1} parent=1 // pred_region
      _
    $region21: #{digitnet_forward.1} parent=1 // pred_fallthru
      _
    // Predicated region
    $region22: #{digitnet_forward.1} parent=1 // pred_check
      _
    $region23: #{digitnet_forward.1} parent=1 // pred_check_branch
      %31 = sbr.rel (0) target = $region25
    $region24: #{digitnet_forward.1} parent=1 // pred_region
      _
    $region25: #{digitnet_forward.1} parent=1 // pred_fallthru
      _
    // Predicated region
    $region26: #{digitnet_forward.1} parent=1 // pred_check
      _
    $region27: #{digitnet_forward.1} parent=1 // pred_check_branch
      %33 = sbr.rel (0) target = $region29
    $region28: #{digitnet_forward.1} parent=1 // pred_region
      _
    $region29: #{digitnet_forward.1} parent=1 // pred_fallthru
      _
    // Predicated region
    $region30: #{digitnet_forward.1} parent=1 // pred_check
      _
    $region31: #{digitnet_forward.1} parent=1 // pred_check_branch
      %35 = sbr.rel (0) target = $region33
    $region32: #{digitnet_forward.1} parent=1 // pred_region
      _
    $region33: #{digitnet_forward.1} parent=1 // pred_fallthru
      _
    // Predicated region
    $region34: #{digitnet_forward.1} parent=1 // pred_check
      _
    $region35: #{digitnet_forward.1} parent=1 // pred_check_branch
      %37 = sbr.rel (0) target = $region37
    $region36: #{digitnet_forward.1} parent=1 // pred_region
      _
    $region37: #{digitnet_forward.1} parent=1 // pred_fallthru
      _
    // Predicated region
    $region38: #{digitnet_forward.1} parent=1 // pred_check
      _
    $region39: #{digitnet_forward.1} parent=1 // pred_check_branch
      %39 = sbr.rel (0) target = $region41
    $region40: #{digitnet_forward.1} parent=1 // pred_region
      _
    $region41: #{digitnet_forward.1} parent=1 // pred_fallthru
      _
    // Predicated region
    $region42: #{digitnet_forward.1} parent=1 // pred_check
      _
    $region43: #{digitnet_forward.1} parent=1 // pred_check_branch
      %41 = sbr.rel (0) target = $region45
    $region44: #{digitnet_forward.1} parent=1 // pred_region
      _
    $region45: #{digitnet_forward.1} parent=1 // pred_fallthru
      _
    // Predicated region
    $region46: #{digitnet_forward.1} parent=1 // pred_check
      _
    $region47: #{digitnet_forward.1} parent=1 // pred_check_branch
      %43 = sbr.rel (0) target = $region49
    $region48: #{digitnet_forward.1} parent=1 // pred_region
      _
    $region49: #{digitnet_forward.1} parent=1 // pred_fallthru
      _
    // Predicated region
    $region50: #{digitnet_forward.1} parent=1 // pred_check
      _
    $region51: #{digitnet_forward.1} parent=1 // pred_check_branch
      %45 = sbr.rel (0) target = $region53
    $region52: #{digitnet_forward.1} parent=1 // pred_region
      _
    $region53: #{digitnet_forward.1} parent=1 // pred_fallthru
      _
    // Predicated region
    $region54: #{digitnet_forward.1} parent=1 // pred_check
      _
    $region55: #{digitnet_forward.1} parent=1 // pred_check_branch
      %47 = sbr.rel (0) target = $region57
    $region56: #{digitnet_forward.1} parent=1 // pred_region
      %s49 = ssub.s32 16, 16
      %50 = vsyncadd [#allocation3], %s49
      %s52 = sshll.u32 %s13, 4
      %s53 = int_to_ptr.vmem [resolvable:$true] %s52
      %55 = dma.vmem_to_smem %s53, 16, [#allocation2], [#allocation3]
    $region57: #{digitnet_forward.1} parent=1 // pred_fallthru
      _
    // Predicated region
    $region58: #{digitnet_forward.1} parent=1 // pred_check
      _
    $region59: #{digitnet_forward.1} parent=1 // pred_check_branch
      %57 = sbr.rel (0) target = $region61
    $region60: #{digitnet_forward.1} parent=1 // pred_region
      %58 = dma.done [#allocation3], 16
    $region61: #{digitnet_forward.1} parent=1 // pred_fallthru
      _
    %59 = sfence
    %v61 = vld [vmem:[%s0] sm:$0xff]
    %v62 = vld [vmem:[%s0 + $0x8] sm:$0xff]
    %v63 = vld [vmem:[%s0 + $0x10] sm:$0xff]
    %v64 = vld [vmem:[%s0 + $0x18] sm:$0xff]
    %v65 = vld [vmem:[%s0 + $0x20] sm:$0xff]
    %v66 = vld [vmem:[%s0 + $0x28] sm:$0xff]
    %v67 = vld [vmem:[%s0 + $0x30] sm:$0xff]
    %v68 = vld [vmem:[%s0 + $0x38] sm:$0xff]
    %v69 = vld [vmem:[%s0 + $0x40] sm:$0xff]
    %v70 = vld [vmem:[%s0 + $0x48] sm:$0xff]
    %v71 = vld [vmem:[%s0 + $0x50] sm:$0xff]
    %v72 = vld [vmem:[%s0 + $0x58] sm:$0xff]
    %v73 = vld [vmem:[%s0 + $0x60] sm:$0xff]
    %v74 = vld [vmem:[%s0 + $0x68] sm:$0xff]
    %v75 = vld [vmem:[%s0 + $0x70] sm:$0xff]
    %v76 = vld [vmem:[%s0 + $0x78] sm:$0xff]
    %v77 = vld [vmem:[%s0 + $0x80] sm:$0xff]
    %v78 = vld [vmem:[%s0 + $0x88] sm:$0xff]
    %v79 = vld [vmem:[%s0 + $0x90] sm:$0xff]
    %v80 = vld [vmem:[%s0 + $0x98] sm:$0xff]
    %v81 = vld [vmem:[%s0 + $0xa0] sm:$0xff]
    %v82 = vld [vmem:[%s0 + $0xa8] sm:$0xff]
    %v83 = vld [vmem:[%s0 + $0xb0] sm:$0xff]
    %v84 = vld [vmem:[%s0 + $0xb8] sm:$0xff]
    %v85 = vld [vmem:[%s0 + $0xc0] sm:$0xf]
    %s86 = sld [smem:[#allocation2]]
    %v87 = vld [vmem:[%s1] sm:$0xff]
    %v88 = vld [vmem:[%s1 + $0x8] sm:$0xff]
    %v89 = vld [vmem:[%s1 + $0x10] sm:$0xff]
    %v90 = vld [vmem:[%s1 + $0x18] sm:$0xff]
    %v91 = vld [vmem:[%s1 + $0x20] sm:$0xff]
    %v92 = vld [vmem:[%s1 + $0x28] sm:$0xff]
    %v93 = vld [vmem:[%s1 + $0x30] sm:$0xff]
    %v94 = vld [vmem:[%s1 + $0x38] sm:$0xff]
    %v95 = vld [vmem:[%s1 + $0x40] sm:$0xff]
    %v96 = vld [vmem:[%s1 + $0x48] sm:$0xff]
    %v97 = vld [vmem:[%s1 + $0x50] sm:$0xff]
    %v98 = vld [vmem:[%s1 + $0x58] sm:$0xff]
    %v99 = vld [vmem:[%s1 + $0x60] sm:$0xff]
    %v100 = vld [vmem:[%s1 + $0x68] sm:$0xff]
    %v101 = vld [vmem:[%s1 + $0x70] sm:$0xff]
    %v102 = vld [vmem:[%s1 + $0x78] sm:$0xff]
    %v103 = vld [vmem:[%s1 + $0x80] sm:$0xff]
    %v104 = vld [vmem:[%s1 + $0x88] sm:$0xff]
    %v105 = vld [vmem:[%s1 + $0x90] sm:$0xff]
    %v106 = vld [vmem:[%s1 + $0x98] sm:$0xff]
    %v107 = vld [vmem:[%s1 + $0xa0] sm:$0xff]
    %v108 = vld [vmem:[%s1 + $0xa8] sm:$0xff]
    %v109 = vld [vmem:[%s1 + $0xb0] sm:$0xff]
    %v110 = vld [vmem:[%s1 + $0xb8] sm:$0xff]
    %v111 = vld [vmem:[%s1 + $0xc0] sm:$0xff]
    %v112 = vld [vmem:[%s1 + $0xc8] sm:$0xff]
    %v113 = vld [vmem:[%s1 + $0xd0] sm:$0xff]
    %v114 = vld [vmem:[%s1 + $0xd8] sm:$0xff]
    %v115 = vld [vmem:[%s1 + $0xe0] sm:$0xff]
    %v116 = vld [vmem:[%s1 + $0xe8] sm:$0xff]
    %v117 = vld [vmem:[%s1 + $0xf0] sm:$0xff]
    %v118 = vld [vmem:[%s1 + $0xf8] sm:$0xff]
    %v119 = vld [vmem:[%s1 + $0x100] sm:$0xff]
    %v120 = vld [vmem:[%s1 + $0x108] sm:$0xff]
    %v121 = vld [vmem:[%s1 + $0x110] sm:$0xff]
    %v122 = vld [vmem:[%s1 + $0x118] sm:$0xff]
    %v123 = vld [vmem:[%s1 + $0x120] sm:$0xff]
    %v124 = vld [vmem:[%s1 + $0x128] sm:$0xff]
    %v125 = vld [vmem:[%s1 + $0x130] sm:$0xff]
    %v126 = vld [vmem:[%s1 + $0x138] sm:$0xff]
    %v127 = vld [vmem:[%s1 + $0x140] sm:$0xff]
    %v128 = vld [vmem:[%s1 + $0x148] sm:$0xff]
    %v129 = vld [vmem:[%s1 + $0x150] sm:$0xff]
    %v130 = vld [vmem:[%s1 + $0x158] sm:$0xff]
    %v131 = vld [vmem:[%s1 + $0x160] sm:$0xff]
    %v132 = vld [vmem:[%s1 + $0x168] sm:$0xff]
    %v133 = vld [vmem:[%s1 + $0x170] sm:$0xff]
    %v134 = vld [vmem:[%s1 + $0x178] sm:$0xff]
    %v135 = vld [vmem:[%s1 + $0x180] sm:$0xff]
    %v136 = vld [vmem:[%s1 + $0x188] sm:$0xff]
    %v137 = vpack.c.bf16 %v62, %v61
    %v138 = vpack.c.bf16 %v64, %v63
    %v139 = vpack.c.bf16 %v66, %v65
    %v140 = vpack.c.bf16 %v68, %v67
    %v141 = vpack.c.bf16 %v70, %v69
    %v142 = vpack.c.bf16 %v72, %v71
    %v143 = vpack.c.bf16 %v74, %v73
    %v144 = vpack.c.bf16 %v76, %v75
    %v145 = vpack.c.bf16 %v78, %v77
    %v146 = vpack.c.bf16 %v80, %v79
    %v147 = vpack.c.bf16 %v82, %v81
    %v148 = vpack.c.bf16 %v84, %v83
    %v149 = vpack.c.bf16 %v85, %v85
    %v150 = vld [vmem:[%s2] sm:$0xff]
    %v151 = vld [vmem:[%s2 + $0x8] sm:$0xff]
    %v152 = vld [vmem:[%s2 + $0x10] sm:$0xff]
    %v153 = vld [vmem:[%s2 + $0x18] sm:$0xff]
    %v154 = vld [vmem:[%s2 + $0x20] sm:$0xff]
    %v155 = vld [vmem:[%s2 + $0x28] sm:$0xff]
    %v156 = vld [vmem:[%s2 + $0x30] sm:$0xff]
    %v157 = vld [vmem:[%s2 + $0x38] sm:$0xff]
    %v158 = vld [vmem:[%s2 + $0x40] sm:$0xff]
    %v159 = vld [vmem:[%s2 + $0x48] sm:$0xff]
    %v160 = vld [vmem:[%s2 + $0x50] sm:$0xff]
    %v161 = vld [vmem:[%s2 + $0x58] sm:$0xff]
    %v162 = vld [vmem:[%s2 + $0x60] sm:$0xff]
    %v163 = vld [vmem:[%s2 + $0x68] sm:$0xff]
    %v164 = vld [vmem:[%s2 + $0x70] sm:$0xff]
    %v165 = vld [vmem:[%s2 + $0x78] sm:$0xff]
    %v166 = vld [vmem:[%s2 + $0x80] sm:$0xff]
    %v167 = vld [vmem:[%s2 + $0x88] sm:$0xff]
    %v168 = vld [vmem:[%s2 + $0x90] sm:$0xff]
    %v169 = vld [vmem:[%s2 + $0x98] sm:$0xff]
    %v170 = vld [vmem:[%s2 + $0xa0] sm:$0xff]
    %v171 = vld [vmem:[%s2 + $0xa8] sm:$0xff]
    %v172 = vld [vmem:[%s2 + $0xb0] sm:$0xff]
    %v173 = vld [vmem:[%s2 + $0xb8] sm:$0xff]
    %v174 = vld [vmem:[%s2 + $0xc0] sm:$0xff]
    %v175 = vld [vmem:[%s2 + $0xc8] sm:$0xff]
    %v176 = vld [vmem:[%s2 + $0xd0] sm:$0xff]
    %v177 = vld [vmem:[%s2 + $0xd8] sm:$0xff]
    %v178 = vld [vmem:[%s2 + $0xe0] sm:$0xff]
    %v179 = vld [vmem:[%s2 + $0xe8] sm:$0xff]
    %v180 = vld [vmem:[%s2 + $0xf0] sm:$0xff]
    %v181 = vld [vmem:[%s2 + $0xf8] sm:$0xff]
    %v182 = vld [vmem:[%s2 + $0x100] sm:$0xff]
    %v183 = vld [vmem:[%s2 + $0x108] sm:$0xff]
    %v184 = vld [vmem:[%s2 + $0x110] sm:$0xff]
    %v185 = vld [vmem:[%s2 + $0x118] sm:$0xff]
    %v186 = vld [vmem:[%s2 + $0x120] sm:$0xff]
    %v187 = vld [vmem:[%s2 + $0x128] sm:$0xff]
    %v188 = vld [vmem:[%s2 + $0x130] sm:$0xff]
    %v189 = vld [vmem:[%s2 + $0x138] sm:$0xff]
    %v190 = vld [vmem:[%s2 + $0x140] sm:$0xff]
    %v191 = vld [vmem:[%s2 + $0x148] sm:$0xff]
    %v192 = vld [vmem:[%s2 + $0x150] sm:$0xff]
    %v193 = vld [vmem:[%s2 + $0x158] sm:$0xff]
    %v194 = vld [vmem:[%s2 + $0x160] sm:$0xff]
    %v195 = vld [vmem:[%s2 + $0x168] sm:$0xff]
    %v196 = vld [vmem:[%s2 + $0x170] sm:$0xff]
    %v197 = vld [vmem:[%s2 + $0x178] sm:$0xff]
    %v198 = vld [vmem:[%s2 + $0x180] sm:$0xff]
    %v199 = vld [vmem:[%s2 + $0x188] sm:$0xff]
    %201 = vset.pattern.permute.xlu0 0
    %202 = vperm.xlu0 %201, %v150
    %v203 = vpop.permute.xlu0 %202
    %206 = vset.pattern.permute.xlu0 0
    %207 = vperm.xlu0 %206, %v151
    %v208 = vpop.permute.xlu0 %207
    %211 = vset.pattern.permute.xlu0 0
    %212 = vperm.xlu0 %211, %v152
    %v213 = vpop.permute.xlu0 %212
    %216 = vset.pattern.permute.xlu0 0
    %217 = vperm.xlu0 %216, %v153
    %v218 = vpop.permute.xlu0 %217
    %221 = vset.pattern.permute.xlu0 0
    %222 = vperm.xlu0 %221, %v154
    %v223 = vpop.permute.xlu0 %222
    %226 = vset.pattern.permute.xlu0 0
    %227 = vperm.xlu0 %226, %v155
    %v228 = vpop.permute.xlu0 %227
    %231 = vset.pattern.permute.xlu0 0
    %232 = vperm.xlu0 %231, %v156
    %v233 = vpop.permute.xlu0 %232
    %236 = vset.pattern.permute.xlu0 0
    %237 = vperm.xlu0 %236, %v157
    %v238 = vpop.permute.xlu0 %237
    %241 = vset.pattern.permute.xlu0 0
    %242 = vperm.xlu0 %241, %v158
    %v243 = vpop.permute.xlu0 %242
    %246 = vset.pattern.permute.xlu0 0
    %247 = vperm.xlu0 %246, %v159
    %v248 = vpop.permute.xlu0 %247
    %251 = vset.pattern.permute.xlu0 0
    %252 = vperm.xlu0 %251, %v160
    %v253 = vpop.permute.xlu0 %252
    %256 = vset.pattern.permute.xlu0 0
    %257 = vperm.xlu0 %256, %v161
    %v258 = vpop.permute.xlu0 %257
    %261 = vset.pattern.permute.xlu0 0
    %262 = vperm.xlu0 %261, %v162
    %v263 = vpop.permute.xlu0 %262
    %266 = vset.pattern.permute.xlu0 0
    %267 = vperm.xlu0 %266, %v163
    %v268 = vpop.permute.xlu0 %267
    %271 = vset.pattern.permute.xlu0 0
    %272 = vperm.xlu0 %271, %v164
    %v273 = vpop.permute.xlu0 %272
    %276 = vset.pattern.permute.xlu0 0
    %277 = vperm.xlu0 %276, %v165
    %v278 = vpop.permute.xlu0 %277
    %281 = vset.pattern.permute.xlu0 0
    %282 = vperm.xlu0 %281, %v166
    %v283 = vpop.permute.xlu0 %282
    %286 = vset.pattern.permute.xlu0 0
    %287 = vperm.xlu0 %286, %v167
    %v288 = vpop.permute.xlu0 %287
    %291 = vset.pattern.permute.xlu0 0
    %292 = vperm.xlu0 %291, %v168
    %v293 = vpop.permute.xlu0 %292
    %296 = vset.pattern.permute.xlu0 0
    %297 = vperm.xlu0 %296, %v169
    %v298 = vpop.permute.xlu0 %297
    %301 = vset.pattern.permute.xlu0 0
    %302 = vperm.xlu0 %301, %v170
    %v303 = vpop.permute.xlu0 %302
    %306 = vset.pattern.permute.xlu0 0
    %307 = vperm.xlu0 %306, %v171
    %v308 = vpop.permute.xlu0 %307
    %311 = vset.pattern.permute.xlu0 0
    %312 = vperm.xlu0 %311, %v172
    %v313 = vpop.permute.xlu0 %312
    %316 = vset.pattern.permute.xlu0 0
    %317 = vperm.xlu0 %316, %v173
    %v318 = vpop.permute.xlu0 %317
    %321 = vset.pattern.permute.xlu0 0
    %322 = vperm.xlu0 %321, %v174
    %v323 = vpop.permute.xlu0 %322
    %326 = vset.pattern.permute.xlu0 0
    %327 = vperm.xlu0 %326, %v175
    %v328 = vpop.permute.xlu0 %327
    %331 = vset.pattern.permute.xlu0 0
    %332 = vperm.xlu0 %331, %v176
    %v333 = vpop.permute.xlu0 %332
    %336 = vset.pattern.permute.xlu0 0
    %337 = vperm.xlu0 %336, %v177
    %v338 = vpop.permute.xlu0 %337
    %341 = vset.pattern.permute.xlu0 0
    %342 = vperm.xlu0 %341, %v178
    %v343 = vpop.permute.xlu0 %342
    %346 = vset.pattern.permute.xlu0 0
    %347 = vperm.xlu0 %346, %v179
    %v348 = vpop.permute.xlu0 %347
    %351 = vset.pattern.permute.xlu0 0
    %352 = vperm.xlu0 %351, %v180
    %v353 = vpop.permute.xlu0 %352
    %356 = vset.pattern.permute.xlu0 0
    %357 = vperm.xlu0 %356, %v181
    %v358 = vpop.permute.xlu0 %357
    %361 = vset.pattern.permute.xlu0 0
    %362 = vperm.xlu0 %361, %v182
    %v363 = vpop.permute.xlu0 %362
    %366 = vset.pattern.permute.xlu0 0
    %367 = vperm.xlu0 %366, %v183
    %v368 = vpop.permute.xlu0 %367
    %371 = vset.pattern.permute.xlu0 0
    %372 = vperm.xlu0 %371, %v184
    %v373 = vpop.permute.xlu0 %372
    %376 = vset.pattern.permute.xlu0 0
    %377 = vperm.xlu0 %376, %v185
    %v378 = vpop.permute.xlu0 %377
    %381 = vset.pattern.permute.xlu0 0
    %382 = vperm.xlu0 %381, %v186
    %v383 = vpop.permute.xlu0 %382
    %386 = vset.pattern.permute.xlu0 0
    %387 = vperm.xlu0 %386, %v187
    %v388 = vpop.permute.xlu0 %387
    %391 = vset.pattern.permute.xlu0 0
    %392 = vperm.xlu0 %391, %v188
    %v393 = vpop.permute.xlu0 %392
    %396 = vset.pattern.permute.xlu0 0
    %397 = vperm.xlu0 %396, %v189
    %v398 = vpop.permute.xlu0 %397
    %401 = vset.pattern.permute.xlu0 0
    %402 = vperm.xlu0 %401, %v190
    %v403 = vpop.permute.xlu0 %402
    %406 = vset.pattern.permute.xlu0 0
    %407 = vperm.xlu0 %406, %v191
    %v408 = vpop.permute.xlu0 %407
    %411 = vset.pattern.permute.xlu0 0
    %412 = vperm.xlu0 %411, %v192
    %v413 = vpop.permute.xlu0 %412
    %416 = vset.pattern.permute.xlu0 0
    %417 = vperm.xlu0 %416, %v193
    %v418 = vpop.permute.xlu0 %417
    %421 = vset.pattern.permute.xlu0 0
    %422 = vperm.xlu0 %421, %v194
    %v423 = vpop.permute.xlu0 %422
    %426 = vset.pattern.permute.xlu0 0
    %427 = vperm.xlu0 %426, %v195
    %v428 = vpop.permute.xlu0 %427
    %431 = vset.pattern.permute.xlu0 0
    %432 = vperm.xlu0 %431, %v196
    %v433 = vpop.permute.xlu0 %432
    %436 = vset.pattern.permute.xlu0 0
    %437 = vperm.xlu0 %436, %v197
    %v438 = vpop.permute.xlu0 %437
    %441 = vset.pattern.permute.xlu0 0
    %442 = vperm.xlu0 %441, %v198
    %v443 = vpop.permute.xlu0 %442
    %446 = vset.pattern.permute.xlu0 0
    %447 = vperm.xlu0 %446, %v199
    %v448 = vpop.permute.xlu0 %447
    %v500 = vunpack.c.l.b16 %v87
    %v501 = vunpack.c.h.b16 %v87
    %v502 = vunpack.c.l.b16 %v88
    %v503 = vunpack.c.h.b16 %v88
    %v504 = vunpack.c.l.b16 %v89
    %v505 = vunpack.c.h.b16 %v89
    %v506 = vunpack.c.l.b16 %v90
    %v507 = vunpack.c.h.b16 %v90
    %v508 = vunpack.c.l.b16 %v91
    %v509 = vunpack.c.h.b16 %v91
    %v510 = vunpack.c.l.b16 %v92
    %v511 = vunpack.c.h.b16 %v92
    %v512 = vunpack.c.l.b16 %v93
    %v513 = vunpack.c.h.b16 %v93
    %v514 = vunpack.c.l.b16 %v94
    %v515 = vunpack.c.h.b16 %v94
    %v516 = vunpack.c.l.b16 %v95
    %v517 = vunpack.c.h.b16 %v95
    %v518 = vunpack.c.l.b16 %v96
    %v519 = vunpack.c.h.b16 %v96
    %v520 = vunpack.c.l.b16 %v97
    %v521 = vunpack.c.h.b16 %v97
    %v522 = vunpack.c.l.b16 %v98
    %v523 = vunpack.c.h.b16 %v98
    %v524 = vunpack.c.l.b16 %v99
    %v525 = vunpack.c.h.b16 %v99
    %v526 = vunpack.c.l.b16 %v100
    %v527 = vunpack.c.h.b16 %v100
    %v528 = vunpack.c.l.b16 %v101
    %v529 = vunpack.c.h.b16 %v101
    %v530 = vunpack.c.l.b16 %v102
    %v531 = vunpack.c.h.b16 %v102
    %v532 = vunpack.c.l.b16 %v103
    %v533 = vunpack.c.h.b16 %v103
    %v534 = vunpack.c.l.b16 %v104
    %v535 = vunpack.c.h.b16 %v104
    %v536 = vunpack.c.l.b16 %v105
    %v537 = vunpack.c.h.b16 %v105
    %v538 = vunpack.c.l.b16 %v106
    %v539 = vunpack.c.h.b16 %v106
    %v540 = vunpack.c.l.b16 %v107
    %v541 = vunpack.c.h.b16 %v107
    %v542 = vunpack.c.l.b16 %v108
    %v543 = vunpack.c.h.b16 %v108
    %v544 = vunpack.c.l.b16 %v109
    %v545 = vunpack.c.h.b16 %v109
    %v546 = vunpack.c.l.b16 %v110
    %v547 = vunpack.c.h.b16 %v110
    %v548 = vunpack.c.l.b16 %v111
    %v549 = vunpack.c.h.b16 %v111
    %v550 = vunpack.c.l.b16 %v112
    %v551 = vunpack.c.h.b16 %v112
    %v552 = vunpack.c.l.b16 %v113
    %v553 = vunpack.c.h.b16 %v113
    %v554 = vunpack.c.l.b16 %v114
    %v555 = vunpack.c.h.b16 %v114
    %v556 = vunpack.c.l.b16 %v115
    %v557 = vunpack.c.h.b16 %v115
    %v558 = vunpack.c.l.b16 %v116
    %v559 = vunpack.c.h.b16 %v116
    %v560 = vunpack.c.l.b16 %v117
    %v561 = vunpack.c.h.b16 %v117
    %v562 = vunpack.c.l.b16 %v118
    %v563 = vunpack.c.h.b16 %v118
    %v564 = vunpack.c.l.b16 %v119
    %v565 = vunpack.c.h.b16 %v119
    %v566 = vunpack.c.l.b16 %v120
    %v567 = vunpack.c.h.b16 %v120
    %v568 = vunpack.c.l.b16 %v121
    %v569 = vunpack.c.h.b16 %v121
    %v570 = vunpack.c.l.b16 %v122
    %v571 = vunpack.c.h.b16 %v122
    %v572 = vunpack.c.l.b16 %v123
    %v573 = vunpack.c.h.b16 %v123
    %v574 = vunpack.c.l.b16 %v124
    %v575 = vunpack.c.h.b16 %v124
    %v576 = vunpack.c.l.b16 %v125
    %v577 = vunpack.c.h.b16 %v125
    %v578 = vunpack.c.l.b16 %v126
    %v579 = vunpack.c.h.b16 %v126
    %v580 = vunpack.c.l.b16 %v127
    %v581 = vunpack.c.h.b16 %v127
    %v582 = vunpack.c.l.b16 %v128
    %v583 = vunpack.c.h.b16 %v128
    %v584 = vunpack.c.l.b16 %v129
    %v585 = vunpack.c.h.b16 %v129
    %v586 = vunpack.c.l.b16 %v130
    %v587 = vunpack.c.h.b16 %v130
    %v588 = vunpack.c.l.b16 %v131
    %v589 = vunpack.c.h.b16 %v131
    %v590 = vunpack.c.l.b16 %v132
    %v591 = vunpack.c.h.b16 %v132
    %v592 = vunpack.c.l.b16 %v133
    %v593 = vunpack.c.h.b16 %v133
    %v594 = vunpack.c.l.b16 %v134
    %v595 = vunpack.c.h.b16 %v134
    %v596 = vunpack.c.l.b16 %v135
    %v597 = vunpack.c.h.b16 %v135
    %v598 = vunpack.c.l.b16 %v136
    %v599 = vunpack.c.h.b16 %v136
    %v600 = vpack.c.b16 %v502, %v500
    %v601 = vpack.c.b16 %v503, %v501
    %v602 = vpack.c.b16 %v506, %v504
    %v603 = vpack.c.b16 %v507, %v505
    %v604 = vpack.c.b16 %v510, %v508
    %v605 = vpack.c.b16 %v511, %v509
    %v606 = vpack.c.b16 %v514, %v512
    %v607 = vpack.c.b16 %v515, %v513
    %v608 = vpack.c.b16 %v518, %v516
    %v609 = vpack.c.b16 %v519, %v517
    %v610 = vpack.c.b16 %v522, %v520
    %v611 = vpack.c.b16 %v523, %v521
    %v612 = vpack.c.b16 %v526, %v524
    %v613 = vpack.c.b16 %v527, %v525
    %v614 = vpack.c.b16 %v530, %v528
    %v615 = vpack.c.b16 %v531, %v529
    %v616 = vpack.c.b16 %v534, %v532
    %v617 = vpack.c.b16 %v535, %v533
    %v618 = vpack.c.b16 %v538, %v536
    %v619 = vpack.c.b16 %v539, %v537
    %v620 = vpack.c.b16 %v542, %v540
    %v621 = vpack.c.b16 %v543, %v541
    %v622 = vpack.c.b16 %v546, %v544
    %v623 = vpack.c.b16 %v547, %v545
    %v624 = vpack.c.b16 %v550, %v548
    %v625 = vpack.c.b16 %v551, %v549
    %v626 = vpack.c.b16 %v554, %v552
    %v627 = vpack.c.b16 %v555, %v553
    %v628 = vpack.c.b16 %v558, %v556
    %v629 = vpack.c.b16 %v559, %v557
    %v630 = vpack.c.b16 %v562, %v560
    %v631 = vpack.c.b16 %v563, %v561
    %v632 = vpack.c.b16 %v566, %v564
    %v633 = vpack.c.b16 %v567, %v565
    %v634 = vpack.c.b16 %v570, %v568
    %v635 = vpack.c.b16 %v571, %v569
    %v636 = vpack.c.b16 %v574, %v572
    %v637 = vpack.c.b16 %v575, %v573
    %v638 = vpack.c.b16 %v578, %v576
    %v639 = vpack.c.b16 %v579, %v577
    %v640 = vpack.c.b16 %v582, %v580
    %v641 = vpack.c.b16 %v583, %v581
    %v642 = vpack.c.b16 %v586, %v584
    %v643 = vpack.c.b16 %v587, %v585
    %v644 = vpack.c.b16 %v590, %v588
    %v645 = vpack.c.b16 %v591, %v589
    %v646 = vpack.c.b16 %v594, %v592
    %v647 = vpack.c.b16 %v595, %v593
    %v648 = vpack.c.b16 %v598, %v596
    %v649 = vpack.c.b16 %v599, %v597
    %vm675 = vcmask 556032
    %v677 = vsel %vm675, %v601, 0
    %v680 = vsel %vm675, %v603, 0
    %v683 = vsel %vm675, %v605, 0
    %v686 = vsel %vm675, %v607, 0
    %v689 = vsel %vm675, %v609, 0
    %v692 = vsel %vm675, %v611, 0
    %v695 = vsel %vm675, %v613, 0
    %v698 = vsel %vm675, %v615, 0
    %v701 = vsel %vm675, %v617, 0
    %v704 = vsel %vm675, %v619, 0
    %v707 = vsel %vm675, %v621, 0
    %v710 = vsel %vm675, %v623, 0
    %v713 = vsel %vm675, %v625, 0
    %v716 = vsel %vm675, %v627, 0
    %v719 = vsel %vm675, %v629, 0
    %v722 = vsel %vm675, %v631, 0
    %v725 = vsel %vm675, %v633, 0
    %v728 = vsel %vm675, %v635, 0
    %v731 = vsel %vm675, %v637, 0
    %v734 = vsel %vm675, %v639, 0
    %v737 = vsel %vm675, %v641, 0
    %v740 = vsel %vm675, %v643, 0
    %v743 = vsel %vm675, %v645, 0
    %v746 = vsel %vm675, %v647, 0
    %v749 = vsel %vm675, %v649, 0
    %vm751 = vcmask 1041408
    %v753 = vsel %vm751, %v149, 0
    %755 = vmatprep.subr.bf16.mxu0 0
    %756 = vmatpush1.bf16.msra.mxu0 %v137
    %757 = vmatprep.subr.bf16.mxu0 0
    %758 = vmatpush1.bf16.msra.mxu0 %v138
    %759 = vmatprep.subr.bf16.mxu0 0
    %760 = vmatpush1.bf16.msra.mxu0 %v139
    %761 = vmatprep.subr.bf16.mxu0 0
    %762 = vmatpush1.bf16.msra.mxu0 %v140
    %763 = vmatprep.subr.bf16.mxu0 0
    %764 = vmatpush1.bf16.msra.mxu0 %v141
    %765 = vmatprep.subr.bf16.mxu0 0
    %766 = vmatpush1.bf16.msra.mxu0 %v142
    %767 = vmatprep.subr.bf16.mxu0 0
    %768 = vmatpush1.bf16.msra.mxu0 %v143
    %769 = vmatprep.subr.bf16.mxu0 0
    %770 = vmatpush1.bf16.msra.mxu0 %v144
    %771 = vmatprep.subr.bf16.mxu0 0
    %772 = vmatpush1.bf16.msra.mxu0 %v145
    %773 = vmatprep.subr.bf16.mxu0 0
    %774 = vmatpush1.bf16.msra.mxu0 %v146
    %775 = vmatprep.subr.bf16.mxu0 0
    %776 = vmatpush1.bf16.msra.mxu0 %v147
    %777 = vmatprep.subr.bf16.mxu0 0
    %778 = vmatpush1.bf16.msra.mxu0 %v148
    %779 = vmatprep.subr.bf16.mxu0 0
    %780 = vmatpush1.bf16.msra.mxu0 %v753
    %781 = vmatprep.subr.bf16.mxu0 0
    %782 = vmatpush1.bf16.msra.mxu0 0
    %783 = vmatprep.subr.bf16.mxu0 0
    %784 = vmatpush1.bf16.msra.mxu0 0
    %785 = vmatprep.subr.bf16.mxu0 0
    %786 = vmatpush1.bf16.msra.mxu0 0
    %787 = vmatprep.mubr.bf16.mxu0 %v677
    %788 = vmatmul.mubr.bf16.gmra.mrb[0].mxu0 %v600
    %v789 = vpop.f32.mrb[0].mxu0
    %v790 = vadd.f32 %v203, %v789
    %v791 = vpop.f32.mrb[0].mxu0
    %v792 = vpop.f32.mrb[0].mxu0
    %v793 = vadd.f32 %v208, %v792
    %v794 = vpop.f32.mrb[0].mxu0
    %795 = vmatprep.mubr.bf16.mxu0 %v680
    %796 = vmatmul.mubr.bf16.gmra.mrb[0].mxu0 %v602
    %v797 = vpop.f32.mrb[0].mxu0
    %v798 = vadd.f32 %v213, %v797
    %v799 = vpop.f32.mrb[0].mxu0
    %v800 = vpop.f32.mrb[0].mxu0
    %v801 = vadd.f32 %v218, %v800
    %v802 = vpop.f32.mrb[0].mxu0
    %803 = vmatprep.mubr.bf16.mxu0 %v683
    %804 = vmatmul.mubr.bf16.gmra.mrb[0].mxu0 %v604
    %v805 = vpop.f32.mrb[0].mxu0
    %v806 = vadd.f32 %v223, %v805
    %v807 = vpop.f32.mrb[0].mxu0
    %v808 = vpop.f32.mrb[0].mxu0
    %v809 = vadd.f32 %v228, %v808
    %v810 = vpop.f32.mrb[0].mxu0
    %811 = vmatprep.mubr.bf16.mxu0 %v686
    %812 = vmatmul.mubr.bf16.gmra.mrb[0].mxu0 %v606
    %v813 = vpop.f32.mrb[0].mxu0
    %v814 = vadd.f32 %v233, %v813
    %v815 = vpop.f32.mrb[0].mxu0
    %v816 = vpop.f32.mrb[0].mxu0
    %v817 = vadd.f32 %v238, %v816
    %v818 = vpop.f32.mrb[0].mxu0
    %819 = vmatprep.mubr.bf16.mxu0 %v689
    %820 = vmatmul.mubr.bf16.gmra.mrb[0].mxu0 %v608
    %v821 = vpop.f32.mrb[0].mxu0
    %v822 = vadd.f32 %v243, %v821
    %v823 = vpop.f32.mrb[0].mxu0
    %v824 = vpop.f32.mrb[0].mxu0
    %v825 = vadd.f32 %v248, %v824
    %v826 = vpop.f32.mrb[0].mxu0
    %827 = vmatprep.mubr.bf16.mxu0 %v692
    %828 = vmatmul.mubr.bf16.gmra.mrb[0].mxu0 %v610
    %v829 = vpop.f32.mrb[0].mxu0
    %v830 = vadd.f32 %v253, %v829
    %v831 = vpop.f32.mrb[0].mxu0
    %v832 = vpop.f32.mrb[0].mxu0
    %v833 = vadd.f32 %v258, %v832
    %v834 = vpop.f32.mrb[0].mxu0
    %835 = vmatprep.mubr.bf16.mxu0 %v695
    %836 = vmatmul.mubr.bf16.gmra.mrb[0].mxu0 %v612
    %v837 = vpop.f32.mrb[0].mxu0
    %v838 = vadd.f32 %v263, %v837
    %v839 = vpop.f32.mrb[0].mxu0
    %v840 = vpop.f32.mrb[0].mxu0
    %v841 = vadd.f32 %v268, %v840
    %v842 = vpop.f32.mrb[0].mxu0
    %843 = vmatprep.mubr.bf16.mxu0 %v698
    %844 = vmatmul.mubr.bf16.gmra.mrb[0].mxu0 %v614
    %v845 = vpop.f32.mrb[0].mxu0
    %v846 = vadd.f32 %v273, %v845
    %v847 = vpop.f32.mrb[0].mxu0
    %v848 = vpop.f32.mrb[0].mxu0
    %v849 = vadd.f32 %v278, %v848
    %v850 = vpop.f32.mrb[0].mxu0
    %851 = vmatprep.mubr.bf16.mxu0 %v701
    %852 = vmatmul.mubr.bf16.gmra.mrb[0].mxu0 %v616
    %v853 = vpop.f32.mrb[0].mxu0
    %v854 = vadd.f32 %v283, %v853
    %v855 = vpop.f32.mrb[0].mxu0
    %v856 = vpop.f32.mrb[0].mxu0
    %v857 = vadd.f32 %v288, %v856
    %v858 = vpop.f32.mrb[0].mxu0
    %859 = vmatprep.mubr.bf16.mxu0 %v704
    %860 = vmatmul.mubr.bf16.gmra.mrb[0].mxu0 %v618
    %v861 = vpop.f32.mrb[0].mxu0
    %v862 = vadd.f32 %v293, %v861
    %v863 = vpop.f32.mrb[0].mxu0
    %v864 = vpop.f32.mrb[0].mxu0
    %v865 = vadd.f32 %v298, %v864
    %v866 = vpop.f32.mrb[0].mxu0
    %867 = vmatprep.mubr.bf16.mxu0 %v707
    %868 = vmatmul.mubr.bf16.gmra.mrb[0].mxu0 %v620
    %v869 = vpop.f32.mrb[0].mxu0
    %v870 = vadd.f32 %v303, %v869
    %v871 = vpop.f32.mrb[0].mxu0
    %v872 = vpop.f32.mrb[0].mxu0
    %v873 = vadd.f32 %v308, %v872
    %v874 = vpop.f32.mrb[0].mxu0
    %875 = vmatprep.mubr.bf16.mxu0 %v710
    %876 = vmatmul.mubr.bf16.gmra.mrb[0].mxu0 %v622
    %v877 = vpop.f32.mrb[0].mxu0
    %v878 = vadd.f32 %v313, %v877
    %v879 = vpop.f32.mrb[0].mxu0
    %v880 = vpop.f32.mrb[0].mxu0
    %v881 = vadd.f32 %v318, %v880
    %v882 = vpop.f32.mrb[0].mxu0
    %883 = vmatprep.mubr.bf16.mxu0 %v713
    %884 = vmatmul.mubr.bf16.gmra.mrb[0].mxu0 %v624
    %v885 = vpop.f32.mrb[0].mxu0
    %v886 = vadd.f32 %v323, %v885
    %v887 = vpop.f32.mrb[0].mxu0
    %v888 = vpop.f32.mrb[0].mxu0
    %v889 = vadd.f32 %v328, %v888
    %v890 = vpop.f32.mrb[0].mxu0
    %891 = vmatprep.mubr.bf16.mxu0 %v716
    %892 = vmatmul.mubr.bf16.gmra.mrb[0].mxu0 %v626
    %v893 = vpop.f32.mrb[0].mxu0
    %v894 = vadd.f32 %v333, %v893
    %v895 = vpop.f32.mrb[0].mxu0
    %v896 = vpop.f32.mrb[0].mxu0
    %v897 = vadd.f32 %v338, %v896
    %v898 = vpop.f32.mrb[0].mxu0
    %899 = vmatprep.mubr.bf16.mxu0 %v719
    %900 = vmatmul.mubr.bf16.gmra.mrb[0].mxu0 %v628
    %v901 = vpop.f32.mrb[0].mxu0
    %v902 = vadd.f32 %v343, %v901
    %v903 = vpop.f32.mrb[0].mxu0
    %v904 = vpop.f32.mrb[0].mxu0
    %v905 = vadd.f32 %v348, %v904
    %v906 = vpop.f32.mrb[0].mxu0
    %907 = vmatprep.mubr.bf16.mxu0 %v722
    %908 = vmatmul.mubr.bf16.gmra.mrb[0].mxu0 %v630
    %v909 = vpop.f32.mrb[0].mxu0
    %v910 = vadd.f32 %v353, %v909
    %v911 = vpop.f32.mrb[0].mxu0
    %v912 = vpop.f32.mrb[0].mxu0
    %v913 = vadd.f32 %v358, %v912
    %v914 = vpop.f32.mrb[0].mxu0
    %915 = vmatprep.mubr.bf16.mxu0 %v725
    %916 = vmatmul.mubr.bf16.gmra.mrb[0].mxu0 %v632
    %v917 = vpop.f32.mrb[0].mxu0
    %v918 = vadd.f32 %v363, %v917
    %v919 = vpop.f32.mrb[0].mxu0
    %v920 = vpop.f32.mrb[0].mxu0
    %v921 = vadd.f32 %v368, %v920
    %v922 = vpop.f32.mrb[0].mxu0
    %923 = vmatprep.mubr.bf16.mxu0 %v728
    %924 = vmatmul.mubr.bf16.gmra.mrb[0].mxu0 %v634
    %v925 = vpop.f32.mrb[0].mxu0
    %v926 = vadd.f32 %v373, %v925
    %v927 = vpop.f32.mrb[0].mxu0
    %v928 = vpop.f32.mrb[0].mxu0
    %v929 = vadd.f32 %v378, %v928
    %v930 = vpop.f32.mrb[0].mxu0
    %931 = vmatprep.mubr.bf16.mxu0 %v731
    %932 = vmatmul.mubr.bf16.gmra.mrb[0].mxu0 %v636
    %v933 = vpop.f32.mrb[0].mxu0
    %v934 = vadd.f32 %v383, %v933
    %v935 = vpop.f32.mrb[0].mxu0
    %v936 = vpop.f32.mrb[0].mxu0
    %v937 = vadd.f32 %v388, %v936
    %v938 = vpop.f32.mrb[0].mxu0
    %939 = vmatprep.mubr.bf16.mxu0 %v734
    %940 = vmatmul.mubr.bf16.gmra.mrb[0].mxu0 %v638
    %v941 = vpop.f32.mrb[0].mxu0
    %v942 = vadd.f32 %v393, %v941
    %v943 = vpop.f32.mrb[0].mxu0
    %v944 = vpop.f32.mrb[0].mxu0
    %v945 = vadd.f32 %v398, %v944
    %v946 = vpop.f32.mrb[0].mxu0
    %947 = vmatprep.mubr.bf16.mxu0 %v737
    %948 = vmatmul.mubr.bf16.gmra.mrb[0].mxu0 %v640
    %v949 = vpop.f32.mrb[0].mxu0
    %v950 = vadd.f32 %v403, %v949
    %v951 = vpop.f32.mrb[0].mxu0
    %v952 = vpop.f32.mrb[0].mxu0
    %v953 = vadd.f32 %v408, %v952
    %v954 = vpop.f32.mrb[0].mxu0
    %955 = vmatprep.mubr.bf16.mxu0 %v740
    %956 = vmatmul.mubr.bf16.gmra.mrb[0].mxu0 %v642
    %v957 = vpop.f32.mrb[0].mxu0
    %v958 = vadd.f32 %v413, %v957
    %v959 = vpop.f32.mrb[0].mxu0
    %v960 = vpop.f32.mrb[0].mxu0
    %v961 = vadd.f32 %v418, %v960
    %v962 = vpop.f32.mrb[0].mxu0
    %963 = vmatprep.mubr.bf16.mxu0 %v743
    %964 = vmatmul.mubr.bf16.gmra.mrb[0].mxu0 %v644
    %v965 = vpop.f32.mrb[0].mxu0
    %v966 = vadd.f32 %v423, %v965
    %v967 = vpop.f32.mrb[0].mxu0
    %v968 = vpop.f32.mrb[0].mxu0
    %v969 = vadd.f32 %v428, %v968
    %v970 = vpop.f32.mrb[0].mxu0
    %971 = vmatprep.mubr.bf16.mxu0 %v746
    %972 = vmatmul.mubr.bf16.gmra.mrb[0].mxu0 %v646
    %v973 = vpop.f32.mrb[0].mxu0
    %v974 = vadd.f32 %v433, %v973
    %v975 = vpop.f32.mrb[0].mxu0
    %v976 = vpop.f32.mrb[0].mxu0
    %v977 = vadd.f32 %v438, %v976
    %v978 = vpop.f32.mrb[0].mxu0
    %979 = vmatprep.mubr.bf16.mxu0 %v749
    %980 = vmatmul.mubr.bf16.gmra.mrb[0].mxu0 %v648
    %v981 = vpop.f32.mrb[0].mxu0
    %v982 = vadd.f32 %v443, %v981
    %v983 = vpop.f32.mrb[0].mxu0
    %v984 = vpop.f32.mrb[0].mxu0
    %v985 = vadd.f32 %v448, %v984
    %v986 = vpop.f32.mrb[0].mxu0
    %987 = vdwg.mxu0
    %vm988 = vcmp.ge.f32.partialorder %v790, 0.0
    %vm989 = vcmp.ge.f32.partialorder %v793, 0.0
    %vm990 = vcmp.ge.f32.partialorder %v798, 0.0
    %vm991 = vcmp.ge.f32.partialorder %v801, 0.0
    %vm992 = vcmp.ge.f32.partialorder %v806, 0.0
    %vm993 = vcmp.ge.f32.partialorder %v809, 0.0
    %vm994 = vcmp.ge.f32.partialorder %v814, 0.0
    %vm995 = vcmp.ge.f32.partialorder %v817, 0.0
    %vm996 = vcmp.ge.f32.partialorder %v822, 0.0
    %vm997 = vcmp.ge.f32.partialorder %v825, 0.0
    %vm998 = vcmp.ge.f32.partialorder %v830, 0.0
    %vm999 = vcmp.ge.f32.partialorder %v833, 0.0
    %vm1000 = vcmp.ge.f32.partialorder %v838, 0.0
    %vm1001 = vcmp.ge.f32.partialorder %v841, 0.0
    %vm1002 = vcmp.ge.f32.partialorder %v846, 0.0
    %vm1003 = vcmp.ge.f32.partialorder %v849, 0.0
    %vm1004 = vcmp.ge.f32.partialorder %v854, 0.0
    %vm1005 = vcmp.ge.f32.partialorder %v857, 0.0
    %vm1006 = vcmp.ge.f32.partialorder %v862, 0.0
    %vm1007 = vcmp.ge.f32.partialorder %v865, 0.0
    %vm1008 = vcmp.ge.f32.partialorder %v870, 0.0
    %vm1009 = vcmp.ge.f32.partialorder %v873, 0.0
    %vm1010 = vcmp.ge.f32.partialorder %v878, 0.0
    %vm1011 = vcmp.ge.f32.partialorder %v881, 0.0
    %vm1012 = vcmp.ge.f32.partialorder %v886, 0.0
    %vm1013 = vcmp.ge.f32.partialorder %v889, 0.0
    %vm1014 = vcmp.ge.f32.partialorder %v894, 0.0
    %vm1015 = vcmp.ge.f32.partialorder %v897, 0.0
    %vm1016 = vcmp.ge.f32.partialorder %v902, 0.0
    %vm1017 = vcmp.ge.f32.partialorder %v905, 0.0
    %vm1018 = vcmp.ge.f32.partialorder %v910, 0.0
    %vm1019 = vcmp.ge.f32.partialorder %v913, 0.0
    %vm1020 = vcmp.ge.f32.partialorder %v918, 0.0
    %vm1021 = vcmp.ge.f32.partialorder %v921, 0.0
    %vm1022 = vcmp.ge.f32.partialorder %v926, 0.0
    %vm1023 = vcmp.ge.f32.partialorder %v929, 0.0
    %vm1024 = vcmp.ge.f32.partialorder %v934, 0.0
    %vm1025 = vcmp.ge.f32.partialorder %v937, 0.0
    %vm1026 = vcmp.ge.f32.partialorder %v942, 0.0
    %vm1027 = vcmp.ge.f32.partialorder %v945, 0.0
    %vm1028 = vcmp.ge.f32.partialorder %v950, 0.0
    %vm1029 = vcmp.ge.f32.partialorder %v953, 0.0
    %vm1030 = vcmp.ge.f32.partialorder %v958, 0.0
    %vm1031 = vcmp.ge.f32.partialorder %v961, 0.0
    %vm1032 = vcmp.ge.f32.partialorder %v966, 0.0
    %vm1033 = vcmp.ge.f32.partialorder %v969, 0.0
    %vm1034 = vcmp.ge.f32.partialorder %v974, 0.0
    %vm1035 = vcmp.ge.f32.partialorder %v977, 0.0
    %vm1036 = vcmp.ge.f32.partialorder %v982, 0.0
    %vm1037 = vcmp.ge.f32.partialorder %v985, 0.0
    %v1038 = vstv %s86
    %v1039 = vmul.f32 %v1038, %v790
    %v1040 = vmul.f32 %v1038, %v793
    %v1041 = vmul.f32 %v1038, %v798
    %v1042 = vmul.f32 %v1038, %v801
    %v1043 = vmul.f32 %v1038, %v806
    %v1044 = vmul.f32 %v1038, %v809
    %v1045 = vmul.f32 %v1038, %v814
    %v1046 = vmul.f32 %v1038, %v817
    %v1047 = vmul.f32 %v1038, %v822
    %v1048 = vmul.f32 %v1038, %v825
    %v1049 = vmul.f32 %v1038, %v830
    %v1050 = vmul.f32 %v1038, %v833
    %v1051 = vmul.f32 %v1038, %v838
    %v1052 = vmul.f32 %v1038, %v841
    %v1053 = vmul.f32 %v1038, %v846
    %v1054 = vmul.f32 %v1038, %v849
    %v1055 = vmul.f32 %v1038, %v854
    %v1056 = vmul.f32 %v1038, %v857
    %v1057 = vmul.f32 %v1038, %v862
    %v1058 = vmul.f32 %v1038, %v865
    %v1059 = vmul.f32 %v1038, %v870
    %v1060 = vmul.f32 %v1038, %v873
    %v1061 = vmul.f32 %v1038, %v878
    %v1062 = vmul.f32 %v1038, %v881
    %v1063 = vmul.f32 %v1038, %v886
    %v1064 = vmul.f32 %v1038, %v889
    %v1065 = vmul.f32 %v1038, %v894
    %v1066 = vmul.f32 %v1038, %v897
    %v1067 = vmul.f32 %v1038, %v902
    %v1068 = vmul.f32 %v1038, %v905
    %v1069 = vmul.f32 %v1038, %v910
    %v1070 = vmul.f32 %v1038, %v913
    %v1071 = vmul.f32 %v1038, %v918
    %v1072 = vmul.f32 %v1038, %v921
    %v1073 = vmul.f32 %v1038, %v926
    %v1074 = vmul.f32 %v1038, %v929
    %v1075 = vmul.f32 %v1038, %v934
    %v1076 = vmul.f32 %v1038, %v937
    %v1077 = vmul.f32 %v1038, %v942
    %v1078 = vmul.f32 %v1038, %v945
    %v1079 = vmul.f32 %v1038, %v950
    %v1080 = vmul.f32 %v1038, %v953
    %v1081 = vmul.f32 %v1038, %v958
    %v1082 = vmul.f32 %v1038, %v961
    %v1083 = vmul.f32 %v1038, %v966
    %v1084 = vmul.f32 %v1038, %v969
    %v1085 = vmul.f32 %v1038, %v974
    %v1086 = vmul.f32 %v1038, %v977
    %v1087 = vmul.f32 %v1038, %v982
    %v1088 = vmul.f32 %v1038, %v985
    %v1089 = vsel %vm988, %v790, %v1039
    %v1090 = vsel %vm989, %v793, %v1040
    %v1091 = vsel %vm990, %v798, %v1041
    %v1092 = vsel %vm991, %v801, %v1042
    %v1093 = vsel %vm992, %v806, %v1043
    %v1094 = vsel %vm993, %v809, %v1044
    %v1095 = vsel %vm994, %v814, %v1045
    %v1096 = vsel %vm995, %v817, %v1046
    %v1097 = vsel %vm996, %v822, %v1047
    %v1098 = vsel %vm997, %v825, %v1048
    %v1099 = vsel %vm998, %v830, %v1049
    %v1100 = vsel %vm999, %v833, %v1050
    %v1101 = vsel %vm1000, %v838, %v1051
    %v1102 = vsel %vm1001, %v841, %v1052
    %v1103 = vsel %vm1002, %v846, %v1053
    %v1104 = vsel %vm1003, %v849, %v1054
    %v1105 = vsel %vm1004, %v854, %v1055
    %v1106 = vsel %vm1005, %v857, %v1056
    %v1107 = vsel %vm1006, %v862, %v1057
    %v1108 = vsel %vm1007, %v865, %v1058
    %v1109 = vsel %vm1008, %v870, %v1059
    %v1110 = vsel %vm1009, %v873, %v1060
    %v1111 = vsel %vm1010, %v878, %v1061
    %v1112 = vsel %vm1011, %v881, %v1062
    %v1113 = vsel %vm1012, %v886, %v1063
    %v1114 = vsel %vm1013, %v889, %v1064
    %v1115 = vsel %vm1014, %v894, %v1065
    %v1116 = vsel %vm1015, %v897, %v1066
    %v1117 = vsel %vm1016, %v902, %v1067
    %v1118 = vsel %vm1017, %v905, %v1068
    %v1119 = vsel %vm1018, %v910, %v1069
    %v1120 = vsel %vm1019, %v913, %v1070
    %v1121 = vsel %vm1020, %v918, %v1071
    %v1122 = vsel %vm1021, %v921, %v1072
    %v1123 = vsel %vm1022, %v926, %v1073
    %v1124 = vsel %vm1023, %v929, %v1074
    %v1125 = vsel %vm1024, %v934, %v1075
    %v1126 = vsel %vm1025, %v937, %v1076
    %v1127 = vsel %vm1026, %v942, %v1077
    %v1128 = vsel %vm1027, %v945, %v1078
    %v1129 = vsel %vm1028, %v950, %v1079
    %v1130 = vsel %vm1029, %v953, %v1080
    %v1131 = vsel %vm1030, %v958, %v1081
    %v1132 = vsel %vm1031, %v961, %v1082
    %v1133 = vsel %vm1032, %v966, %v1083
    %v1134 = vsel %vm1033, %v969, %v1084
    %v1135 = vsel %vm1034, %v974, %v1085
    %v1136 = vsel %vm1035, %v977, %v1086
    %v1137 = vsel %vm1036, %v982, %v1087
    %v1138 = vsel %vm1037, %v985, %v1088
    %s1139 = sld [smem:[#allocation2 + $0x1]]
    %v1140 = vld [vmem:[%s3] sm:$0xff]
    %v1141 = vld [vmem:[%s3 + $0x8] sm:$0xff]
    %v1142 = vld [vmem:[%s3 + $0x10] sm:$0xff]
    %v1143 = vld [vmem:[%s3 + $0x18] sm:$0xff]
    %v1144 = vld [vmem:[%s3 + $0x20] sm:$0xff]
    %v1145 = vld [vmem:[%s3 + $0x28] sm:$0xff]
    %v1146 = vld [vmem:[%s3 + $0x30] sm:$0xff]
    %v1147 = vld [vmem:[%s3 + $0x38] sm:$0xff]
    %v1148 = vld [vmem:[%s3 + $0x40] sm:$0xff]
    %v1149 = vld [vmem:[%s3 + $0x48] sm:$0xff]
    %v1150 = vld [vmem:[%s3 + $0x50] sm:$0xff]
    %v1151 = vld [vmem:[%s3 + $0x58] sm:$0xff]
    %v1152 = vld [vmem:[%s3 + $0x60] sm:$0xff]
    %v1153 = vld [vmem:[%s3 + $0x68] sm:$0xff]
    %v1154 = vld [vmem:[%s3 + $0x70] sm:$0xff]
    %v1155 = vld [vmem:[%s3 + $0x78] sm:$0xff]
    %v1156 = vld [vmem:[%s3 + $0x80] sm:$0xff]
    %v1157 = vld [vmem:[%s3 + $0x88] sm:$0xff]
    %v1158 = vld [vmem:[%s3 + $0x90] sm:$0xff]
    %v1159 = vld [vmem:[%s3 + $0x98] sm:$0xff]
    %v1160 = vld [vmem:[%s3 + $0xa0] sm:$0xff]
    %v1161 = vld [vmem:[%s3 + $0xa8] sm:$0xff]
    %v1162 = vld [vmem:[%s3 + $0xb0] sm:$0xff]
    %v1163 = vld [vmem:[%s3 + $0xb8] sm:$0xff]
    %v1164 = vld [vmem:[%s3 + $0xc0] sm:$0xff]
    %v1165 = vld [vmem:[%s3 + $0xc8] sm:$0xff]
    %v1166 = vld [vmem:[%s3 + $0xd0] sm:$0xff]
    %v1167 = vld [vmem:[%s3 + $0xd8] sm:$0xff]
    %v1168 = vld [vmem:[%s3 + $0xe0] sm:$0xff]
    %v1169 = vld [vmem:[%s3 + $0xe8] sm:$0xff]
    %v1170 = vld [vmem:[%s3 + $0xf0] sm:$0xff]
    %v1171 = vld [vmem:[%s3 + $0xf8] sm:$0xff]
    %v1172 = vld [vmem:[%s3 + $0x100] sm:$0xff]
    %v1173 = vld [vmem:[%s3 + $0x108] sm:$0xff]
    %v1174 = vld [vmem:[%s3 + $0x110] sm:$0xff]
    %v1175 = vld [vmem:[%s3 + $0x118] sm:$0xff]
    %v1176 = vld [vmem:[%s3 + $0x120] sm:$0xff]
    %v1177 = vld [vmem:[%s3 + $0x128] sm:$0xff]
    %v1178 = vld [vmem:[%s3 + $0x130] sm:$0xff]
    %v1179 = vld [vmem:[%s3 + $0x138] sm:$0xff]
    %v1180 = vld [vmem:[%s3 + $0x140] sm:$0xff]
    %v1181 = vld [vmem:[%s3 + $0x148] sm:$0xff]
    %v1182 = vld [vmem:[%s3 + $0x150] sm:$0xff]
    %v1183 = vld [vmem:[%s3 + $0x158] sm:$0xff]
    %v1184 = vld [vmem:[%s3 + $0x160] sm:$0xff]
    %v1185 = vld [vmem:[%s3 + $0x168] sm:$0xff]
    %v1186 = vld [vmem:[%s3 + $0x170] sm:$0xff]
    %v1187 = vld [vmem:[%s3 + $0x178] sm:$0xff]
    %v1188 = vld [vmem:[%s3 + $0x180] sm:$0xff]
    %v1189 = vld [vmem:[%s3 + $0x188] sm:$0xff]
    %v1190 = vld [vmem:[%s3 + $0x190] sm:$0xff]
    %v1191 = vld [vmem:[%s3 + $0x198] sm:$0xff]
    %v1192 = vld [vmem:[%s3 + $0x1a0] sm:$0xff]
    %v1193 = vld [vmem:[%s3 + $0x1a8] sm:$0xff]
    %v1194 = vld [vmem:[%s3 + $0x1b0] sm:$0xff]
    %v1195 = vld [vmem:[%s3 + $0x1b8] sm:$0xff]
    %v1196 = vld [vmem:[%s3 + $0x1c0] sm:$0xff]
    %v1197 = vld [vmem:[%s3 + $0x1c8] sm:$0xff]
    %v1198 = vld [vmem:[%s3 + $0x1d0] sm:$0xff]
    %v1199 = vld [vmem:[%s3 + $0x1d8] sm:$0xff]
    %v1200 = vld [vmem:[%s3 + $0x1e0] sm:$0xff]
    %v1201 = vld [vmem:[%s3 + $0x1e8] sm:$0xff]
    %v1202 = vld [vmem:[%s3 + $0x1f0] sm:$0xff]
    %v1203 = vld [vmem:[%s3 + $0x1f8] sm:$0xff]
    %v1204 = vld [vmem:[%s3 + $0x200] sm:$0xff]
    %v1205 = vld [vmem:[%s3 + $0x208] sm:$0xff]
    %v1206 = vld [vmem:[%s3 + $0x210] sm:$0xff]
    %v1207 = vld [vmem:[%s3 + $0x218] sm:$0xff]
    %v1208 = vld [vmem:[%s3 + $0x220] sm:$0xff]
    %v1209 = vld [vmem:[%s3 + $0x228] sm:$0xff]
    %v1210 = vld [vmem:[%s3 + $0x230] sm:$0xff]
    %v1211 = vld [vmem:[%s3 + $0x238] sm:$0xff]
    %v1212 = vld [vmem:[%s3 + $0x240] sm:$0xff]
    %v1213 = vld [vmem:[%s3 + $0x248] sm:$0xff]
    %v1214 = vld [vmem:[%s3 + $0x250] sm:$0xff]
    %v1215 = vld [vmem:[%s3 + $0x258] sm:$0xff]
    %v1216 = vld [vmem:[%s3 + $0x260] sm:$0xff]
    %v1217 = vld [vmem:[%s3 + $0x268] sm:$0xff]
    %v1218 = vld [vmem:[%s3 + $0x270] sm:$0xff]
    %v1219 = vld [vmem:[%s3 + $0x278] sm:$0xff]
    %v1220 = vld [vmem:[%s3 + $0x280] sm:$0xff]
    %v1221 = vld [vmem:[%s3 + $0x288] sm:$0xff]
    %v1222 = vld [vmem:[%s3 + $0x290] sm:$0xff]
    %v1223 = vld [vmem:[%s3 + $0x298] sm:$0xff]
    %v1224 = vld [vmem:[%s3 + $0x2a0] sm:$0xff]
    %v1225 = vld [vmem:[%s3 + $0x2a8] sm:$0xff]
    %v1226 = vld [vmem:[%s3 + $0x2b0] sm:$0xff]
    %v1227 = vld [vmem:[%s3 + $0x2b8] sm:$0xff]
    %v1228 = vld [vmem:[%s3 + $0x2c0] sm:$0xff]
    %v1229 = vld [vmem:[%s3 + $0x2c8] sm:$0xff]
    %v1230 = vld [vmem:[%s3 + $0x2d0] sm:$0xff]
    %v1231 = vld [vmem:[%s3 + $0x2d8] sm:$0xff]
    %v1232 = vld [vmem:[%s3 + $0x2e0] sm:$0xff]
    %v1233 = vld [vmem:[%s3 + $0x2e8] sm:$0xff]
    %v1234 = vld [vmem:[%s3 + $0x2f0] sm:$0xff]
    %v1235 = vld [vmem:[%s3 + $0x2f8] sm:$0xff]
    %v1236 = vld [vmem:[%s3 + $0x300] sm:$0xff]
    %v1237 = vld [vmem:[%s3 + $0x308] sm:$0xff]
    %v1238 = vld [vmem:[%s3 + $0x310] sm:$0xff]
    %v1239 = vld [vmem:[%s3 + $0x318] sm:$0xff]
    %v1240 = vld [vmem:[%s3 + $0x320] sm:$0xff]
    %v1241 = vld [vmem:[%s3 + $0x328] sm:$0xff]
    %v1242 = vld [vmem:[%s3 + $0x330] sm:$0xff]
    %v1243 = vld [vmem:[%s3 + $0x338] sm:$0xff]
    %v1244 = vld [vmem:[%s3 + $0x340] sm:$0xff]
    %v1245 = vld [vmem:[%s3 + $0x348] sm:$0xff]
    %v1246 = vld [vmem:[%s3 + $0x350] sm:$0xff]
    %v1247 = vld [vmem:[%s3 + $0x358] sm:$0xff]
    %v1248 = vld [vmem:[%s3 + $0x360] sm:$0xff]
    %v1249 = vld [vmem:[%s3 + $0x368] sm:$0xff]
    %v1250 = vld [vmem:[%s3 + $0x370] sm:$0xff]
    %v1251 = vld [vmem:[%s3 + $0x378] sm:$0xff]
    %v1252 = vld [vmem:[%s3 + $0x380] sm:$0xff]
    %v1253 = vld [vmem:[%s3 + $0x388] sm:$0xff]
    %v1254 = vld [vmem:[%s3 + $0x390] sm:$0xff]
    %v1255 = vld [vmem:[%s3 + $0x398] sm:$0xff]
    %v1256 = vld [vmem:[%s3 + $0x3a0] sm:$0xff]
    %v1257 = vld [vmem:[%s3 + $0x3a8] sm:$0xff]
    %v1258 = vld [vmem:[%s3 + $0x3b0] sm:$0xff]
    %v1259 = vld [vmem:[%s3 + $0x3b8] sm:$0xff]
    %v1260 = vld [vmem:[%s3 + $0x3c0] sm:$0xff]
    %v1261 = vld [vmem:[%s3 + $0x3c8] sm:$0xff]
    %v1262 = vld [vmem:[%s3 + $0x3d0] sm:$0xff]
    %v1263 = vld [vmem:[%s3 + $0x3d8] sm:$0xff]
    %v1264 = vld [vmem:[%s3 + $0x3e0] sm:$0xff]
    %v1265 = vld [vmem:[%s3 + $0x3e8] sm:$0xff]
    %v1266 = vld [vmem:[%s3 + $0x3f0] sm:$0xff]
    %v1267 = vld [vmem:[%s3 + $0x3f8] sm:$0xff]
    %v1268 = vpack.c.bf16 %v1090, %v1089
    %v1269 = vpack.c.bf16 %v1092, %v1091
    %v1270 = vpack.c.bf16 %v1094, %v1093
    %v1271 = vpack.c.bf16 %v1096, %v1095
    %v1272 = vpack.c.bf16 %v1098, %v1097
    %v1273 = vpack.c.bf16 %v1100, %v1099
    %v1274 = vpack.c.bf16 %v1102, %v1101
    %v1275 = vpack.c.bf16 %v1104, %v1103
    %v1276 = vpack.c.bf16 %v1106, %v1105
    %v1277 = vpack.c.bf16 %v1108, %v1107
    %v1278 = vpack.c.bf16 %v1110, %v1109
    %v1279 = vpack.c.bf16 %v1112, %v1111
    %v1280 = vpack.c.bf16 %v1114, %v1113
    %v1281 = vpack.c.bf16 %v1116, %v1115
    %v1282 = vpack.c.bf16 %v1118, %v1117
    %v1283 = vpack.c.bf16 %v1120, %v1119
    %v1284 = vpack.c.bf16 %v1122, %v1121
    %v1285 = vpack.c.bf16 %v1124, %v1123
    %v1286 = vpack.c.bf16 %v1126, %v1125
    %v1287 = vpack.c.bf16 %v1128, %v1127
    %v1288 = vpack.c.bf16 %v1130, %v1129
    %v1289 = vpack.c.bf16 %v1132, %v1131
    %v1290 = vpack.c.bf16 %v1134, %v1133
    %v1291 = vpack.c.bf16 %v1136, %v1135
    %v1292 = vpack.c.bf16 %v1138, %v1137
    %v1293 = vld [vmem:[%s4] sm:$0xff]
    %v1294 = vld [vmem:[%s4 + $0x8] sm:$0xff]
    %v1295 = vld [vmem:[%s4 + $0x10] sm:$0xff]
    %v1296 = vld [vmem:[%s4 + $0x18] sm:$0xff]
    %v1297 = vld [vmem:[%s4 + $0x20] sm:$0xff]
    %v1298 = vld [vmem:[%s4 + $0x28] sm:$0xff]
    %v1299 = vld [vmem:[%s4 + $0x30] sm:$0xff]
    %v1300 = vld [vmem:[%s4 + $0x38] sm:$0xff]
    %v1301 = vld [vmem:[%s4 + $0x40] sm:$0xff]
    %v1302 = vld [vmem:[%s4 + $0x48] sm:$0xff]
    %v1303 = vld [vmem:[%s4 + $0x50] sm:$0xff]
    %v1304 = vld [vmem:[%s4 + $0x58] sm:$0xff]
    %v1305 = vld [vmem:[%s4 + $0x60] sm:$0xff]
    %v1306 = vld [vmem:[%s4 + $0x68] sm:$0xff]
    %v1307 = vld [vmem:[%s4 + $0x70] sm:$0xff]
    %v1308 = vld [vmem:[%s4 + $0x78] sm:$0xff]
    %v1309 = vld [vmem:[%s4 + $0x80] sm:$0xff]
    %v1310 = vld [vmem:[%s4 + $0x88] sm:$0xff]
    %v1311 = vld [vmem:[%s4 + $0x90] sm:$0xff]
    %v1312 = vld [vmem:[%s4 + $0x98] sm:$0xff]
    %v1313 = vld [vmem:[%s4 + $0xa0] sm:$0xff]
    %v1314 = vld [vmem:[%s4 + $0xa8] sm:$0xff]
    %v1315 = vld [vmem:[%s4 + $0xb0] sm:$0xff]
    %v1316 = vld [vmem:[%s4 + $0xb8] sm:$0xff]
    %v1317 = vld [vmem:[%s4 + $0xc0] sm:$0xff]
    %v1318 = vld [vmem:[%s4 + $0xc8] sm:$0xff]
    %v1319 = vld [vmem:[%s4 + $0xd0] sm:$0xff]
    %v1320 = vld [vmem:[%s4 + $0xd8] sm:$0xff]
    %v1321 = vld [vmem:[%s4 + $0xe0] sm:$0xff]
    %v1322 = vld [vmem:[%s4 + $0xe8] sm:$0xff]
    %v1323 = vld [vmem:[%s4 + $0xf0] sm:$0xff]
    %v1324 = vld [vmem:[%s4 + $0xf8] sm:$0xff]
    %v1325 = vld [vmem:[%s4 + $0x100] sm:$0xff]
    %v1326 = vld [vmem:[%s4 + $0x108] sm:$0xff]
    %v1327 = vld [vmem:[%s4 + $0x110] sm:$0xff]
    %v1328 = vld [vmem:[%s4 + $0x118] sm:$0xff]
    %v1329 = vld [vmem:[%s4 + $0x120] sm:$0xff]
    %v1330 = vld [vmem:[%s4 + $0x128] sm:$0xff]
    %v1331 = vld [vmem:[%s4 + $0x130] sm:$0xff]
    %v1332 = vld [vmem:[%s4 + $0x138] sm:$0xff]
    %v1333 = vld [vmem:[%s4 + $0x140] sm:$0xff]
    %v1334 = vld [vmem:[%s4 + $0x148] sm:$0xff]
    %v1335 = vld [vmem:[%s4 + $0x150] sm:$0xff]
    %v1336 = vld [vmem:[%s4 + $0x158] sm:$0xff]
    %v1337 = vld [vmem:[%s4 + $0x160] sm:$0xff]
    %v1338 = vld [vmem:[%s4 + $0x168] sm:$0xff]
    %v1339 = vld [vmem:[%s4 + $0x170] sm:$0xff]
    %v1340 = vld [vmem:[%s4 + $0x178] sm:$0xff]
    %v1341 = vld [vmem:[%s4 + $0x180] sm:$0xff]
    %v1342 = vld [vmem:[%s4 + $0x188] sm:$0xff]
    %v1343 = vld [vmem:[%s4 + $0x190] sm:$0xff]
    %v1344 = vld [vmem:[%s4 + $0x198] sm:$0xff]
    %v1345 = vld [vmem:[%s4 + $0x1a0] sm:$0xff]
    %v1346 = vld [vmem:[%s4 + $0x1a8] sm:$0xff]
    %v1347 = vld [vmem:[%s4 + $0x1b0] sm:$0xff]
    %v1348 = vld [vmem:[%s4 + $0x1b8] sm:$0xff]
    %v1349 = vld [vmem:[%s4 + $0x1c0] sm:$0xff]
    %v1350 = vld [vmem:[%s4 + $0x1c8] sm:$0xff]
    %v1351 = vld [vmem:[%s4 + $0x1d0] sm:$0xff]
    %v1352 = vld [vmem:[%s4 + $0x1d8] sm:$0xff]
    %v1353 = vld [vmem:[%s4 + $0x1e0] sm:$0xff]
    %v1354 = vld [vmem:[%s4 + $0x1e8] sm:$0xff]
    %v1355 = vld [vmem:[%s4 + $0x1f0] sm:$0xff]
    %v1356 = vld [vmem:[%s4 + $0x1f8] sm:$0xff]
    %1358 = vset.pattern.permute.xlu0 0
    %1359 = vperm.xlu0 %1358, %v1293
    %v1360 = vpop.permute.xlu0 %1359
    %1363 = vset.pattern.permute.xlu0 0
    %1364 = vperm.xlu0 %1363, %v1294
    %v1365 = vpop.permute.xlu0 %1364
    %1368 = vset.pattern.permute.xlu0 0
    %1369 = vperm.xlu0 %1368, %v1295
    %v1370 = vpop.permute.xlu0 %1369
    %1373 = vset.pattern.permute.xlu0 0
    %1374 = vperm.xlu0 %1373, %v1296
    %v1375 = vpop.permute.xlu0 %1374
    %1378 = vset.pattern.permute.xlu0 0
    %1379 = vperm.xlu0 %1378, %v1297
    %v1380 = vpop.permute.xlu0 %1379
    %1383 = vset.pattern.permute.xlu0 0
    %1384 = vperm.xlu0 %1383, %v1298
    %v1385 = vpop.permute.xlu0 %1384
    %1388 = vset.pattern.permute.xlu0 0
    %1389 = vperm.xlu0 %1388, %v1299
    %v1390 = vpop.permute.xlu0 %1389
    %1393 = vset.pattern.permute.xlu0 0
    %1394 = vperm.xlu0 %1393, %v1300
    %v1395 = vpop.permute.xlu0 %1394
    %1398 = vset.pattern.permute.xlu0 0
    %1399 = vperm.xlu0 %1398, %v1301
    %v1400 = vpop.permute.xlu0 %1399
    %1403 = vset.pattern.permute.xlu0 0
    %1404 = vperm.xlu0 %1403, %v1302
    %v1405 = vpop.permute.xlu0 %1404
    %1408 = vset.pattern.permute.xlu0 0
    %1409 = vperm.xlu0 %1408, %v1303
    %v1410 = vpop.permute.xlu0 %1409
    %1413 = vset.pattern.permute.xlu0 0
    %1414 = vperm.xlu0 %1413, %v1304
    %v1415 = vpop.permute.xlu0 %1414
    %1418 = vset.pattern.permute.xlu0 0
    %1419 = vperm.xlu0 %1418, %v1305
    %v1420 = vpop.permute.xlu0 %1419
    %1423 = vset.pattern.permute.xlu0 0
    %1424 = vperm.xlu0 %1423, %v1306
    %v1425 = vpop.permute.xlu0 %1424
    %1428 = vset.pattern.permute.xlu0 0
    %1429 = vperm.xlu0 %1428, %v1307
    %v1430 = vpop.permute.xlu0 %1429
    %1433 = vset.pattern.permute.xlu0 0
    %1434 = vperm.xlu0 %1433, %v1308
    %v1435 = vpop.permute.xlu0 %1434
    %1438 = vset.pattern.permute.xlu0 0
    %1439 = vperm.xlu0 %1438, %v1309
    %v1440 = vpop.permute.xlu0 %1439
    %1443 = vset.pattern.permute.xlu0 0
    %1444 = vperm.xlu0 %1443, %v1310
    %v1445 = vpop.permute.xlu0 %1444
    %1448 = vset.pattern.permute.xlu0 0
    %1449 = vperm.xlu0 %1448, %v1311
    %v1450 = vpop.permute.xlu0 %1449
    %1453 = vset.pattern.permute.xlu0 0
    %1454 = vperm.xlu0 %1453, %v1312
    %v1455 = vpop.permute.xlu0 %1454
    %1458 = vset.pattern.permute.xlu0 0
    %1459 = vperm.xlu0 %1458, %v1313
    %v1460 = vpop.permute.xlu0 %1459
    %1463 = vset.pattern.permute.xlu0 0
    %1464 = vperm.xlu0 %1463, %v1314
    %v1465 = vpop.permute.xlu0 %1464
    %1468 = vset.pattern.permute.xlu0 0
    %1469 = vperm.xlu0 %1468, %v1315
    %v1470 = vpop.permute.xlu0 %1469
    %1473 = vset.pattern.permute.xlu0 0
    %1474 = vperm.xlu0 %1473, %v1316
    %v1475 = vpop.permute.xlu0 %1474
    %1478 = vset.pattern.permute.xlu0 0
    %1479 = vperm.xlu0 %1478, %v1317
    %v1480 = vpop.permute.xlu0 %1479
    %1483 = vset.pattern.permute.xlu0 0
    %1484 = vperm.xlu0 %1483, %v1318
    %v1485 = vpop.permute.xlu0 %1484
    %1488 = vset.pattern.permute.xlu0 0
    %1489 = vperm.xlu0 %1488, %v1319
    %v1490 = vpop.permute.xlu0 %1489
    %1493 = vset.pattern.permute.xlu0 0
    %1494 = vperm.xlu0 %1493, %v1320
    %v1495 = vpop.permute.xlu0 %1494
    %1498 = vset.pattern.permute.xlu0 0
    %1499 = vperm.xlu0 %1498, %v1321
    %v1500 = vpop.permute.xlu0 %1499
    %1503 = vset.pattern.permute.xlu0 0
    %1504 = vperm.xlu0 %1503, %v1322
    %v1505 = vpop.permute.xlu0 %1504
    %1508 = vset.pattern.permute.xlu0 0
    %1509 = vperm.xlu0 %1508, %v1323
    %v1510 = vpop.permute.xlu0 %1509
    %1513 = vset.pattern.permute.xlu0 0
    %1514 = vperm.xlu0 %1513, %v1324
    %v1515 = vpop.permute.xlu0 %1514
    %1518 = vset.pattern.permute.xlu0 0
    %1519 = vperm.xlu0 %1518, %v1325
    %v1520 = vpop.permute.xlu0 %1519
    %1523 = vset.pattern.permute.xlu0 0
    %1524 = vperm.xlu0 %1523, %v1326
    %v1525 = vpop.permute.xlu0 %1524
    %1528 = vset.pattern.permute.xlu0 0
    %1529 = vperm.xlu0 %1528, %v1327
    %v1530 = vpop.permute.xlu0 %1529
    %1533 = vset.pattern.permute.xlu0 0
    %1534 = vperm.xlu0 %1533, %v1328
    %v1535 = vpop.permute.xlu0 %1534
    %1538 = vset.pattern.permute.xlu0 0
    %1539 = vperm.xlu0 %1538, %v1329
    %v1540 = vpop.permute.xlu0 %1539
    %1543 = vset.pattern.permute.xlu0 0
    %1544 = vperm.xlu0 %1543, %v1330
    %v1545 = vpop.permute.xlu0 %1544
    %1548 = vset.pattern.permute.xlu0 0
    %1549 = vperm.xlu0 %1548, %v1331
    %v1550 = vpop.permute.xlu0 %1549
    %1553 = vset.pattern.permute.xlu0 0
    %1554 = vperm.xlu0 %1553, %v1332
    %v1555 = vpop.permute.xlu0 %1554
    %1558 = vset.pattern.permute.xlu0 0
    %1559 = vperm.xlu0 %1558, %v1333
    %v1560 = vpop.permute.xlu0 %1559
    %1563 = vset.pattern.permute.xlu0 0
    %1564 = vperm.xlu0 %1563, %v1334
    %v1565 = vpop.permute.xlu0 %1564
    %1568 = vset.pattern.permute.xlu0 0
    %1569 = vperm.xlu0 %1568, %v1335
    %v1570 = vpop.permute.xlu0 %1569
    %1573 = vset.pattern.permute.xlu0 0
    %1574 = vperm.xlu0 %1573, %v1336
    %v1575 = vpop.permute.xlu0 %1574
    %1578 = vset.pattern.permute.xlu0 0
    %1579 = vperm.xlu0 %1578, %v1337
    %v1580 = vpop.permute.xlu0 %1579
    %1583 = vset.pattern.permute.xlu0 0
    %1584 = vperm.xlu0 %1583, %v1338
    %v1585 = vpop.permute.xlu0 %1584
    %1588 = vset.pattern.permute.xlu0 0
    %1589 = vperm.xlu0 %1588, %v1339
    %v1590 = vpop.permute.xlu0 %1589
    %1593 = vset.pattern.permute.xlu0 0
    %1594 = vperm.xlu0 %1593, %v1340
    %v1595 = vpop.permute.xlu0 %1594
    %1598 = vset.pattern.permute.xlu0 0
    %1599 = vperm.xlu0 %1598, %v1341
    %v1600 = vpop.permute.xlu0 %1599
    %1603 = vset.pattern.permute.xlu0 0
    %1604 = vperm.xlu0 %1603, %v1342
    %v1605 = vpop.permute.xlu0 %1604
    %1608 = vset.pattern.permute.xlu0 0
    %1609 = vperm.xlu0 %1608, %v1343
    %v1610 = vpop.permute.xlu0 %1609
    %1613 = vset.pattern.permute.xlu0 0
    %1614 = vperm.xlu0 %1613, %v1344
    %v1615 = vpop.permute.xlu0 %1614
    %1618 = vset.pattern.permute.xlu0 0
    %1619 = vperm.xlu0 %1618, %v1345
    %v1620 = vpop.permute.xlu0 %1619
    %1623 = vset.pattern.permute.xlu0 0
    %1624 = vperm.xlu0 %1623, %v1346
    %v1625 = vpop.permute.xlu0 %1624
    %1628 = vset.pattern.permute.xlu0 0
    %1629 = vperm.xlu0 %1628, %v1347
    %v1630 = vpop.permute.xlu0 %1629
    %1633 = vset.pattern.permute.xlu0 0
    %1634 = vperm.xlu0 %1633, %v1348
    %v1635 = vpop.permute.xlu0 %1634
    %1638 = vset.pattern.permute.xlu0 0
    %1639 = vperm.xlu0 %1638, %v1349
    %v1640 = vpop.permute.xlu0 %1639
    %1643 = vset.pattern.permute.xlu0 0
    %1644 = vperm.xlu0 %1643, %v1350
    %v1645 = vpop.permute.xlu0 %1644
    %1648 = vset.pattern.permute.xlu0 0
    %1649 = vperm.xlu0 %1648, %v1351
    %v1650 = vpop.permute.xlu0 %1649
    %1653 = vset.pattern.permute.xlu0 0
    %1654 = vperm.xlu0 %1653, %v1352
    %v1655 = vpop.permute.xlu0 %1654
    %1658 = vset.pattern.permute.xlu0 0
    %1659 = vperm.xlu0 %1658, %v1353
    %v1660 = vpop.permute.xlu0 %1659
    %1663 = vset.pattern.permute.xlu0 0
    %1664 = vperm.xlu0 %1663, %v1354
    %v1665 = vpop.permute.xlu0 %1664
    %1668 = vset.pattern.permute.xlu0 0
    %1669 = vperm.xlu0 %1668, %v1355
    %v1670 = vpop.permute.xlu0 %1669
    %1673 = vset.pattern.permute.xlu0 0
    %1674 = vperm.xlu0 %1673, %v1356
    %v1675 = vpop.permute.xlu0 %1674
    %v1805 = vunpack.c.l.b16 %v1140
    %v1806 = vunpack.c.h.b16 %v1140
    %v1807 = vunpack.c.l.b16 %v1141
    %v1808 = vunpack.c.h.b16 %v1141
    %v1809 = vunpack.c.l.b16 %v1142
    %v1810 = vunpack.c.h.b16 %v1142
    %v1811 = vunpack.c.l.b16 %v1143
    %v1812 = vunpack.c.h.b16 %v1143
    %v1813 = vunpack.c.l.b16 %v1144
    %v1814 = vunpack.c.h.b16 %v1144
    %v1815 = vunpack.c.l.b16 %v1145
    %v1816 = vunpack.c.h.b16 %v1145
    %v1817 = vunpack.c.l.b16 %v1146
    %v1818 = vunpack.c.h.b16 %v1146
    %v1819 = vunpack.c.l.b16 %v1147
    %v1820 = vunpack.c.h.b16 %v1147
    %v1821 = vunpack.c.l.b16 %v1148
    %v1822 = vunpack.c.h.b16 %v1148
    %v1823 = vunpack.c.l.b16 %v1149
    %v1824 = vunpack.c.h.b16 %v1149
    %v1825 = vunpack.c.l.b16 %v1150
    %v1826 = vunpack.c.h.b16 %v1150
    %v1827 = vunpack.c.l.b16 %v1151
    %v1828 = vunpack.c.h.b16 %v1151
    %v1829 = vunpack.c.l.b16 %v1152
    %v1830 = vunpack.c.h.b16 %v1152
    %v1831 = vunpack.c.l.b16 %v1153
    %v1832 = vunpack.c.h.b16 %v1153
    %v1833 = vunpack.c.l.b16 %v1154
    %v1834 = vunpack.c.h.b16 %v1154
    %v1835 = vunpack.c.l.b16 %v1155
    %v1836 = vunpack.c.h.b16 %v1155
    %v1837 = vunpack.c.l.b16 %v1156
    %v1838 = vunpack.c.h.b16 %v1156
    %v1839 = vunpack.c.l.b16 %v1157
    %v1840 = vunpack.c.h.b16 %v1157
    %v1841 = vunpack.c.l.b16 %v1158
    %v1842 = vunpack.c.h.b16 %v1158
    %v1843 = vunpack.c.l.b16 %v1159
    %v1844 = vunpack.c.h.b16 %v1159
    %v1845 = vunpack.c.l.b16 %v1160
    %v1846 = vunpack.c.h.b16 %v1160
    %v1847 = vunpack.c.l.b16 %v1161
    %v1848 = vunpack.c.h.b16 %v1161
    %v1849 = vunpack.c.l.b16 %v1162
    %v1850 = vunpack.c.h.b16 %v1162
    %v1851 = vunpack.c.l.b16 %v1163
    %v1852 = vunpack.c.h.b16 %v1163
    %v1853 = vunpack.c.l.b16 %v1164
    %v1854 = vunpack.c.h.b16 %v1164
    %v1855 = vunpack.c.l.b16 %v1165
    %v1856 = vunpack.c.h.b16 %v1165
    %v1857 = vunpack.c.l.b16 %v1166
    %v1858 = vunpack.c.h.b16 %v1166
    %v1859 = vunpack.c.l.b16 %v1167
    %v1860 = vunpack.c.h.b16 %v1167
    %v1861 = vunpack.c.l.b16 %v1168
    %v1862 = vunpack.c.h.b16 %v1168
    %v1863 = vunpack.c.l.b16 %v1169
    %v1864 = vunpack.c.h.b16 %v1169
    %v1865 = vunpack.c.l.b16 %v1170
    %v1866 = vunpack.c.h.b16 %v1170
    %v1867 = vunpack.c.l.b16 %v1171
    %v1868 = vunpack.c.h.b16 %v1171
    %v1869 = vunpack.c.l.b16 %v1172
    %v1870 = vunpack.c.h.b16 %v1172
    %v1871 = vunpack.c.l.b16 %v1173
    %v1872 = vunpack.c.h.b16 %v1173
    %v1873 = vunpack.c.l.b16 %v1174
    %v1874 = vunpack.c.h.b16 %v1174
    %v1875 = vunpack.c.l.b16 %v1175
    %v1876 = vunpack.c.h.b16 %v1175
    %v1877 = vunpack.c.l.b16 %v1176
    %v1878 = vunpack.c.h.b16 %v1176
    %v1879 = vunpack.c.l.b16 %v1177
    %v1880 = vunpack.c.h.b16 %v1177
    %v1881 = vunpack.c.l.b16 %v1178
    %v1882 = vunpack.c.h.b16 %v1178
    %v1883 = vunpack.c.l.b16 %v1179
    %v1884 = vunpack.c.h.b16 %v1179
    %v1885 = vunpack.c.l.b16 %v1180
    %v1886 = vunpack.c.h.b16 %v1180
    %v1887 = vunpack.c.l.b16 %v1181
    %v1888 = vunpack.c.h.b16 %v1181
    %v1889 = vunpack.c.l.b16 %v1182
    %v1890 = vunpack.c.h.b16 %v1182
    %v1891 = vunpack.c.l.b16 %v1183
    %v1892 = vunpack.c.h.b16 %v1183
    %v1893 = vunpack.c.l.b16 %v1184
    %v1894 = vunpack.c.h.b16 %v1184
    %v1895 = vunpack.c.l.b16 %v1185
    %v1896 = vunpack.c.h.b16 %v1185
    %v1897 = vunpack.c.l.b16 %v1186
    %v1898 = vunpack.c.h.b16 %v1186
    %v1899 = vunpack.c.l.b16 %v1187
    %v1900 = vunpack.c.h.b16 %v1187
    %v1901 = vunpack.c.l.b16 %v1188
    %v1902 = vunpack.c.h.b16 %v1188
    %v1903 = vunpack.c.l.b16 %v1189
    %v1904 = vunpack.c.h.b16 %v1189
    %v1905 = vunpack.c.l.b16 %v1190
    %v1906 = vunpack.c.h.b16 %v1190
    %v1907 = vunpack.c.l.b16 %v1191
    %v1908 = vunpack.c.h.b16 %v1191
    %v1909 = vunpack.c.l.b16 %v1192
    %v1910 = vunpack.c.h.b16 %v1192
    %v1911 = vunpack.c.l.b16 %v1193
    %v1912 = vunpack.c.h.b16 %v1193
    %v1913 = vunpack.c.l.b16 %v1194
    %v1914 = vunpack.c.h.b16 %v1194
    %v1915 = vunpack.c.l.b16 %v1195
    %v1916 = vunpack.c.h.b16 %v1195
    %v1917 = vunpack.c.l.b16 %v1196
    %v1918 = vunpack.c.h.b16 %v1196
    %v1919 = vunpack.c.l.b16 %v1197
    %v1920 = vunpack.c.h.b16 %v1197
    %v1921 = vunpack.c.l.b16 %v1198
    %v1922 = vunpack.c.h.b16 %v1198
    %v1923 = vunpack.c.l.b16 %v1199
    %v1924 = vunpack.c.h.b16 %v1199
    %v1925 = vunpack.c.l.b16 %v1200
    %v1926 = vunpack.c.h.b16 %v1200
    %v1927 = vunpack.c.l.b16 %v1201
    %v1928 = vunpack.c.h.b16 %v1201
    %v1929 = vunpack.c.l.b16 %v1202
    %v1930 = vunpack.c.h.b16 %v1202
    %v1931 = vunpack.c.l.b16 %v1203
    %v1932 = vunpack.c.h.b16 %v1203
    %v1933 = vunpack.c.l.b16 %v1204
    %v1934 = vunpack.c.h.b16 %v1204
    %v1935 = vunpack.c.l.b16 %v1205
    %v1936 = vunpack.c.h.b16 %v1205
    %v1937 = vunpack.c.l.b16 %v1206
    %v1938 = vunpack.c.h.b16 %v1206
    %v1939 = vunpack.c.l.b16 %v1207
    %v1940 = vunpack.c.h.b16 %v1207
    %v1941 = vunpack.c.l.b16 %v1208
    %v1942 = vunpack.c.h.b16 %v1208
    %v1943 = vunpack.c.l.b16 %v1209
    %v1944 = vunpack.c.h.b16 %v1209
    %v1945 = vunpack.c.l.b16 %v1210
    %v1946 = vunpack.c.h.b16 %v1210
    %v1947 = vunpack.c.l.b16 %v1211
    %v1948 = vunpack.c.h.b16 %v1211
    %v1949 = vunpack.c.l.b16 %v1212
    %v1950 = vunpack.c.h.b16 %v1212
    %v1951 = vunpack.c.l.b16 %v1213
    %v1952 = vunpack.c.h.b16 %v1213
    %v1953 = vunpack.c.l.b16 %v1214
    %v1954 = vunpack.c.h.b16 %v1214
    %v1955 = vunpack.c.l.b16 %v1215
    %v1956 = vunpack.c.h.b16 %v1215
    %v1957 = vunpack.c.l.b16 %v1216
    %v1958 = vunpack.c.h.b16 %v1216
    %v1959 = vunpack.c.l.b16 %v1217
    %v1960 = vunpack.c.h.b16 %v1217
    %v1961 = vunpack.c.l.b16 %v1218
    %v1962 = vunpack.c.h.b16 %v1218
    %v1963 = vunpack.c.l.b16 %v1219
    %v1964 = vunpack.c.h.b16 %v1219
    %v1965 = vunpack.c.l.b16 %v1220
    %v1966 = vunpack.c.h.b16 %v1220
    %v1967 = vunpack.c.l.b16 %v1221
    %v1968 = vunpack.c.h.b16 %v1221
    %v1969 = vunpack.c.l.b16 %v1222
    %v1970 = vunpack.c.h.b16 %v1222
    %v1971 = vunpack.c.l.b16 %v1223
    %v1972 = vunpack.c.h.b16 %v1223
    %v1973 = vunpack.c.l.b16 %v1224
    %v1974 = vunpack.c.h.b16 %v1224
    %v1975 = vunpack.c.l.b16 %v1225
    %v1976 = vunpack.c.h.b16 %v1225
    %v1977 = vunpack.c.l.b16 %v1226
    %v1978 = vunpack.c.h.b16 %v1226
    %v1979 = vunpack.c.l.b16 %v1227
    %v1980 = vunpack.c.h.b16 %v1227
    %v1981 = vunpack.c.l.b16 %v1228
    %v1982 = vunpack.c.h.b16 %v1228
    %v1983 = vunpack.c.l.b16 %v1229
    %v1984 = vunpack.c.h.b16 %v1229
    %v1985 = vunpack.c.l.b16 %v1230
    %v1986 = vunpack.c.h.b16 %v1230
    %v1987 = vunpack.c.l.b16 %v1231
    %v1988 = vunpack.c.h.b16 %v1231
    %v1989 = vunpack.c.l.b16 %v1232
    %v1990 = vunpack.c.h.b16 %v1232
    %v1991 = vunpack.c.l.b16 %v1233
    %v1992 = vunpack.c.h.b16 %v1233
    %v1993 = vunpack.c.l.b16 %v1234
    %v1994 = vunpack.c.h.b16 %v1234
    %v1995 = vunpack.c.l.b16 %v1235
    %v1996 = vunpack.c.h.b16 %v1235
    %v1997 = vunpack.c.l.b16 %v1236
    %v1998 = vunpack.c.h.b16 %v1236
    %v1999 = vunpack.c.l.b16 %v1237
    %v2000 = vunpack.c.h.b16 %v1237
    %v2001 = vunpack.c.l.b16 %v1238
    %v2002 = vunpack.c.h.b16 %v1238
    %v2003 = vunpack.c.l.b16 %v1239
    %v2004 = vunpack.c.h.b16 %v1239
    %v2005 = vunpack.c.l.b16 %v1240
    %v2006 = vunpack.c.h.b16 %v1240
    %v2007 = vunpack.c.l.b16 %v1241
    %v2008 = vunpack.c.h.b16 %v1241
    %v2009 = vunpack.c.l.b16 %v1242
    %v2010 = vunpack.c.h.b16 %v1242
    %v2011 = vunpack.c.l.b16 %v1243
    %v2012 = vunpack.c.h.b16 %v1243
    %v2013 = vunpack.c.l.b16 %v1244
    %v2014 = vunpack.c.h.b16 %v1244
    %v2015 = vunpack.c.l.b16 %v1245
    %v2016 = vunpack.c.h.b16 %v1245
    %v2017 = vunpack.c.l.b16 %v1246
    %v2018 = vunpack.c.h.b16 %v1246
    %v2019 = vunpack.c.l.b16 %v1247
    %v2020 = vunpack.c.h.b16 %v1247
    %v2021 = vunpack.c.l.b16 %v1248
    %v2022 = vunpack.c.h.b16 %v1248
    %v2023 = vunpack.c.l.b16 %v1249
    %v2024 = vunpack.c.h.b16 %v1249
    %v2025 = vunpack.c.l.b16 %v1250
    %v2026 = vunpack.c.h.b16 %v1250
    %v2027 = vunpack.c.l.b16 %v1251
    %v2028 = vunpack.c.h.b16 %v1251
    %v2029 = vunpack.c.l.b16 %v1252
    %v2030 = vunpack.c.h.b16 %v1252
    %v2031 = vunpack.c.l.b16 %v1253
    %v2032 = vunpack.c.h.b16 %v1253
    %v2033 = vunpack.c.l.b16 %v1254
    %v2034 = vunpack.c.h.b16 %v1254
    %v2035 = vunpack.c.l.b16 %v1255
    %v2036 = vunpack.c.h.b16 %v1255
    %v2037 = vunpack.c.l.b16 %v1256
    %v2038 = vunpack.c.h.b16 %v1256
    %v2039 = vunpack.c.l.b16 %v1257
    %v2040 = vunpack.c.h.b16 %v1257
    %v2041 = vunpack.c.l.b16 %v1258
    %v2042 = vunpack.c.h.b16 %v1258
    %v2043 = vunpack.c.l.b16 %v1259
    %v2044 = vunpack.c.h.b16 %v1259
    %v2045 = vunpack.c.l.b16 %v1260
    %v2046 = vunpack.c.h.b16 %v1260
    %v2047 = vunpack.c.l.b16 %v1261
    %v2048 = vunpack.c.h.b16 %v1261
    %v2049 = vunpack.c.l.b16 %v1262
    %v2050 = vunpack.c.h.b16 %v1262
    %v2051 = vunpack.c.l.b16 %v1263
    %v2052 = vunpack.c.h.b16 %v1263
    %v2053 = vunpack.c.l.b16 %v1264
    %v2054 = vunpack.c.h.b16 %v1264
    %v2055 = vunpack.c.l.b16 %v1265
    %v2056 = vunpack.c.h.b16 %v1265
    %v2057 = vunpack.c.l.b16 %v1266
    %v2058 = vunpack.c.h.b16 %v1266
    %v2059 = vunpack.c.l.b16 %v1267
    %v2060 = vunpack.c.h.b16 %v1267
    %v2061 = vpack.c.b16 %v1809, %v1805
    %v2062 = vpack.c.b16 %v1810, %v1806
    %v2063 = vpack.c.b16 %v1811, %v1807
    %v2064 = vpack.c.b16 %v1812, %v1808
    %v2065 = vpack.c.b16 %v1817, %v1813
    %v2066 = vpack.c.b16 %v1818, %v1814
    %v2067 = vpack.c.b16 %v1819, %v1815
    %v2068 = vpack.c.b16 %v1820, %v1816
    %v2069 = vpack.c.b16 %v1825, %v1821
    %v2070 = vpack.c.b16 %v1826, %v1822
    %v2071 = vpack.c.b16 %v1827, %v1823
    %v2072 = vpack.c.b16 %v1828, %v1824
    %v2073 = vpack.c.b16 %v1833, %v1829
    %v2074 = vpack.c.b16 %v1834, %v1830
    %v2075 = vpack.c.b16 %v1835, %v1831
    %v2076 = vpack.c.b16 %v1836, %v1832
    %v2077 = vpack.c.b16 %v1841, %v1837
    %v2078 = vpack.c.b16 %v1842, %v1838
    %v2079 = vpack.c.b16 %v1843, %v1839
    %v2080 = vpack.c.b16 %v1844, %v1840
    %v2081 = vpack.c.b16 %v1849, %v1845
    %v2082 = vpack.c.b16 %v1850, %v1846
    %v2083 = vpack.c.b16 %v1851, %v1847
    %v2084 = vpack.c.b16 %v1852, %v1848
    %v2085 = vpack.c.b16 %v1857, %v1853
    %v2086 = vpack.c.b16 %v1858, %v1854
    %v2087 = vpack.c.b16 %v1859, %v1855
    %v2088 = vpack.c.b16 %v1860, %v1856
    %v2089 = vpack.c.b16 %v1865, %v1861
    %v2090 = vpack.c.b16 %v1866, %v1862
    %v2091 = vpack.c.b16 %v1867, %v1863
    %v2092 = vpack.c.b16 %v1868, %v1864
    %v2093 = vpack.c.b16 %v1873, %v1869
    %v2094 = vpack.c.b16 %v1874, %v1870
    %v2095 = vpack.c.b16 %v1875, %v1871
    %v2096 = vpack.c.b16 %v1876, %v1872
    %v2097 = vpack.c.b16 %v1881, %v1877
    %v2098 = vpack.c.b16 %v1882, %v1878
    %v2099 = vpack.c.b16 %v1883, %v1879
    %v2100 = vpack.c.b16 %v1884, %v1880
    %v2101 = vpack.c.b16 %v1889, %v1885
    %v2102 = vpack.c.b16 %v1890, %v1886
    %v2103 = vpack.c.b16 %v1891, %v1887
    %v2104 = vpack.c.b16 %v1892, %v1888
    %v2105 = vpack.c.b16 %v1897, %v1893
    %v2106 = vpack.c.b16 %v1898, %v1894
    %v2107 = vpack.c.b16 %v1899, %v1895
    %v2108 = vpack.c.b16 %v1900, %v1896
    %v2109 = vpack.c.b16 %v1905, %v1901
    %v2110 = vpack.c.b16 %v1906, %v1902
    %v2111 = vpack.c.b16 %v1907, %v1903
    %v2112 = vpack.c.b16 %v1908, %v1904
    %v2113 = vpack.c.b16 %v1913, %v1909
    %v2114 = vpack.c.b16 %v1914, %v1910
    %v2115 = vpack.c.b16 %v1915, %v1911
    %v2116 = vpack.c.b16 %v1916, %v1912
    %v2117 = vpack.c.b16 %v1921, %v1917
    %v2118 = vpack.c.b16 %v1922, %v1918
    %v2119 = vpack.c.b16 %v1923, %v1919
    %v2120 = vpack.c.b16 %v1924, %v1920
    %v2121 = vpack.c.b16 %v1929, %v1925
    %v2122 = vpack.c.b16 %v1930, %v1926
    %v2123 = vpack.c.b16 %v1931, %v1927
    %v2124 = vpack.c.b16 %v1932, %v1928
    %v2125 = vpack.c.b16 %v1937, %v1933
    %v2126 = vpack.c.b16 %v1938, %v1934
    %v2127 = vpack.c.b16 %v1939, %v1935
    %v2128 = vpack.c.b16 %v1940, %v1936
    %v2129 = vpack.c.b16 %v1945, %v1941
    %v2130 = vpack.c.b16 %v1946, %v1942
    %v2131 = vpack.c.b16 %v1947, %v1943
    %v2132 = vpack.c.b16 %v1948, %v1944
    %v2133 = vpack.c.b16 %v1953, %v1949
    %v2134 = vpack.c.b16 %v1954, %v1950
    %v2135 = vpack.c.b16 %v1955, %v1951
    %v2136 = vpack.c.b16 %v1956, %v1952
    %v2137 = vpack.c.b16 %v1961, %v1957
    %v2138 = vpack.c.b16 %v1962, %v1958
    %v2139 = vpack.c.b16 %v1963, %v1959
    %v2140 = vpack.c.b16 %v1964, %v1960
    %v2141 = vpack.c.b16 %v1969, %v1965
    %v2142 = vpack.c.b16 %v1970, %v1966
    %v2143 = vpack.c.b16 %v1971, %v1967
    %v2144 = vpack.c.b16 %v1972, %v1968
    %v2145 = vpack.c.b16 %v1977, %v1973
    %v2146 = vpack.c.b16 %v1978, %v1974
    %v2147 = vpack.c.b16 %v1979, %v1975
    %v2148 = vpack.c.b16 %v1980, %v1976
    %v2149 = vpack.c.b16 %v1985, %v1981
    %v2150 = vpack.c.b16 %v1986, %v1982
    %v2151 = vpack.c.b16 %v1987, %v1983
    %v2152 = vpack.c.b16 %v1988, %v1984
    %v2153 = vpack.c.b16 %v1993, %v1989
    %v2154 = vpack.c.b16 %v1994, %v1990
    %v2155 = vpack.c.b16 %v1995, %v1991
    %v2156 = vpack.c.b16 %v1996, %v1992
    %v2157 = vpack.c.b16 %v2001, %v1997
    %v2158 = vpack.c.b16 %v2002, %v1998
    %v2159 = vpack.c.b16 %v2003, %v1999
    %v2160 = vpack.c.b16 %v2004, %v2000
    %v2161 = vpack.c.b16 %v2009, %v2005
    %v2162 = vpack.c.b16 %v2010, %v2006
    %v2163 = vpack.c.b16 %v2011, %v2007
    %v2164 = vpack.c.b16 %v2012, %v2008
    %v2165 = vpack.c.b16 %v2017, %v2013
    %v2166 = vpack.c.b16 %v2018, %v2014
    %v2167 = vpack.c.b16 %v2019, %v2015
    %v2168 = vpack.c.b16 %v2020, %v2016
    %v2169 = vpack.c.b16 %v2025, %v2021
    %v2170 = vpack.c.b16 %v2026, %v2022
    %v2171 = vpack.c.b16 %v2027, %v2023
    %v2172 = vpack.c.b16 %v2028, %v2024
    %v2173 = vpack.c.b16 %v2033, %v2029
    %v2174 = vpack.c.b16 %v2034, %v2030
    %v2175 = vpack.c.b16 %v2035, %v2031
    %v2176 = vpack.c.b16 %v2036, %v2032
    %v2177 = vpack.c.b16 %v2041, %v2037
    %v2178 = vpack.c.b16 %v2042, %v2038
    %v2179 = vpack.c.b16 %v2043, %v2039
    %v2180 = vpack.c.b16 %v2044, %v2040
    %v2181 = vpack.c.b16 %v2049, %v2045
    %v2182 = vpack.c.b16 %v2050, %v2046
    %v2183 = vpack.c.b16 %v2051, %v2047
    %v2184 = vpack.c.b16 %v2052, %v2048
    %v2185 = vpack.c.b16 %v2057, %v2053
    %v2186 = vpack.c.b16 %v2058, %v2054
    %v2187 = vpack.c.b16 %v2059, %v2055
    %v2188 = vpack.c.b16 %v2060, %v2056
    %vm2285 = vcmask 130048
    %v2287 = vsel %vm2285, %v2064, 0
    %v2290 = vsel %vm2285, %v2068, 0
    %v2293 = vsel %vm2285, %v2072, 0
    %v2296 = vsel %vm2285, %v2076, 0
    %v2299 = vsel %vm2285, %v2080, 0
    %v2302 = vsel %vm2285, %v2084, 0
    %v2305 = vsel %vm2285, %v2088, 0
    %v2308 = vsel %vm2285, %v2092, 0
    %v2311 = vsel %vm2285, %v2096, 0
    %v2314 = vsel %vm2285, %v2100, 0
    %v2317 = vsel %vm2285, %v2104, 0
    %v2320 = vsel %vm2285, %v2108, 0
    %v2323 = vsel %vm2285, %v2112, 0
    %v2326 = vsel %vm2285, %v2116, 0
    %v2329 = vsel %vm2285, %v2120, 0
    %v2332 = vsel %vm2285, %v2124, 0
    %v2335 = vsel %vm2285, %v2128, 0
    %v2338 = vsel %vm2285, %v2132, 0
    %v2341 = vsel %vm2285, %v2136, 0
    %v2344 = vsel %vm2285, %v2140, 0
    %v2347 = vsel %vm2285, %v2144, 0
    %v2350 = vsel %vm2285, %v2148, 0
    %v2353 = vsel %vm2285, %v2152, 0
    %v2356 = vsel %vm2285, %v2156, 0
    %v2359 = vsel %vm2285, %v2160, 0
    %v2362 = vsel %vm2285, %v2164, 0
    %v2365 = vsel %vm2285, %v2168, 0
    %v2368 = vsel %vm2285, %v2172, 0
    %v2371 = vsel %vm2285, %v2176, 0
    %v2374 = vsel %vm2285, %v2180, 0
    %v2377 = vsel %vm2285, %v2184, 0
    %v2380 = vsel %vm2285, %v2188, 0
    %2382 = vmatprep.subr.bf16.mxu0 0
    %2383 = vmatpush1.bf16.msra.mxu0 %v1268
    %2384 = vmatprep.subr.bf16.mxu0 0
    %2385 = vmatpush1.bf16.msra.mxu0 %v1269
    %2386 = vmatprep.subr.bf16.mxu0 0
    %2387 = vmatpush1.bf16.msra.mxu0 %v1270
    %2388 = vmatprep.subr.bf16.mxu0 0
    %2389 = vmatpush1.bf16.msra.mxu0 %v1271
    %2390 = vmatprep.subr.bf16.mxu0 0
    %2391 = vmatpush1.bf16.msra.mxu0 %v1272
    %2392 = vmatprep.subr.bf16.mxu0 0
    %2393 = vmatpush1.bf16.msra.mxu0 %v1273
    %2394 = vmatprep.subr.bf16.mxu0 0
    %2395 = vmatpush1.bf16.msra.mxu0 %v1274
    %2396 = vmatprep.subr.bf16.mxu0 0
    %2397 = vmatpush1.bf16.msra.mxu0 %v1275
    %2398 = vmatprep.subr.bf16.mxu0 0
    %2399 = vmatpush1.bf16.msra.mxu0 %v1276
    %2400 = vmatprep.subr.bf16.mxu0 0
    %2401 = vmatpush1.bf16.msra.mxu0 %v1277
    %2402 = vmatprep.subr.bf16.mxu0 0
    %2403 = vmatpush1.bf16.msra.mxu0 %v1278
    %2404 = vmatprep.subr.bf16.mxu0 0
    %2405 = vmatpush1.bf16.msra.mxu0 %v1279
    %2406 = vmatprep.subr.bf16.mxu0 0
    %2407 = vmatpush1.bf16.msra.mxu0 %v1280
    %2408 = vmatprep.subr.bf16.mxu0 0
    %2409 = vmatpush1.bf16.msra.mxu0 %v1281
    %2410 = vmatprep.subr.bf16.mxu0 0
    %2411 = vmatpush1.bf16.msra.mxu0 %v1282
    %2412 = vmatprep.subr.bf16.mxu0 0
    %2413 = vmatpush1.bf16.msra.mxu0 %v1283
    %2414 = vmatprep.mubr.bf16.mxu0 %v2062
    %2415 = vmatmul.mubr.bf16.gmra.mrb[0].mxu0 %v2061
    %v2416 = vpop.f32.mrb[0].mxu0
    %v2417 = vadd.f32 %v1360, %v2416
    %v2418 = vpop.f32.mrb[0].mxu0
    %v2419 = vpop.f32.mrb[0].mxu0
    %v2420 = vadd.f32 %v1365, %v2419
    %v2421 = vpop.f32.mrb[0].mxu0
    %2422 = vmatprep.mubr.bf16.mxu0 %v2066
    %2423 = vmatmul.mubr.bf16.gmra.mrb[0].mxu0 %v2065
    %v2424 = vpop.f32.mrb[0].mxu0
    %v2425 = vadd.f32 %v1370, %v2424
    %v2426 = vpop.f32.mrb[0].mxu0
    %v2427 = vpop.f32.mrb[0].mxu0
    %v2428 = vadd.f32 %v1375, %v2427
    %v2429 = vpop.f32.mrb[0].mxu0
    %2430 = vmatprep.mubr.bf16.mxu0 %v2070
    %2431 = vmatmul.mubr.bf16.gmra.mrb[0].mxu0 %v2069
    %v2432 = vpop.f32.mrb[0].mxu0
    %v2433 = vadd.f32 %v1380, %v2432
    %v2434 = vpop.f32.mrb[0].mxu0
    %v2435 = vpop.f32.mrb[0].mxu0
    %v2436 = vadd.f32 %v1385, %v2435
    %v2437 = vpop.f32.mrb[0].mxu0
    %2438 = vmatprep.mubr.bf16.mxu0 %v2074
    %2439 = vmatmul.mubr.bf16.gmra.mrb[0].mxu0 %v2073
    %v2440 = vpop.f32.mrb[0].mxu0
    %v2441 = vadd.f32 %v1390, %v2440
    %v2442 = vpop.f32.mrb[0].mxu0
    %v2443 = vpop.f32.mrb[0].mxu0
    %v2444 = vadd.f32 %v1395, %v2443
    %v2445 = vpop.f32.mrb[0].mxu0
    %2446 = vmatprep.mubr.bf16.mxu0 %v2078
    %2447 = vmatmul.mubr.bf16.gmra.mrb[0].mxu0 %v2077
    %v2448 = vpop.f32.mrb[0].mxu0
    %v2449 = vadd.f32 %v1400, %v2448
    %v2450 = vpop.f32.mrb[0].mxu0
    %v2451 = vpop.f32.mrb[0].mxu0
    %v2452 = vadd.f32 %v1405, %v2451
    %v2453 = vpop.f32.mrb[0].mxu0
    %2454 = vmatprep.mubr.bf16.mxu0 %v2082
    %2455 = vmatmul.mubr.bf16.gmra.mrb[0].mxu0 %v2081
    %v2456 = vpop.f32.mrb[0].mxu0
    %v2457 = vadd.f32 %v1410, %v2456
    %v2458 = vpop.f32.mrb[0].mxu0
    %v2459 = vpop.f32.mrb[0].mxu0
    %v2460 = vadd.f32 %v1415, %v2459
    %v2461 = vpop.f32.mrb[0].mxu0
    %2462 = vmatprep.mubr.bf16.mxu0 %v2086
    %2463 = vmatmul.mubr.bf16.gmra.mrb[0].mxu0 %v2085
    %v2464 = vpop.f32.mrb[0].mxu0
    %v2465 = vadd.f32 %v1420, %v2464
    %v2466 = vpop.f32.mrb[0].mxu0
    %v2467 = vpop.f32.mrb[0].mxu0
    %v2468 = vadd.f32 %v1425, %v2467
    %v2469 = vpop.f32.mrb[0].mxu0
    %2470 = vmatprep.mubr.bf16.mxu0 %v2090
    %2471 = vmatmul.mubr.bf16.gmra.mrb[0].mxu0 %v2089
    %v2472 = vpop.f32.mrb[0].mxu0
    %v2473 = vadd.f32 %v1430, %v2472
    %v2474 = vpop.f32.mrb[0].mxu0
    %v2475 = vpop.f32.mrb[0].mxu0
    %v2476 = vadd.f32 %v1435, %v2475
    %v2477 = vpop.f32.mrb[0].mxu0
    %2478 = vmatprep.mubr.bf16.mxu0 %v2094
    %2479 = vmatmul.mubr.bf16.gmra.mrb[0].mxu0 %v2093
    %v2480 = vpop.f32.mrb[0].mxu0
    %v2481 = vadd.f32 %v1440, %v2480
    %v2482 = vpop.f32.mrb[0].mxu0
    %v2483 = vpop.f32.mrb[0].mxu0
    %v2484 = vadd.f32 %v1445, %v2483
    %v2485 = vpop.f32.mrb[0].mxu0
    %2486 = vmatprep.mubr.bf16.mxu0 %v2098
    %2487 = vmatmul.mubr.bf16.gmra.mrb[0].mxu0 %v2097
    %v2488 = vpop.f32.mrb[0].mxu0
    %v2489 = vadd.f32 %v1450, %v2488
    %v2490 = vpop.f32.mrb[0].mxu0
    %v2491 = vpop.f32.mrb[0].mxu0
    %v2492 = vadd.f32 %v1455, %v2491
    %v2493 = vpop.f32.mrb[0].mxu0
    %2494 = vmatprep.mubr.bf16.mxu0 %v2102
    %2495 = vmatmul.mubr.bf16.gmra.mrb[0].mxu0 %v2101
    %v2496 = vpop.f32.mrb[0].mxu0
    %v2497 = vadd.f32 %v1460, %v2496
    %v2498 = vpop.f32.mrb[0].mxu0
    %v2499 = vpop.f32.mrb[0].mxu0
    %v2500 = vadd.f32 %v1465, %v2499
    %v2501 = vpop.f32.mrb[0].mxu0
    %2502 = vmatprep.mubr.bf16.mxu0 %v2106
    %2503 = vmatmul.mubr.bf16.gmra.mrb[0].mxu0 %v2105
    %v2504 = vpop.f32.mrb[0].mxu0
    %v2505 = vadd.f32 %v1470, %v2504
    %v2506 = vpop.f32.mrb[0].mxu0
    %v2507 = vpop.f32.mrb[0].mxu0
    %v2508 = vadd.f32 %v1475, %v2507
    %v2509 = vpop.f32.mrb[0].mxu0
    %2510 = vmatprep.mubr.bf16.mxu0 %v2110
    %2511 = vmatmul.mubr.bf16.gmra.mrb[0].mxu0 %v2109
    %v2512 = vpop.f32.mrb[0].mxu0
    %v2513 = vadd.f32 %v1480, %v2512
    %v2514 = vpop.f32.mrb[0].mxu0
    %v2515 = vpop.f32.mrb[0].mxu0
    %v2516 = vadd.f32 %v1485, %v2515
    %v2517 = vpop.f32.mrb[0].mxu0
    %2518 = vmatprep.mubr.bf16.mxu0 %v2114
    %2519 = vmatmul.mubr.bf16.gmra.mrb[0].mxu0 %v2113
    %v2520 = vpop.f32.mrb[0].mxu0
    %v2521 = vadd.f32 %v1490, %v2520
    %v2522 = vpop.f32.mrb[0].mxu0
    %v2523 = vpop.f32.mrb[0].mxu0
    %v2524 = vadd.f32 %v1495, %v2523
    %v2525 = vpop.f32.mrb[0].mxu0
    %2526 = vmatprep.mubr.bf16.mxu0 %v2118
    %2527 = vmatmul.mubr.bf16.gmra.mrb[0].mxu0 %v2117
    %v2528 = vpop.f32.mrb[0].mxu0
    %v2529 = vadd.f32 %v1500, %v2528
    %v2530 = vpop.f32.mrb[0].mxu0
    %v2531 = vpop.f32.mrb[0].mxu0
    %v2532 = vadd.f32 %v1505, %v2531
    %v2533 = vpop.f32.mrb[0].mxu0
    %2534 = vmatprep.mubr.bf16.mxu0 %v2122
    %2535 = vmatmul.mubr.bf16.gmra.mrb[0].mxu0 %v2121
    %v2536 = vpop.f32.mrb[0].mxu0
    %v2537 = vadd.f32 %v1510, %v2536
    %v2538 = vpop.f32.mrb[0].mxu0
    %v2539 = vpop.f32.mrb[0].mxu0
    %v2540 = vadd.f32 %v1515, %v2539
    %v2541 = vpop.f32.mrb[0].mxu0
    %2542 = vmatprep.mubr.bf16.mxu0 %v2126
    %2543 = vmatmul.mubr.bf16.gmra.mrb[0].mxu0 %v2125
    %v2544 = vpop.f32.mrb[0].mxu0
    %v2545 = vadd.f32 %v1520, %v2544
    %v2546 = vpop.f32.mrb[0].mxu0
    %v2547 = vpop.f32.mrb[0].mxu0
    %v2548 = vadd.f32 %v1525, %v2547
    %v2549 = vpop.f32.mrb[0].mxu0
    %2550 = vmatprep.mubr.bf16.mxu0 %v2130
    %2551 = vmatmul.mubr.bf16.gmra.mrb[0].mxu0 %v2129
    %v2552 = vpop.f32.mrb[0].mxu0
    %v2553 = vadd.f32 %v1530, %v2552
    %v2554 = vpop.f32.mrb[0].mxu0
    %v2555 = vpop.f32.mrb[0].mxu0
    %v2556 = vadd.f32 %v1535, %v2555
    %v2557 = vpop.f32.mrb[0].mxu0
    %2558 = vmatprep.mubr.bf16.mxu0 %v2134
    %2559 = vmatmul.mubr.bf16.gmra.mrb[0].mxu0 %v2133
    %v2560 = vpop.f32.mrb[0].mxu0
    %v2561 = vadd.f32 %v1540, %v2560
    %v2562 = vpop.f32.mrb[0].mxu0
    %v2563 = vpop.f32.mrb[0].mxu0
    %v2564 = vadd.f32 %v1545, %v2563
    %v2565 = vpop.f32.mrb[0].mxu0
    %2566 = vmatprep.mubr.bf16.mxu0 %v2138
    %2567 = vmatmul.mubr.bf16.gmra.mrb[0].mxu0 %v2137
    %v2568 = vpop.f32.mrb[0].mxu0
    %v2569 = vadd.f32 %v1550, %v2568
    %v2570 = vpop.f32.mrb[0].mxu0
    %v2571 = vpop.f32.mrb[0].mxu0
    %v2572 = vadd.f32 %v1555, %v2571
    %v2573 = vpop.f32.mrb[0].mxu0
    %2574 = vmatprep.mubr.bf16.mxu0 %v2142
    %2575 = vmatmul.mubr.bf16.gmra.mrb[0].mxu0 %v2141
    %v2576 = vpop.f32.mrb[0].mxu0
    %v2577 = vadd.f32 %v1560, %v2576
    %v2578 = vpop.f32.mrb[0].mxu0
    %v2579 = vpop.f32.mrb[0].mxu0
    %v2580 = vadd.f32 %v1565, %v2579
    %v2581 = vpop.f32.mrb[0].mxu0
    %2582 = vmatprep.mubr.bf16.mxu0 %v2146
    %2583 = vmatmul.mubr.bf16.gmra.mrb[0].mxu0 %v2145
    %v2584 = vpop.f32.mrb[0].mxu0
    %v2585 = vadd.f32 %v1570, %v2584
    %v2586 = vpop.f32.mrb[0].mxu0
    %v2587 = vpop.f32.mrb[0].mxu0
    %v2588 = vadd.f32 %v1575, %v2587
    %v2589 = vpop.f32.mrb[0].mxu0
    %2590 = vmatprep.mubr.bf16.mxu0 %v2150
    %2591 = vmatmul.mubr.bf16.gmra.mrb[0].mxu0 %v2149
    %v2592 = vpop.f32.mrb[0].mxu0
    %v2593 = vadd.f32 %v1580, %v2592
    %v2594 = vpop.f32.mrb[0].mxu0
    %v2595 = vpop.f32.mrb[0].mxu0
    %v2596 = vadd.f32 %v1585, %v2595
    %v2597 = vpop.f32.mrb[0].mxu0
    %2598 = vmatprep.mubr.bf16.mxu0 %v2154
    %2599 = vmatmul.mubr.bf16.gmra.mrb[0].mxu0 %v2153
    %v2600 = vpop.f32.mrb[0].mxu0
    %v2601 = vadd.f32 %v1590, %v2600
    %v2602 = vpop.f32.mrb[0].mxu0
    %v2603 = vpop.f32.mrb[0].mxu0
    %v2604 = vadd.f32 %v1595, %v2603
    %v2605 = vpop.f32.mrb[0].mxu0
    %2606 = vmatprep.mubr.bf16.mxu0 %v2158
    %2607 = vmatmul.mubr.bf16.gmra.mrb[0].mxu0 %v2157
    %v2608 = vpop.f32.mrb[0].mxu0
    %v2609 = vadd.f32 %v1600, %v2608
    %v2610 = vpop.f32.mrb[0].mxu0
    %v2611 = vpop.f32.mrb[0].mxu0
    %v2612 = vadd.f32 %v1605, %v2611
    %v2613 = vpop.f32.mrb[0].mxu0
    %2614 = vmatprep.mubr.bf16.mxu0 %v2162
    %2615 = vmatmul.mubr.bf16.gmra.mrb[0].mxu0 %v2161
    %v2616 = vpop.f32.mrb[0].mxu0
    %v2617 = vadd.f32 %v1610, %v2616
    %v2618 = vpop.f32.mrb[0].mxu0
    %v2619 = vpop.f32.mrb[0].mxu0
    %v2620 = vadd.f32 %v1615, %v2619
    %v2621 = vpop.f32.mrb[0].mxu0
    %2622 = vmatprep.mubr.bf16.mxu0 %v2166
    %2623 = vmatmul.mubr.bf16.gmra.mrb[0].mxu0 %v2165
    %v2624 = vpop.f32.mrb[0].mxu0
    %v2625 = vadd.f32 %v1620, %v2624
    %v2626 = vpop.f32.mrb[0].mxu0
    %v2627 = vpop.f32.mrb[0].mxu0
    %v2628 = vadd.f32 %v1625, %v2627
    %v2629 = vpop.f32.mrb[0].mxu0
    %2630 = vmatprep.mubr.bf16.mxu0 %v2170
    %2631 = vmatmul.mubr.bf16.gmra.mrb[0].mxu0 %v2169
    %v2632 = vpop.f32.mrb[0].mxu0
    %v2633 = vadd.f32 %v1630, %v2632
    %v2634 = vpop.f32.mrb[0].mxu0
    %v2635 = vpop.f32.mrb[0].mxu0
    %v2636 = vadd.f32 %v1635, %v2635
    %v2637 = vpop.f32.mrb[0].mxu0
    %2638 = vmatprep.mubr.bf16.mxu0 %v2174
    %2639 = vmatmul.mubr.bf16.gmra.mrb[0].mxu0 %v2173
    %v2640 = vpop.f32.mrb[0].mxu0
    %v2641 = vadd.f32 %v1640, %v2640
    %v2642 = vpop.f32.mrb[0].mxu0
    %v2643 = vpop.f32.mrb[0].mxu0
    %v2644 = vadd.f32 %v1645, %v2643
    %v2645 = vpop.f32.mrb[0].mxu0
    %2646 = vmatprep.mubr.bf16.mxu0 %v2178
    %2647 = vmatmul.mubr.bf16.gmra.mrb[0].mxu0 %v2177
    %v2648 = vpop.f32.mrb[0].mxu0
    %v2649 = vadd.f32 %v1650, %v2648
    %v2650 = vpop.f32.mrb[0].mxu0
    %v2651 = vpop.f32.mrb[0].mxu0
    %v2652 = vadd.f32 %v1655, %v2651
    %v2653 = vpop.f32.mrb[0].mxu0
    %2654 = vmatprep.mubr.bf16.mxu0 %v2182
    %2655 = vmatmul.mubr.bf16.gmra.mrb[0].mxu0 %v2181
    %v2656 = vpop.f32.mrb[0].mxu0
    %v2657 = vadd.f32 %v1660, %v2656
    %v2658 = vpop.f32.mrb[0].mxu0
    %v2659 = vpop.f32.mrb[0].mxu0
    %v2660 = vadd.f32 %v1665, %v2659
    %v2661 = vpop.f32.mrb[0].mxu0
    %2662 = vmatprep.mubr.bf16.mxu0 %v2186
    %2663 = vmatmul.mubr.bf16.gmra.mrb[0].mxu0 %v2185
    %v2664 = vpop.f32.mrb[0].mxu0
    %v2665 = vadd.f32 %v1670, %v2664
    %v2666 = vpop.f32.mrb[0].mxu0
    %v2667 = vpop.f32.mrb[0].mxu0
    %v2668 = vadd.f32 %v1675, %v2667
    %v2669 = vpop.f32.mrb[0].mxu0
    %2670 = vdwg.mxu0
    %2671 = vmatprep.subr.bf16.mxu0 0
    %2672 = vmatpush1.bf16.msra.mxu0 %v1284
    %2673 = vmatprep.subr.bf16.mxu0 0
    %2674 = vmatpush1.bf16.msra.mxu0 %v1285
    %2675 = vmatprep.subr.bf16.mxu0 0
    %2676 = vmatpush1.bf16.msra.mxu0 %v1286
    %2677 = vmatprep.subr.bf16.mxu0 0
    %2678 = vmatpush1.bf16.msra.mxu0 %v1287
    %2679 = vmatprep.subr.bf16.mxu0 0
    %2680 = vmatpush1.bf16.msra.mxu0 %v1288
    %2681 = vmatprep.subr.bf16.mxu0 0
    %2682 = vmatpush1.bf16.msra.mxu0 %v1289
    %2683 = vmatprep.subr.bf16.mxu0 0
    %2684 = vmatpush1.bf16.msra.mxu0 %v1290
    %2685 = vmatprep.subr.bf16.mxu0 0
    %2686 = vmatpush1.bf16.msra.mxu0 %v1291
    %2687 = vmatprep.subr.bf16.mxu0 0
    %2688 = vmatpush1.bf16.msra.mxu0 %v1292
    %2689 = vmatprep.subr.bf16.mxu0 0
    %2690 = vmatpush1.bf16.msra.mxu0 0
    %2691 = vmatprep.subr.bf16.mxu0 0
    %2692 = vmatpush1.bf16.msra.mxu0 0
    %2693 = vmatprep.subr.bf16.mxu0 0
    %2694 = vmatpush1.bf16.msra.mxu0 0
    %2695 = vmatprep.subr.bf16.mxu0 0
    %2696 = vmatpush1.bf16.msra.mxu0 0
    %2697 = vmatprep.subr.bf16.mxu0 0
    %2698 = vmatpush1.bf16.msra.mxu0 0
    %2699 = vmatprep.subr.bf16.mxu0 0
    %2700 = vmatpush1.bf16.msra.mxu0 0
    %2701 = vmatprep.subr.bf16.mxu0 0
    %2702 = vmatpush1.bf16.msra.mxu0 0
    %2703 = vmatprep.mubr.bf16.mxu0 %v2287
    %2704 = vmatmul.mubr.bf16.gmra.mrb[0].mxu0 %v2063
    %v2705 = vpop.f32.mrb[0].mxu0
    %v2706 = vadd.f32 %v2417, %v2705
    %v2707 = vpop.f32.mrb[0].mxu0
    %v2708 = vpop.f32.mrb[0].mxu0
    %v2709 = vadd.f32 %v2420, %v2708
    %v2710 = vpop.f32.mrb[0].mxu0
    %2711 = vmatprep.mubr.bf16.mxu0 %v2290
    %2712 = vmatmul.mubr.bf16.gmra.mrb[0].mxu0 %v2067
    %v2713 = vpop.f32.mrb[0].mxu0
    %v2714 = vadd.f32 %v2425, %v2713
    %v2715 = vpop.f32.mrb[0].mxu0
    %v2716 = vpop.f32.mrb[0].mxu0
    %v2717 = vadd.f32 %v2428, %v2716
    %v2718 = vpop.f32.mrb[0].mxu0
    %2719 = vmatprep.mubr.bf16.mxu0 %v2293
    %2720 = vmatmul.mubr.bf16.gmra.mrb[0].mxu0 %v2071
    %v2721 = vpop.f32.mrb[0].mxu0
    %v2722 = vadd.f32 %v2433, %v2721
    %v2723 = vpop.f32.mrb[0].mxu0
    %v2724 = vpop.f32.mrb[0].mxu0
    %v2725 = vadd.f32 %v2436, %v2724
    %v2726 = vpop.f32.mrb[0].mxu0
    %2727 = vmatprep.mubr.bf16.mxu0 %v2296
    %2728 = vmatmul.mubr.bf16.gmra.mrb[0].mxu0 %v2075
    %v2729 = vpop.f32.mrb[0].mxu0
    %v2730 = vadd.f32 %v2441, %v2729
    %v2731 = vpop.f32.mrb[0].mxu0
    %v2732 = vpop.f32.mrb[0].mxu0
    %v2733 = vadd.f32 %v2444, %v2732
    %v2734 = vpop.f32.mrb[0].mxu0
    %2735 = vmatprep.mubr.bf16.mxu0 %v2299
    %2736 = vmatmul.mubr.bf16.gmra.mrb[0].mxu0 %v2079
    %v2737 = vpop.f32.mrb[0].mxu0
    %v2738 = vadd.f32 %v2449, %v2737
    %v2739 = vpop.f32.mrb[0].mxu0
    %v2740 = vpop.f32.mrb[0].mxu0
    %v2741 = vadd.f32 %v2452, %v2740
    %v2742 = vpop.f32.mrb[0].mxu0
    %2743 = vmatprep.mubr.bf16.mxu0 %v2302
    %2744 = vmatmul.mubr.bf16.gmra.mrb[0].mxu0 %v2083
    %v2745 = vpop.f32.mrb[0].mxu0
    %v2746 = vadd.f32 %v2457, %v2745
    %v2747 = vpop.f32.mrb[0].mxu0
    %v2748 = vpop.f32.mrb[0].mxu0
    %v2749 = vadd.f32 %v2460, %v2748
    %v2750 = vpop.f32.mrb[0].mxu0
    %2751 = vmatprep.mubr.bf16.mxu0 %v2305
    %2752 = vmatmul.mubr.bf16.gmra.mrb[0].mxu0 %v2087
    %v2753 = vpop.f32.mrb[0].mxu0
    %v2754 = vadd.f32 %v2465, %v2753
    %v2755 = vpop.f32.mrb[0].mxu0
    %v2756 = vpop.f32.mrb[0].mxu0
    %v2757 = vadd.f32 %v2468, %v2756
    %v2758 = vpop.f32.mrb[0].mxu0
    %2759 = vmatprep.mubr.bf16.mxu0 %v2308
    %2760 = vmatmul.mubr.bf16.gmra.mrb[0].mxu0 %v2091
    %v2761 = vpop.f32.mrb[0].mxu0
    %v2762 = vadd.f32 %v2473, %v2761
    %v2763 = vpop.f32.mrb[0].mxu0
    %v2764 = vpop.f32.mrb[0].mxu0
    %v2765 = vadd.f32 %v2476, %v2764
    %v2766 = vpop.f32.mrb[0].mxu0
    %2767 = vmatprep.mubr.bf16.mxu0 %v2311
    %2768 = vmatmul.mubr.bf16.gmra.mrb[0].mxu0 %v2095
    %v2769 = vpop.f32.mrb[0].mxu0
    %v2770 = vadd.f32 %v2481, %v2769
    %v2771 = vpop.f32.mrb[0].mxu0
    %v2772 = vpop.f32.mrb[0].mxu0
    %v2773 = vadd.f32 %v2484, %v2772
    %v2774 = vpop.f32.mrb[0].mxu0
    %2775 = vmatprep.mubr.bf16.mxu0 %v2314
    %2776 = vmatmul.mubr.bf16.gmra.mrb[0].mxu0 %v2099
    %v2777 = vpop.f32.mrb[0].mxu0
    %v2778 = vadd.f32 %v2489, %v2777
    %v2779 = vpop.f32.mrb[0].mxu0
    %v2780 = vpop.f32.mrb[0].mxu0
    %v2781 = vadd.f32 %v2492, %v2780
    %v2782 = vpop.f32.mrb[0].mxu0
    %2783 = vmatprep.mubr.bf16.mxu0 %v2317
    %2784 = vmatmul.mubr.bf16.gmra.mrb[0].mxu0 %v2103
    %v2785 = vpop.f32.mrb[0].mxu0
    %v2786 = vadd.f32 %v2497, %v2785
    %v2787 = vpop.f32.mrb[0].mxu0
    %v2788 = vpop.f32.mrb[0].mxu0
    %v2789 = vadd.f32 %v2500, %v2788
    %v2790 = vpop.f32.mrb[0].mxu0
    %2791 = vmatprep.mubr.bf16.mxu0 %v2320
    %2792 = vmatmul.mubr.bf16.gmra.mrb[0].mxu0 %v2107
    %v2793 = vpop.f32.mrb[0].mxu0
    %v2794 = vadd.f32 %v2505, %v2793
    %v2795 = vpop.f32.mrb[0].mxu0
    %v2796 = vpop.f32.mrb[0].mxu0
    %v2797 = vadd.f32 %v2508, %v2796
    %v2798 = vpop.f32.mrb[0].mxu0
    %2799 = vmatprep.mubr.bf16.mxu0 %v2323
    %2800 = vmatmul.mubr.bf16.gmra.mrb[0].mxu0 %v2111
    %v2801 = vpop.f32.mrb[0].mxu0
    %v2802 = vadd.f32 %v2513, %v2801
    %v2803 = vpop.f32.mrb[0].mxu0
    %v2804 = vpop.f32.mrb[0].mxu0
    %v2805 = vadd.f32 %v2516, %v2804
    %v2806 = vpop.f32.mrb[0].mxu0
    %2807 = vmatprep.mubr.bf16.mxu0 %v2326
    %2808 = vmatmul.mubr.bf16.gmra.mrb[0].mxu0 %v2115
    %v2809 = vpop.f32.mrb[0].mxu0
    %v2810 = vadd.f32 %v2521, %v2809
    %v2811 = vpop.f32.mrb[0].mxu0
    %v2812 = vpop.f32.mrb[0].mxu0
    %v2813 = vadd.f32 %v2524, %v2812
    %v2814 = vpop.f32.mrb[0].mxu0
    %2815 = vmatprep.mubr.bf16.mxu0 %v2329
    %2816 = vmatmul.mubr.bf16.gmra.mrb[0].mxu0 %v2119
    %v2817 = vpop.f32.mrb[0].mxu0
    %v2818 = vadd.f32 %v2529, %v2817
    %v2819 = vpop.f32.mrb[0].mxu0
    %v2820 = vpop.f32.mrb[0].mxu0
    %v2821 = vadd.f32 %v2532, %v2820
    %v2822 = vpop.f32.mrb[0].mxu0
    %2823 = vmatprep.mubr.bf16.mxu0 %v2332
    %2824 = vmatmul.mubr.bf16.gmra.mrb[0].mxu0 %v2123
    %v2825 = vpop.f32.mrb[0].mxu0
    %v2826 = vadd.f32 %v2537, %v2825
    %v2827 = vpop.f32.mrb[0].mxu0
    %v2828 = vpop.f32.mrb[0].mxu0
    %v2829 = vadd.f32 %v2540, %v2828
    %v2830 = vpop.f32.mrb[0].mxu0
    %2831 = vmatprep.mubr.bf16.mxu0 %v2335
    %2832 = vmatmul.mubr.bf16.gmra.mrb[0].mxu0 %v2127
    %v2833 = vpop.f32.mrb[0].mxu0
    %v2834 = vadd.f32 %v2545, %v2833
    %v2835 = vpop.f32.mrb[0].mxu0
    %v2836 = vpop.f32.mrb[0].mxu0
    %v2837 = vadd.f32 %v2548, %v2836
    %v2838 = vpop.f32.mrb[0].mxu0
    %2839 = vmatprep.mubr.bf16.mxu0 %v2338
    %2840 = vmatmul.mubr.bf16.gmra.mrb[0].mxu0 %v2131
    %v2841 = vpop.f32.mrb[0].mxu0
    %v2842 = vadd.f32 %v2553, %v2841
    %v2843 = vpop.f32.mrb[0].mxu0
    %v2844 = vpop.f32.mrb[0].mxu0
    %v2845 = vadd.f32 %v2556, %v2844
    %v2846 = vpop.f32.mrb[0].mxu0
    %2847 = vmatprep.mubr.bf16.mxu0 %v2341
    %2848 = vmatmul.mubr.bf16.gmra.mrb[0].mxu0 %v2135
    %v2849 = vpop.f32.mrb[0].mxu0
    %v2850 = vadd.f32 %v2561, %v2849
    %v2851 = vpop.f32.mrb[0].mxu0
    %v2852 = vpop.f32.mrb[0].mxu0
    %v2853 = vadd.f32 %v2564, %v2852
    %v2854 = vpop.f32.mrb[0].mxu0
    %2855 = vmatprep.mubr.bf16.mxu0 %v2344
    %2856 = vmatmul.mubr.bf16.gmra.mrb[0].mxu0 %v2139
    %v2857 = vpop.f32.mrb[0].mxu0
    %v2858 = vadd.f32 %v2569, %v2857
    %v2859 = vpop.f32.mrb[0].mxu0
    %v2860 = vpop.f32.mrb[0].mxu0
    %v2861 = vadd.f32 %v2572, %v2860
    %v2862 = vpop.f32.mrb[0].mxu0
    %2863 = vmatprep.mubr.bf16.mxu0 %v2347
    %2864 = vmatmul.mubr.bf16.gmra.mrb[0].mxu0 %v2143
    %v2865 = vpop.f32.mrb[0].mxu0
    %v2866 = vadd.f32 %v2577, %v2865
    %v2867 = vpop.f32.mrb[0].mxu0
    %v2868 = vpop.f32.mrb[0].mxu0
    %v2869 = vadd.f32 %v2580, %v2868
    %v2870 = vpop.f32.mrb[0].mxu0
    %2871 = vmatprep.mubr.bf16.mxu0 %v2350
    %2872 = vmatmul.mubr.bf16.gmra.mrb[0].mxu0 %v2147
    %v2873 = vpop.f32.mrb[0].mxu0
    %v2874 = vadd.f32 %v2585, %v2873
    %v2875 = vpop.f32.mrb[0].mxu0
    %v2876 = vpop.f32.mrb[0].mxu0
    %v2877 = vadd.f32 %v2588, %v2876
    %v2878 = vpop.f32.mrb[0].mxu0
    %2879 = vmatprep.mubr.bf16.mxu0 %v2353
    %2880 = vmatmul.mubr.bf16.gmra.mrb[0].mxu0 %v2151
    %v2881 = vpop.f32.mrb[0].mxu0
    %v2882 = vadd.f32 %v2593, %v2881
    %v2883 = vpop.f32.mrb[0].mxu0
    %v2884 = vpop.f32.mrb[0].mxu0
    %v2885 = vadd.f32 %v2596, %v2884
    %v2886 = vpop.f32.mrb[0].mxu0
    %2887 = vmatprep.mubr.bf16.mxu0 %v2356
    %2888 = vmatmul.mubr.bf16.gmra.mrb[0].mxu0 %v2155
    %v2889 = vpop.f32.mrb[0].mxu0
    %v2890 = vadd.f32 %v2601, %v2889
    %v2891 = vpop.f32.mrb[0].mxu0
    %v2892 = vpop.f32.mrb[0].mxu0
    %v2893 = vadd.f32 %v2604, %v2892
    %v2894 = vpop.f32.mrb[0].mxu0
    %2895 = vmatprep.mubr.bf16.mxu0 %v2359
    %2896 = vmatmul.mubr.bf16.gmra.mrb[0].mxu0 %v2159
    %v2897 = vpop.f32.mrb[0].mxu0
    %v2898 = vadd.f32 %v2609, %v2897
    %v2899 = vpop.f32.mrb[0].mxu0
    %v2900 = vpop.f32.mrb[0].mxu0
    %v2901 = vadd.f32 %v2612, %v2900
    %v2902 = vpop.f32.mrb[0].mxu0
    %2903 = vmatprep.mubr.bf16.mxu0 %v2362
    %2904 = vmatmul.mubr.bf16.gmra.mrb[0].mxu0 %v2163
    %v2905 = vpop.f32.mrb[0].mxu0
    %v2906 = vadd.f32 %v2617, %v2905
    %v2907 = vpop.f32.mrb[0].mxu0
    %v2908 = vpop.f32.mrb[0].mxu0
    %v2909 = vadd.f32 %v2620, %v2908
    %v2910 = vpop.f32.mrb[0].mxu0
    %2911 = vmatprep.mubr.bf16.mxu0 %v2365
    %2912 = vmatmul.mubr.bf16.gmra.mrb[0].mxu0 %v2167
    %v2913 = vpop.f32.mrb[0].mxu0
    %v2914 = vadd.f32 %v2625, %v2913
    %v2915 = vpop.f32.mrb[0].mxu0
    %v2916 = vpop.f32.mrb[0].mxu0
    %v2917 = vadd.f32 %v2628, %v2916
    %v2918 = vpop.f32.mrb[0].mxu0
    %2919 = vmatprep.mubr.bf16.mxu0 %v2368
    %2920 = vmatmul.mubr.bf16.gmra.mrb[0].mxu0 %v2171
    %v2921 = vpop.f32.mrb[0].mxu0
    %v2922 = vadd.f32 %v2633, %v2921
    %v2923 = vpop.f32.mrb[0].mxu0
    %v2924 = vpop.f32.mrb[0].mxu0
    %v2925 = vadd.f32 %v2636, %v2924
    %v2926 = vpop.f32.mrb[0].mxu0
    %2927 = vmatprep.mubr.bf16.mxu0 %v2371
    %2928 = vmatmul.mubr.bf16.gmra.mrb[0].mxu0 %v2175
    %v2929 = vpop.f32.mrb[0].mxu0
    %v2930 = vadd.f32 %v2641, %v2929
    %v2931 = vpop.f32.mrb[0].mxu0
    %v2932 = vpop.f32.mrb[0].mxu0
    %v2933 = vadd.f32 %v2644, %v2932
    %v2934 = vpop.f32.mrb[0].mxu0
    %2935 = vmatprep.mubr.bf16.mxu0 %v2374
    %2936 = vmatmul.mubr.bf16.gmra.mrb[0].mxu0 %v2179
    %v2937 = vpop.f32.mrb[0].mxu0
    %v2938 = vadd.f32 %v2649, %v2937
    %v2939 = vpop.f32.mrb[0].mxu0
    %v2940 = vpop.f32.mrb[0].mxu0
    %v2941 = vadd.f32 %v2652, %v2940
    %v2942 = vpop.f32.mrb[0].mxu0
    %2943 = vmatprep.mubr.bf16.mxu0 %v2377
    %2944 = vmatmul.mubr.bf16.gmra.mrb[0].mxu0 %v2183
    %v2945 = vpop.f32.mrb[0].mxu0
    %v2946 = vadd.f32 %v2657, %v2945
    %v2947 = vpop.f32.mrb[0].mxu0
    %v2948 = vpop.f32.mrb[0].mxu0
    %v2949 = vadd.f32 %v2660, %v2948
    %v2950 = vpop.f32.mrb[0].mxu0
    %2951 = vmatprep.mubr.bf16.mxu0 %v2380
    %2952 = vmatmul.mubr.bf16.gmra.mrb[0].mxu0 %v2187
    %v2953 = vpop.f32.mrb[0].mxu0
    %v2954 = vadd.f32 %v2665, %v2953
    %v2955 = vpop.f32.mrb[0].mxu0
    %v2956 = vpop.f32.mrb[0].mxu0
    %v2957 = vadd.f32 %v2668, %v2956
    %v2958 = vpop.f32.mrb[0].mxu0
    %2959 = vdwg.mxu0
    %vm2960 = vcmp.ge.f32.partialorder %v2706, 0.0
    %vm2961 = vcmp.ge.f32.partialorder %v2709, 0.0
    %vm2962 = vcmp.ge.f32.partialorder %v2714, 0.0
    %vm2963 = vcmp.ge.f32.partialorder %v2717, 0.0
    %vm2964 = vcmp.ge.f32.partialorder %v2722, 0.0
    %vm2965 = vcmp.ge.f32.partialorder %v2725, 0.0
    %vm2966 = vcmp.ge.f32.partialorder %v2730, 0.0
    %vm2967 = vcmp.ge.f32.partialorder %v2733, 0.0
    %vm2968 = vcmp.ge.f32.partialorder %v2738, 0.0
    %vm2969 = vcmp.ge.f32.partialorder %v2741, 0.0
    %vm2970 = vcmp.ge.f32.partialorder %v2746, 0.0
    %vm2971 = vcmp.ge.f32.partialorder %v2749, 0.0
    %vm2972 = vcmp.ge.f32.partialorder %v2754, 0.0
    %vm2973 = vcmp.ge.f32.partialorder %v2757, 0.0
    %vm2974 = vcmp.ge.f32.partialorder %v2762, 0.0
    %vm2975 = vcmp.ge.f32.partialorder %v2765, 0.0
    %vm2976 = vcmp.ge.f32.partialorder %v2770, 0.0
    %vm2977 = vcmp.ge.f32.partialorder %v2773, 0.0
    %vm2978 = vcmp.ge.f32.partialorder %v2778, 0.0
    %vm2979 = vcmp.ge.f32.partialorder %v2781, 0.0
    %vm2980 = vcmp.ge.f32.partialorder %v2786, 0.0
    %vm2981 = vcmp.ge.f32.partialorder %v2789, 0.0
    %vm2982 = vcmp.ge.f32.partialorder %v2794, 0.0
    %vm2983 = vcmp.ge.f32.partialorder %v2797, 0.0
    %vm2984 = vcmp.ge.f32.partialorder %v2802, 0.0
    %vm2985 = vcmp.ge.f32.partialorder %v2805, 0.0
    %vm2986 = vcmp.ge.f32.partialorder %v2810, 0.0
    %vm2987 = vcmp.ge.f32.partialorder %v2813, 0.0
    %vm2988 = vcmp.ge.f32.partialorder %v2818, 0.0
    %vm2989 = vcmp.ge.f32.partialorder %v2821, 0.0
    %vm2990 = vcmp.ge.f32.partialorder %v2826, 0.0
    %vm2991 = vcmp.ge.f32.partialorder %v2829, 0.0
    %vm2992 = vcmp.ge.f32.partialorder %v2834, 0.0
    %vm2993 = vcmp.ge.f32.partialorder %v2837, 0.0
    %vm2994 = vcmp.ge.f32.partialorder %v2842, 0.0
    %vm2995 = vcmp.ge.f32.partialorder %v2845, 0.0
    %vm2996 = vcmp.ge.f32.partialorder %v2850, 0.0
    %vm2997 = vcmp.ge.f32.partialorder %v2853, 0.0
    %vm2998 = vcmp.ge.f32.partialorder %v2858, 0.0
    %vm2999 = vcmp.ge.f32.partialorder %v2861, 0.0
    %vm3000 = vcmp.ge.f32.partialorder %v2866, 0.0
    %vm3001 = vcmp.ge.f32.partialorder %v2869, 0.0
    %vm3002 = vcmp.ge.f32.partialorder %v2874, 0.0
    %vm3003 = vcmp.ge.f32.partialorder %v2877, 0.0
    %vm3004 = vcmp.ge.f32.partialorder %v2882, 0.0
    %vm3005 = vcmp.ge.f32.partialorder %v2885, 0.0
    %vm3006 = vcmp.ge.f32.partialorder %v2890, 0.0
    %vm3007 = vcmp.ge.f32.partialorder %v2893, 0.0
    %vm3008 = vcmp.ge.f32.partialorder %v2898, 0.0
    %vm3009 = vcmp.ge.f32.partialorder %v2901, 0.0
    %vm3010 = vcmp.ge.f32.partialorder %v2906, 0.0
    %vm3011 = vcmp.ge.f32.partialorder %v2909, 0.0
    %vm3012 = vcmp.ge.f32.partialorder %v2914, 0.0
    %vm3013 = vcmp.ge.f32.partialorder %v2917, 0.0
    %vm3014 = vcmp.ge.f32.partialorder %v2922, 0.0
    %vm3015 = vcmp.ge.f32.partialorder %v2925, 0.0
    %vm3016 = vcmp.ge.f32.partialorder %v2930, 0.0
    %vm3017 = vcmp.ge.f32.partialorder %v2933, 0.0
    %vm3018 = vcmp.ge.f32.partialorder %v2938, 0.0
    %vm3019 = vcmp.ge.f32.partialorder %v2941, 0.0
    %vm3020 = vcmp.ge.f32.partialorder %v2946, 0.0
    %vm3021 = vcmp.ge.f32.partialorder %v2949, 0.0
    %vm3022 = vcmp.ge.f32.partialorder %v2954, 0.0
    %vm3023 = vcmp.ge.f32.partialorder %v2957, 0.0
    %v3024 = vstv %s1139
    %v3025 = vmul.f32 %v3024, %v2706
    %v3026 = vmul.f32 %v3024, %v2709
    %v3027 = vmul.f32 %v3024, %v2714
    %v3028 = vmul.f32 %v3024, %v2717
    %v3029 = vmul.f32 %v3024, %v2722
    %v3030 = vmul.f32 %v3024, %v2725
    %v3031 = vmul.f32 %v3024, %v2730
    %v3032 = vmul.f32 %v3024, %v2733
    %v3033 = vmul.f32 %v3024, %v2738
    %v3034 = vmul.f32 %v3024, %v2741
    %v3035 = vmul.f32 %v3024, %v2746
    %v3036 = vmul.f32 %v3024, %v2749
    %v3037 = vmul.f32 %v3024, %v2754
    %v3038 = vmul.f32 %v3024, %v2757
    %v3039 = vmul.f32 %v3024, %v2762
    %v3040 = vmul.f32 %v3024, %v2765
    %v3041 = vmul.f32 %v3024, %v2770
    %v3042 = vmul.f32 %v3024, %v2773
    %v3043 = vmul.f32 %v3024, %v2778
    %v3044 = vmul.f32 %v3024, %v2781
    %v3045 = vmul.f32 %v3024, %v2786
    %v3046 = vmul.f32 %v3024, %v2789
    %v3047 = vmul.f32 %v3024, %v2794
    %v3048 = vmul.f32 %v3024, %v2797
    %v3049 = vmul.f32 %v3024, %v2802
    %v3050 = vmul.f32 %v3024, %v2805
    %v3051 = vmul.f32 %v3024, %v2810
    %v3052 = vmul.f32 %v3024, %v2813
    %v3053 = vmul.f32 %v3024, %v2818
    %v3054 = vmul.f32 %v3024, %v2821
    %v3055 = vmul.f32 %v3024, %v2826
    %v3056 = vmul.f32 %v3024, %v2829
    %v3057 = vmul.f32 %v3024, %v2834
    %v3058 = vmul.f32 %v3024, %v2837
    %v3059 = vmul.f32 %v3024, %v2842
    %v3060 = vmul.f32 %v3024, %v2845
    %v3061 = vmul.f32 %v3024, %v2850
    %v3062 = vmul.f32 %v3024, %v2853
    %v3063 = vmul.f32 %v3024, %v2858
    %v3064 = vmul.f32 %v3024, %v2861
    %v3065 = vmul.f32 %v3024, %v2866
    %v3066 = vmul.f32 %v3024, %v2869
    %v3067 = vmul.f32 %v3024, %v2874
    %v3068 = vmul.f32 %v3024, %v2877
    %v3069 = vmul.f32 %v3024, %v2882
    %v3070 = vmul.f32 %v3024, %v2885
    %v3071 = vmul.f32 %v3024, %v2890
    %v3072 = vmul.f32 %v3024, %v2893
    %v3073 = vmul.f32 %v3024, %v2898
    %v3074 = vmul.f32 %v3024, %v2901
    %v3075 = vmul.f32 %v3024, %v2906
    %v3076 = vmul.f32 %v3024, %v2909
    %v3077 = vmul.f32 %v3024, %v2914
    %v3078 = vmul.f32 %v3024, %v2917
    %v3079 = vmul.f32 %v3024, %v2922
    %v3080 = vmul.f32 %v3024, %v2925
    %v3081 = vmul.f32 %v3024, %v2930
    %v3082 = vmul.f32 %v3024, %v2933
    %v3083 = vmul.f32 %v3024, %v2938
    %v3084 = vmul.f32 %v3024, %v2941
    %v3085 = vmul.f32 %v3024, %v2946
    %v3086 = vmul.f32 %v3024, %v2949
    %v3087 = vmul.f32 %v3024, %v2954
    %v3088 = vmul.f32 %v3024, %v2957
    %v3089 = vsel %vm2960, %v2706, %v3025
    %v3090 = vsel %vm2961, %v2709, %v3026
    %v3091 = vsel %vm2962, %v2714, %v3027
    %v3092 = vsel %vm2963, %v2717, %v3028
    %v3093 = vsel %vm2964, %v2722, %v3029
    %v3094 = vsel %vm2965, %v2725, %v3030
    %v3095 = vsel %vm2966, %v2730, %v3031
    %v3096 = vsel %vm2967, %v2733, %v3032
    %v3097 = vsel %vm2968, %v2738, %v3033
    %v3098 = vsel %vm2969, %v2741, %v3034
    %v3099 = vsel %vm2970, %v2746, %v3035
    %v3100 = vsel %vm2971, %v2749, %v3036
    %v3101 = vsel %vm2972, %v2754, %v3037
    %v3102 = vsel %vm2973, %v2757, %v3038
    %v3103 = vsel %vm2974, %v2762, %v3039
    %v3104 = vsel %vm2975, %v2765, %v3040
    %v3105 = vsel %vm2976, %v2770, %v3041
    %v3106 = vsel %vm2977, %v2773, %v3042
    %v3107 = vsel %vm2978, %v2778, %v3043
    %v3108 = vsel %vm2979, %v2781, %v3044
    %v3109 = vsel %vm2980, %v2786, %v3045
    %v3110 = vsel %vm2981, %v2789, %v3046
    %v3111 = vsel %vm2982, %v2794, %v3047
    %v3112 = vsel %vm2983, %v2797, %v3048
    %v3113 = vsel %vm2984, %v2802, %v3049
    %v3114 = vsel %vm2985, %v2805, %v3050
    %v3115 = vsel %vm2986, %v2810, %v3051
    %v3116 = vsel %vm2987, %v2813, %v3052
    %v3117 = vsel %vm2988, %v2818, %v3053
    %v3118 = vsel %vm2989, %v2821, %v3054
    %v3119 = vsel %vm2990, %v2826, %v3055
    %v3120 = vsel %vm2991, %v2829, %v3056
    %v3121 = vsel %vm2992, %v2834, %v3057
    %v3122 = vsel %vm2993, %v2837, %v3058
    %v3123 = vsel %vm2994, %v2842, %v3059
    %v3124 = vsel %vm2995, %v2845, %v3060
    %v3125 = vsel %vm2996, %v2850, %v3061
    %v3126 = vsel %vm2997, %v2853, %v3062
    %v3127 = vsel %vm2998, %v2858, %v3063
    %v3128 = vsel %vm2999, %v2861, %v3064
    %v3129 = vsel %vm3000, %v2866, %v3065
    %v3130 = vsel %vm3001, %v2869, %v3066
    %v3131 = vsel %vm3002, %v2874, %v3067
    %v3132 = vsel %vm3003, %v2877, %v3068
    %v3133 = vsel %vm3004, %v2882, %v3069
    %v3134 = vsel %vm3005, %v2885, %v3070
    %v3135 = vsel %vm3006, %v2890, %v3071
    %v3136 = vsel %vm3007, %v2893, %v3072
    %v3137 = vsel %vm3008, %v2898, %v3073
    %v3138 = vsel %vm3009, %v2901, %v3074
    %v3139 = vsel %vm3010, %v2906, %v3075
    %v3140 = vsel %vm3011, %v2909, %v3076
    %v3141 = vsel %vm3012, %v2914, %v3077
    %v3142 = vsel %vm3013, %v2917, %v3078
    %v3143 = vsel %vm3014, %v2922, %v3079
    %v3144 = vsel %vm3015, %v2925, %v3080
    %v3145 = vsel %vm3016, %v2930, %v3081
    %v3146 = vsel %vm3017, %v2933, %v3082
    %v3147 = vsel %vm3018, %v2938, %v3083
    %v3148 = vsel %vm3019, %v2941, %v3084
    %v3149 = vsel %vm3020, %v2946, %v3085
    %v3150 = vsel %vm3021, %v2949, %v3086
    %v3151 = vsel %vm3022, %v2954, %v3087
    %v3152 = vsel %vm3023, %v2957, %v3088
    %s3153 = sld [smem:[#allocation2 + $0x2]]
    %v3154 = vld [vmem:[%s5] sm:$0xff]
    %v3155 = vld [vmem:[%s5 + $0x8] sm:$0xff]
    %v3156 = vld [vmem:[%s5 + $0x10] sm:$0xff]
    %v3157 = vld [vmem:[%s5 + $0x18] sm:$0xff]
    %v3158 = vld [vmem:[%s5 + $0x20] sm:$0xff]
    %v3159 = vld [vmem:[%s5 + $0x28] sm:$0xff]
    %v3160 = vld [vmem:[%s5 + $0x30] sm:$0xff]
    %v3161 = vld [vmem:[%s5 + $0x38] sm:$0xff]
    %v3162 = vld [vmem:[%s5 + $0x40] sm:$0xff]
    %v3163 = vld [vmem:[%s5 + $0x48] sm:$0xff]
    %v3164 = vld [vmem:[%s5 + $0x50] sm:$0xff]
    %v3165 = vld [vmem:[%s5 + $0x58] sm:$0xff]
    %v3166 = vld [vmem:[%s5 + $0x60] sm:$0xff]
    %v3167 = vld [vmem:[%s5 + $0x68] sm:$0xff]
    %v3168 = vld [vmem:[%s5 + $0x70] sm:$0xff]
    %v3169 = vld [vmem:[%s5 + $0x78] sm:$0xff]
    %v3170 = vld [vmem:[%s5 + $0x80] sm:$0xff]
    %v3171 = vld [vmem:[%s5 + $0x88] sm:$0xff]
    %v3172 = vld [vmem:[%s5 + $0x90] sm:$0xff]
    %v3173 = vld [vmem:[%s5 + $0x98] sm:$0xff]
    %v3174 = vld [vmem:[%s5 + $0xa0] sm:$0xff]
    %v3175 = vld [vmem:[%s5 + $0xa8] sm:$0xff]
    %v3176 = vld [vmem:[%s5 + $0xb0] sm:$0xff]
    %v3177 = vld [vmem:[%s5 + $0xb8] sm:$0xff]
    %v3178 = vld [vmem:[%s5 + $0xc0] sm:$0xff]
    %v3179 = vld [vmem:[%s5 + $0xc8] sm:$0xff]
    %v3180 = vld [vmem:[%s5 + $0xd0] sm:$0xff]
    %v3181 = vld [vmem:[%s5 + $0xd8] sm:$0xff]
    %v3182 = vld [vmem:[%s5 + $0xe0] sm:$0xff]
    %v3183 = vld [vmem:[%s5 + $0xe8] sm:$0xff]
    %v3184 = vld [vmem:[%s5 + $0xf0] sm:$0xff]
    %v3185 = vld [vmem:[%s5 + $0xf8] sm:$0xff]
    %v3186 = vld [vmem:[%s5 + $0x100] sm:$0xff]
    %v3187 = vld [vmem:[%s5 + $0x108] sm:$0xff]
    %v3188 = vld [vmem:[%s5 + $0x110] sm:$0xff]
    %v3189 = vld [vmem:[%s5 + $0x118] sm:$0xff]
    %v3190 = vld [vmem:[%s5 + $0x120] sm:$0xff]
    %v3191 = vld [vmem:[%s5 + $0x128] sm:$0xff]
    %v3192 = vld [vmem:[%s5 + $0x130] sm:$0xff]
    %v3193 = vld [vmem:[%s5 + $0x138] sm:$0xff]
    %v3194 = vld [vmem:[%s5 + $0x140] sm:$0xff]
    %v3195 = vld [vmem:[%s5 + $0x148] sm:$0xff]
    %v3196 = vld [vmem:[%s5 + $0x150] sm:$0xff]
    %v3197 = vld [vmem:[%s5 + $0x158] sm:$0xff]
    %v3198 = vld [vmem:[%s5 + $0x160] sm:$0xff]
    %v3199 = vld [vmem:[%s5 + $0x168] sm:$0xff]
    %v3200 = vld [vmem:[%s5 + $0x170] sm:$0xff]
    %v3201 = vld [vmem:[%s5 + $0x178] sm:$0xff]
    %v3202 = vld [vmem:[%s5 + $0x180] sm:$0xff]
    %v3203 = vld [vmem:[%s5 + $0x188] sm:$0xff]
    %v3204 = vld [vmem:[%s5 + $0x190] sm:$0xff]
    %v3205 = vld [vmem:[%s5 + $0x198] sm:$0xff]
    %v3206 = vld [vmem:[%s5 + $0x1a0] sm:$0xff]
    %v3207 = vld [vmem:[%s5 + $0x1a8] sm:$0xff]
    %v3208 = vld [vmem:[%s5 + $0x1b0] sm:$0xff]
    %v3209 = vld [vmem:[%s5 + $0x1b8] sm:$0xff]
    %v3210 = vld [vmem:[%s5 + $0x1c0] sm:$0xff]
    %v3211 = vld [vmem:[%s5 + $0x1c8] sm:$0xff]
    %v3212 = vld [vmem:[%s5 + $0x1d0] sm:$0xff]
    %v3213 = vld [vmem:[%s5 + $0x1d8] sm:$0xff]
    %v3214 = vld [vmem:[%s5 + $0x1e0] sm:$0xff]
    %v3215 = vld [vmem:[%s5 + $0x1e8] sm:$0xff]
    %v3216 = vld [vmem:[%s5 + $0x1f0] sm:$0xff]
    %v3217 = vld [vmem:[%s5 + $0x1f8] sm:$0xff]
    %v3218 = vld [vmem:[%s5 + $0x200] sm:$0xff]
    %v3219 = vld [vmem:[%s5 + $0x208] sm:$0xff]
    %v3220 = vld [vmem:[%s5 + $0x210] sm:$0xff]
    %v3221 = vld [vmem:[%s5 + $0x218] sm:$0xff]
    %v3222 = vld [vmem:[%s5 + $0x220] sm:$0xff]
    %v3223 = vld [vmem:[%s5 + $0x228] sm:$0xff]
    %v3224 = vld [vmem:[%s5 + $0x230] sm:$0xff]
    %v3225 = vld [vmem:[%s5 + $0x238] sm:$0xff]
    %v3226 = vld [vmem:[%s5 + $0x240] sm:$0xff]
    %v3227 = vld [vmem:[%s5 + $0x248] sm:$0xff]
    %v3228 = vld [vmem:[%s5 + $0x250] sm:$0xff]
    %v3229 = vld [vmem:[%s5 + $0x258] sm:$0xff]
    %v3230 = vld [vmem:[%s5 + $0x260] sm:$0xff]
    %v3231 = vld [vmem:[%s5 + $0x268] sm:$0xff]
    %v3232 = vld [vmem:[%s5 + $0x270] sm:$0xff]
    %v3233 = vld [vmem:[%s5 + $0x278] sm:$0xff]
    %v3234 = vld [vmem:[%s5 + $0x280] sm:$0xff]
    %v3235 = vld [vmem:[%s5 + $0x288] sm:$0xff]
    %v3236 = vld [vmem:[%s5 + $0x290] sm:$0xff]
    %v3237 = vld [vmem:[%s5 + $0x298] sm:$0xff]
    %v3238 = vld [vmem:[%s5 + $0x2a0] sm:$0xff]
    %v3239 = vld [vmem:[%s5 + $0x2a8] sm:$0xff]
    %v3240 = vld [vmem:[%s5 + $0x2b0] sm:$0xff]
    %v3241 = vld [vmem:[%s5 + $0x2b8] sm:$0xff]
    %v3242 = vld [vmem:[%s5 + $0x2c0] sm:$0xff]
    %v3243 = vld [vmem:[%s5 + $0x2c8] sm:$0xff]
    %v3244 = vld [vmem:[%s5 + $0x2d0] sm:$0xff]
    %v3245 = vld [vmem:[%s5 + $0x2d8] sm:$0xff]
    %v3246 = vld [vmem:[%s5 + $0x2e0] sm:$0xff]
    %v3247 = vld [vmem:[%s5 + $0x2e8] sm:$0xff]
    %v3248 = vld [vmem:[%s5 + $0x2f0] sm:$0xff]
    %v3249 = vld [vmem:[%s5 + $0x2f8] sm:$0xff]
    %v3250 = vld [vmem:[%s5 + $0x300] sm:$0xff]
    %v3251 = vld [vmem:[%s5 + $0x308] sm:$0xff]
    %v3252 = vld [vmem:[%s5 + $0x310] sm:$0xff]
    %v3253 = vld [vmem:[%s5 + $0x318] sm:$0xff]
    %v3254 = vld [vmem:[%s5 + $0x320] sm:$0xff]
    %v3255 = vld [vmem:[%s5 + $0x328] sm:$0xff]
    %v3256 = vld [vmem:[%s5 + $0x330] sm:$0xff]
    %v3257 = vld [vmem:[%s5 + $0x338] sm:$0xff]
    %v3258 = vld [vmem:[%s5 + $0x340] sm:$0xff]
    %v3259 = vld [vmem:[%s5 + $0x348] sm:$0xff]
    %v3260 = vld [vmem:[%s5 + $0x350] sm:$0xff]
    %v3261 = vld [vmem:[%s5 + $0x358] sm:$0xff]
    %v3262 = vld [vmem:[%s5 + $0x360] sm:$0xff]
    %v3263 = vld [vmem:[%s5 + $0x368] sm:$0xff]
    %v3264 = vld [vmem:[%s5 + $0x370] sm:$0xff]
    %v3265 = vld [vmem:[%s5 + $0x378] sm:$0xff]
    %v3266 = vld [vmem:[%s5 + $0x380] sm:$0xff]
    %v3267 = vld [vmem:[%s5 + $0x388] sm:$0xff]
    %v3268 = vld [vmem:[%s5 + $0x390] sm:$0xff]
    %v3269 = vld [vmem:[%s5 + $0x398] sm:$0xff]
    %v3270 = vld [vmem:[%s5 + $0x3a0] sm:$0xff]
    %v3271 = vld [vmem:[%s5 + $0x3a8] sm:$0xff]
    %v3272 = vld [vmem:[%s5 + $0x3b0] sm:$0xff]
    %v3273 = vld [vmem:[%s5 + $0x3b8] sm:$0xff]
    %v3274 = vld [vmem:[%s5 + $0x3c0] sm:$0xff]
    %v3275 = vld [vmem:[%s5 + $0x3c8] sm:$0xff]
    %v3276 = vld [vmem:[%s5 + $0x3d0] sm:$0xff]
    %v3277 = vld [vmem:[%s5 + $0x3d8] sm:$0xff]
    %v3278 = vld [vmem:[%s5 + $0x3e0] sm:$0xff]
    %v3279 = vld [vmem:[%s5 + $0x3e8] sm:$0xff]
    %v3280 = vld [vmem:[%s5 + $0x3f0] sm:$0xff]
    %v3281 = vld [vmem:[%s5 + $0x3f8] sm:$0xff]
    %v3282 = vld [vmem:[%s5 + $0x400] sm:$0xff]
    %v3283 = vld [vmem:[%s5 + $0x408] sm:$0xff]
    %v3284 = vld [vmem:[%s5 + $0x410] sm:$0xff]
    %v3285 = vld [vmem:[%s5 + $0x418] sm:$0xff]
    %v3286 = vld [vmem:[%s5 + $0x420] sm:$0xff]
    %v3287 = vld [vmem:[%s5 + $0x428] sm:$0xff]
    %v3288 = vld [vmem:[%s5 + $0x430] sm:$0xff]
    %v3289 = vld [vmem:[%s5 + $0x438] sm:$0xff]
    %v3290 = vld [vmem:[%s5 + $0x440] sm:$0xff]
    %v3291 = vld [vmem:[%s5 + $0x448] sm:$0xff]
    %v3292 = vld [vmem:[%s5 + $0x450] sm:$0xff]
    %v3293 = vld [vmem:[%s5 + $0x458] sm:$0xff]
    %v3294 = vld [vmem:[%s5 + $0x460] sm:$0xff]
    %v3295 = vld [vmem:[%s5 + $0x468] sm:$0xff]
    %v3296 = vld [vmem:[%s5 + $0x470] sm:$0xff]
    %v3297 = vld [vmem:[%s5 + $0x478] sm:$0xff]
    %v3298 = vpack.c.bf16 %v3090, %v3089
    %v3299 = vpack.c.bf16 %v3092, %v3091
    %v3300 = vpack.c.bf16 %v3094, %v3093
    %v3301 = vpack.c.bf16 %v3096, %v3095
    %v3302 = vpack.c.bf16 %v3098, %v3097
    %v3303 = vpack.c.bf16 %v3100, %v3099
    %v3304 = vpack.c.bf16 %v3102, %v3101
    %v3305 = vpack.c.bf16 %v3104, %v3103
    %v3306 = vpack.c.bf16 %v3106, %v3105
    %v3307 = vpack.c.bf16 %v3108, %v3107
    %v3308 = vpack.c.bf16 %v3110, %v3109
    %v3309 = vpack.c.bf16 %v3112, %v3111
    %v3310 = vpack.c.bf16 %v3114, %v3113
    %v3311 = vpack.c.bf16 %v3116, %v3115
    %v3312 = vpack.c.bf16 %v3118, %v3117
    %v3313 = vpack.c.bf16 %v3120, %v3119
    %v3314 = vpack.c.bf16 %v3122, %v3121
    %v3315 = vpack.c.bf16 %v3124, %v3123
    %v3316 = vpack.c.bf16 %v3126, %v3125
    %v3317 = vpack.c.bf16 %v3128, %v3127
    %v3318 = vpack.c.bf16 %v3130, %v3129
    %v3319 = vpack.c.bf16 %v3132, %v3131
    %v3320 = vpack.c.bf16 %v3134, %v3133
    %v3321 = vpack.c.bf16 %v3136, %v3135
    %v3322 = vpack.c.bf16 %v3138, %v3137
    %v3323 = vpack.c.bf16 %v3140, %v3139
    %v3324 = vpack.c.bf16 %v3142, %v3141
    %v3325 = vpack.c.bf16 %v3144, %v3143
    %v3326 = vpack.c.bf16 %v3146, %v3145
    %v3327 = vpack.c.bf16 %v3148, %v3147
    %v3328 = vpack.c.bf16 %v3150, %v3149
    %v3329 = vpack.c.bf16 %v3152, %v3151
    %v3330 = vld [vmem:[%s6] sm:$0xff]
    %v3331 = vld [vmem:[%s6 + $0x8] sm:$0xff]
    %v3332 = vld [vmem:[%s6 + $0x10] sm:$0xff]
    %v3333 = vld [vmem:[%s6 + $0x18] sm:$0xff]
    %v3334 = vld [vmem:[%s6 + $0x20] sm:$0xff]
    %v3335 = vld [vmem:[%s6 + $0x28] sm:$0xff]
    %v3336 = vld [vmem:[%s6 + $0x30] sm:$0xff]
    %v3337 = vld [vmem:[%s6 + $0x38] sm:$0xff]
    %v3338 = vld [vmem:[%s6 + $0x40] sm:$0xff]
    %v3339 = vld [vmem:[%s6 + $0x48] sm:$0xff]
    %v3340 = vld [vmem:[%s6 + $0x50] sm:$0xff]
    %v3341 = vld [vmem:[%s6 + $0x58] sm:$0xff]
    %v3342 = vld [vmem:[%s6 + $0x60] sm:$0xff]
    %v3343 = vld [vmem:[%s6 + $0x68] sm:$0xff]
    %v3344 = vld [vmem:[%s6 + $0x70] sm:$0xff]
    %v3345 = vld [vmem:[%s6 + $0x78] sm:$0xff]
    %v3346 = vld [vmem:[%s6 + $0x80] sm:$0xff]
    %v3347 = vld [vmem:[%s6 + $0x88] sm:$0xff]
    %v3348 = vld [vmem:[%s6 + $0x90] sm:$0xff]
    %v3349 = vld [vmem:[%s6 + $0x98] sm:$0xff]
    %v3350 = vld [vmem:[%s6 + $0xa0] sm:$0xff]
    %v3351 = vld [vmem:[%s6 + $0xa8] sm:$0xff]
    %v3352 = vld [vmem:[%s6 + $0xb0] sm:$0xff]
    %v3353 = vld [vmem:[%s6 + $0xb8] sm:$0xff]
    %v3354 = vld [vmem:[%s6 + $0xc0] sm:$0xff]
    %v3355 = vld [vmem:[%s6 + $0xc8] sm:$0xff]
    %v3356 = vld [vmem:[%s6 + $0xd0] sm:$0xff]
    %v3357 = vld [vmem:[%s6 + $0xd8] sm:$0xff]
    %v3358 = vld [vmem:[%s6 + $0xe0] sm:$0xff]
    %v3359 = vld [vmem:[%s6 + $0xe8] sm:$0xff]
    %v3360 = vld [vmem:[%s6 + $0xf0] sm:$0xff]
    %v3361 = vld [vmem:[%s6 + $0xf8] sm:$0xff]
    %v3362 = vld [vmem:[%s6 + $0x100] sm:$0xff]
    %v3363 = vld [vmem:[%s6 + $0x108] sm:$0xff]
    %v3364 = vld [vmem:[%s6 + $0x110] sm:$0xff]
    %v3365 = vld [vmem:[%s6 + $0x118] sm:$0xff]
    %v3366 = vld [vmem:[%s6 + $0x120] sm:$0xff]
    %v3367 = vld [vmem:[%s6 + $0x128] sm:$0xff]
    %v3368 = vld [vmem:[%s6 + $0x130] sm:$0xff]
    %v3369 = vld [vmem:[%s6 + $0x138] sm:$0xff]
    %v3370 = vld [vmem:[%s6 + $0x140] sm:$0xff]
    %v3371 = vld [vmem:[%s6 + $0x148] sm:$0xff]
    %v3372 = vld [vmem:[%s6 + $0x150] sm:$0xff]
    %v3373 = vld [vmem:[%s6 + $0x158] sm:$0xff]
    %v3374 = vld [vmem:[%s6 + $0x160] sm:$0xff]
    %v3375 = vld [vmem:[%s6 + $0x168] sm:$0xff]
    %v3376 = vld [vmem:[%s6 + $0x170] sm:$0xff]
    %v3377 = vld [vmem:[%s6 + $0x178] sm:$0xff]
    %v3378 = vld [vmem:[%s6 + $0x180] sm:$0xff]
    %v3379 = vld [vmem:[%s6 + $0x188] sm:$0xff]
    %v3380 = vld [vmem:[%s6 + $0x190] sm:$0xff]
    %v3381 = vld [vmem:[%s6 + $0x198] sm:$0xff]
    %v3382 = vld [vmem:[%s6 + $0x1a0] sm:$0xff]
    %v3383 = vld [vmem:[%s6 + $0x1a8] sm:$0xff]
    %v3384 = vld [vmem:[%s6 + $0x1b0] sm:$0xff]
    %v3385 = vld [vmem:[%s6 + $0x1b8] sm:$0xff]
    %v3386 = vld [vmem:[%s6 + $0x1c0] sm:$0xff]
    %v3387 = vld [vmem:[%s6 + $0x1c8] sm:$0xff]
    %v3388 = vld [vmem:[%s6 + $0x1d0] sm:$0xff]
    %v3389 = vld [vmem:[%s6 + $0x1d8] sm:$0xff]
    %v3390 = vld [vmem:[%s6 + $0x1e0] sm:$0xff]
    %v3391 = vld [vmem:[%s6 + $0x1e8] sm:$0xff]
    %v3392 = vld [vmem:[%s6 + $0x1f0] sm:$0xff]
    %v3393 = vld [vmem:[%s6 + $0x1f8] sm:$0xff]
    %v3394 = vld [vmem:[%s6 + $0x200] sm:$0xff]
    %v3395 = vld [vmem:[%s6 + $0x208] sm:$0xff]
    %v3396 = vld [vmem:[%s6 + $0x210] sm:$0xff]
    %v3397 = vld [vmem:[%s6 + $0x218] sm:$0xff]
    %v3398 = vld [vmem:[%s6 + $0x220] sm:$0xff]
    %v3399 = vld [vmem:[%s6 + $0x228] sm:$0xff]
    %v3400 = vld [vmem:[%s6 + $0x230] sm:$0xff]
    %v3401 = vld [vmem:[%s6 + $0x238] sm:$0xff]
    %3403 = vset.pattern.permute.xlu0 0
    %3404 = vperm.xlu0 %3403, %v3330
    %v3405 = vpop.permute.xlu0 %3404
    %3408 = vset.pattern.permute.xlu0 0
    %3409 = vperm.xlu0 %3408, %v3331
    %v3410 = vpop.permute.xlu0 %3409
    %3413 = vset.pattern.permute.xlu0 0
    %3414 = vperm.xlu0 %3413, %v3332
    %v3415 = vpop.permute.xlu0 %3414
    %3418 = vset.pattern.permute.xlu0 0
    %3419 = vperm.xlu0 %3418, %v3333
    %v3420 = vpop.permute.xlu0 %3419
    %3423 = vset.pattern.permute.xlu0 0
    %3424 = vperm.xlu0 %3423, %v3334
    %v3425 = vpop.permute.xlu0 %3424
    %3428 = vset.pattern.permute.xlu0 0
    %3429 = vperm.xlu0 %3428, %v3335
    %v3430 = vpop.permute.xlu0 %3429
    %3433 = vset.pattern.permute.xlu0 0
    %3434 = vperm.xlu0 %3433, %v3336
    %v3435 = vpop.permute.xlu0 %3434
    %3438 = vset.pattern.permute.xlu0 0
    %3439 = vperm.xlu0 %3438, %v3337
    %v3440 = vpop.permute.xlu0 %3439
    %3443 = vset.pattern.permute.xlu0 0
    %3444 = vperm.xlu0 %3443, %v3338
    %v3445 = vpop.permute.xlu0 %3444
    %3448 = vset.pattern.permute.xlu0 0
    %3449 = vperm.xlu0 %3448, %v3339
    %v3450 = vpop.permute.xlu0 %3449
    %3453 = vset.pattern.permute.xlu0 0
    %3454 = vperm.xlu0 %3453, %v3340
    %v3455 = vpop.permute.xlu0 %3454
    %3458 = vset.pattern.permute.xlu0 0
    %3459 = vperm.xlu0 %3458, %v3341
    %v3460 = vpop.permute.xlu0 %3459
    %3463 = vset.pattern.permute.xlu0 0
    %3464 = vperm.xlu0 %3463, %v3342
    %v3465 = vpop.permute.xlu0 %3464
    %3468 = vset.pattern.permute.xlu0 0
    %3469 = vperm.xlu0 %3468, %v3343
    %v3470 = vpop.permute.xlu0 %3469
    %3473 = vset.pattern.permute.xlu0 0
    %3474 = vperm.xlu0 %3473, %v3344
    %v3475 = vpop.permute.xlu0 %3474
    %3478 = vset.pattern.permute.xlu0 0
    %3479 = vperm.xlu0 %3478, %v3345
    %v3480 = vpop.permute.xlu0 %3479
    %3483 = vset.pattern.permute.xlu0 0
    %3484 = vperm.xlu0 %3483, %v3346
    %v3485 = vpop.permute.xlu0 %3484
    %3488 = vset.pattern.permute.xlu0 0
    %3489 = vperm.xlu0 %3488, %v3347
    %v3490 = vpop.permute.xlu0 %3489
    %3493 = vset.pattern.permute.xlu0 0
    %3494 = vperm.xlu0 %3493, %v3348
    %v3495 = vpop.permute.xlu0 %3494
    %3498 = vset.pattern.permute.xlu0 0
    %3499 = vperm.xlu0 %3498, %v3349
    %v3500 = vpop.permute.xlu0 %3499
    %3503 = vset.pattern.permute.xlu0 0
    %3504 = vperm.xlu0 %3503, %v3350
    %v3505 = vpop.permute.xlu0 %3504
    %3508 = vset.pattern.permute.xlu0 0
    %3509 = vperm.xlu0 %3508, %v3351
    %v3510 = vpop.permute.xlu0 %3509
    %3513 = vset.pattern.permute.xlu0 0
    %3514 = vperm.xlu0 %3513, %v3352
    %v3515 = vpop.permute.xlu0 %3514
    %3518 = vset.pattern.permute.xlu0 0
    %3519 = vperm.xlu0 %3518, %v3353
    %v3520 = vpop.permute.xlu0 %3519
    %3523 = vset.pattern.permute.xlu0 0
    %3524 = vperm.xlu0 %3523, %v3354
    %v3525 = vpop.permute.xlu0 %3524
    %3528 = vset.pattern.permute.xlu0 0
    %3529 = vperm.xlu0 %3528, %v3355
    %v3530 = vpop.permute.xlu0 %3529
    %3533 = vset.pattern.permute.xlu0 0
    %3534 = vperm.xlu0 %3533, %v3356
    %v3535 = vpop.permute.xlu0 %3534
    %3538 = vset.pattern.permute.xlu0 0
    %3539 = vperm.xlu0 %3538, %v3357
    %v3540 = vpop.permute.xlu0 %3539
    %3543 = vset.pattern.permute.xlu0 0
    %3544 = vperm.xlu0 %3543, %v3358
    %v3545 = vpop.permute.xlu0 %3544
    %3548 = vset.pattern.permute.xlu0 0
    %3549 = vperm.xlu0 %3548, %v3359
    %v3550 = vpop.permute.xlu0 %3549
    %3553 = vset.pattern.permute.xlu0 0
    %3554 = vperm.xlu0 %3553, %v3360
    %v3555 = vpop.permute.xlu0 %3554
    %3558 = vset.pattern.permute.xlu0 0
    %3559 = vperm.xlu0 %3558, %v3361
    %v3560 = vpop.permute.xlu0 %3559
    %3563 = vset.pattern.permute.xlu0 0
    %3564 = vperm.xlu0 %3563, %v3362
    %v3565 = vpop.permute.xlu0 %3564
    %3568 = vset.pattern.permute.xlu0 0
    %3569 = vperm.xlu0 %3568, %v3363
    %v3570 = vpop.permute.xlu0 %3569
    %3573 = vset.pattern.permute.xlu0 0
    %3574 = vperm.xlu0 %3573, %v3364
    %v3575 = vpop.permute.xlu0 %3574
    %3578 = vset.pattern.permute.xlu0 0
    %3579 = vperm.xlu0 %3578, %v3365
    %v3580 = vpop.permute.xlu0 %3579
    %3583 = vset.pattern.permute.xlu0 0
    %3584 = vperm.xlu0 %3583, %v3366
    %v3585 = vpop.permute.xlu0 %3584
    %3588 = vset.pattern.permute.xlu0 0
    %3589 = vperm.xlu0 %3588, %v3367
    %v3590 = vpop.permute.xlu0 %3589
    %3593 = vset.pattern.permute.xlu0 0
    %3594 = vperm.xlu0 %3593, %v3368
    %v3595 = vpop.permute.xlu0 %3594
    %3598 = vset.pattern.permute.xlu0 0
    %3599 = vperm.xlu0 %3598, %v3369
    %v3600 = vpop.permute.xlu0 %3599
    %3603 = vset.pattern.permute.xlu0 0
    %3604 = vperm.xlu0 %3603, %v3370
    %v3605 = vpop.permute.xlu0 %3604
    %3608 = vset.pattern.permute.xlu0 0
    %3609 = vperm.xlu0 %3608, %v3371
    %v3610 = vpop.permute.xlu0 %3609
    %3613 = vset.pattern.permute.xlu0 0
    %3614 = vperm.xlu0 %3613, %v3372
    %v3615 = vpop.permute.xlu0 %3614
    %3618 = vset.pattern.permute.xlu0 0
    %3619 = vperm.xlu0 %3618, %v3373
    %v3620 = vpop.permute.xlu0 %3619
    %3623 = vset.pattern.permute.xlu0 0
    %3624 = vperm.xlu0 %3623, %v3374
    %v3625 = vpop.permute.xlu0 %3624
    %3628 = vset.pattern.permute.xlu0 0
    %3629 = vperm.xlu0 %3628, %v3375
    %v3630 = vpop.permute.xlu0 %3629
    %3633 = vset.pattern.permute.xlu0 0
    %3634 = vperm.xlu0 %3633, %v3376
    %v3635 = vpop.permute.xlu0 %3634
    %3638 = vset.pattern.permute.xlu0 0
    %3639 = vperm.xlu0 %3638, %v3377
    %v3640 = vpop.permute.xlu0 %3639
    %3643 = vset.pattern.permute.xlu0 0
    %3644 = vperm.xlu0 %3643, %v3378
    %v3645 = vpop.permute.xlu0 %3644
    %3648 = vset.pattern.permute.xlu0 0
    %3649 = vperm.xlu0 %3648, %v3379
    %v3650 = vpop.permute.xlu0 %3649
    %3653 = vset.pattern.permute.xlu0 0
    %3654 = vperm.xlu0 %3653, %v3380
    %v3655 = vpop.permute.xlu0 %3654
    %3658 = vset.pattern.permute.xlu0 0
    %3659 = vperm.xlu0 %3658, %v3381
    %v3660 = vpop.permute.xlu0 %3659
    %3663 = vset.pattern.permute.xlu0 0
    %3664 = vperm.xlu0 %3663, %v3382
    %v3665 = vpop.permute.xlu0 %3664
    %3668 = vset.pattern.permute.xlu0 0
    %3669 = vperm.xlu0 %3668, %v3383
    %v3670 = vpop.permute.xlu0 %3669
    %3673 = vset.pattern.permute.xlu0 0
    %3674 = vperm.xlu0 %3673, %v3384
    %v3675 = vpop.permute.xlu0 %3674
    %3678 = vset.pattern.permute.xlu0 0
    %3679 = vperm.xlu0 %3678, %v3385
    %v3680 = vpop.permute.xlu0 %3679
    %3683 = vset.pattern.permute.xlu0 0
    %3684 = vperm.xlu0 %3683, %v3386
    %v3685 = vpop.permute.xlu0 %3684
    %3688 = vset.pattern.permute.xlu0 0
    %3689 = vperm.xlu0 %3688, %v3387
    %v3690 = vpop.permute.xlu0 %3689
    %3693 = vset.pattern.permute.xlu0 0
    %3694 = vperm.xlu0 %3693, %v3388
    %v3695 = vpop.permute.xlu0 %3694
    %3698 = vset.pattern.permute.xlu0 0
    %3699 = vperm.xlu0 %3698, %v3389
    %v3700 = vpop.permute.xlu0 %3699
    %3703 = vset.pattern.permute.xlu0 0
    %3704 = vperm.xlu0 %3703, %v3390
    %v3705 = vpop.permute.xlu0 %3704
    %3708 = vset.pattern.permute.xlu0 0
    %3709 = vperm.xlu0 %3708, %v3391
    %v3710 = vpop.permute.xlu0 %3709
    %3713 = vset.pattern.permute.xlu0 0
    %3714 = vperm.xlu0 %3713, %v3392
    %v3715 = vpop.permute.xlu0 %3714
    %3718 = vset.pattern.permute.xlu0 0
    %3719 = vperm.xlu0 %3718, %v3393
    %v3720 = vpop.permute.xlu0 %3719
    %3723 = vset.pattern.permute.xlu0 0
    %3724 = vperm.xlu0 %3723, %v3394
    %v3725 = vpop.permute.xlu0 %3724
    %3728 = vset.pattern.permute.xlu0 0
    %3729 = vperm.xlu0 %3728, %v3395
    %v3730 = vpop.permute.xlu0 %3729
    %3733 = vset.pattern.permute.xlu0 0
    %3734 = vperm.xlu0 %3733, %v3396
    %v3735 = vpop.permute.xlu0 %3734
    %3738 = vset.pattern.permute.xlu0 0
    %3739 = vperm.xlu0 %3738, %v3397
    %v3740 = vpop.permute.xlu0 %3739
    %3743 = vset.pattern.permute.xlu0 0
    %3744 = vperm.xlu0 %3743, %v3398
    %v3745 = vpop.permute.xlu0 %3744
    %3748 = vset.pattern.permute.xlu0 0
    %3749 = vperm.xlu0 %3748, %v3399
    %v3750 = vpop.permute.xlu0 %3749
    %3753 = vset.pattern.permute.xlu0 0
    %3754 = vperm.xlu0 %3753, %v3400
    %v3755 = vpop.permute.xlu0 %3754
    %3758 = vset.pattern.permute.xlu0 0
    %3759 = vperm.xlu0 %3758, %v3401
    %v3760 = vpop.permute.xlu0 %3759
    %v3906 = vunpack.c.l.b16 %v3154
    %v3907 = vunpack.c.h.b16 %v3154
    %v3908 = vunpack.c.l.b16 %v3155
    %v3909 = vunpack.c.h.b16 %v3155
    %v3910 = vunpack.c.l.b16 %v3156
    %v3911 = vunpack.c.h.b16 %v3156
    %v3912 = vunpack.c.l.b16 %v3157
    %v3913 = vunpack.c.h.b16 %v3157
    %v3914 = vunpack.c.l.b16 %v3158
    %v3915 = vunpack.c.h.b16 %v3158
    %v3916 = vunpack.c.l.b16 %v3159
    %v3917 = vunpack.c.h.b16 %v3159
    %v3918 = vunpack.c.l.b16 %v3160
    %v3919 = vunpack.c.h.b16 %v3160
    %v3920 = vunpack.c.l.b16 %v3161
    %v3921 = vunpack.c.h.b16 %v3161
    %v3922 = vunpack.c.l.b16 %v3162
    %v3923 = vunpack.c.h.b16 %v3162
    %v3924 = vunpack.c.l.b16 %v3163
    %v3925 = vunpack.c.h.b16 %v3163
    %v3926 = vunpack.c.l.b16 %v3164
    %v3927 = vunpack.c.h.b16 %v3164
    %v3928 = vunpack.c.l.b16 %v3165
    %v3929 = vunpack.c.h.b16 %v3165
    %v3930 = vunpack.c.l.b16 %v3166
    %v3931 = vunpack.c.h.b16 %v3166
    %v3932 = vunpack.c.l.b16 %v3167
    %v3933 = vunpack.c.h.b16 %v3167
    %v3934 = vunpack.c.l.b16 %v3168
    %v3935 = vunpack.c.h.b16 %v3168
    %v3936 = vunpack.c.l.b16 %v3169
    %v3937 = vunpack.c.h.b16 %v3169
    %v3938 = vunpack.c.l.b16 %v3170
    %v3939 = vunpack.c.h.b16 %v3170
    %v3940 = vunpack.c.l.b16 %v3171
    %v3941 = vunpack.c.h.b16 %v3171
    %v3942 = vunpack.c.l.b16 %v3172
    %v3943 = vunpack.c.h.b16 %v3172
    %v3944 = vunpack.c.l.b16 %v3173
    %v3945 = vunpack.c.h.b16 %v3173
    %v3946 = vunpack.c.l.b16 %v3174
    %v3947 = vunpack.c.h.b16 %v3174
    %v3948 = vunpack.c.l.b16 %v3175
    %v3949 = vunpack.c.h.b16 %v3175
    %v3950 = vunpack.c.l.b16 %v3176
    %v3951 = vunpack.c.h.b16 %v3176
    %v3952 = vunpack.c.l.b16 %v3177
    %v3953 = vunpack.c.h.b16 %v3177
    %v3954 = vunpack.c.l.b16 %v3178
    %v3955 = vunpack.c.h.b16 %v3178
    %v3956 = vunpack.c.l.b16 %v3179
    %v3957 = vunpack.c.h.b16 %v3179
    %v3958 = vunpack.c.l.b16 %v3180
    %v3959 = vunpack.c.h.b16 %v3180
    %v3960 = vunpack.c.l.b16 %v3181
    %v3961 = vunpack.c.h.b16 %v3181
    %v3962 = vunpack.c.l.b16 %v3182
    %v3963 = vunpack.c.h.b16 %v3182
    %v3964 = vunpack.c.l.b16 %v3183
    %v3965 = vunpack.c.h.b16 %v3183
    %v3966 = vunpack.c.l.b16 %v3184
    %v3967 = vunpack.c.h.b16 %v3184
    %v3968 = vunpack.c.l.b16 %v3185
    %v3969 = vunpack.c.h.b16 %v3185
    %v3970 = vunpack.c.l.b16 %v3186
    %v3971 = vunpack.c.h.b16 %v3186
    %v3972 = vunpack.c.l.b16 %v3187
    %v3973 = vunpack.c.h.b16 %v3187
    %v3974 = vunpack.c.l.b16 %v3188
    %v3975 = vunpack.c.h.b16 %v3188
    %v3976 = vunpack.c.l.b16 %v3189
    %v3977 = vunpack.c.h.b16 %v3189
    %v3978 = vunpack.c.l.b16 %v3190
    %v3979 = vunpack.c.h.b16 %v3190
    %v3980 = vunpack.c.l.b16 %v3191
    %v3981 = vunpack.c.h.b16 %v3191
    %v3982 = vunpack.c.l.b16 %v3192
    %v3983 = vunpack.c.h.b16 %v3192
    %v3984 = vunpack.c.l.b16 %v3193
    %v3985 = vunpack.c.h.b16 %v3193
    %v3986 = vunpack.c.l.b16 %v3194
    %v3987 = vunpack.c.h.b16 %v3194
    %v3988 = vunpack.c.l.b16 %v3195
    %v3989 = vunpack.c.h.b16 %v3195
    %v3990 = vunpack.c.l.b16 %v3196
    %v3991 = vunpack.c.h.b16 %v3196
    %v3992 = vunpack.c.l.b16 %v3197
    %v3993 = vunpack.c.h.b16 %v3197
    %v3994 = vunpack.c.l.b16 %v3198
    %v3995 = vunpack.c.h.b16 %v3198
    %v3996 = vunpack.c.l.b16 %v3199
    %v3997 = vunpack.c.h.b16 %v3199
    %v3998 = vunpack.c.l.b16 %v3200
    %v3999 = vunpack.c.h.b16 %v3200
    %v4000 = vunpack.c.l.b16 %v3201
    %v4001 = vunpack.c.h.b16 %v3201
    %v4002 = vunpack.c.l.b16 %v3202
    %v4003 = vunpack.c.h.b16 %v3202
    %v4004 = vunpack.c.l.b16 %v3203
    %v4005 = vunpack.c.h.b16 %v3203
    %v4006 = vunpack.c.l.b16 %v3204
    %v4007 = vunpack.c.h.b16 %v3204
    %v4008 = vunpack.c.l.b16 %v3205
    %v4009 = vunpack.c.h.b16 %v3205
    %v4010 = vunpack.c.l.b16 %v3206
    %v4011 = vunpack.c.h.b16 %v3206
    %v4012 = vunpack.c.l.b16 %v3207
    %v4013 = vunpack.c.h.b16 %v3207
    %v4014 = vunpack.c.l.b16 %v3208
    %v4015 = vunpack.c.h.b16 %v3208
    %v4016 = vunpack.c.l.b16 %v3209
    %v4017 = vunpack.c.h.b16 %v3209
    %v4018 = vunpack.c.l.b16 %v3210
    %v4019 = vunpack.c.h.b16 %v3210
    %v4020 = vunpack.c.l.b16 %v3211
    %v4021 = vunpack.c.h.b16 %v3211
    %v4022 = vunpack.c.l.b16 %v3212
    %v4023 = vunpack.c.h.b16 %v3212
    %v4024 = vunpack.c.l.b16 %v3213
    %v4025 = vunpack.c.h.b16 %v3213
    %v4026 = vunpack.c.l.b16 %v3214
    %v4027 = vunpack.c.h.b16 %v3214
    %v4028 = vunpack.c.l.b16 %v3215
    %v4029 = vunpack.c.h.b16 %v3215
    %v4030 = vunpack.c.l.b16 %v3216
    %v4031 = vunpack.c.h.b16 %v3216
    %v4032 = vunpack.c.l.b16 %v3217
    %v4033 = vunpack.c.h.b16 %v3217
    %v4034 = vunpack.c.l.b16 %v3218
    %v4035 = vunpack.c.h.b16 %v3218
    %v4036 = vunpack.c.l.b16 %v3219
    %v4037 = vunpack.c.h.b16 %v3219
    %v4038 = vunpack.c.l.b16 %v3220
    %v4039 = vunpack.c.h.b16 %v3220
    %v4040 = vunpack.c.l.b16 %v3221
    %v4041 = vunpack.c.h.b16 %v3221
    %v4042 = vunpack.c.l.b16 %v3222
    %v4043 = vunpack.c.h.b16 %v3222
    %v4044 = vunpack.c.l.b16 %v3223
    %v4045 = vunpack.c.h.b16 %v3223
    %v4046 = vunpack.c.l.b16 %v3224
    %v4047 = vunpack.c.h.b16 %v3224
    %v4048 = vunpack.c.l.b16 %v3225
    %v4049 = vunpack.c.h.b16 %v3225
    %v4050 = vunpack.c.l.b16 %v3226
    %v4051 = vunpack.c.h.b16 %v3226
    %v4052 = vunpack.c.l.b16 %v3227
    %v4053 = vunpack.c.h.b16 %v3227
    %v4054 = vunpack.c.l.b16 %v3228
    %v4055 = vunpack.c.h.b16 %v3228
    %v4056 = vunpack.c.l.b16 %v3229
    %v4057 = vunpack.c.h.b16 %v3229
    %v4058 = vunpack.c.l.b16 %v3230
    %v4059 = vunpack.c.h.b16 %v3230
    %v4060 = vunpack.c.l.b16 %v3231
    %v4061 = vunpack.c.h.b16 %v3231
    %v4062 = vunpack.c.l.b16 %v3232
    %v4063 = vunpack.c.h.b16 %v3232
    %v4064 = vunpack.c.l.b16 %v3233
    %v4065 = vunpack.c.h.b16 %v3233
    %v4066 = vunpack.c.l.b16 %v3234
    %v4067 = vunpack.c.h.b16 %v3234
    %v4068 = vunpack.c.l.b16 %v3235
    %v4069 = vunpack.c.h.b16 %v3235
    %v4070 = vunpack.c.l.b16 %v3236
    %v4071 = vunpack.c.h.b16 %v3236
    %v4072 = vunpack.c.l.b16 %v3237
    %v4073 = vunpack.c.h.b16 %v3237
    %v4074 = vunpack.c.l.b16 %v3238
    %v4075 = vunpack.c.h.b16 %v3238
    %v4076 = vunpack.c.l.b16 %v3239
    %v4077 = vunpack.c.h.b16 %v3239
    %v4078 = vunpack.c.l.b16 %v3240
    %v4079 = vunpack.c.h.b16 %v3240
    %v4080 = vunpack.c.l.b16 %v3241
    %v4081 = vunpack.c.h.b16 %v3241
    %v4082 = vunpack.c.l.b16 %v3242
    %v4083 = vunpack.c.h.b16 %v3242
    %v4084 = vunpack.c.l.b16 %v3243
    %v4085 = vunpack.c.h.b16 %v3243
    %v4086 = vunpack.c.l.b16 %v3244
    %v4087 = vunpack.c.h.b16 %v3244
    %v4088 = vunpack.c.l.b16 %v3245
    %v4089 = vunpack.c.h.b16 %v3245
    %v4090 = vunpack.c.l.b16 %v3246
    %v4091 = vunpack.c.h.b16 %v3246
    %v4092 = vunpack.c.l.b16 %v3247
    %v4093 = vunpack.c.h.b16 %v3247
    %v4094 = vunpack.c.l.b16 %v3248
    %v4095 = vunpack.c.h.b16 %v3248
    %v4096 = vunpack.c.l.b16 %v3249
    %v4097 = vunpack.c.h.b16 %v3249
    %v4098 = vunpack.c.l.b16 %v3250
    %v4099 = vunpack.c.h.b16 %v3250
    %v4100 = vunpack.c.l.b16 %v3251
    %v4101 = vunpack.c.h.b16 %v3251
    %v4102 = vunpack.c.l.b16 %v3252
    %v4103 = vunpack.c.h.b16 %v3252
    %v4104 = vunpack.c.l.b16 %v3253
    %v4105 = vunpack.c.h.b16 %v3253
    %v4106 = vunpack.c.l.b16 %v3254
    %v4107 = vunpack.c.h.b16 %v3254
    %v4108 = vunpack.c.l.b16 %v3255
    %v4109 = vunpack.c.h.b16 %v3255
    %v4110 = vunpack.c.l.b16 %v3256
    %v4111 = vunpack.c.h.b16 %v3256
    %v4112 = vunpack.c.l.b16 %v3257
    %v4113 = vunpack.c.h.b16 %v3257
    %v4114 = vunpack.c.l.b16 %v3258
    %v4115 = vunpack.c.h.b16 %v3258
    %v4116 = vunpack.c.l.b16 %v3259
    %v4117 = vunpack.c.h.b16 %v3259
    %v4118 = vunpack.c.l.b16 %v3260
    %v4119 = vunpack.c.h.b16 %v3260
    %v4120 = vunpack.c.l.b16 %v3261
    %v4121 = vunpack.c.h.b16 %v3261
    %v4122 = vunpack.c.l.b16 %v3262
    %v4123 = vunpack.c.h.b16 %v3262
    %v4124 = vunpack.c.l.b16 %v3263
    %v4125 = vunpack.c.h.b16 %v3263
    %v4126 = vunpack.c.l.b16 %v3264
    %v4127 = vunpack.c.h.b16 %v3264
    %v4128 = vunpack.c.l.b16 %v3265
    %v4129 = vunpack.c.h.b16 %v3265
    %v4130 = vunpack.c.l.b16 %v3266
    %v4131 = vunpack.c.h.b16 %v3266
    %v4132 = vunpack.c.l.b16 %v3267
    %v4133 = vunpack.c.h.b16 %v3267
    %v4134 = vunpack.c.l.b16 %v3268
    %v4135 = vunpack.c.h.b16 %v3268
    %v4136 = vunpack.c.l.b16 %v3269
    %v4137 = vunpack.c.h.b16 %v3269
    %v4138 = vunpack.c.l.b16 %v3270
    %v4139 = vunpack.c.h.b16 %v3270
    %v4140 = vunpack.c.l.b16 %v3271
    %v4141 = vunpack.c.h.b16 %v3271
    %v4142 = vunpack.c.l.b16 %v3272
    %v4143 = vunpack.c.h.b16 %v3272
    %v4144 = vunpack.c.l.b16 %v3273
    %v4145 = vunpack.c.h.b16 %v3273
    %v4146 = vunpack.c.l.b16 %v3274
    %v4147 = vunpack.c.h.b16 %v3274
    %v4148 = vunpack.c.l.b16 %v3275
    %v4149 = vunpack.c.h.b16 %v3275
    %v4150 = vunpack.c.l.b16 %v3276
    %v4151 = vunpack.c.h.b16 %v3276
    %v4152 = vunpack.c.l.b16 %v3277
    %v4153 = vunpack.c.h.b16 %v3277
    %v4154 = vunpack.c.l.b16 %v3278
    %v4155 = vunpack.c.h.b16 %v3278
    %v4156 = vunpack.c.l.b16 %v3279
    %v4157 = vunpack.c.h.b16 %v3279
    %v4158 = vunpack.c.l.b16 %v3280
    %v4159 = vunpack.c.h.b16 %v3280
    %v4160 = vunpack.c.l.b16 %v3281
    %v4161 = vunpack.c.h.b16 %v3281
    %v4162 = vunpack.c.l.b16 %v3282
    %v4163 = vunpack.c.h.b16 %v3282
    %v4164 = vunpack.c.l.b16 %v3283
    %v4165 = vunpack.c.h.b16 %v3283
    %v4166 = vunpack.c.l.b16 %v3284
    %v4167 = vunpack.c.h.b16 %v3284
    %v4168 = vunpack.c.l.b16 %v3285
    %v4169 = vunpack.c.h.b16 %v3285
    %v4170 = vunpack.c.l.b16 %v3286
    %v4171 = vunpack.c.h.b16 %v3286
    %v4172 = vunpack.c.l.b16 %v3287
    %v4173 = vunpack.c.h.b16 %v3287
    %v4174 = vunpack.c.l.b16 %v3288
    %v4175 = vunpack.c.h.b16 %v3288
    %v4176 = vunpack.c.l.b16 %v3289
    %v4177 = vunpack.c.h.b16 %v3289
    %v4178 = vunpack.c.l.b16 %v3290
    %v4179 = vunpack.c.h.b16 %v3290
    %v4180 = vunpack.c.l.b16 %v3291
    %v4181 = vunpack.c.h.b16 %v3291
    %v4182 = vunpack.c.l.b16 %v3292
    %v4183 = vunpack.c.h.b16 %v3292
    %v4184 = vunpack.c.l.b16 %v3293
    %v4185 = vunpack.c.h.b16 %v3293
    %v4186 = vunpack.c.l.b16 %v3294
    %v4187 = vunpack.c.h.b16 %v3294
    %v4188 = vunpack.c.l.b16 %v3295
    %v4189 = vunpack.c.h.b16 %v3295
    %v4190 = vunpack.c.l.b16 %v3296
    %v4191 = vunpack.c.h.b16 %v3296
    %v4192 = vunpack.c.l.b16 %v3297
    %v4193 = vunpack.c.h.b16 %v3297
    %v4194 = vpack.c.b16 %v3910, %v3906
    %v4195 = vpack.c.b16 %v3911, %v3907
    %v4196 = vpack.c.b16 %v3912, %v3908
    %v4197 = vpack.c.b16 %v3913, %v3909
    %v4198 = vpack.c.b16 %v3918, %v3914
    %v4199 = vpack.c.b16 %v3919, %v3915
    %v4200 = vpack.c.b16 %v3920, %v3916
    %v4201 = vpack.c.b16 %v3921, %v3917
    %v4202 = vpack.c.b16 %v3926, %v3922
    %v4203 = vpack.c.b16 %v3927, %v3923
    %v4204 = vpack.c.b16 %v3928, %v3924
    %v4205 = vpack.c.b16 %v3929, %v3925
    %v4206 = vpack.c.b16 %v3934, %v3930
    %v4207 = vpack.c.b16 %v3935, %v3931
    %v4208 = vpack.c.b16 %v3936, %v3932
    %v4209 = vpack.c.b16 %v3937, %v3933
    %v4210 = vpack.c.b16 %v3942, %v3938
    %v4211 = vpack.c.b16 %v3943, %v3939
    %v4212 = vpack.c.b16 %v3944, %v3940
    %v4213 = vpack.c.b16 %v3945, %v3941
    %v4214 = vpack.c.b16 %v3950, %v3946
    %v4215 = vpack.c.b16 %v3951, %v3947
    %v4216 = vpack.c.b16 %v3952, %v3948
    %v4217 = vpack.c.b16 %v3953, %v3949
    %v4218 = vpack.c.b16 %v3958, %v3954
    %v4219 = vpack.c.b16 %v3959, %v3955
    %v4220 = vpack.c.b16 %v3960, %v3956
    %v4221 = vpack.c.b16 %v3961, %v3957
    %v4222 = vpack.c.b16 %v3966, %v3962
    %v4223 = vpack.c.b16 %v3967, %v3963
    %v4224 = vpack.c.b16 %v3968, %v3964
    %v4225 = vpack.c.b16 %v3969, %v3965
    %v4226 = vpack.c.b16 %v3974, %v3970
    %v4227 = vpack.c.b16 %v3975, %v3971
    %v4228 = vpack.c.b16 %v3976, %v3972
    %v4229 = vpack.c.b16 %v3977, %v3973
    %v4230 = vpack.c.b16 %v3982, %v3978
    %v4231 = vpack.c.b16 %v3983, %v3979
    %v4232 = vpack.c.b16 %v3984, %v3980
    %v4233 = vpack.c.b16 %v3985, %v3981
    %v4234 = vpack.c.b16 %v3990, %v3986
    %v4235 = vpack.c.b16 %v3991, %v3987
    %v4236 = vpack.c.b16 %v3992, %v3988
    %v4237 = vpack.c.b16 %v3993, %v3989
    %v4238 = vpack.c.b16 %v3998, %v3994
    %v4239 = vpack.c.b16 %v3999, %v3995
    %v4240 = vpack.c.b16 %v4000, %v3996
    %v4241 = vpack.c.b16 %v4001, %v3997
    %v4242 = vpack.c.b16 %v4006, %v4002
    %v4243 = vpack.c.b16 %v4007, %v4003
    %v4244 = vpack.c.b16 %v4008, %v4004
    %v4245 = vpack.c.b16 %v4009, %v4005
    %v4246 = vpack.c.b16 %v4014, %v4010
    %v4247 = vpack.c.b16 %v4015, %v4011
    %v4248 = vpack.c.b16 %v4016, %v4012
    %v4249 = vpack.c.b16 %v4017, %v4013
    %v4250 = vpack.c.b16 %v4022, %v4018
    %v4251 = vpack.c.b16 %v4023, %v4019
    %v4252 = vpack.c.b16 %v4024, %v4020
    %v4253 = vpack.c.b16 %v4025, %v4021
    %v4254 = vpack.c.b16 %v4030, %v4026
    %v4255 = vpack.c.b16 %v4031, %v4027
    %v4256 = vpack.c.b16 %v4032, %v4028
    %v4257 = vpack.c.b16 %v4033, %v4029
    %v4258 = vpack.c.b16 %v4038, %v4034
    %v4259 = vpack.c.b16 %v4039, %v4035
    %v4260 = vpack.c.b16 %v4040, %v4036
    %v4261 = vpack.c.b16 %v4041, %v4037
    %v4262 = vpack.c.b16 %v4046, %v4042
    %v4263 = vpack.c.b16 %v4047, %v4043
    %v4264 = vpack.c.b16 %v4048, %v4044
    %v4265 = vpack.c.b16 %v4049, %v4045
    %v4266 = vpack.c.b16 %v4054, %v4050
    %v4267 = vpack.c.b16 %v4055, %v4051
    %v4268 = vpack.c.b16 %v4056, %v4052
    %v4269 = vpack.c.b16 %v4057, %v4053
    %v4270 = vpack.c.b16 %v4062, %v4058
    %v4271 = vpack.c.b16 %v4063, %v4059
    %v4272 = vpack.c.b16 %v4064, %v4060
    %v4273 = vpack.c.b16 %v4065, %v4061
    %v4274 = vpack.c.b16 %v4070, %v4066
    %v4275 = vpack.c.b16 %v4071, %v4067
    %v4276 = vpack.c.b16 %v4072, %v4068
    %v4277 = vpack.c.b16 %v4073, %v4069
    %v4278 = vpack.c.b16 %v4078, %v4074
    %v4279 = vpack.c.b16 %v4079, %v4075
    %v4280 = vpack.c.b16 %v4080, %v4076
    %v4281 = vpack.c.b16 %v4081, %v4077
    %v4282 = vpack.c.b16 %v4086, %v4082
    %v4283 = vpack.c.b16 %v4087, %v4083
    %v4284 = vpack.c.b16 %v4088, %v4084
    %v4285 = vpack.c.b16 %v4089, %v4085
    %v4286 = vpack.c.b16 %v4094, %v4090
    %v4287 = vpack.c.b16 %v4095, %v4091
    %v4288 = vpack.c.b16 %v4096, %v4092
    %v4289 = vpack.c.b16 %v4097, %v4093
    %v4290 = vpack.c.b16 %v4102, %v4098
    %v4291 = vpack.c.b16 %v4103, %v4099
    %v4292 = vpack.c.b16 %v4104, %v4100
    %v4293 = vpack.c.b16 %v4105, %v4101
    %v4294 = vpack.c.b16 %v4110, %v4106
    %v4295 = vpack.c.b16 %v4111, %v4107
    %v4296 = vpack.c.b16 %v4112, %v4108
    %v4297 = vpack.c.b16 %v4113, %v4109
    %v4298 = vpack.c.b16 %v4118, %v4114
    %v4299 = vpack.c.b16 %v4119, %v4115
    %v4300 = vpack.c.b16 %v4120, %v4116
    %v4301 = vpack.c.b16 %v4121, %v4117
    %v4302 = vpack.c.b16 %v4126, %v4122
    %v4303 = vpack.c.b16 %v4127, %v4123
    %v4304 = vpack.c.b16 %v4128, %v4124
    %v4305 = vpack.c.b16 %v4129, %v4125
    %v4306 = vpack.c.b16 %v4134, %v4130
    %v4307 = vpack.c.b16 %v4135, %v4131
    %v4308 = vpack.c.b16 %v4136, %v4132
    %v4309 = vpack.c.b16 %v4137, %v4133
    %v4310 = vpack.c.b16 %v4142, %v4138
    %v4311 = vpack.c.b16 %v4143, %v4139
    %v4312 = vpack.c.b16 %v4144, %v4140
    %v4313 = vpack.c.b16 %v4145, %v4141
    %v4314 = vpack.c.b16 %v4150, %v4146
    %v4315 = vpack.c.b16 %v4151, %v4147
    %v4316 = vpack.c.b16 %v4152, %v4148
    %v4317 = vpack.c.b16 %v4153, %v4149
    %v4318 = vpack.c.b16 %v4158, %v4154
    %v4319 = vpack.c.b16 %v4159, %v4155
    %v4320 = vpack.c.b16 %v4160, %v4156
    %v4321 = vpack.c.b16 %v4161, %v4157
    %v4322 = vpack.c.b16 %v4166, %v4162
    %v4323 = vpack.c.b16 %v4167, %v4163
    %v4324 = vpack.c.b16 %v4168, %v4164
    %v4325 = vpack.c.b16 %v4169, %v4165
    %v4326 = vpack.c.b16 %v4174, %v4170
    %v4327 = vpack.c.b16 %v4175, %v4171
    %v4328 = vpack.c.b16 %v4176, %v4172
    %v4329 = vpack.c.b16 %v4177, %v4173
    %v4330 = vpack.c.b16 %v4182, %v4178
    %v4331 = vpack.c.b16 %v4183, %v4179
    %v4332 = vpack.c.b16 %v4184, %v4180
    %v4333 = vpack.c.b16 %v4185, %v4181
    %v4334 = vpack.c.b16 %v4190, %v4186
    %v4335 = vpack.c.b16 %v4191, %v4187
    %v4336 = vpack.c.b16 %v4192, %v4188
    %v4337 = vpack.c.b16 %v4193, %v4189
    %4482 = vmatprep.subr.bf16.mxu0 0
    %4483 = vmatpush1.bf16.msra.mxu0 %v3298
    %4484 = vmatprep.subr.bf16.mxu0 0
    %4485 = vmatpush1.bf16.msra.mxu0 %v3299
    %4486 = vmatprep.subr.bf16.mxu0 0
    %4487 = vmatpush1.bf16.msra.mxu0 %v3300
    %4488 = vmatprep.subr.bf16.mxu0 0
    %4489 = vmatpush1.bf16.msra.mxu0 %v3301
    %4490 = vmatprep.subr.bf16.mxu0 0
    %4491 = vmatpush1.bf16.msra.mxu0 %v3302
    %4492 = vmatprep.subr.bf16.mxu0 0
    %4493 = vmatpush1.bf16.msra.mxu0 %v3303
    %4494 = vmatprep.subr.bf16.mxu0 0
    %4495 = vmatpush1.bf16.msra.mxu0 %v3304
    %4496 = vmatprep.subr.bf16.mxu0 0
    %4497 = vmatpush1.bf16.msra.mxu0 %v3305
    %4498 = vmatprep.subr.bf16.mxu0 0
    %4499 = vmatpush1.bf16.msra.mxu0 %v3306
    %4500 = vmatprep.subr.bf16.mxu0 0
    %4501 = vmatpush1.bf16.msra.mxu0 %v3307
    %4502 = vmatprep.subr.bf16.mxu0 0
    %4503 = vmatpush1.bf16.msra.mxu0 %v3308
    %4504 = vmatprep.subr.bf16.mxu0 0
    %4505 = vmatpush1.bf16.msra.mxu0 %v3309
    %4506 = vmatprep.subr.bf16.mxu0 0
    %4507 = vmatpush1.bf16.msra.mxu0 %v3310
    %4508 = vmatprep.subr.bf16.mxu0 0
    %4509 = vmatpush1.bf16.msra.mxu0 %v3311
    %4510 = vmatprep.subr.bf16.mxu0 0
    %4511 = vmatpush1.bf16.msra.mxu0 %v3312
    %4512 = vmatprep.subr.bf16.mxu0 0
    %4513 = vmatpush1.bf16.msra.mxu0 %v3313
    %4514 = vmatprep.mubr.bf16.mxu0 %v4195
    %4515 = vmatmul.mubr.bf16.gmra.mrb[0].mxu0 %v4194
    %v4516 = vpop.f32.mrb[0].mxu0
    %v4517 = vadd.f32 %v3405, %v4516
    %v4518 = vpop.f32.mrb[0].mxu0
    %v4519 = vpop.f32.mrb[0].mxu0
    %v4520 = vadd.f32 %v3410, %v4519
    %v4521 = vpop.f32.mrb[0].mxu0
    %4522 = vmatprep.mubr.bf16.mxu0 %v4199
    %4523 = vmatmul.mubr.bf16.gmra.mrb[0].mxu0 %v4198
    %v4524 = vpop.f32.mrb[0].mxu0
    %v4525 = vadd.f32 %v3415, %v4524
    %v4526 = vpop.f32.mrb[0].mxu0
    %v4527 = vpop.f32.mrb[0].mxu0
    %v4528 = vadd.f32 %v3420, %v4527
    %v4529 = vpop.f32.mrb[0].mxu0
    %4530 = vmatprep.mubr.bf16.mxu0 %v4203
    %4531 = vmatmul.mubr.bf16.gmra.mrb[0].mxu0 %v4202
    %v4532 = vpop.f32.mrb[0].mxu0
    %v4533 = vadd.f32 %v3425, %v4532
    %v4534 = vpop.f32.mrb[0].mxu0
    %v4535 = vpop.f32.mrb[0].mxu0
    %v4536 = vadd.f32 %v3430, %v4535
    %v4537 = vpop.f32.mrb[0].mxu0
    %4538 = vmatprep.mubr.bf16.mxu0 %v4207
    %4539 = vmatmul.mubr.bf16.gmra.mrb[0].mxu0 %v4206
    %v4540 = vpop.f32.mrb[0].mxu0
    %v4541 = vadd.f32 %v3435, %v4540
    %v4542 = vpop.f32.mrb[0].mxu0
    %v4543 = vpop.f32.mrb[0].mxu0
    %v4544 = vadd.f32 %v3440, %v4543
    %v4545 = vpop.f32.mrb[0].mxu0
    %4546 = vmatprep.mubr.bf16.mxu0 %v4211
    %4547 = vmatmul.mubr.bf16.gmra.mrb[0].mxu0 %v4210
    %v4548 = vpop.f32.mrb[0].mxu0
    %v4549 = vadd.f32 %v3445, %v4548
    %v4550 = vpop.f32.mrb[0].mxu0
    %v4551 = vpop.f32.mrb[0].mxu0
    %v4552 = vadd.f32 %v3450, %v4551
    %v4553 = vpop.f32.mrb[0].mxu0
    %4554 = vmatprep.mubr.bf16.mxu0 %v4215
    %4555 = vmatmul.mubr.bf16.gmra.mrb[0].mxu0 %v4214
    %v4556 = vpop.f32.mrb[0].mxu0
    %v4557 = vadd.f32 %v3455, %v4556
    %v4558 = vpop.f32.mrb[0].mxu0
    %v4559 = vpop.f32.mrb[0].mxu0
    %v4560 = vadd.f32 %v3460, %v4559
    %v4561 = vpop.f32.mrb[0].mxu0
    %4562 = vmatprep.mubr.bf16.mxu0 %v4219
    %4563 = vmatmul.mubr.bf16.gmra.mrb[0].mxu0 %v4218
    %v4564 = vpop.f32.mrb[0].mxu0
    %v4565 = vadd.f32 %v3465, %v4564
    %v4566 = vpop.f32.mrb[0].mxu0
    %v4567 = vpop.f32.mrb[0].mxu0
    %v4568 = vadd.f32 %v3470, %v4567
    %v4569 = vpop.f32.mrb[0].mxu0
    %4570 = vmatprep.mubr.bf16.mxu0 %v4223
    %4571 = vmatmul.mubr.bf16.gmra.mrb[0].mxu0 %v4222
    %v4572 = vpop.f32.mrb[0].mxu0
    %v4573 = vadd.f32 %v3475, %v4572
    %v4574 = vpop.f32.mrb[0].mxu0
    %v4575 = vpop.f32.mrb[0].mxu0
    %v4576 = vadd.f32 %v3480, %v4575
    %v4577 = vpop.f32.mrb[0].mxu0
    %4578 = vmatprep.mubr.bf16.mxu0 %v4227
    %4579 = vmatmul.mubr.bf16.gmra.mrb[0].mxu0 %v4226
    %v4580 = vpop.f32.mrb[0].mxu0
    %v4581 = vadd.f32 %v3485, %v4580
    %v4582 = vpop.f32.mrb[0].mxu0
    %v4583 = vpop.f32.mrb[0].mxu0
    %v4584 = vadd.f32 %v3490, %v4583
    %v4585 = vpop.f32.mrb[0].mxu0
    %4586 = vmatprep.mubr.bf16.mxu0 %v4231
    %4587 = vmatmul.mubr.bf16.gmra.mrb[0].mxu0 %v4230
    %v4588 = vpop.f32.mrb[0].mxu0
    %v4589 = vadd.f32 %v3495, %v4588
    %v4590 = vpop.f32.mrb[0].mxu0
    %v4591 = vpop.f32.mrb[0].mxu0
    %v4592 = vadd.f32 %v3500, %v4591
    %v4593 = vpop.f32.mrb[0].mxu0
    %4594 = vmatprep.mubr.bf16.mxu0 %v4235
    %4595 = vmatmul.mubr.bf16.gmra.mrb[0].mxu0 %v4234
    %v4596 = vpop.f32.mrb[0].mxu0
    %v4597 = vadd.f32 %v3505, %v4596
    %v4598 = vpop.f32.mrb[0].mxu0
    %v4599 = vpop.f32.mrb[0].mxu0
    %v4600 = vadd.f32 %v3510, %v4599
    %v4601 = vpop.f32.mrb[0].mxu0
    %4602 = vmatprep.mubr.bf16.mxu0 %v4239
    %4603 = vmatmul.mubr.bf16.gmra.mrb[0].mxu0 %v4238
    %v4604 = vpop.f32.mrb[0].mxu0
    %v4605 = vadd.f32 %v3515, %v4604
    %v4606 = vpop.f32.mrb[0].mxu0
    %v4607 = vpop.f32.mrb[0].mxu0
    %v4608 = vadd.f32 %v3520, %v4607
    %v4609 = vpop.f32.mrb[0].mxu0
    %4610 = vmatprep.mubr.bf16.mxu0 %v4243
    %4611 = vmatmul.mubr.bf16.gmra.mrb[0].mxu0 %v4242
    %v4612 = vpop.f32.mrb[0].mxu0
    %v4613 = vadd.f32 %v3525, %v4612
    %v4614 = vpop.f32.mrb[0].mxu0
    %v4615 = vpop.f32.mrb[0].mxu0
    %v4616 = vadd.f32 %v3530, %v4615
    %v4617 = vpop.f32.mrb[0].mxu0
    %4618 = vmatprep.mubr.bf16.mxu0 %v4247
    %4619 = vmatmul.mubr.bf16.gmra.mrb[0].mxu0 %v4246
    %v4620 = vpop.f32.mrb[0].mxu0
    %v4621 = vadd.f32 %v3535, %v4620
    %v4622 = vpop.f32.mrb[0].mxu0
    %v4623 = vpop.f32.mrb[0].mxu0
    %v4624 = vadd.f32 %v3540, %v4623
    %v4625 = vpop.f32.mrb[0].mxu0
    %4626 = vmatprep.mubr.bf16.mxu0 %v4251
    %4627 = vmatmul.mubr.bf16.gmra.mrb[0].mxu0 %v4250
    %v4628 = vpop.f32.mrb[0].mxu0
    %v4629 = vadd.f32 %v3545, %v4628
    %v4630 = vpop.f32.mrb[0].mxu0
    %v4631 = vpop.f32.mrb[0].mxu0
    %v4632 = vadd.f32 %v3550, %v4631
    %v4633 = vpop.f32.mrb[0].mxu0
    %4634 = vmatprep.mubr.bf16.mxu0 %v4255
    %4635 = vmatmul.mubr.bf16.gmra.mrb[0].mxu0 %v4254
    %v4636 = vpop.f32.mrb[0].mxu0
    %v4637 = vadd.f32 %v3555, %v4636
    %v4638 = vpop.f32.mrb[0].mxu0
    %v4639 = vpop.f32.mrb[0].mxu0
    %v4640 = vadd.f32 %v3560, %v4639
    %v4641 = vpop.f32.mrb[0].mxu0
    %4642 = vmatprep.mubr.bf16.mxu0 %v4259
    %4643 = vmatmul.mubr.bf16.gmra.mrb[0].mxu0 %v4258
    %v4644 = vpop.f32.mrb[0].mxu0
    %v4645 = vadd.f32 %v3565, %v4644
    %v4646 = vpop.f32.mrb[0].mxu0
    %v4647 = vpop.f32.mrb[0].mxu0
    %v4648 = vadd.f32 %v3570, %v4647
    %v4649 = vpop.f32.mrb[0].mxu0
    %4650 = vmatprep.mubr.bf16.mxu0 %v4263
    %4651 = vmatmul.mubr.bf16.gmra.mrb[0].mxu0 %v4262
    %v4652 = vpop.f32.mrb[0].mxu0
    %v4653 = vadd.f32 %v3575, %v4652
    %v4654 = vpop.f32.mrb[0].mxu0
    %v4655 = vpop.f32.mrb[0].mxu0
    %v4656 = vadd.f32 %v3580, %v4655
    %v4657 = vpop.f32.mrb[0].mxu0
    %4658 = vmatprep.mubr.bf16.mxu0 %v4267
    %4659 = vmatmul.mubr.bf16.gmra.mrb[0].mxu0 %v4266
    %v4660 = vpop.f32.mrb[0].mxu0
    %v4661 = vadd.f32 %v3585, %v4660
    %v4662 = vpop.f32.mrb[0].mxu0
    %v4663 = vpop.f32.mrb[0].mxu0
    %v4664 = vadd.f32 %v3590, %v4663
    %v4665 = vpop.f32.mrb[0].mxu0
    %4666 = vmatprep.mubr.bf16.mxu0 %v4271
    %4667 = vmatmul.mubr.bf16.gmra.mrb[0].mxu0 %v4270
    %v4668 = vpop.f32.mrb[0].mxu0
    %v4669 = vadd.f32 %v3595, %v4668
    %v4670 = vpop.f32.mrb[0].mxu0
    %v4671 = vpop.f32.mrb[0].mxu0
    %v4672 = vadd.f32 %v3600, %v4671
    %v4673 = vpop.f32.mrb[0].mxu0
    %4674 = vmatprep.mubr.bf16.mxu0 %v4275
    %4675 = vmatmul.mubr.bf16.gmra.mrb[0].mxu0 %v4274
    %v4676 = vpop.f32.mrb[0].mxu0
    %v4677 = vadd.f32 %v3605, %v4676
    %v4678 = vpop.f32.mrb[0].mxu0
    %v4679 = vpop.f32.mrb[0].mxu0
    %v4680 = vadd.f32 %v3610, %v4679
    %v4681 = vpop.f32.mrb[0].mxu0
    %4682 = vmatprep.mubr.bf16.mxu0 %v4279
    %4683 = vmatmul.mubr.bf16.gmra.mrb[0].mxu0 %v4278
    %v4684 = vpop.f32.mrb[0].mxu0
    %v4685 = vadd.f32 %v3615, %v4684
    %v4686 = vpop.f32.mrb[0].mxu0
    %v4687 = vpop.f32.mrb[0].mxu0
    %v4688 = vadd.f32 %v3620, %v4687
    %v4689 = vpop.f32.mrb[0].mxu0
    %4690 = vmatprep.mubr.bf16.mxu0 %v4283
    %4691 = vmatmul.mubr.bf16.gmra.mrb[0].mxu0 %v4282
    %v4692 = vpop.f32.mrb[0].mxu0
    %v4693 = vadd.f32 %v3625, %v4692
    %v4694 = vpop.f32.mrb[0].mxu0
    %v4695 = vpop.f32.mrb[0].mxu0
    %v4696 = vadd.f32 %v3630, %v4695
    %v4697 = vpop.f32.mrb[0].mxu0
    %4698 = vmatprep.mubr.bf16.mxu0 %v4287
    %4699 = vmatmul.mubr.bf16.gmra.mrb[0].mxu0 %v4286
    %v4700 = vpop.f32.mrb[0].mxu0
    %v4701 = vadd.f32 %v3635, %v4700
    %v4702 = vpop.f32.mrb[0].mxu0
    %v4703 = vpop.f32.mrb[0].mxu0
    %v4704 = vadd.f32 %v3640, %v4703
    %v4705 = vpop.f32.mrb[0].mxu0
    %4706 = vmatprep.mubr.bf16.mxu0 %v4291
    %4707 = vmatmul.mubr.bf16.gmra.mrb[0].mxu0 %v4290
    %v4708 = vpop.f32.mrb[0].mxu0
    %v4709 = vadd.f32 %v3645, %v4708
    %v4710 = vpop.f32.mrb[0].mxu0
    %v4711 = vpop.f32.mrb[0].mxu0
    %v4712 = vadd.f32 %v3650, %v4711
    %v4713 = vpop.f32.mrb[0].mxu0
    %4714 = vmatprep.mubr.bf16.mxu0 %v4295
    %4715 = vmatmul.mubr.bf16.gmra.mrb[0].mxu0 %v4294
    %v4716 = vpop.f32.mrb[0].mxu0
    %v4717 = vadd.f32 %v3655, %v4716
    %v4718 = vpop.f32.mrb[0].mxu0
    %v4719 = vpop.f32.mrb[0].mxu0
    %v4720 = vadd.f32 %v3660, %v4719
    %v4721 = vpop.f32.mrb[0].mxu0
    %4722 = vmatprep.mubr.bf16.mxu0 %v4299
    %4723 = vmatmul.mubr.bf16.gmra.mrb[0].mxu0 %v4298
    %v4724 = vpop.f32.mrb[0].mxu0
    %v4725 = vadd.f32 %v3665, %v4724
    %v4726 = vpop.f32.mrb[0].mxu0
    %v4727 = vpop.f32.mrb[0].mxu0
    %v4728 = vadd.f32 %v3670, %v4727
    %v4729 = vpop.f32.mrb[0].mxu0
    %4730 = vmatprep.mubr.bf16.mxu0 %v4303
    %4731 = vmatmul.mubr.bf16.gmra.mrb[0].mxu0 %v4302
    %v4732 = vpop.f32.mrb[0].mxu0
    %v4733 = vadd.f32 %v3675, %v4732
    %v4734 = vpop.f32.mrb[0].mxu0
    %v4735 = vpop.f32.mrb[0].mxu0
    %v4736 = vadd.f32 %v3680, %v4735
    %v4737 = vpop.f32.mrb[0].mxu0
    %4738 = vmatprep.mubr.bf16.mxu0 %v4307
    %4739 = vmatmul.mubr.bf16.gmra.mrb[0].mxu0 %v4306
    %v4740 = vpop.f32.mrb[0].mxu0
    %v4741 = vadd.f32 %v3685, %v4740
    %v4742 = vpop.f32.mrb[0].mxu0
    %v4743 = vpop.f32.mrb[0].mxu0
    %v4744 = vadd.f32 %v3690, %v4743
    %v4745 = vpop.f32.mrb[0].mxu0
    %4746 = vmatprep.mubr.bf16.mxu0 %v4311
    %4747 = vmatmul.mubr.bf16.gmra.mrb[0].mxu0 %v4310
    %v4748 = vpop.f32.mrb[0].mxu0
    %v4749 = vadd.f32 %v3695, %v4748
    %v4750 = vpop.f32.mrb[0].mxu0
    %v4751 = vpop.f32.mrb[0].mxu0
    %v4752 = vadd.f32 %v3700, %v4751
    %v4753 = vpop.f32.mrb[0].mxu0
    %4754 = vmatprep.mubr.bf16.mxu0 %v4315
    %4755 = vmatmul.mubr.bf16.gmra.mrb[0].mxu0 %v4314
    %v4756 = vpop.f32.mrb[0].mxu0
    %v4757 = vadd.f32 %v3705, %v4756
    %v4758 = vpop.f32.mrb[0].mxu0
    %v4759 = vpop.f32.mrb[0].mxu0
    %v4760 = vadd.f32 %v3710, %v4759
    %v4761 = vpop.f32.mrb[0].mxu0
    %4762 = vmatprep.mubr.bf16.mxu0 %v4319
    %4763 = vmatmul.mubr.bf16.gmra.mrb[0].mxu0 %v4318
    %v4764 = vpop.f32.mrb[0].mxu0
    %v4765 = vadd.f32 %v3715, %v4764
    %v4766 = vpop.f32.mrb[0].mxu0
    %v4767 = vpop.f32.mrb[0].mxu0
    %v4768 = vadd.f32 %v3720, %v4767
    %v4769 = vpop.f32.mrb[0].mxu0
    %4770 = vmatprep.mubr.bf16.mxu0 %v4323
    %4771 = vmatmul.mubr.bf16.gmra.mrb[0].mxu0 %v4322
    %v4772 = vpop.f32.mrb[0].mxu0
    %v4773 = vadd.f32 %v3725, %v4772
    %v4774 = vpop.f32.mrb[0].mxu0
    %v4775 = vpop.f32.mrb[0].mxu0
    %v4776 = vadd.f32 %v3730, %v4775
    %v4777 = vpop.f32.mrb[0].mxu0
    %4778 = vmatprep.mubr.bf16.mxu0 %v4327
    %4779 = vmatmul.mubr.bf16.gmra.mrb[0].mxu0 %v4326
    %v4780 = vpop.f32.mrb[0].mxu0
    %v4781 = vadd.f32 %v3735, %v4780
    %v4782 = vpop.f32.mrb[0].mxu0
    %v4783 = vpop.f32.mrb[0].mxu0
    %v4784 = vadd.f32 %v3740, %v4783
    %v4785 = vpop.f32.mrb[0].mxu0
    %4786 = vmatprep.mubr.bf16.mxu0 %v4331
    %4787 = vmatmul.mubr.bf16.gmra.mrb[0].mxu0 %v4330
    %v4788 = vpop.f32.mrb[0].mxu0
    %v4789 = vadd.f32 %v3745, %v4788
    %v4790 = vpop.f32.mrb[0].mxu0
    %v4791 = vpop.f32.mrb[0].mxu0
    %v4792 = vadd.f32 %v3750, %v4791
    %v4793 = vpop.f32.mrb[0].mxu0
    %4794 = vmatprep.mubr.bf16.mxu0 %v4335
    %4795 = vmatmul.mubr.bf16.gmra.mrb[0].mxu0 %v4334
    %v4796 = vpop.f32.mrb[0].mxu0
    %v4797 = vadd.f32 %v3755, %v4796
    %v4798 = vpop.f32.mrb[0].mxu0
    %v4799 = vpop.f32.mrb[0].mxu0
    %v4800 = vadd.f32 %v3760, %v4799
    %v4801 = vpop.f32.mrb[0].mxu0
    %4802 = vdwg.mxu0
    %4803 = vmatprep.subr.bf16.mxu0 0
    %4804 = vmatpush1.bf16.msra.mxu0 %v3314
    %4805 = vmatprep.subr.bf16.mxu0 0
    %4806 = vmatpush1.bf16.msra.mxu0 %v3315
    %4807 = vmatprep.subr.bf16.mxu0 0
    %4808 = vmatpush1.bf16.msra.mxu0 %v3316
    %4809 = vmatprep.subr.bf16.mxu0 0
    %4810 = vmatpush1.bf16.msra.mxu0 %v3317
    %4811 = vmatprep.subr.bf16.mxu0 0
    %4812 = vmatpush1.bf16.msra.mxu0 %v3318
    %4813 = vmatprep.subr.bf16.mxu0 0
    %4814 = vmatpush1.bf16.msra.mxu0 %v3319
    %4815 = vmatprep.subr.bf16.mxu0 0
    %4816 = vmatpush1.bf16.msra.mxu0 %v3320
    %4817 = vmatprep.subr.bf16.mxu0 0
    %4818 = vmatpush1.bf16.msra.mxu0 %v3321
    %4819 = vmatprep.subr.bf16.mxu0 0
    %4820 = vmatpush1.bf16.msra.mxu0 %v3322
    %4821 = vmatprep.subr.bf16.mxu0 0
    %4822 = vmatpush1.bf16.msra.mxu0 %v3323
    %4823 = vmatprep.subr.bf16.mxu0 0
    %4824 = vmatpush1.bf16.msra.mxu0 %v3324
    %4825 = vmatprep.subr.bf16.mxu0 0
    %4826 = vmatpush1.bf16.msra.mxu0 %v3325
    %4827 = vmatprep.subr.bf16.mxu0 0
    %4828 = vmatpush1.bf16.msra.mxu0 %v3326
    %4829 = vmatprep.subr.bf16.mxu0 0
    %4830 = vmatpush1.bf16.msra.mxu0 %v3327
    %4831 = vmatprep.subr.bf16.mxu0 0
    %4832 = vmatpush1.bf16.msra.mxu0 %v3328
    %4833 = vmatprep.subr.bf16.mxu0 0
    %4834 = vmatpush1.bf16.msra.mxu0 %v3329
    %4835 = vmatprep.mubr.bf16.mxu0 %v4197
    %4836 = vmatmul.mubr.bf16.gmra.mrb[0].mxu0 %v4196
    %v4837 = vpop.f32.mrb[0].mxu0
    %v4838 = vadd.f32 %v4517, %v4837
    %v4839 = vpop.f32.mrb[0].mxu0
    %v4840 = vpop.f32.mrb[0].mxu0
    %v4841 = vadd.f32 %v4520, %v4840
    %v4842 = vpop.f32.mrb[0].mxu0
    %4843 = vmatprep.mubr.bf16.mxu0 %v4201
    %4844 = vmatmul.mubr.bf16.gmra.mrb[0].mxu0 %v4200
    %v4845 = vpop.f32.mrb[0].mxu0
    %v4846 = vadd.f32 %v4525, %v4845
    %v4847 = vpop.f32.mrb[0].mxu0
    %v4848 = vpop.f32.mrb[0].mxu0
    %v4849 = vadd.f32 %v4528, %v4848
    %v4850 = vpop.f32.mrb[0].mxu0
    %4851 = vmatprep.mubr.bf16.mxu0 %v4205
    %4852 = vmatmul.mubr.bf16.gmra.mrb[0].mxu0 %v4204
    %v4853 = vpop.f32.mrb[0].mxu0
    %v4854 = vadd.f32 %v4533, %v4853
    %v4855 = vpop.f32.mrb[0].mxu0
    %v4856 = vpop.f32.mrb[0].mxu0
    %v4857 = vadd.f32 %v4536, %v4856
    %v4858 = vpop.f32.mrb[0].mxu0
    %4859 = vmatprep.mubr.bf16.mxu0 %v4209
    %4860 = vmatmul.mubr.bf16.gmra.mrb[0].mxu0 %v4208
    %v4861 = vpop.f32.mrb[0].mxu0
    %v4862 = vadd.f32 %v4541, %v4861
    %v4863 = vpop.f32.mrb[0].mxu0
    %v4864 = vpop.f32.mrb[0].mxu0
    %v4865 = vadd.f32 %v4544, %v4864
    %v4866 = vpop.f32.mrb[0].mxu0
    %4867 = vmatprep.mubr.bf16.mxu0 %v4213
    %4868 = vmatmul.mubr.bf16.gmra.mrb[0].mxu0 %v4212
    %v4869 = vpop.f32.mrb[0].mxu0
    %v4870 = vadd.f32 %v4549, %v4869
    %v4871 = vpop.f32.mrb[0].mxu0
    %v4872 = vpop.f32.mrb[0].mxu0
    %v4873 = vadd.f32 %v4552, %v4872
    %v4874 = vpop.f32.mrb[0].mxu0
    %4875 = vmatprep.mubr.bf16.mxu0 %v4217
    %4876 = vmatmul.mubr.bf16.gmra.mrb[0].mxu0 %v4216
    %v4877 = vpop.f32.mrb[0].mxu0
    %v4878 = vadd.f32 %v4557, %v4877
    %v4879 = vpop.f32.mrb[0].mxu0
    %v4880 = vpop.f32.mrb[0].mxu0
    %v4881 = vadd.f32 %v4560, %v4880
    %v4882 = vpop.f32.mrb[0].mxu0
    %4883 = vmatprep.mubr.bf16.mxu0 %v4221
    %4884 = vmatmul.mubr.bf16.gmra.mrb[0].mxu0 %v4220
    %v4885 = vpop.f32.mrb[0].mxu0
    %v4886 = vadd.f32 %v4565, %v4885
    %v4887 = vpop.f32.mrb[0].mxu0
    %v4888 = vpop.f32.mrb[0].mxu0
    %v4889 = vadd.f32 %v4568, %v4888
    %v4890 = vpop.f32.mrb[0].mxu0
    %4891 = vmatprep.mubr.bf16.mxu0 %v4225
    %4892 = vmatmul.mubr.bf16.gmra.mrb[0].mxu0 %v4224
    %v4893 = vpop.f32.mrb[0].mxu0
    %v4894 = vadd.f32 %v4573, %v4893
    %v4895 = vpop.f32.mrb[0].mxu0
    %v4896 = vpop.f32.mrb[0].mxu0
    %v4897 = vadd.f32 %v4576, %v4896
    %v4898 = vpop.f32.mrb[0].mxu0
    %4899 = vmatprep.mubr.bf16.mxu0 %v4229
    %4900 = vmatmul.mubr.bf16.gmra.mrb[0].mxu0 %v4228
    %v4901 = vpop.f32.mrb[0].mxu0
    %v4902 = vadd.f32 %v4581, %v4901
    %v4903 = vpop.f32.mrb[0].mxu0
    %v4904 = vpop.f32.mrb[0].mxu0
    %v4905 = vadd.f32 %v4584, %v4904
    %v4906 = vpop.f32.mrb[0].mxu0
    %4907 = vmatprep.mubr.bf16.mxu0 %v4233
    %4908 = vmatmul.mubr.bf16.gmra.mrb[0].mxu0 %v4232
    %v4909 = vpop.f32.mrb[0].mxu0
    %v4910 = vadd.f32 %v4589, %v4909
    %v4911 = vpop.f32.mrb[0].mxu0
    %v4912 = vpop.f32.mrb[0].mxu0
    %v4913 = vadd.f32 %v4592, %v4912
    %v4914 = vpop.f32.mrb[0].mxu0
    %4915 = vmatprep.mubr.bf16.mxu0 %v4237
    %4916 = vmatmul.mubr.bf16.gmra.mrb[0].mxu0 %v4236
    %v4917 = vpop.f32.mrb[0].mxu0
    %v4918 = vadd.f32 %v4597, %v4917
    %v4919 = vpop.f32.mrb[0].mxu0
    %v4920 = vpop.f32.mrb[0].mxu0
    %v4921 = vadd.f32 %v4600, %v4920
    %v4922 = vpop.f32.mrb[0].mxu0
    %4923 = vmatprep.mubr.bf16.mxu0 %v4241
    %4924 = vmatmul.mubr.bf16.gmra.mrb[0].mxu0 %v4240
    %v4925 = vpop.f32.mrb[0].mxu0
    %v4926 = vadd.f32 %v4605, %v4925
    %v4927 = vpop.f32.mrb[0].mxu0
    %v4928 = vpop.f32.mrb[0].mxu0
    %v4929 = vadd.f32 %v4608, %v4928
    %v4930 = vpop.f32.mrb[0].mxu0
    %4931 = vmatprep.mubr.bf16.mxu0 %v4245
    %4932 = vmatmul.mubr.bf16.gmra.mrb[0].mxu0 %v4244
    %v4933 = vpop.f32.mrb[0].mxu0
    %v4934 = vadd.f32 %v4613, %v4933
    %v4935 = vpop.f32.mrb[0].mxu0
    %v4936 = vpop.f32.mrb[0].mxu0
    %v4937 = vadd.f32 %v4616, %v4936
    %v4938 = vpop.f32.mrb[0].mxu0
    %4939 = vmatprep.mubr.bf16.mxu0 %v4249
    %4940 = vmatmul.mubr.bf16.gmra.mrb[0].mxu0 %v4248
    %v4941 = vpop.f32.mrb[0].mxu0
    %v4942 = vadd.f32 %v4621, %v4941
    %v4943 = vpop.f32.mrb[0].mxu0
    %v4944 = vpop.f32.mrb[0].mxu0
    %v4945 = vadd.f32 %v4624, %v4944
    %v4946 = vpop.f32.mrb[0].mxu0
    %4947 = vmatprep.mubr.bf16.mxu0 %v4253
    %4948 = vmatmul.mubr.bf16.gmra.mrb[0].mxu0 %v4252
    %v4949 = vpop.f32.mrb[0].mxu0
    %v4950 = vadd.f32 %v4629, %v4949
    %v4951 = vpop.f32.mrb[0].mxu0
    %v4952 = vpop.f32.mrb[0].mxu0
    %v4953 = vadd.f32 %v4632, %v4952
    %v4954 = vpop.f32.mrb[0].mxu0
    %4955 = vmatprep.mubr.bf16.mxu0 %v4257
    %4956 = vmatmul.mubr.bf16.gmra.mrb[0].mxu0 %v4256
    %v4957 = vpop.f32.mrb[0].mxu0
    %v4958 = vadd.f32 %v4637, %v4957
    %v4959 = vpop.f32.mrb[0].mxu0
    %v4960 = vpop.f32.mrb[0].mxu0
    %v4961 = vadd.f32 %v4640, %v4960
    %v4962 = vpop.f32.mrb[0].mxu0
    %4963 = vmatprep.mubr.bf16.mxu0 %v4261
    %4964 = vmatmul.mubr.bf16.gmra.mrb[0].mxu0 %v4260
    %v4965 = vpop.f32.mrb[0].mxu0
    %v4966 = vadd.f32 %v4645, %v4965
    %v4967 = vpop.f32.mrb[0].mxu0
    %v4968 = vpop.f32.mrb[0].mxu0
    %v4969 = vadd.f32 %v4648, %v4968
    %v4970 = vpop.f32.mrb[0].mxu0
    %4971 = vmatprep.mubr.bf16.mxu0 %v4265
    %4972 = vmatmul.mubr.bf16.gmra.mrb[0].mxu0 %v4264
    %v4973 = vpop.f32.mrb[0].mxu0
    %v4974 = vadd.f32 %v4653, %v4973
    %v4975 = vpop.f32.mrb[0].mxu0
    %v4976 = vpop.f32.mrb[0].mxu0
    %v4977 = vadd.f32 %v4656, %v4976
    %v4978 = vpop.f32.mrb[0].mxu0
    %4979 = vmatprep.mubr.bf16.mxu0 %v4269
    %4980 = vmatmul.mubr.bf16.gmra.mrb[0].mxu0 %v4268
    %v4981 = vpop.f32.mrb[0].mxu0
    %v4982 = vadd.f32 %v4661, %v4981
    %v4983 = vpop.f32.mrb[0].mxu0
    %v4984 = vpop.f32.mrb[0].mxu0
    %v4985 = vadd.f32 %v4664, %v4984
    %v4986 = vpop.f32.mrb[0].mxu0
    %4987 = vmatprep.mubr.bf16.mxu0 %v4273
    %4988 = vmatmul.mubr.bf16.gmra.mrb[0].mxu0 %v4272
    %v4989 = vpop.f32.mrb[0].mxu0
    %v4990 = vadd.f32 %v4669, %v4989
    %v4991 = vpop.f32.mrb[0].mxu0
    %v4992 = vpop.f32.mrb[0].mxu0
    %v4993 = vadd.f32 %v4672, %v4992
    %v4994 = vpop.f32.mrb[0].mxu0
    %4995 = vmatprep.mubr.bf16.mxu0 %v4277
    %4996 = vmatmul.mubr.bf16.gmra.mrb[0].mxu0 %v4276
    %v4997 = vpop.f32.mrb[0].mxu0
    %v4998 = vadd.f32 %v4677, %v4997
    %v4999 = vpop.f32.mrb[0].mxu0
    %v5000 = vpop.f32.mrb[0].mxu0
    %v5001 = vadd.f32 %v4680, %v5000
    %v5002 = vpop.f32.mrb[0].mxu0
    %5003 = vmatprep.mubr.bf16.mxu0 %v4281
    %5004 = vmatmul.mubr.bf16.gmra.mrb[0].mxu0 %v4280
    %v5005 = vpop.f32.mrb[0].mxu0
    %v5006 = vadd.f32 %v4685, %v5005
    %v5007 = vpop.f32.mrb[0].mxu0
    %v5008 = vpop.f32.mrb[0].mxu0
    %v5009 = vadd.f32 %v4688, %v5008
    %v5010 = vpop.f32.mrb[0].mxu0
    %5011 = vmatprep.mubr.bf16.mxu0 %v4285
    %5012 = vmatmul.mubr.bf16.gmra.mrb[0].mxu0 %v4284
    %v5013 = vpop.f32.mrb[0].mxu0
    %v5014 = vadd.f32 %v4693, %v5013
    %v5015 = vpop.f32.mrb[0].mxu0
    %v5016 = vpop.f32.mrb[0].mxu0
    %v5017 = vadd.f32 %v4696, %v5016
    %v5018 = vpop.f32.mrb[0].mxu0
    %5019 = vmatprep.mubr.bf16.mxu0 %v4289
    %5020 = vmatmul.mubr.bf16.gmra.mrb[0].mxu0 %v4288
    %v5021 = vpop.f32.mrb[0].mxu0
    %v5022 = vadd.f32 %v4701, %v5021
    %v5023 = vpop.f32.mrb[0].mxu0
    %v5024 = vpop.f32.mrb[0].mxu0
    %v5025 = vadd.f32 %v4704, %v5024
    %v5026 = vpop.f32.mrb[0].mxu0
    %5027 = vmatprep.mubr.bf16.mxu0 %v4293
    %5028 = vmatmul.mubr.bf16.gmra.mrb[0].mxu0 %v4292
    %v5029 = vpop.f32.mrb[0].mxu0
    %v5030 = vadd.f32 %v4709, %v5029
    %v5031 = vpop.f32.mrb[0].mxu0
    %v5032 = vpop.f32.mrb[0].mxu0
    %v5033 = vadd.f32 %v4712, %v5032
    %v5034 = vpop.f32.mrb[0].mxu0
    %5035 = vmatprep.mubr.bf16.mxu0 %v4297
    %5036 = vmatmul.mubr.bf16.gmra.mrb[0].mxu0 %v4296
    %v5037 = vpop.f32.mrb[0].mxu0
    %v5038 = vadd.f32 %v4717, %v5037
    %v5039 = vpop.f32.mrb[0].mxu0
    %v5040 = vpop.f32.mrb[0].mxu0
    %v5041 = vadd.f32 %v4720, %v5040
    %v5042 = vpop.f32.mrb[0].mxu0
    %5043 = vmatprep.mubr.bf16.mxu0 %v4301
    %5044 = vmatmul.mubr.bf16.gmra.mrb[0].mxu0 %v4300
    %v5045 = vpop.f32.mrb[0].mxu0
    %v5046 = vadd.f32 %v4725, %v5045
    %v5047 = vpop.f32.mrb[0].mxu0
    %v5048 = vpop.f32.mrb[0].mxu0
    %v5049 = vadd.f32 %v4728, %v5048
    %v5050 = vpop.f32.mrb[0].mxu0
    %5051 = vmatprep.mubr.bf16.mxu0 %v4305
    %5052 = vmatmul.mubr.bf16.gmra.mrb[0].mxu0 %v4304
    %v5053 = vpop.f32.mrb[0].mxu0
    %v5054 = vadd.f32 %v4733, %v5053
    %v5055 = vpop.f32.mrb[0].mxu0
    %v5056 = vpop.f32.mrb[0].mxu0
    %v5057 = vadd.f32 %v4736, %v5056
    %v5058 = vpop.f32.mrb[0].mxu0
    %5059 = vmatprep.mubr.bf16.mxu0 %v4309
    %5060 = vmatmul.mubr.bf16.gmra.mrb[0].mxu0 %v4308
    %v5061 = vpop.f32.mrb[0].mxu0
    %v5062 = vadd.f32 %v4741, %v5061
    %v5063 = vpop.f32.mrb[0].mxu0
    %v5064 = vpop.f32.mrb[0].mxu0
    %v5065 = vadd.f32 %v4744, %v5064
    %v5066 = vpop.f32.mrb[0].mxu0
    %5067 = vmatprep.mubr.bf16.mxu0 %v4313
    %5068 = vmatmul.mubr.bf16.gmra.mrb[0].mxu0 %v4312
    %v5069 = vpop.f32.mrb[0].mxu0
    %v5070 = vadd.f32 %v4749, %v5069
    %v5071 = vpop.f32.mrb[0].mxu0
    %v5072 = vpop.f32.mrb[0].mxu0
    %v5073 = vadd.f32 %v4752, %v5072
    %v5074 = vpop.f32.mrb[0].mxu0
    %5075 = vmatprep.mubr.bf16.mxu0 %v4317
    %5076 = vmatmul.mubr.bf16.gmra.mrb[0].mxu0 %v4316
    %v5077 = vpop.f32.mrb[0].mxu0
    %v5078 = vadd.f32 %v4757, %v5077
    %v5079 = vpop.f32.mrb[0].mxu0
    %v5080 = vpop.f32.mrb[0].mxu0
    %v5081 = vadd.f32 %v4760, %v5080
    %v5082 = vpop.f32.mrb[0].mxu0
    %5083 = vmatprep.mubr.bf16.mxu0 %v4321
    %5084 = vmatmul.mubr.bf16.gmra.mrb[0].mxu0 %v4320
    %v5085 = vpop.f32.mrb[0].mxu0
    %v5086 = vadd.f32 %v4765, %v5085
    %v5087 = vpop.f32.mrb[0].mxu0
    %v5088 = vpop.f32.mrb[0].mxu0
    %v5089 = vadd.f32 %v4768, %v5088
    %v5090 = vpop.f32.mrb[0].mxu0
    %5091 = vmatprep.mubr.bf16.mxu0 %v4325
    %5092 = vmatmul.mubr.bf16.gmra.mrb[0].mxu0 %v4324
    %v5093 = vpop.f32.mrb[0].mxu0
    %v5094 = vadd.f32 %v4773, %v5093
    %v5095 = vpop.f32.mrb[0].mxu0
    %v5096 = vpop.f32.mrb[0].mxu0
    %v5097 = vadd.f32 %v4776, %v5096
    %v5098 = vpop.f32.mrb[0].mxu0
    %5099 = vmatprep.mubr.bf16.mxu0 %v4329
    %5100 = vmatmul.mubr.bf16.gmra.mrb[0].mxu0 %v4328
    %v5101 = vpop.f32.mrb[0].mxu0
    %v5102 = vadd.f32 %v4781, %v5101
    %v5103 = vpop.f32.mrb[0].mxu0
    %v5104 = vpop.f32.mrb[0].mxu0
    %v5105 = vadd.f32 %v4784, %v5104
    %v5106 = vpop.f32.mrb[0].mxu0
    %5107 = vmatprep.mubr.bf16.mxu0 %v4333
    %5108 = vmatmul.mubr.bf16.gmra.mrb[0].mxu0 %v4332
    %v5109 = vpop.f32.mrb[0].mxu0
    %v5110 = vadd.f32 %v4789, %v5109
    %v5111 = vpop.f32.mrb[0].mxu0
    %v5112 = vpop.f32.mrb[0].mxu0
    %v5113 = vadd.f32 %v4792, %v5112
    %v5114 = vpop.f32.mrb[0].mxu0
    %5115 = vmatprep.mubr.bf16.mxu0 %v4337
    %5116 = vmatmul.mubr.bf16.gmra.mrb[0].mxu0 %v4336
    %v5117 = vpop.f32.mrb[0].mxu0
    %v5118 = vadd.f32 %v4797, %v5117
    %v5119 = vpop.f32.mrb[0].mxu0
    %v5120 = vpop.f32.mrb[0].mxu0
    %v5121 = vadd.f32 %v4800, %v5120
    %v5122 = vpop.f32.mrb[0].mxu0
    %5123 = vdwg.mxu0
    %vm5124 = vcmp.ge.f32.partialorder %v4838, 0.0
    %vm5125 = vcmp.ge.f32.partialorder %v4841, 0.0
    %vm5126 = vcmp.ge.f32.partialorder %v4846, 0.0
    %vm5127 = vcmp.ge.f32.partialorder %v4849, 0.0
    %vm5128 = vcmp.ge.f32.partialorder %v4854, 0.0
    %vm5129 = vcmp.ge.f32.partialorder %v4857, 0.0
    %vm5130 = vcmp.ge.f32.partialorder %v4862, 0.0
    %vm5131 = vcmp.ge.f32.partialorder %v4865, 0.0
    %vm5132 = vcmp.ge.f32.partialorder %v4870, 0.0
    %vm5133 = vcmp.ge.f32.partialorder %v4873, 0.0
    %vm5134 = vcmp.ge.f32.partialorder %v4878, 0.0
    %vm5135 = vcmp.ge.f32.partialorder %v4881, 0.0
    %vm5136 = vcmp.ge.f32.partialorder %v4886, 0.0
    %vm5137 = vcmp.ge.f32.partialorder %v4889, 0.0
    %vm5138 = vcmp.ge.f32.partialorder %v4894, 0.0
    %vm5139 = vcmp.ge.f32.partialorder %v4897, 0.0
    %vm5140 = vcmp.ge.f32.partialorder %v4902, 0.0
    %vm5141 = vcmp.ge.f32.partialorder %v4905, 0.0
    %vm5142 = vcmp.ge.f32.partialorder %v4910, 0.0
    %vm5143 = vcmp.ge.f32.partialorder %v4913, 0.0
    %vm5144 = vcmp.ge.f32.partialorder %v4918, 0.0
    %vm5145 = vcmp.ge.f32.partialorder %v4921, 0.0
    %vm5146 = vcmp.ge.f32.partialorder %v4926, 0.0
    %vm5147 = vcmp.ge.f32.partialorder %v4929, 0.0
    %vm5148 = vcmp.ge.f32.partialorder %v4934, 0.0
    %vm5149 = vcmp.ge.f32.partialorder %v4937, 0.0
    %vm5150 = vcmp.ge.f32.partialorder %v4942, 0.0
    %vm5151 = vcmp.ge.f32.partialorder %v4945, 0.0
    %vm5152 = vcmp.ge.f32.partialorder %v4950, 0.0
    %vm5153 = vcmp.ge.f32.partialorder %v4953, 0.0
    %vm5154 = vcmp.ge.f32.partialorder %v4958, 0.0
    %vm5155 = vcmp.ge.f32.partialorder %v4961, 0.0
    %vm5156 = vcmp.ge.f32.partialorder %v4966, 0.0
    %vm5157 = vcmp.ge.f32.partialorder %v4969, 0.0
    %vm5158 = vcmp.ge.f32.partialorder %v4974, 0.0
    %vm5159 = vcmp.ge.f32.partialorder %v4977, 0.0
    %vm5160 = vcmp.ge.f32.partialorder %v4982, 0.0
    %vm5161 = vcmp.ge.f32.partialorder %v4985, 0.0
    %vm5162 = vcmp.ge.f32.partialorder %v4990, 0.0
    %vm5163 = vcmp.ge.f32.partialorder %v4993, 0.0
    %vm5164 = vcmp.ge.f32.partialorder %v4998, 0.0
    %vm5165 = vcmp.ge.f32.partialorder %v5001, 0.0
    %vm5166 = vcmp.ge.f32.partialorder %v5006, 0.0
    %vm5167 = vcmp.ge.f32.partialorder %v5009, 0.0
    %vm5168 = vcmp.ge.f32.partialorder %v5014, 0.0
    %vm5169 = vcmp.ge.f32.partialorder %v5017, 0.0
    %vm5170 = vcmp.ge.f32.partialorder %v5022, 0.0
    %vm5171 = vcmp.ge.f32.partialorder %v5025, 0.0
    %vm5172 = vcmp.ge.f32.partialorder %v5030, 0.0
    %vm5173 = vcmp.ge.f32.partialorder %v5033, 0.0
    %vm5174 = vcmp.ge.f32.partialorder %v5038, 0.0
    %vm5175 = vcmp.ge.f32.partialorder %v5041, 0.0
    %vm5176 = vcmp.ge.f32.partialorder %v5046, 0.0
    %vm5177 = vcmp.ge.f32.partialorder %v5049, 0.0
    %vm5178 = vcmp.ge.f32.partialorder %v5054, 0.0
    %vm5179 = vcmp.ge.f32.partialorder %v5057, 0.0
    %vm5180 = vcmp.ge.f32.partialorder %v5062, 0.0
    %vm5181 = vcmp.ge.f32.partialorder %v5065, 0.0
    %vm5182 = vcmp.ge.f32.partialorder %v5070, 0.0
    %vm5183 = vcmp.ge.f32.partialorder %v5073, 0.0
    %vm5184 = vcmp.ge.f32.partialorder %v5078, 0.0
    %vm5185 = vcmp.ge.f32.partialorder %v5081, 0.0
    %vm5186 = vcmp.ge.f32.partialorder %v5086, 0.0
    %vm5187 = vcmp.ge.f32.partialorder %v5089, 0.0
    %vm5188 = vcmp.ge.f32.partialorder %v5094, 0.0
    %vm5189 = vcmp.ge.f32.partialorder %v5097, 0.0
    %vm5190 = vcmp.ge.f32.partialorder %v5102, 0.0
    %vm5191 = vcmp.ge.f32.partialorder %v5105, 0.0
    %vm5192 = vcmp.ge.f32.partialorder %v5110, 0.0
    %vm5193 = vcmp.ge.f32.partialorder %v5113, 0.0
    %vm5194 = vcmp.ge.f32.partialorder %v5118, 0.0
    %vm5195 = vcmp.ge.f32.partialorder %v5121, 0.0
    %v5196 = vstv %s3153
    %v5197 = vmul.f32 %v5196, %v4838
    %v5198 = vmul.f32 %v5196, %v4841
    %v5199 = vmul.f32 %v5196, %v4846
    %v5200 = vmul.f32 %v5196, %v4849
    %v5201 = vmul.f32 %v5196, %v4854
    %v5202 = vmul.f32 %v5196, %v4857
    %v5203 = vmul.f32 %v5196, %v4862
    %v5204 = vmul.f32 %v5196, %v4865
    %v5205 = vmul.f32 %v5196, %v4870
    %v5206 = vmul.f32 %v5196, %v4873
    %v5207 = vmul.f32 %v5196, %v4878
    %v5208 = vmul.f32 %v5196, %v4881
    %v5209 = vmul.f32 %v5196, %v4886
    %v5210 = vmul.f32 %v5196, %v4889
    %v5211 = vmul.f32 %v5196, %v4894
    %v5212 = vmul.f32 %v5196, %v4897
    %v5213 = vmul.f32 %v5196, %v4902
    %v5214 = vmul.f32 %v5196, %v4905
    %v5215 = vmul.f32 %v5196, %v4910
    %v5216 = vmul.f32 %v5196, %v4913
    %v5217 = vmul.f32 %v5196, %v4918
    %v5218 = vmul.f32 %v5196, %v4921
    %v5219 = vmul.f32 %v5196, %v4926
    %v5220 = vmul.f32 %v5196, %v4929
    %v5221 = vmul.f32 %v5196, %v4934
    %v5222 = vmul.f32 %v5196, %v4937
    %v5223 = vmul.f32 %v5196, %v4942
    %v5224 = vmul.f32 %v5196, %v4945
    %v5225 = vmul.f32 %v5196, %v4950
    %v5226 = vmul.f32 %v5196, %v4953
    %v5227 = vmul.f32 %v5196, %v4958
    %v5228 = vmul.f32 %v5196, %v4961
    %v5229 = vmul.f32 %v5196, %v4966
    %v5230 = vmul.f32 %v5196, %v4969
    %v5231 = vmul.f32 %v5196, %v4974
    %v5232 = vmul.f32 %v5196, %v4977
    %v5233 = vmul.f32 %v5196, %v4982
    %v5234 = vmul.f32 %v5196, %v4985
    %v5235 = vmul.f32 %v5196, %v4990
    %v5236 = vmul.f32 %v5196, %v4993
    %v5237 = vmul.f32 %v5196, %v4998
    %v5238 = vmul.f32 %v5196, %v5001
    %v5239 = vmul.f32 %v5196, %v5006
    %v5240 = vmul.f32 %v5196, %v5009
    %v5241 = vmul.f32 %v5196, %v5014
    %v5242 = vmul.f32 %v5196, %v5017
    %v5243 = vmul.f32 %v5196, %v5022
    %v5244 = vmul.f32 %v5196, %v5025
    %v5245 = vmul.f32 %v5196, %v5030
    %v5246 = vmul.f32 %v5196, %v5033
    %v5247 = vmul.f32 %v5196, %v5038
    %v5248 = vmul.f32 %v5196, %v5041
    %v5249 = vmul.f32 %v5196, %v5046
    %v5250 = vmul.f32 %v5196, %v5049
    %v5251 = vmul.f32 %v5196, %v5054
    %v5252 = vmul.f32 %v5196, %v5057
    %v5253 = vmul.f32 %v5196, %v5062
    %v5254 = vmul.f32 %v5196, %v5065
    %v5255 = vmul.f32 %v5196, %v5070
    %v5256 = vmul.f32 %v5196, %v5073
    %v5257 = vmul.f32 %v5196, %v5078
    %v5258 = vmul.f32 %v5196, %v5081
    %v5259 = vmul.f32 %v5196, %v5086
    %v5260 = vmul.f32 %v5196, %v5089
    %v5261 = vmul.f32 %v5196, %v5094
    %v5262 = vmul.f32 %v5196, %v5097
    %v5263 = vmul.f32 %v5196, %v5102
    %v5264 = vmul.f32 %v5196, %v5105
    %v5265 = vmul.f32 %v5196, %v5110
    %v5266 = vmul.f32 %v5196, %v5113
    %v5267 = vmul.f32 %v5196, %v5118
    %v5268 = vmul.f32 %v5196, %v5121
    %v5269 = vsel %vm5124, %v4838, %v5197
    %v5270 = vsel %vm5125, %v4841, %v5198
    %v5271 = vsel %vm5126, %v4846, %v5199
    %v5272 = vsel %vm5127, %v4849, %v5200
    %v5273 = vsel %vm5128, %v4854, %v5201
    %v5274 = vsel %vm5129, %v4857, %v5202
    %v5275 = vsel %vm5130, %v4862, %v5203
    %v5276 = vsel %vm5131, %v4865, %v5204
    %v5277 = vsel %vm5132, %v4870, %v5205
    %v5278 = vsel %vm5133, %v4873, %v5206
    %v5279 = vsel %vm5134, %v4878, %v5207
    %v5280 = vsel %vm5135, %v4881, %v5208
    %v5281 = vsel %vm5136, %v4886, %v5209
    %v5282 = vsel %vm5137, %v4889, %v5210
    %v5283 = vsel %vm5138, %v4894, %v5211
    %v5284 = vsel %vm5139, %v4897, %v5212
    %v5285 = vsel %vm5140, %v4902, %v5213
    %v5286 = vsel %vm5141, %v4905, %v5214
    %v5287 = vsel %vm5142, %v4910, %v5215
    %v5288 = vsel %vm5143, %v4913, %v5216
    %v5289 = vsel %vm5144, %v4918, %v5217
    %v5290 = vsel %vm5145, %v4921, %v5218
    %v5291 = vsel %vm5146, %v4926, %v5219
    %v5292 = vsel %vm5147, %v4929, %v5220
    %v5293 = vsel %vm5148, %v4934, %v5221
    %v5294 = vsel %vm5149, %v4937, %v5222
    %v5295 = vsel %vm5150, %v4942, %v5223
    %v5296 = vsel %vm5151, %v4945, %v5224
    %v5297 = vsel %vm5152, %v4950, %v5225
    %v5298 = vsel %vm5153, %v4953, %v5226
    %v5299 = vsel %vm5154, %v4958, %v5227
    %v5300 = vsel %vm5155, %v4961, %v5228
    %v5301 = vsel %vm5156, %v4966, %v5229
    %v5302 = vsel %vm5157, %v4969, %v5230
    %v5303 = vsel %vm5158, %v4974, %v5231
    %v5304 = vsel %vm5159, %v4977, %v5232
    %v5305 = vsel %vm5160, %v4982, %v5233
    %v5306 = vsel %vm5161, %v4985, %v5234
    %v5307 = vsel %vm5162, %v4990, %v5235
    %v5308 = vsel %vm5163, %v4993, %v5236
    %v5309 = vsel %vm5164, %v4998, %v5237
    %v5310 = vsel %vm5165, %v5001, %v5238
    %v5311 = vsel %vm5166, %v5006, %v5239
    %v5312 = vsel %vm5167, %v5009, %v5240
    %v5313 = vsel %vm5168, %v5014, %v5241
    %v5314 = vsel %vm5169, %v5017, %v5242
    %v5315 = vsel %vm5170, %v5022, %v5243
    %v5316 = vsel %vm5171, %v5025, %v5244
    %v5317 = vsel %vm5172, %v5030, %v5245
    %v5318 = vsel %vm5173, %v5033, %v5246
    %v5319 = vsel %vm5174, %v5038, %v5247
    %v5320 = vsel %vm5175, %v5041, %v5248
    %v5321 = vsel %vm5176, %v5046, %v5249
    %v5322 = vsel %vm5177, %v5049, %v5250
    %v5323 = vsel %vm5178, %v5054, %v5251
    %v5324 = vsel %vm5179, %v5057, %v5252
    %v5325 = vsel %vm5180, %v5062, %v5253
    %v5326 = vsel %vm5181, %v5065, %v5254
    %v5327 = vsel %vm5182, %v5070, %v5255
    %v5328 = vsel %vm5183, %v5073, %v5256
    %v5329 = vsel %vm5184, %v5078, %v5257
    %v5330 = vsel %vm5185, %v5081, %v5258
    %v5331 = vsel %vm5186, %v5086, %v5259
    %v5332 = vsel %vm5187, %v5089, %v5260
    %v5333 = vsel %vm5188, %v5094, %v5261
    %v5334 = vsel %vm5189, %v5097, %v5262
    %v5335 = vsel %vm5190, %v5102, %v5263
    %v5336 = vsel %vm5191, %v5105, %v5264
    %v5337 = vsel %vm5192, %v5110, %v5265
    %v5338 = vsel %vm5193, %v5113, %v5266
    %v5339 = vsel %vm5194, %v5118, %v5267
    %v5340 = vsel %vm5195, %v5121, %v5268
    %s5341 = sld [smem:[#allocation2 + $0x3]]
    %v5342 = vld [vmem:[%s7] sm:$0xff]
    %v5343 = vld [vmem:[%s7 + $0x8] sm:$0xff]
    %v5344 = vld [vmem:[%s7 + $0x10] sm:$0xf]
    %v5345 = vld [vmem:[%s7 + $0x14] sm:$0xff]
    %v5346 = vld [vmem:[%s7 + $0x1c] sm:$0xff]
    %v5347 = vld [vmem:[%s7 + $0x24] sm:$0xf]
    %v5348 = vld [vmem:[%s7 + $0x28] sm:$0xff]
    %v5349 = vld [vmem:[%s7 + $0x30] sm:$0xff]
    %v5350 = vld [vmem:[%s7 + $0x38] sm:$0xf]
    %v5351 = vld [vmem:[%s7 + $0x3c] sm:$0xff]
    %v5352 = vld [vmem:[%s7 + $0x44] sm:$0xff]
    %v5353 = vld [vmem:[%s7 + $0x4c] sm:$0xf]
    %v5354 = vld [vmem:[%s7 + $0x50] sm:$0xff]
    %v5355 = vld [vmem:[%s7 + $0x58] sm:$0xff]
    %v5356 = vld [vmem:[%s7 + $0x60] sm:$0xf]
    %v5357 = vld [vmem:[%s7 + $0x64] sm:$0xff]
    %v5358 = vld [vmem:[%s7 + $0x6c] sm:$0xff]
    %v5359 = vld [vmem:[%s7 + $0x74] sm:$0xf]
    %v5360 = vld [vmem:[%s7 + $0x78] sm:$0xff]
    %v5361 = vld [vmem:[%s7 + $0x80] sm:$0xff]
    %v5362 = vld [vmem:[%s7 + $0x88] sm:$0xf]
    %v5363 = vld [vmem:[%s7 + $0x8c] sm:$0xff]
    %v5364 = vld [vmem:[%s7 + $0x94] sm:$0xff]
    %v5365 = vld [vmem:[%s7 + $0x9c] sm:$0xf]
    %v5366 = vld [vmem:[%s7 + $0xa0] sm:$0xff]
    %v5367 = vld [vmem:[%s7 + $0xa8] sm:$0xff]
    %v5368 = vld [vmem:[%s7 + $0xb0] sm:$0xf]
    %v5369 = vld [vmem:[%s7 + $0xb4] sm:$0xff]
    %v5370 = vld [vmem:[%s7 + $0xbc] sm:$0xff]
    %v5371 = vld [vmem:[%s7 + $0xc4] sm:$0xf]
    %v5372 = vld [vmem:[%s7 + $0xc8] sm:$0xff]
    %v5373 = vld [vmem:[%s7 + $0xd0] sm:$0xff]
    %v5374 = vld [vmem:[%s7 + $0xd8] sm:$0xf]
    %v5375 = vld [vmem:[%s7 + $0xdc] sm:$0xff]
    %v5376 = vld [vmem:[%s7 + $0xe4] sm:$0xff]
    %v5377 = vld [vmem:[%s7 + $0xec] sm:$0xf]
    %v5378 = vld [vmem:[%s7 + $0xf0] sm:$0xff]
    %v5379 = vld [vmem:[%s7 + $0xf8] sm:$0xff]
    %v5380 = vld [vmem:[%s7 + $0x100] sm:$0xf]
    %v5381 = vld [vmem:[%s7 + $0x104] sm:$0xff]
    %v5382 = vld [vmem:[%s7 + $0x10c] sm:$0xff]
    %v5383 = vld [vmem:[%s7 + $0x114] sm:$0xf]
    %v5384 = vld [vmem:[%s7 + $0x118] sm:$0xff]
    %v5385 = vld [vmem:[%s7 + $0x120] sm:$0xff]
    %v5386 = vld [vmem:[%s7 + $0x128] sm:$0xf]
    %v5387 = vld [vmem:[%s7 + $0x12c] sm:$0xff]
    %v5388 = vld [vmem:[%s7 + $0x134] sm:$0xff]
    %v5389 = vld [vmem:[%s7 + $0x13c] sm:$0xf]
    %v5390 = vld [vmem:[%s7 + $0x140] sm:$0xff]
    %v5391 = vld [vmem:[%s7 + $0x148] sm:$0xff]
    %v5392 = vld [vmem:[%s7 + $0x150] sm:$0xf]
    %v5393 = vld [vmem:[%s7 + $0x154] sm:$0xff]
    %v5394 = vld [vmem:[%s7 + $0x15c] sm:$0xff]
    %v5395 = vld [vmem:[%s7 + $0x164] sm:$0xf]
    %v5396 = vld [vmem:[%s7 + $0x168] sm:$0xff]
    %v5397 = vld [vmem:[%s7 + $0x170] sm:$0xff]
    %v5398 = vld [vmem:[%s7 + $0x178] sm:$0xf]
    %v5399 = vld [vmem:[%s7 + $0x17c] sm:$0xff]
    %v5400 = vld [vmem:[%s7 + $0x184] sm:$0xff]
    %v5401 = vld [vmem:[%s7 + $0x18c] sm:$0xf]
    %v5402 = vld [vmem:[%s7 + $0x190] sm:$0xff]
    %v5403 = vld [vmem:[%s7 + $0x198] sm:$0xff]
    %v5404 = vld [vmem:[%s7 + $0x1a0] sm:$0xf]
    %v5405 = vld [vmem:[%s7 + $0x1a4] sm:$0xff]
    %v5406 = vld [vmem:[%s7 + $0x1ac] sm:$0xff]
    %v5407 = vld [vmem:[%s7 + $0x1b4] sm:$0xf]
    %v5408 = vld [vmem:[%s7 + $0x1b8] sm:$0xff]
    %v5409 = vld [vmem:[%s7 + $0x1c0] sm:$0xff]
    %v5410 = vld [vmem:[%s7 + $0x1c8] sm:$0xf]
    %v5411 = vld [vmem:[%s7 + $0x1cc] sm:$0xff]
    %v5412 = vld [vmem:[%s7 + $0x1d4] sm:$0xff]
    %v5413 = vld [vmem:[%s7 + $0x1dc] sm:$0xf]
    %v5414 = vld [vmem:[%s7 + $0x1e0] sm:$0xff]
    %v5415 = vld [vmem:[%s7 + $0x1e8] sm:$0xff]
    %v5416 = vld [vmem:[%s7 + $0x1f0] sm:$0xf]
    %v5417 = vld [vmem:[%s7 + $0x1f4] sm:$0xff]
    %v5418 = vld [vmem:[%s7 + $0x1fc] sm:$0xff]
    %v5419 = vld [vmem:[%s7 + $0x204] sm:$0xf]
    %v5420 = vld [vmem:[%s7 + $0x208] sm:$0xff]
    %v5421 = vld [vmem:[%s7 + $0x210] sm:$0xff]
    %v5422 = vld [vmem:[%s7 + $0x218] sm:$0xf]
    %v5423 = vld [vmem:[%s7 + $0x21c] sm:$0xff]
    %v5424 = vld [vmem:[%s7 + $0x224] sm:$0xff]
    %v5425 = vld [vmem:[%s7 + $0x22c] sm:$0xf]
    %v5426 = vld [vmem:[%s7 + $0x230] sm:$0xff]
    %v5427 = vld [vmem:[%s7 + $0x238] sm:$0xff]
    %v5428 = vld [vmem:[%s7 + $0x240] sm:$0xf]
    %v5429 = vld [vmem:[%s7 + $0x244] sm:$0xff]
    %v5430 = vld [vmem:[%s7 + $0x24c] sm:$0xff]
    %v5431 = vld [vmem:[%s7 + $0x254] sm:$0xf]
    %v5432 = vld [vmem:[%s7 + $0x258] sm:$0xff]
    %v5433 = vld [vmem:[%s7 + $0x260] sm:$0xff]
    %v5434 = vld [vmem:[%s7 + $0x268] sm:$0xf]
    %v5435 = vld [vmem:[%s7 + $0x26c] sm:$0xff]
    %v5436 = vld [vmem:[%s7 + $0x274] sm:$0xff]
    %v5437 = vld [vmem:[%s7 + $0x27c] sm:$0xf]
    %v5438 = vpack.c.bf16 %v5270, %v5269
    %v5439 = vpack.c.bf16 %v5272, %v5271
    %v5440 = vpack.c.bf16 %v5274, %v5273
    %v5441 = vpack.c.bf16 %v5276, %v5275
    %v5442 = vpack.c.bf16 %v5278, %v5277
    %v5443 = vpack.c.bf16 %v5280, %v5279
    %v5444 = vpack.c.bf16 %v5282, %v5281
    %v5445 = vpack.c.bf16 %v5284, %v5283
    %v5446 = vpack.c.bf16 %v5286, %v5285
    %v5447 = vpack.c.bf16 %v5288, %v5287
    %v5448 = vpack.c.bf16 %v5290, %v5289
    %v5449 = vpack.c.bf16 %v5292, %v5291
    %v5450 = vpack.c.bf16 %v5294, %v5293
    %v5451 = vpack.c.bf16 %v5296, %v5295
    %v5452 = vpack.c.bf16 %v5298, %v5297
    %v5453 = vpack.c.bf16 %v5300, %v5299
    %v5454 = vpack.c.bf16 %v5302, %v5301
    %v5455 = vpack.c.bf16 %v5304, %v5303
    %v5456 = vpack.c.bf16 %v5306, %v5305
    %v5457 = vpack.c.bf16 %v5308, %v5307
    %v5458 = vpack.c.bf16 %v5310, %v5309
    %v5459 = vpack.c.bf16 %v5312, %v5311
    %v5460 = vpack.c.bf16 %v5314, %v5313
    %v5461 = vpack.c.bf16 %v5316, %v5315
    %v5462 = vpack.c.bf16 %v5318, %v5317
    %v5463 = vpack.c.bf16 %v5320, %v5319
    %v5464 = vpack.c.bf16 %v5322, %v5321
    %v5465 = vpack.c.bf16 %v5324, %v5323
    %v5466 = vpack.c.bf16 %v5326, %v5325
    %v5467 = vpack.c.bf16 %v5328, %v5327
    %v5468 = vpack.c.bf16 %v5330, %v5329
    %v5469 = vpack.c.bf16 %v5332, %v5331
    %v5470 = vpack.c.bf16 %v5334, %v5333
    %v5471 = vpack.c.bf16 %v5336, %v5335
    %v5472 = vpack.c.bf16 %v5338, %v5337
    %v5473 = vpack.c.bf16 %v5340, %v5339
    %v5474 = vld [vmem:[%s8] sm:$0xff]
    %v5475 = vld [vmem:[%s8 + $0x8] sm:$0xff]
    %v5476 = vld [vmem:[%s8 + $0x10] sm:$0xff]
    %v5477 = vld [vmem:[%s8 + $0x18] sm:$0xff]
    %v5478 = vld [vmem:[%s8 + $0x20] sm:$0xff]
    %v5479 = vld [vmem:[%s8 + $0x28] sm:$0xff]
    %v5480 = vld [vmem:[%s8 + $0x30] sm:$0xff]
    %v5481 = vld [vmem:[%s8 + $0x38] sm:$0xff]
    %v5482 = vld [vmem:[%s8 + $0x40] sm:$0xff]
    %v5483 = vld [vmem:[%s8 + $0x48] sm:$0xff]
    %v5484 = vld [vmem:[%s8 + $0x50] sm:$0xff]
    %v5485 = vld [vmem:[%s8 + $0x58] sm:$0xff]
    %v5486 = vld [vmem:[%s8 + $0x60] sm:$0xff]
    %v5487 = vld [vmem:[%s8 + $0x68] sm:$0xff]
    %v5488 = vld [vmem:[%s8 + $0x70] sm:$0xff]
    %v5489 = vld [vmem:[%s8 + $0x78] sm:$0xff]
    %v5490 = vld [vmem:[%s8 + $0x80] sm:$0xff]
    %v5491 = vld [vmem:[%s8 + $0x88] sm:$0xff]
    %v5492 = vld [vmem:[%s8 + $0x90] sm:$0xff]
    %v5493 = vld [vmem:[%s8 + $0x98] sm:$0xff]
    %v5494 = vld [vmem:[%s8 + $0xa0] sm:$0xff]
    %v5495 = vld [vmem:[%s8 + $0xa8] sm:$0xff]
    %v5496 = vld [vmem:[%s8 + $0xb0] sm:$0xff]
    %v5497 = vld [vmem:[%s8 + $0xb8] sm:$0xff]
    %v5498 = vld [vmem:[%s8 + $0xc0] sm:$0xff]
    %v5499 = vld [vmem:[%s8 + $0xc8] sm:$0xff]
    %v5500 = vld [vmem:[%s8 + $0xd0] sm:$0xff]
    %v5501 = vld [vmem:[%s8 + $0xd8] sm:$0xff]
    %v5502 = vld [vmem:[%s8 + $0xe0] sm:$0xff]
    %v5503 = vld [vmem:[%s8 + $0xe8] sm:$0xff]
    %v5504 = vld [vmem:[%s8 + $0xf0] sm:$0xff]
    %v5505 = vld [vmem:[%s8 + $0xf8] sm:$0xff]
    %5507 = vset.pattern.permute.xlu0 0
    %5508 = vperm.xlu0 %5507, %v5474
    %v5509 = vpop.permute.xlu0 %5508
    %5512 = vset.pattern.permute.xlu0 0
    %5513 = vperm.xlu0 %5512, %v5475
    %v5514 = vpop.permute.xlu0 %5513
    %5517 = vset.pattern.permute.xlu0 0
    %5518 = vperm.xlu0 %5517, %v5476
    %v5519 = vpop.permute.xlu0 %5518
    %5522 = vset.pattern.permute.xlu0 0
    %5523 = vperm.xlu0 %5522, %v5477
    %v5524 = vpop.permute.xlu0 %5523
    %5527 = vset.pattern.permute.xlu0 0
    %5528 = vperm.xlu0 %5527, %v5478
    %v5529 = vpop.permute.xlu0 %5528
    %5532 = vset.pattern.permute.xlu0 0
    %5533 = vperm.xlu0 %5532, %v5479
    %v5534 = vpop.permute.xlu0 %5533
    %5537 = vset.pattern.permute.xlu0 0
    %5538 = vperm.xlu0 %5537, %v5480
    %v5539 = vpop.permute.xlu0 %5538
    %5542 = vset.pattern.permute.xlu0 0
    %5543 = vperm.xlu0 %5542, %v5481
    %v5544 = vpop.permute.xlu0 %5543
    %5547 = vset.pattern.permute.xlu0 0
    %5548 = vperm.xlu0 %5547, %v5482
    %v5549 = vpop.permute.xlu0 %5548
    %5552 = vset.pattern.permute.xlu0 0
    %5553 = vperm.xlu0 %5552, %v5483
    %v5554 = vpop.permute.xlu0 %5553
    %5557 = vset.pattern.permute.xlu0 0
    %5558 = vperm.xlu0 %5557, %v5484
    %v5559 = vpop.permute.xlu0 %5558
    %5562 = vset.pattern.permute.xlu0 0
    %5563 = vperm.xlu0 %5562, %v5485
    %v5564 = vpop.permute.xlu0 %5563
    %5567 = vset.pattern.permute.xlu0 0
    %5568 = vperm.xlu0 %5567, %v5486
    %v5569 = vpop.permute.xlu0 %5568
    %5572 = vset.pattern.permute.xlu0 0
    %5573 = vperm.xlu0 %5572, %v5487
    %v5574 = vpop.permute.xlu0 %5573
    %5577 = vset.pattern.permute.xlu0 0
    %5578 = vperm.xlu0 %5577, %v5488
    %v5579 = vpop.permute.xlu0 %5578
    %5582 = vset.pattern.permute.xlu0 0
    %5583 = vperm.xlu0 %5582, %v5489
    %v5584 = vpop.permute.xlu0 %5583
    %5587 = vset.pattern.permute.xlu0 0
    %5588 = vperm.xlu0 %5587, %v5490
    %v5589 = vpop.permute.xlu0 %5588
    %5592 = vset.pattern.permute.xlu0 0
    %5593 = vperm.xlu0 %5592, %v5491
    %v5594 = vpop.permute.xlu0 %5593
    %5597 = vset.pattern.permute.xlu0 0
    %5598 = vperm.xlu0 %5597, %v5492
    %v5599 = vpop.permute.xlu0 %5598
    %5602 = vset.pattern.permute.xlu0 0
    %5603 = vperm.xlu0 %5602, %v5493
    %v5604 = vpop.permute.xlu0 %5603
    %5607 = vset.pattern.permute.xlu0 0
    %5608 = vperm.xlu0 %5607, %v5494
    %v5609 = vpop.permute.xlu0 %5608
    %5612 = vset.pattern.permute.xlu0 0
    %5613 = vperm.xlu0 %5612, %v5495
    %v5614 = vpop.permute.xlu0 %5613
    %5617 = vset.pattern.permute.xlu0 0
    %5618 = vperm.xlu0 %5617, %v5496
    %v5619 = vpop.permute.xlu0 %5618
    %5622 = vset.pattern.permute.xlu0 0
    %5623 = vperm.xlu0 %5622, %v5497
    %v5624 = vpop.permute.xlu0 %5623
    %5627 = vset.pattern.permute.xlu0 0
    %5628 = vperm.xlu0 %5627, %v5498
    %v5629 = vpop.permute.xlu0 %5628
    %5632 = vset.pattern.permute.xlu0 0
    %5633 = vperm.xlu0 %5632, %v5499
    %v5634 = vpop.permute.xlu0 %5633
    %5637 = vset.pattern.permute.xlu0 0
    %5638 = vperm.xlu0 %5637, %v5500
    %v5639 = vpop.permute.xlu0 %5638
    %5642 = vset.pattern.permute.xlu0 0
    %5643 = vperm.xlu0 %5642, %v5501
    %v5644 = vpop.permute.xlu0 %5643
    %5647 = vset.pattern.permute.xlu0 0
    %5648 = vperm.xlu0 %5647, %v5502
    %v5649 = vpop.permute.xlu0 %5648
    %5652 = vset.pattern.permute.xlu0 0
    %5653 = vperm.xlu0 %5652, %v5503
    %v5654 = vpop.permute.xlu0 %5653
    %5657 = vset.pattern.permute.xlu0 0
    %5658 = vperm.xlu0 %5657, %v5504
    %v5659 = vpop.permute.xlu0 %5658
    %5662 = vset.pattern.permute.xlu0 0
    %5663 = vperm.xlu0 %5662, %v5505
    %v5664 = vpop.permute.xlu0 %5663
    %v5762 = vunpack.c.l.b16 %v5342
    %v5763 = vunpack.c.h.b16 %v5342
    %v5764 = vunpack.c.l.b16 %v5343
    %v5765 = vunpack.c.h.b16 %v5343
    %v5766 = vunpack.c.l.b16 %v5344
    %v5767 = vunpack.c.l.b16 %v5345
    %v5768 = vunpack.c.h.b16 %v5345
    %v5769 = vunpack.c.l.b16 %v5346
    %v5770 = vunpack.c.h.b16 %v5346
    %v5771 = vunpack.c.l.b16 %v5347
    %v5772 = vunpack.c.l.b16 %v5348
    %v5773 = vunpack.c.h.b16 %v5348
    %v5774 = vunpack.c.l.b16 %v5349
    %v5775 = vunpack.c.h.b16 %v5349
    %v5776 = vunpack.c.l.b16 %v5350
    %v5777 = vunpack.c.l.b16 %v5351
    %v5778 = vunpack.c.h.b16 %v5351
    %v5779 = vunpack.c.l.b16 %v5352
    %v5780 = vunpack.c.h.b16 %v5352
    %v5781 = vunpack.c.l.b16 %v5353
    %v5782 = vunpack.c.l.b16 %v5354
    %v5783 = vunpack.c.h.b16 %v5354
    %v5784 = vunpack.c.l.b16 %v5355
    %v5785 = vunpack.c.h.b16 %v5355
    %v5786 = vunpack.c.l.b16 %v5356
    %v5787 = vunpack.c.l.b16 %v5357
    %v5788 = vunpack.c.h.b16 %v5357
    %v5789 = vunpack.c.l.b16 %v5358
    %v5790 = vunpack.c.h.b16 %v5358
    %v5791 = vunpack.c.l.b16 %v5359
    %v5792 = vunpack.c.l.b16 %v5360
    %v5793 = vunpack.c.h.b16 %v5360
    %v5794 = vunpack.c.l.b16 %v5361
    %v5795 = vunpack.c.h.b16 %v5361
    %v5796 = vunpack.c.l.b16 %v5362
    %v5797 = vunpack.c.l.b16 %v5363
    %v5798 = vunpack.c.h.b16 %v5363
    %v5799 = vunpack.c.l.b16 %v5364
    %v5800 = vunpack.c.h.b16 %v5364
    %v5801 = vunpack.c.l.b16 %v5365
    %v5802 = vunpack.c.l.b16 %v5366
    %v5803 = vunpack.c.h.b16 %v5366
    %v5804 = vunpack.c.l.b16 %v5367
    %v5805 = vunpack.c.h.b16 %v5367
    %v5806 = vunpack.c.l.b16 %v5368
    %v5807 = vunpack.c.l.b16 %v5369
    %v5808 = vunpack.c.h.b16 %v5369
    %v5809 = vunpack.c.l.b16 %v5370
    %v5810 = vunpack.c.h.b16 %v5370
    %v5811 = vunpack.c.l.b16 %v5371
    %v5812 = vunpack.c.l.b16 %v5372
    %v5813 = vunpack.c.h.b16 %v5372
    %v5814 = vunpack.c.l.b16 %v5373
    %v5815 = vunpack.c.h.b16 %v5373
    %v5816 = vunpack.c.l.b16 %v5374
    %v5817 = vunpack.c.l.b16 %v5375
    %v5818 = vunpack.c.h.b16 %v5375
    %v5819 = vunpack.c.l.b16 %v5376
    %v5820 = vunpack.c.h.b16 %v5376
    %v5821 = vunpack.c.l.b16 %v5377
    %v5822 = vunpack.c.l.b16 %v5378
    %v5823 = vunpack.c.h.b16 %v5378
    %v5824 = vunpack.c.l.b16 %v5379
    %v5825 = vunpack.c.h.b16 %v5379
    %v5826 = vunpack.c.l.b16 %v5380
    %v5827 = vunpack.c.l.b16 %v5381
    %v5828 = vunpack.c.h.b16 %v5381
    %v5829 = vunpack.c.l.b16 %v5382
    %v5830 = vunpack.c.h.b16 %v5382
    %v5831 = vunpack.c.l.b16 %v5383
    %v5832 = vunpack.c.l.b16 %v5384
    %v5833 = vunpack.c.h.b16 %v5384
    %v5834 = vunpack.c.l.b16 %v5385
    %v5835 = vunpack.c.h.b16 %v5385
    %v5836 = vunpack.c.l.b16 %v5386
    %v5837 = vunpack.c.l.b16 %v5387
    %v5838 = vunpack.c.h.b16 %v5387
    %v5839 = vunpack.c.l.b16 %v5388
    %v5840 = vunpack.c.h.b16 %v5388
    %v5841 = vunpack.c.l.b16 %v5389
    %v5842 = vunpack.c.l.b16 %v5390
    %v5843 = vunpack.c.h.b16 %v5390
    %v5844 = vunpack.c.l.b16 %v5391
    %v5845 = vunpack.c.h.b16 %v5391
    %v5846 = vunpack.c.l.b16 %v5392
    %v5847 = vunpack.c.l.b16 %v5393
    %v5848 = vunpack.c.h.b16 %v5393
    %v5849 = vunpack.c.l.b16 %v5394
    %v5850 = vunpack.c.h.b16 %v5394
    %v5851 = vunpack.c.l.b16 %v5395
    %v5852 = vunpack.c.l.b16 %v5396
    %v5853 = vunpack.c.h.b16 %v5396
    %v5854 = vunpack.c.l.b16 %v5397
    %v5855 = vunpack.c.h.b16 %v5397
    %v5856 = vunpack.c.l.b16 %v5398
    %v5857 = vunpack.c.l.b16 %v5399
    %v5858 = vunpack.c.h.b16 %v5399
    %v5859 = vunpack.c.l.b16 %v5400
    %v5860 = vunpack.c.h.b16 %v5400
    %v5861 = vunpack.c.l.b16 %v5401
    %v5862 = vunpack.c.l.b16 %v5402
    %v5863 = vunpack.c.h.b16 %v5402
    %v5864 = vunpack.c.l.b16 %v5403
    %v5865 = vunpack.c.h.b16 %v5403
    %v5866 = vunpack.c.l.b16 %v5404
    %v5867 = vunpack.c.l.b16 %v5405
    %v5868 = vunpack.c.h.b16 %v5405
    %v5869 = vunpack.c.l.b16 %v5406
    %v5870 = vunpack.c.h.b16 %v5406
    %v5871 = vunpack.c.l.b16 %v5407
    %v5872 = vunpack.c.l.b16 %v5408
    %v5873 = vunpack.c.h.b16 %v5408
    %v5874 = vunpack.c.l.b16 %v5409
    %v5875 = vunpack.c.h.b16 %v5409
    %v5876 = vunpack.c.l.b16 %v5410
    %v5877 = vunpack.c.l.b16 %v5411
    %v5878 = vunpack.c.h.b16 %v5411
    %v5879 = vunpack.c.l.b16 %v5412
    %v5880 = vunpack.c.h.b16 %v5412
    %v5881 = vunpack.c.l.b16 %v5413
    %v5882 = vunpack.c.l.b16 %v5414
    %v5883 = vunpack.c.h.b16 %v5414
    %v5884 = vunpack.c.l.b16 %v5415
    %v5885 = vunpack.c.h.b16 %v5415
    %v5886 = vunpack.c.l.b16 %v5416
    %v5887 = vunpack.c.l.b16 %v5417
    %v5888 = vunpack.c.h.b16 %v5417
    %v5889 = vunpack.c.l.b16 %v5418
    %v5890 = vunpack.c.h.b16 %v5418
    %v5891 = vunpack.c.l.b16 %v5419
    %v5892 = vunpack.c.l.b16 %v5420
    %v5893 = vunpack.c.h.b16 %v5420
    %v5894 = vunpack.c.l.b16 %v5421
    %v5895 = vunpack.c.h.b16 %v5421
    %v5896 = vunpack.c.l.b16 %v5422
    %v5897 = vunpack.c.l.b16 %v5423
    %v5898 = vunpack.c.h.b16 %v5423
    %v5899 = vunpack.c.l.b16 %v5424
    %v5900 = vunpack.c.h.b16 %v5424
    %v5901 = vunpack.c.l.b16 %v5425
    %v5902 = vunpack.c.l.b16 %v5426
    %v5903 = vunpack.c.h.b16 %v5426
    %v5904 = vunpack.c.l.b16 %v5427
    %v5905 = vunpack.c.h.b16 %v5427
    %v5906 = vunpack.c.l.b16 %v5428
    %v5907 = vunpack.c.l.b16 %v5429
    %v5908 = vunpack.c.h.b16 %v5429
    %v5909 = vunpack.c.l.b16 %v5430
    %v5910 = vunpack.c.h.b16 %v5430
    %v5911 = vunpack.c.l.b16 %v5431
    %v5912 = vunpack.c.l.b16 %v5432
    %v5913 = vunpack.c.h.b16 %v5432
    %v5914 = vunpack.c.l.b16 %v5433
    %v5915 = vunpack.c.h.b16 %v5433
    %v5916 = vunpack.c.l.b16 %v5434
    %v5917 = vunpack.c.l.b16 %v5435
    %v5918 = vunpack.c.h.b16 %v5435
    %v5919 = vunpack.c.l.b16 %v5436
    %v5920 = vunpack.c.h.b16 %v5436
    %v5921 = vunpack.c.l.b16 %v5437
    %v5922 = vpack.c.b16 %v5767, %v5762
    %v5923 = vpack.c.b16 %v5768, %v5763
    %v5924 = vpack.c.b16 %v5769, %v5764
    %v5925 = vpack.c.b16 %v5770, %v5765
    %v5926 = vpack.c.b16 %v5771, %v5766
    %v5927 = vpack.c.b16 %v5777, %v5772
    %v5928 = vpack.c.b16 %v5778, %v5773
    %v5929 = vpack.c.b16 %v5779, %v5774
    %v5930 = vpack.c.b16 %v5780, %v5775
    %v5931 = vpack.c.b16 %v5781, %v5776
    %v5932 = vpack.c.b16 %v5787, %v5782
    %v5933 = vpack.c.b16 %v5788, %v5783
    %v5934 = vpack.c.b16 %v5789, %v5784
    %v5935 = vpack.c.b16 %v5790, %v5785
    %v5936 = vpack.c.b16 %v5791, %v5786
    %v5937 = vpack.c.b16 %v5797, %v5792
    %v5938 = vpack.c.b16 %v5798, %v5793
    %v5939 = vpack.c.b16 %v5799, %v5794
    %v5940 = vpack.c.b16 %v5800, %v5795
    %v5941 = vpack.c.b16 %v5801, %v5796
    %v5942 = vpack.c.b16 %v5807, %v5802
    %v5943 = vpack.c.b16 %v5808, %v5803
    %v5944 = vpack.c.b16 %v5809, %v5804
    %v5945 = vpack.c.b16 %v5810, %v5805
    %v5946 = vpack.c.b16 %v5811, %v5806
    %v5947 = vpack.c.b16 %v5817, %v5812
    %v5948 = vpack.c.b16 %v5818, %v5813
    %v5949 = vpack.c.b16 %v5819, %v5814
    %v5950 = vpack.c.b16 %v5820, %v5815
    %v5951 = vpack.c.b16 %v5821, %v5816
    %v5952 = vpack.c.b16 %v5827, %v5822
    %v5953 = vpack.c.b16 %v5828, %v5823
    %v5954 = vpack.c.b16 %v5829, %v5824
    %v5955 = vpack.c.b16 %v5830, %v5825
    %v5956 = vpack.c.b16 %v5831, %v5826
    %v5957 = vpack.c.b16 %v5837, %v5832
    %v5958 = vpack.c.b16 %v5838, %v5833
    %v5959 = vpack.c.b16 %v5839, %v5834
    %v5960 = vpack.c.b16 %v5840, %v5835
    %v5961 = vpack.c.b16 %v5841, %v5836
    %v5962 = vpack.c.b16 %v5847, %v5842
    %v5963 = vpack.c.b16 %v5848, %v5843
    %v5964 = vpack.c.b16 %v5849, %v5844
    %v5965 = vpack.c.b16 %v5850, %v5845
    %v5966 = vpack.c.b16 %v5851, %v5846
    %v5967 = vpack.c.b16 %v5857, %v5852
    %v5968 = vpack.c.b16 %v5858, %v5853
    %v5969 = vpack.c.b16 %v5859, %v5854
    %v5970 = vpack.c.b16 %v5860, %v5855
    %v5971 = vpack.c.b16 %v5861, %v5856
    %v5972 = vpack.c.b16 %v5867, %v5862
    %v5973 = vpack.c.b16 %v5868, %v5863
    %v5974 = vpack.c.b16 %v5869, %v5864
    %v5975 = vpack.c.b16 %v5870, %v5865
    %v5976 = vpack.c.b16 %v5871, %v5866
    %v5977 = vpack.c.b16 %v5877, %v5872
    %v5978 = vpack.c.b16 %v5878, %v5873
    %v5979 = vpack.c.b16 %v5879, %v5874
    %v5980 = vpack.c.b16 %v5880, %v5875
    %v5981 = vpack.c.b16 %v5881, %v5876
    %v5982 = vpack.c.b16 %v5887, %v5882
    %v5983 = vpack.c.b16 %v5888, %v5883
    %v5984 = vpack.c.b16 %v5889, %v5884
    %v5985 = vpack.c.b16 %v5890, %v5885
    %v5986 = vpack.c.b16 %v5891, %v5886
    %v5987 = vpack.c.b16 %v5897, %v5892
    %v5988 = vpack.c.b16 %v5898, %v5893
    %v5989 = vpack.c.b16 %v5899, %v5894
    %v5990 = vpack.c.b16 %v5900, %v5895
    %v5991 = vpack.c.b16 %v5901, %v5896
    %v5992 = vpack.c.b16 %v5907, %v5902
    %v5993 = vpack.c.b16 %v5908, %v5903
    %v5994 = vpack.c.b16 %v5909, %v5904
    %v5995 = vpack.c.b16 %v5910, %v5905
    %v5996 = vpack.c.b16 %v5911, %v5906
    %v5997 = vpack.c.b16 %v5917, %v5912
    %v5998 = vpack.c.b16 %v5918, %v5913
    %v5999 = vpack.c.b16 %v5919, %v5914
    %v6000 = vpack.c.b16 %v5920, %v5915
    %v6001 = vpack.c.b16 %v5921, %v5916
    %vm6066 = vcmask 523264
    %v6068 = vsel %vm6066, %v5926, 0
    %v6071 = vsel %vm6066, %v5931, 0
    %v6074 = vsel %vm6066, %v5936, 0
    %v6077 = vsel %vm6066, %v5941, 0
    %v6080 = vsel %vm6066, %v5946, 0
    %v6083 = vsel %vm6066, %v5951, 0
    %v6086 = vsel %vm6066, %v5956, 0
    %v6089 = vsel %vm6066, %v5961, 0
    %v6092 = vsel %vm6066, %v5966, 0
    %v6095 = vsel %vm6066, %v5971, 0
    %v6098 = vsel %vm6066, %v5976, 0
    %v6101 = vsel %vm6066, %v5981, 0
    %v6104 = vsel %vm6066, %v5986, 0
    %v6107 = vsel %vm6066, %v5991, 0
    %v6110 = vsel %vm6066, %v5996, 0
    %v6113 = vsel %vm6066, %v6001, 0
    %6115 = vmatprep.subr.bf16.mxu0 0
    %6116 = vmatpush1.bf16.msra.mxu0 %v5438
    %6117 = vmatprep.subr.bf16.mxu0 0
    %6118 = vmatpush1.bf16.msra.mxu0 %v5439
    %6119 = vmatprep.subr.bf16.mxu0 0
    %6120 = vmatpush1.bf16.msra.mxu0 %v5440
    %6121 = vmatprep.subr.bf16.mxu0 0
    %6122 = vmatpush1.bf16.msra.mxu0 %v5441
    %6123 = vmatprep.subr.bf16.mxu0 0
    %6124 = vmatpush1.bf16.msra.mxu0 %v5442
    %6125 = vmatprep.subr.bf16.mxu0 0
    %6126 = vmatpush1.bf16.msra.mxu0 %v5443
    %6127 = vmatprep.subr.bf16.mxu0 0
    %6128 = vmatpush1.bf16.msra.mxu0 %v5444
    %6129 = vmatprep.subr.bf16.mxu0 0
    %6130 = vmatpush1.bf16.msra.mxu0 %v5445
    %6131 = vmatprep.subr.bf16.mxu0 0
    %6132 = vmatpush1.bf16.msra.mxu0 %v5446
    %6133 = vmatprep.subr.bf16.mxu0 0
    %6134 = vmatpush1.bf16.msra.mxu0 %v5447
    %6135 = vmatprep.subr.bf16.mxu0 0
    %6136 = vmatpush1.bf16.msra.mxu0 %v5448
    %6137 = vmatprep.subr.bf16.mxu0 0
    %6138 = vmatpush1.bf16.msra.mxu0 %v5449
    %6139 = vmatprep.subr.bf16.mxu0 0
    %6140 = vmatpush1.bf16.msra.mxu0 %v5450
    %6141 = vmatprep.subr.bf16.mxu0 0
    %6142 = vmatpush1.bf16.msra.mxu0 %v5451
    %6143 = vmatprep.subr.bf16.mxu0 0
    %6144 = vmatpush1.bf16.msra.mxu0 %v5452
    %6145 = vmatprep.subr.bf16.mxu0 0
    %6146 = vmatpush1.bf16.msra.mxu0 %v5453
    %6147 = vmatprep.mubr.bf16.mxu0 %v5923
    %6148 = vmatmul.mubr.bf16.gmra.mrb[0].mxu0 %v5922
    %v6149 = vpop.f32.mrb[0].mxu0
    %v6150 = vadd.f32 %v5509, %v6149
    %v6151 = vpop.f32.mrb[0].mxu0
    %v6152 = vpop.f32.mrb[0].mxu0
    %v6153 = vadd.f32 %v5514, %v6152
    %v6154 = vpop.f32.mrb[0].mxu0
    %6155 = vmatprep.mubr.bf16.mxu0 %v5928
    %6156 = vmatmul.mubr.bf16.gmra.mrb[0].mxu0 %v5927
    %v6157 = vpop.f32.mrb[0].mxu0
    %v6158 = vadd.f32 %v5519, %v6157
    %v6159 = vpop.f32.mrb[0].mxu0
    %v6160 = vpop.f32.mrb[0].mxu0
    %v6161 = vadd.f32 %v5524, %v6160
    %v6162 = vpop.f32.mrb[0].mxu0
    %6163 = vmatprep.mubr.bf16.mxu0 %v5933
    %6164 = vmatmul.mubr.bf16.gmra.mrb[0].mxu0 %v5932
    %v6165 = vpop.f32.mrb[0].mxu0
    %v6166 = vadd.f32 %v5529, %v6165
    %v6167 = vpop.f32.mrb[0].mxu0
    %v6168 = vpop.f32.mrb[0].mxu0
    %v6169 = vadd.f32 %v5534, %v6168
    %v6170 = vpop.f32.mrb[0].mxu0
    %6171 = vmatprep.mubr.bf16.mxu0 %v5938
    %6172 = vmatmul.mubr.bf16.gmra.mrb[0].mxu0 %v5937
    %v6173 = vpop.f32.mrb[0].mxu0
    %v6174 = vadd.f32 %v5539, %v6173
    %v6175 = vpop.f32.mrb[0].mxu0
    %v6176 = vpop.f32.mrb[0].mxu0
    %v6177 = vadd.f32 %v5544, %v6176
    %v6178 = vpop.f32.mrb[0].mxu0
    %6179 = vmatprep.mubr.bf16.mxu0 %v5943
    %6180 = vmatmul.mubr.bf16.gmra.mrb[0].mxu0 %v5942
    %v6181 = vpop.f32.mrb[0].mxu0
    %v6182 = vadd.f32 %v5549, %v6181
    %v6183 = vpop.f32.mrb[0].mxu0
    %v6184 = vpop.f32.mrb[0].mxu0
    %v6185 = vadd.f32 %v5554, %v6184
    %v6186 = vpop.f32.mrb[0].mxu0
    %6187 = vmatprep.mubr.bf16.mxu0 %v5948
    %6188 = vmatmul.mubr.bf16.gmra.mrb[0].mxu0 %v5947
    %v6189 = vpop.f32.mrb[0].mxu0
    %v6190 = vadd.f32 %v5559, %v6189
    %v6191 = vpop.f32.mrb[0].mxu0
    %v6192 = vpop.f32.mrb[0].mxu0
    %v6193 = vadd.f32 %v5564, %v6192
    %v6194 = vpop.f32.mrb[0].mxu0
    %6195 = vmatprep.mubr.bf16.mxu0 %v5953
    %6196 = vmatmul.mubr.bf16.gmra.mrb[0].mxu0 %v5952
    %v6197 = vpop.f32.mrb[0].mxu0
    %v6198 = vadd.f32 %v5569, %v6197
    %v6199 = vpop.f32.mrb[0].mxu0
    %v6200 = vpop.f32.mrb[0].mxu0
    %v6201 = vadd.f32 %v5574, %v6200
    %v6202 = vpop.f32.mrb[0].mxu0
    %6203 = vmatprep.mubr.bf16.mxu0 %v5958
    %6204 = vmatmul.mubr.bf16.gmra.mrb[0].mxu0 %v5957
    %v6205 = vpop.f32.mrb[0].mxu0
    %v6206 = vadd.f32 %v5579, %v6205
    %v6207 = vpop.f32.mrb[0].mxu0
    %v6208 = vpop.f32.mrb[0].mxu0
    %v6209 = vadd.f32 %v5584, %v6208
    %v6210 = vpop.f32.mrb[0].mxu0
    %6211 = vmatprep.mubr.bf16.mxu0 %v5963
    %6212 = vmatmul.mubr.bf16.gmra.mrb[0].mxu0 %v5962
    %v6213 = vpop.f32.mrb[0].mxu0
    %v6214 = vadd.f32 %v5589, %v6213
    %v6215 = vpop.f32.mrb[0].mxu0
    %v6216 = vpop.f32.mrb[0].mxu0
    %v6217 = vadd.f32 %v5594, %v6216
    %v6218 = vpop.f32.mrb[0].mxu0
    %6219 = vmatprep.mubr.bf16.mxu0 %v5968
    %6220 = vmatmul.mubr.bf16.gmra.mrb[0].mxu0 %v5967
    %v6221 = vpop.f32.mrb[0].mxu0
    %v6222 = vadd.f32 %v5599, %v6221
    %v6223 = vpop.f32.mrb[0].mxu0
    %v6224 = vpop.f32.mrb[0].mxu0
    %v6225 = vadd.f32 %v5604, %v6224
    %v6226 = vpop.f32.mrb[0].mxu0
    %6227 = vmatprep.mubr.bf16.mxu0 %v5973
    %6228 = vmatmul.mubr.bf16.gmra.mrb[0].mxu0 %v5972
    %v6229 = vpop.f32.mrb[0].mxu0
    %v6230 = vadd.f32 %v5609, %v6229
    %v6231 = vpop.f32.mrb[0].mxu0
    %v6232 = vpop.f32.mrb[0].mxu0
    %v6233 = vadd.f32 %v5614, %v6232
    %v6234 = vpop.f32.mrb[0].mxu0
    %6235 = vmatprep.mubr.bf16.mxu0 %v5978
    %6236 = vmatmul.mubr.bf16.gmra.mrb[0].mxu0 %v5977
    %v6237 = vpop.f32.mrb[0].mxu0
    %v6238 = vadd.f32 %v5619, %v6237
    %v6239 = vpop.f32.mrb[0].mxu0
    %v6240 = vpop.f32.mrb[0].mxu0
    %v6241 = vadd.f32 %v5624, %v6240
    %v6242 = vpop.f32.mrb[0].mxu0
    %6243 = vmatprep.mubr.bf16.mxu0 %v5983
    %6244 = vmatmul.mubr.bf16.gmra.mrb[0].mxu0 %v5982
    %v6245 = vpop.f32.mrb[0].mxu0
    %v6246 = vadd.f32 %v5629, %v6245
    %v6247 = vpop.f32.mrb[0].mxu0
    %v6248 = vpop.f32.mrb[0].mxu0
    %v6249 = vadd.f32 %v5634, %v6248
    %v6250 = vpop.f32.mrb[0].mxu0
    %6251 = vmatprep.mubr.bf16.mxu0 %v5988
    %6252 = vmatmul.mubr.bf16.gmra.mrb[0].mxu0 %v5987
    %v6253 = vpop.f32.mrb[0].mxu0
    %v6254 = vadd.f32 %v5639, %v6253
    %v6255 = vpop.f32.mrb[0].mxu0
    %v6256 = vpop.f32.mrb[0].mxu0
    %v6257 = vadd.f32 %v5644, %v6256
    %v6258 = vpop.f32.mrb[0].mxu0
    %6259 = vmatprep.mubr.bf16.mxu0 %v5993
    %6260 = vmatmul.mubr.bf16.gmra.mrb[0].mxu0 %v5992
    %v6261 = vpop.f32.mrb[0].mxu0
    %v6262 = vadd.f32 %v5649, %v6261
    %v6263 = vpop.f32.mrb[0].mxu0
    %v6264 = vpop.f32.mrb[0].mxu0
    %v6265 = vadd.f32 %v5654, %v6264
    %v6266 = vpop.f32.mrb[0].mxu0
    %6267 = vmatprep.mubr.bf16.mxu0 %v5998
    %6268 = vmatmul.mubr.bf16.gmra.mrb[0].mxu0 %v5997
    %v6269 = vpop.f32.mrb[0].mxu0
    %v6270 = vadd.f32 %v5659, %v6269
    %v6271 = vpop.f32.mrb[0].mxu0
    %v6272 = vpop.f32.mrb[0].mxu0
    %v6273 = vadd.f32 %v5664, %v6272
    %v6274 = vpop.f32.mrb[0].mxu0
    %6275 = vdwg.mxu0
    %6276 = vmatprep.subr.bf16.mxu0 0
    %6277 = vmatpush1.bf16.msra.mxu0 %v5454
    %6278 = vmatprep.subr.bf16.mxu0 0
    %6279 = vmatpush1.bf16.msra.mxu0 %v5455
    %6280 = vmatprep.subr.bf16.mxu0 0
    %6281 = vmatpush1.bf16.msra.mxu0 %v5456
    %6282 = vmatprep.subr.bf16.mxu0 0
    %6283 = vmatpush1.bf16.msra.mxu0 %v5457
    %6284 = vmatprep.subr.bf16.mxu0 0
    %6285 = vmatpush1.bf16.msra.mxu0 %v5458
    %6286 = vmatprep.subr.bf16.mxu0 0
    %6287 = vmatpush1.bf16.msra.mxu0 %v5459
    %6288 = vmatprep.subr.bf16.mxu0 0
    %6289 = vmatpush1.bf16.msra.mxu0 %v5460
    %6290 = vmatprep.subr.bf16.mxu0 0
    %6291 = vmatpush1.bf16.msra.mxu0 %v5461
    %6292 = vmatprep.subr.bf16.mxu0 0
    %6293 = vmatpush1.bf16.msra.mxu0 %v5462
    %6294 = vmatprep.subr.bf16.mxu0 0
    %6295 = vmatpush1.bf16.msra.mxu0 %v5463
    %6296 = vmatprep.subr.bf16.mxu0 0
    %6297 = vmatpush1.bf16.msra.mxu0 %v5464
    %6298 = vmatprep.subr.bf16.mxu0 0
    %6299 = vmatpush1.bf16.msra.mxu0 %v5465
    %6300 = vmatprep.subr.bf16.mxu0 0
    %6301 = vmatpush1.bf16.msra.mxu0 %v5466
    %6302 = vmatprep.subr.bf16.mxu0 0
    %6303 = vmatpush1.bf16.msra.mxu0 %v5467
    %6304 = vmatprep.subr.bf16.mxu0 0
    %6305 = vmatpush1.bf16.msra.mxu0 %v5468
    %6306 = vmatprep.subr.bf16.mxu0 0
    %6307 = vmatpush1.bf16.msra.mxu0 %v5469
    %6308 = vmatprep.mubr.bf16.mxu0 %v5925
    %6309 = vmatmul.mubr.bf16.gmra.mrb[0].mxu0 %v5924
    %v6310 = vpop.f32.mrb[0].mxu0
    %v6311 = vadd.f32 %v6150, %v6310
    %v6312 = vpop.f32.mrb[0].mxu0
    %v6313 = vpop.f32.mrb[0].mxu0
    %v6314 = vadd.f32 %v6153, %v6313
    %v6315 = vpop.f32.mrb[0].mxu0
    %6316 = vmatprep.mubr.bf16.mxu0 %v5930
    %6317 = vmatmul.mubr.bf16.gmra.mrb[0].mxu0 %v5929
    %v6318 = vpop.f32.mrb[0].mxu0
    %v6319 = vadd.f32 %v6158, %v6318
    %v6320 = vpop.f32.mrb[0].mxu0
    %v6321 = vpop.f32.mrb[0].mxu0
    %v6322 = vadd.f32 %v6161, %v6321
    %v6323 = vpop.f32.mrb[0].mxu0
    %6324 = vmatprep.mubr.bf16.mxu0 %v5935
    %6325 = vmatmul.mubr.bf16.gmra.mrb[0].mxu0 %v5934
    %v6326 = vpop.f32.mrb[0].mxu0
    %v6327 = vadd.f32 %v6166, %v6326
    %v6328 = vpop.f32.mrb[0].mxu0
    %v6329 = vpop.f32.mrb[0].mxu0
    %v6330 = vadd.f32 %v6169, %v6329
    %v6331 = vpop.f32.mrb[0].mxu0
    %6332 = vmatprep.mubr.bf16.mxu0 %v5940
    %6333 = vmatmul.mubr.bf16.gmra.mrb[0].mxu0 %v5939
    %v6334 = vpop.f32.mrb[0].mxu0
    %v6335 = vadd.f32 %v6174, %v6334
    %v6336 = vpop.f32.mrb[0].mxu0
    %v6337 = vpop.f32.mrb[0].mxu0
    %v6338 = vadd.f32 %v6177, %v6337
    %v6339 = vpop.f32.mrb[0].mxu0
    %6340 = vmatprep.mubr.bf16.mxu0 %v5945
    %6341 = vmatmul.mubr.bf16.gmra.mrb[0].mxu0 %v5944
    %v6342 = vpop.f32.mrb[0].mxu0
    %v6343 = vadd.f32 %v6182, %v6342
    %v6344 = vpop.f32.mrb[0].mxu0
    %v6345 = vpop.f32.mrb[0].mxu0
    %v6346 = vadd.f32 %v6185, %v6345
    %v6347 = vpop.f32.mrb[0].mxu0
    %6348 = vmatprep.mubr.bf16.mxu0 %v5950
    %6349 = vmatmul.mubr.bf16.gmra.mrb[0].mxu0 %v5949
    %v6350 = vpop.f32.mrb[0].mxu0
    %v6351 = vadd.f32 %v6190, %v6350
    %v6352 = vpop.f32.mrb[0].mxu0
    %v6353 = vpop.f32.mrb[0].mxu0
    %v6354 = vadd.f32 %v6193, %v6353
    %v6355 = vpop.f32.mrb[0].mxu0
    %6356 = vmatprep.mubr.bf16.mxu0 %v5955
    %6357 = vmatmul.mubr.bf16.gmra.mrb[0].mxu0 %v5954
    %v6358 = vpop.f32.mrb[0].mxu0
    %v6359 = vadd.f32 %v6198, %v6358
    %v6360 = vpop.f32.mrb[0].mxu0
    %v6361 = vpop.f32.mrb[0].mxu0
    %v6362 = vadd.f32 %v6201, %v6361
    %v6363 = vpop.f32.mrb[0].mxu0
    %6364 = vmatprep.mubr.bf16.mxu0 %v5960
    %6365 = vmatmul.mubr.bf16.gmra.mrb[0].mxu0 %v5959
    %v6366 = vpop.f32.mrb[0].mxu0
    %v6367 = vadd.f32 %v6206, %v6366
    %v6368 = vpop.f32.mrb[0].mxu0
    %v6369 = vpop.f32.mrb[0].mxu0
    %v6370 = vadd.f32 %v6209, %v6369
    %v6371 = vpop.f32.mrb[0].mxu0
    %6372 = vmatprep.mubr.bf16.mxu0 %v5965
    %6373 = vmatmul.mubr.bf16.gmra.mrb[0].mxu0 %v5964
    %v6374 = vpop.f32.mrb[0].mxu0
    %v6375 = vadd.f32 %v6214, %v6374
    %v6376 = vpop.f32.mrb[0].mxu0
    %v6377 = vpop.f32.mrb[0].mxu0
    %v6378 = vadd.f32 %v6217, %v6377
    %v6379 = vpop.f32.mrb[0].mxu0
    %6380 = vmatprep.mubr.bf16.mxu0 %v5970
    %6381 = vmatmul.mubr.bf16.gmra.mrb[0].mxu0 %v5969
    %v6382 = vpop.f32.mrb[0].mxu0
    %v6383 = vadd.f32 %v6222, %v6382
    %v6384 = vpop.f32.mrb[0].mxu0
    %v6385 = vpop.f32.mrb[0].mxu0
    %v6386 = vadd.f32 %v6225, %v6385
    %v6387 = vpop.f32.mrb[0].mxu0
    %6388 = vmatprep.mubr.bf16.mxu0 %v5975
    %6389 = vmatmul.mubr.bf16.gmra.mrb[0].mxu0 %v5974
    %v6390 = vpop.f32.mrb[0].mxu0
    %v6391 = vadd.f32 %v6230, %v6390
    %v6392 = vpop.f32.mrb[0].mxu0
    %v6393 = vpop.f32.mrb[0].mxu0
    %v6394 = vadd.f32 %v6233, %v6393
    %v6395 = vpop.f32.mrb[0].mxu0
    %6396 = vmatprep.mubr.bf16.mxu0 %v5980
    %6397 = vmatmul.mubr.bf16.gmra.mrb[0].mxu0 %v5979
    %v6398 = vpop.f32.mrb[0].mxu0
    %v6399 = vadd.f32 %v6238, %v6398
    %v6400 = vpop.f32.mrb[0].mxu0
    %v6401 = vpop.f32.mrb[0].mxu0
    %v6402 = vadd.f32 %v6241, %v6401
    %v6403 = vpop.f32.mrb[0].mxu0
    %6404 = vmatprep.mubr.bf16.mxu0 %v5985
    %6405 = vmatmul.mubr.bf16.gmra.mrb[0].mxu0 %v5984
    %v6406 = vpop.f32.mrb[0].mxu0
    %v6407 = vadd.f32 %v6246, %v6406
    %v6408 = vpop.f32.mrb[0].mxu0
    %v6409 = vpop.f32.mrb[0].mxu0
    %v6410 = vadd.f32 %v6249, %v6409
    %v6411 = vpop.f32.mrb[0].mxu0
    %6412 = vmatprep.mubr.bf16.mxu0 %v5990
    %6413 = vmatmul.mubr.bf16.gmra.mrb[0].mxu0 %v5989
    %v6414 = vpop.f32.mrb[0].mxu0
    %v6415 = vadd.f32 %v6254, %v6414
    %v6416 = vpop.f32.mrb[0].mxu0
    %v6417 = vpop.f32.mrb[0].mxu0
    %v6418 = vadd.f32 %v6257, %v6417
    %v6419 = vpop.f32.mrb[0].mxu0
    %6420 = vmatprep.mubr.bf16.mxu0 %v5995
    %6421 = vmatmul.mubr.bf16.gmra.mrb[0].mxu0 %v5994
    %v6422 = vpop.f32.mrb[0].mxu0
    %v6423 = vadd.f32 %v6262, %v6422
    %v6424 = vpop.f32.mrb[0].mxu0
    %v6425 = vpop.f32.mrb[0].mxu0
    %v6426 = vadd.f32 %v6265, %v6425
    %v6427 = vpop.f32.mrb[0].mxu0
    %6428 = vmatprep.mubr.bf16.mxu0 %v6000
    %6429 = vmatmul.mubr.bf16.gmra.mrb[0].mxu0 %v5999
    %v6430 = vpop.f32.mrb[0].mxu0
    %v6431 = vadd.f32 %v6270, %v6430
    %v6432 = vpop.f32.mrb[0].mxu0
    %v6433 = vpop.f32.mrb[0].mxu0
    %v6434 = vadd.f32 %v6273, %v6433
    %v6435 = vpop.f32.mrb[0].mxu0
    %6436 = vdwg.mxu0
    %6437 = vmatprep.subr.bf16.mxu0 0
    %6438 = vmatpush1.bf16.msra.mxu0 %v5470
    %6439 = vmatprep.subr.bf16.mxu0 0
    %6440 = vmatpush1.bf16.msra.mxu0 %v5471
    %6441 = vmatprep.subr.bf16.mxu0 0
    %6442 = vmatpush1.bf16.msra.mxu0 %v5472
    %6443 = vmatprep.subr.bf16.mxu0 0
    %6444 = vmatpush1.bf16.msra.mxu0 %v5473
    %6445 = vmatprep.subr.bf16.mxu0 0
    %6446 = vmatpush1.bf16.msra.mxu0 0
    %6447 = vmatprep.subr.bf16.mxu0 0
    %6448 = vmatpush1.bf16.msra.mxu0 0
    %6449 = vmatprep.subr.bf16.mxu0 0
    %6450 = vmatpush1.bf16.msra.mxu0 0
    %6451 = vmatprep.subr.bf16.mxu0 0
    %6452 = vmatpush1.bf16.msra.mxu0 0
    %6453 = vmatprep.subr.bf16.mxu0 0
    %6454 = vmatpush1.bf16.msra.mxu0 0
    %6455 = vmatprep.subr.bf16.mxu0 0
    %6456 = vmatpush1.bf16.msra.mxu0 0
    %6457 = vmatprep.subr.bf16.mxu0 0
    %6458 = vmatpush1.bf16.msra.mxu0 0
    %6459 = vmatprep.subr.bf16.mxu0 0
    %6460 = vmatpush1.bf16.msra.mxu0 0
    %6461 = vmatprep.subr.bf16.mxu0 0
    %6462 = vmatpush1.bf16.msra.mxu0 0
    %6463 = vmatprep.subr.bf16.mxu0 0
    %6464 = vmatpush1.bf16.msra.mxu0 0
    %6465 = vmatprep.subr.bf16.mxu0 0
    %6466 = vmatpush1.bf16.msra.mxu0 0
    %6467 = vmatprep.subr.bf16.mxu0 0
    %6468 = vmatpush1.bf16.msra.mxu0 0
    %6469 = vmatprep.mubr.bf16.mxu0 0
    %6470 = vmatmul.mubr.bf16.gmra.mrb[0].mxu0 %v6068
    %v6471 = vpop.f32.mrb[0].mxu0
    %v6472 = vadd.f32 %v6311, %v6471
    %v6473 = vpop.f32.mrb[0].mxu0
    %v6474 = vpop.f32.mrb[0].mxu0
    %v6475 = vadd.f32 %v6314, %v6474
    %v6476 = vpop.f32.mrb[0].mxu0
    %6477 = vmatprep.mubr.bf16.mxu0 0
    %6478 = vmatmul.mubr.bf16.gmra.mrb[0].mxu0 %v6071
    %v6479 = vpop.f32.mrb[0].mxu0
    %v6480 = vadd.f32 %v6319, %v6479
    %v6481 = vpop.f32.mrb[0].mxu0
    %v6482 = vpop.f32.mrb[0].mxu0
    %v6483 = vadd.f32 %v6322, %v6482
    %v6484 = vpop.f32.mrb[0].mxu0
    %6485 = vmatprep.mubr.bf16.mxu0 0
    %6486 = vmatmul.mubr.bf16.gmra.mrb[0].mxu0 %v6074
    %v6487 = vpop.f32.mrb[0].mxu0
    %v6488 = vadd.f32 %v6327, %v6487
    %v6489 = vpop.f32.mrb[0].mxu0
    %v6490 = vpop.f32.mrb[0].mxu0
    %v6491 = vadd.f32 %v6330, %v6490
    %v6492 = vpop.f32.mrb[0].mxu0
    %6493 = vmatprep.mubr.bf16.mxu0 0
    %6494 = vmatmul.mubr.bf16.gmra.mrb[0].mxu0 %v6077
    %v6495 = vpop.f32.mrb[0].mxu0
    %v6496 = vadd.f32 %v6335, %v6495
    %v6497 = vpop.f32.mrb[0].mxu0
    %v6498 = vpop.f32.mrb[0].mxu0
    %v6499 = vadd.f32 %v6338, %v6498
    %v6500 = vpop.f32.mrb[0].mxu0
    %6501 = vmatprep.mubr.bf16.mxu0 0
    %6502 = vmatmul.mubr.bf16.gmra.mrb[0].mxu0 %v6080
    %v6503 = vpop.f32.mrb[0].mxu0
    %v6504 = vadd.f32 %v6343, %v6503
    %v6505 = vpop.f32.mrb[0].mxu0
    %v6506 = vpop.f32.mrb[0].mxu0
    %v6507 = vadd.f32 %v6346, %v6506
    %v6508 = vpop.f32.mrb[0].mxu0
    %6509 = vmatprep.mubr.bf16.mxu0 0
    %6510 = vmatmul.mubr.bf16.gmra.mrb[0].mxu0 %v6083
    %v6511 = vpop.f32.mrb[0].mxu0
    %v6512 = vadd.f32 %v6351, %v6511
    %v6513 = vpop.f32.mrb[0].mxu0
    %v6514 = vpop.f32.mrb[0].mxu0
    %v6515 = vadd.f32 %v6354, %v6514
    %v6516 = vpop.f32.mrb[0].mxu0
    %6517 = vmatprep.mubr.bf16.mxu0 0
    %6518 = vmatmul.mubr.bf16.gmra.mrb[0].mxu0 %v6086
    %v6519 = vpop.f32.mrb[0].mxu0
    %v6520 = vadd.f32 %v6359, %v6519
    %v6521 = vpop.f32.mrb[0].mxu0
    %v6522 = vpop.f32.mrb[0].mxu0
    %v6523 = vadd.f32 %v6362, %v6522
    %v6524 = vpop.f32.mrb[0].mxu0
    %6525 = vmatprep.mubr.bf16.mxu0 0
    %6526 = vmatmul.mubr.bf16.gmra.mrb[0].mxu0 %v6089
    %v6527 = vpop.f32.mrb[0].mxu0
    %v6528 = vadd.f32 %v6367, %v6527
    %v6529 = vpop.f32.mrb[0].mxu0
    %v6530 = vpop.f32.mrb[0].mxu0
    %v6531 = vadd.f32 %v6370, %v6530
    %v6532 = vpop.f32.mrb[0].mxu0
    %6533 = vmatprep.mubr.bf16.mxu0 0
    %6534 = vmatmul.mubr.bf16.gmra.mrb[0].mxu0 %v6092
    %v6535 = vpop.f32.mrb[0].mxu0
    %v6536 = vadd.f32 %v6375, %v6535
    %v6537 = vpop.f32.mrb[0].mxu0
    %v6538 = vpop.f32.mrb[0].mxu0
    %v6539 = vadd.f32 %v6378, %v6538
    %v6540 = vpop.f32.mrb[0].mxu0
    %6541 = vmatprep.mubr.bf16.mxu0 0
    %6542 = vmatmul.mubr.bf16.gmra.mrb[0].mxu0 %v6095
    %v6543 = vpop.f32.mrb[0].mxu0
    %v6544 = vadd.f32 %v6383, %v6543
    %v6545 = vpop.f32.mrb[0].mxu0
    %v6546 = vpop.f32.mrb[0].mxu0
    %v6547 = vadd.f32 %v6386, %v6546
    %v6548 = vpop.f32.mrb[0].mxu0
    %6549 = vmatprep.mubr.bf16.mxu0 0
    %6550 = vmatmul.mubr.bf16.gmra.mrb[0].mxu0 %v6098
    %v6551 = vpop.f32.mrb[0].mxu0
    %v6552 = vadd.f32 %v6391, %v6551
    %v6553 = vpop.f32.mrb[0].mxu0
    %v6554 = vpop.f32.mrb[0].mxu0
    %v6555 = vadd.f32 %v6394, %v6554
    %v6556 = vpop.f32.mrb[0].mxu0
    %6557 = vmatprep.mubr.bf16.mxu0 0
    %6558 = vmatmul.mubr.bf16.gmra.mrb[0].mxu0 %v6101
    %v6559 = vpop.f32.mrb[0].mxu0
    %v6560 = vadd.f32 %v6399, %v6559
    %v6561 = vpop.f32.mrb[0].mxu0
    %v6562 = vpop.f32.mrb[0].mxu0
    %v6563 = vadd.f32 %v6402, %v6562
    %v6564 = vpop.f32.mrb[0].mxu0
    %6565 = vmatprep.mubr.bf16.mxu0 0
    %6566 = vmatmul.mubr.bf16.gmra.mrb[0].mxu0 %v6104
    %v6567 = vpop.f32.mrb[0].mxu0
    %v6568 = vadd.f32 %v6407, %v6567
    %v6569 = vpop.f32.mrb[0].mxu0
    %v6570 = vpop.f32.mrb[0].mxu0
    %v6571 = vadd.f32 %v6410, %v6570
    %v6572 = vpop.f32.mrb[0].mxu0
    %6573 = vmatprep.mubr.bf16.mxu0 0
    %6574 = vmatmul.mubr.bf16.gmra.mrb[0].mxu0 %v6107
    %v6575 = vpop.f32.mrb[0].mxu0
    %v6576 = vadd.f32 %v6415, %v6575
    %v6577 = vpop.f32.mrb[0].mxu0
    %v6578 = vpop.f32.mrb[0].mxu0
    %v6579 = vadd.f32 %v6418, %v6578
    %v6580 = vpop.f32.mrb[0].mxu0
    %6581 = vmatprep.mubr.bf16.mxu0 0
    %6582 = vmatmul.mubr.bf16.gmra.mrb[0].mxu0 %v6110
    %v6583 = vpop.f32.mrb[0].mxu0
    %v6584 = vadd.f32 %v6423, %v6583
    %v6585 = vpop.f32.mrb[0].mxu0
    %v6586 = vpop.f32.mrb[0].mxu0
    %v6587 = vadd.f32 %v6426, %v6586
    %v6588 = vpop.f32.mrb[0].mxu0
    %6589 = vmatprep.mubr.bf16.mxu0 0
    %6590 = vmatmul.mubr.bf16.gmra.mrb[0].mxu0 %v6113
    %v6591 = vpop.f32.mrb[0].mxu0
    %v6592 = vadd.f32 %v6431, %v6591
    %v6593 = vpop.f32.mrb[0].mxu0
    %v6594 = vpop.f32.mrb[0].mxu0
    %v6595 = vadd.f32 %v6434, %v6594
    %v6596 = vpop.f32.mrb[0].mxu0
    %6597 = vdwg.mxu0
    %vm6598 = vcmp.ge.f32.partialorder %v6472, 0.0
    %vm6599 = vcmp.ge.f32.partialorder %v6475, 0.0
    %vm6600 = vcmp.ge.f32.partialorder %v6480, 0.0
    %vm6601 = vcmp.ge.f32.partialorder %v6483, 0.0
    %vm6602 = vcmp.ge.f32.partialorder %v6488, 0.0
    %vm6603 = vcmp.ge.f32.partialorder %v6491, 0.0
    %vm6604 = vcmp.ge.f32.partialorder %v6496, 0.0
    %vm6605 = vcmp.ge.f32.partialorder %v6499, 0.0
    %vm6606 = vcmp.ge.f32.partialorder %v6504, 0.0
    %vm6607 = vcmp.ge.f32.partialorder %v6507, 0.0
    %vm6608 = vcmp.ge.f32.partialorder %v6512, 0.0
    %vm6609 = vcmp.ge.f32.partialorder %v6515, 0.0
    %vm6610 = vcmp.ge.f32.partialorder %v6520, 0.0
    %vm6611 = vcmp.ge.f32.partialorder %v6523, 0.0
    %vm6612 = vcmp.ge.f32.partialorder %v6528, 0.0
    %vm6613 = vcmp.ge.f32.partialorder %v6531, 0.0
    %vm6614 = vcmp.ge.f32.partialorder %v6536, 0.0
    %vm6615 = vcmp.ge.f32.partialorder %v6539, 0.0
    %vm6616 = vcmp.ge.f32.partialorder %v6544, 0.0
    %vm6617 = vcmp.ge.f32.partialorder %v6547, 0.0
    %vm6618 = vcmp.ge.f32.partialorder %v6552, 0.0
    %vm6619 = vcmp.ge.f32.partialorder %v6555, 0.0
    %vm6620 = vcmp.ge.f32.partialorder %v6560, 0.0
    %vm6621 = vcmp.ge.f32.partialorder %v6563, 0.0
    %vm6622 = vcmp.ge.f32.partialorder %v6568, 0.0
    %vm6623 = vcmp.ge.f32.partialorder %v6571, 0.0
    %vm6624 = vcmp.ge.f32.partialorder %v6576, 0.0
    %vm6625 = vcmp.ge.f32.partialorder %v6579, 0.0
    %vm6626 = vcmp.ge.f32.partialorder %v6584, 0.0
    %vm6627 = vcmp.ge.f32.partialorder %v6587, 0.0
    %vm6628 = vcmp.ge.f32.partialorder %v6592, 0.0
    %vm6629 = vcmp.ge.f32.partialorder %v6595, 0.0
    %v6630 = vstv %s5341
    %v6631 = vmul.f32 %v6630, %v6472
    %v6632 = vmul.f32 %v6630, %v6475
    %v6633 = vmul.f32 %v6630, %v6480
    %v6634 = vmul.f32 %v6630, %v6483
    %v6635 = vmul.f32 %v6630, %v6488
    %v6636 = vmul.f32 %v6630, %v6491
    %v6637 = vmul.f32 %v6630, %v6496
    %v6638 = vmul.f32 %v6630, %v6499
    %v6639 = vmul.f32 %v6630, %v6504
    %v6640 = vmul.f32 %v6630, %v6507
    %v6641 = vmul.f32 %v6630, %v6512
    %v6642 = vmul.f32 %v6630, %v6515
    %v6643 = vmul.f32 %v6630, %v6520
    %v6644 = vmul.f32 %v6630, %v6523
    %v6645 = vmul.f32 %v6630, %v6528
    %v6646 = vmul.f32 %v6630, %v6531
    %v6647 = vmul.f32 %v6630, %v6536
    %v6648 = vmul.f32 %v6630, %v6539
    %v6649 = vmul.f32 %v6630, %v6544
    %v6650 = vmul.f32 %v6630, %v6547
    %v6651 = vmul.f32 %v6630, %v6552
    %v6652 = vmul.f32 %v6630, %v6555
    %v6653 = vmul.f32 %v6630, %v6560
    %v6654 = vmul.f32 %v6630, %v6563
    %v6655 = vmul.f32 %v6630, %v6568
    %v6656 = vmul.f32 %v6630, %v6571
    %v6657 = vmul.f32 %v6630, %v6576
    %v6658 = vmul.f32 %v6630, %v6579
    %v6659 = vmul.f32 %v6630, %v6584
    %v6660 = vmul.f32 %v6630, %v6587
    %v6661 = vmul.f32 %v6630, %v6592
    %v6662 = vmul.f32 %v6630, %v6595
    %v6663 = vsel %vm6598, %v6472, %v6631
    %v6664 = vsel %vm6599, %v6475, %v6632
    %v6665 = vsel %vm6600, %v6480, %v6633
    %v6666 = vsel %vm6601, %v6483, %v6634
    %v6667 = vsel %vm6602, %v6488, %v6635
    %v6668 = vsel %vm6603, %v6491, %v6636
    %v6669 = vsel %vm6604, %v6496, %v6637
    %v6670 = vsel %vm6605, %v6499, %v6638
    %v6671 = vsel %vm6606, %v6504, %v6639
    %v6672 = vsel %vm6607, %v6507, %v6640
    %v6673 = vsel %vm6608, %v6512, %v6641
    %v6674 = vsel %vm6609, %v6515, %v6642
    %v6675 = vsel %vm6610, %v6520, %v6643
    %v6676 = vsel %vm6611, %v6523, %v6644
    %v6677 = vsel %vm6612, %v6528, %v6645
    %v6678 = vsel %vm6613, %v6531, %v6646
    %v6679 = vsel %vm6614, %v6536, %v6647
    %v6680 = vsel %vm6615, %v6539, %v6648
    %v6681 = vsel %vm6616, %v6544, %v6649
    %v6682 = vsel %vm6617, %v6547, %v6650
    %v6683 = vsel %vm6618, %v6552, %v6651
    %v6684 = vsel %vm6619, %v6555, %v6652
    %v6685 = vsel %vm6620, %v6560, %v6653
    %v6686 = vsel %vm6621, %v6563, %v6654
    %v6687 = vsel %vm6622, %v6568, %v6655
    %v6688 = vsel %vm6623, %v6571, %v6656
    %v6689 = vsel %vm6624, %v6576, %v6657
    %v6690 = vsel %vm6625, %v6579, %v6658
    %v6691 = vsel %vm6626, %v6584, %v6659
    %v6692 = vsel %vm6627, %v6587, %v6660
    %v6693 = vsel %vm6628, %v6592, %v6661
    %v6694 = vsel %vm6629, %v6595, %v6662
    %s6695 = sld [smem:[#allocation2 + $0x4]]
    %v6696 = vld [vmem:[%s9] sm:$0xff]
    %v6697 = vld [vmem:[%s9 + $0x8] sm:$0xff]
    %v6698 = vld [vmem:[%s9 + $0x10] sm:$0xff]
    %v6699 = vld [vmem:[%s9 + $0x18] sm:$0xff]
    %v6700 = vld [vmem:[%s9 + $0x20] sm:$0xff]
    %v6701 = vld [vmem:[%s9 + $0x28] sm:$0xff]
    %v6702 = vld [vmem:[%s9 + $0x30] sm:$0xff]
    %v6703 = vld [vmem:[%s9 + $0x38] sm:$0xff]
    %v6704 = vpack.c.bf16 %v6664, %v6663
    %v6705 = vpack.c.bf16 %v6666, %v6665
    %v6706 = vpack.c.bf16 %v6668, %v6667
    %v6707 = vpack.c.bf16 %v6670, %v6669
    %v6708 = vpack.c.bf16 %v6672, %v6671
    %v6709 = vpack.c.bf16 %v6674, %v6673
    %v6710 = vpack.c.bf16 %v6676, %v6675
    %v6711 = vpack.c.bf16 %v6678, %v6677
    %v6712 = vpack.c.bf16 %v6680, %v6679
    %v6713 = vpack.c.bf16 %v6682, %v6681
    %v6714 = vpack.c.bf16 %v6684, %v6683
    %v6715 = vpack.c.bf16 %v6686, %v6685
    %v6716 = vpack.c.bf16 %v6688, %v6687
    %v6717 = vpack.c.bf16 %v6690, %v6689
    %v6718 = vpack.c.bf16 %v6692, %v6691
    %v6719 = vpack.c.bf16 %v6694, %v6693
    %v6720 = vld [vmem:[%s10] sm:$0xff]
    %v6721 = vld [vmem:[%s10 + $0x8] sm:$0xff]
    %v6722 = vld [vmem:[%s10 + $0x10] sm:$0xff]
    %v6723 = vld [vmem:[%s10 + $0x18] sm:$0xff]
    %v6724 = vld [vmem:[%s10 + $0x20] sm:$0xff]
    %v6725 = vld [vmem:[%s10 + $0x28] sm:$0xff]
    %v6726 = vld [vmem:[%s10 + $0x30] sm:$0xff]
    %v6727 = vld [vmem:[%s10 + $0x38] sm:$0xff]
    %6729 = vset.pattern.permute.xlu0 0
    %6730 = vperm.xlu0 %6729, %v6720
    %v6731 = vpop.permute.xlu0 %6730
    %6734 = vset.pattern.permute.xlu0 0
    %6735 = vperm.xlu0 %6734, %v6721
    %v6736 = vpop.permute.xlu0 %6735
    %6739 = vset.pattern.permute.xlu0 0
    %6740 = vperm.xlu0 %6739, %v6722
    %v6741 = vpop.permute.xlu0 %6740
    %6744 = vset.pattern.permute.xlu0 0
    %6745 = vperm.xlu0 %6744, %v6723
    %v6746 = vpop.permute.xlu0 %6745
    %6749 = vset.pattern.permute.xlu0 0
    %6750 = vperm.xlu0 %6749, %v6724
    %v6751 = vpop.permute.xlu0 %6750
    %6754 = vset.pattern.permute.xlu0 0
    %6755 = vperm.xlu0 %6754, %v6725
    %v6756 = vpop.permute.xlu0 %6755
    %6759 = vset.pattern.permute.xlu0 0
    %6760 = vperm.xlu0 %6759, %v6726
    %v6761 = vpop.permute.xlu0 %6760
    %6764 = vset.pattern.permute.xlu0 0
    %6765 = vperm.xlu0 %6764, %v6727
    %v6766 = vpop.permute.xlu0 %6765
    %v6776 = vunpack.c.l.b16 %v6696
    %v6777 = vunpack.c.h.b16 %v6696
    %v6778 = vunpack.c.l.b16 %v6697
    %v6779 = vunpack.c.h.b16 %v6697
    %v6780 = vunpack.c.l.b16 %v6698
    %v6781 = vunpack.c.h.b16 %v6698
    %v6782 = vunpack.c.l.b16 %v6699
    %v6783 = vunpack.c.h.b16 %v6699
    %v6784 = vunpack.c.l.b16 %v6700
    %v6785 = vunpack.c.h.b16 %v6700
    %v6786 = vunpack.c.l.b16 %v6701
    %v6787 = vunpack.c.h.b16 %v6701
    %v6788 = vunpack.c.l.b16 %v6702
    %v6789 = vunpack.c.h.b16 %v6702
    %v6790 = vunpack.c.l.b16 %v6703
    %v6791 = vunpack.c.h.b16 %v6703
    %v6792 = vpack.c.b16 %v6778, %v6776
    %v6793 = vpack.c.b16 %v6779, %v6777
    %v6794 = vpack.c.b16 %v6782, %v6780
    %v6795 = vpack.c.b16 %v6783, %v6781
    %v6796 = vpack.c.b16 %v6786, %v6784
    %v6797 = vpack.c.b16 %v6787, %v6785
    %v6798 = vpack.c.b16 %v6790, %v6788
    %v6799 = vpack.c.b16 %v6791, %v6789
    %6808 = vmatprep.subr.bf16.mxu0 0
    %6809 = vmatpush1.bf16.msra.mxu0 %v6704
    %6810 = vmatprep.subr.bf16.mxu0 0
    %6811 = vmatpush1.bf16.msra.mxu0 %v6705
    %6812 = vmatprep.subr.bf16.mxu0 0
    %6813 = vmatpush1.bf16.msra.mxu0 %v6706
    %6814 = vmatprep.subr.bf16.mxu0 0
    %6815 = vmatpush1.bf16.msra.mxu0 %v6707
    %6816 = vmatprep.subr.bf16.mxu0 0
    %6817 = vmatpush1.bf16.msra.mxu0 %v6708
    %6818 = vmatprep.subr.bf16.mxu0 0
    %6819 = vmatpush1.bf16.msra.mxu0 %v6709
    %6820 = vmatprep.subr.bf16.mxu0 0
    %6821 = vmatpush1.bf16.msra.mxu0 %v6710
    %6822 = vmatprep.subr.bf16.mxu0 0
    %6823 = vmatpush1.bf16.msra.mxu0 %v6711
    %6824 = vmatprep.subr.bf16.mxu0 0
    %6825 = vmatpush1.bf16.msra.mxu0 %v6712
    %6826 = vmatprep.subr.bf16.mxu0 0
    %6827 = vmatpush1.bf16.msra.mxu0 %v6713
    %6828 = vmatprep.subr.bf16.mxu0 0
    %6829 = vmatpush1.bf16.msra.mxu0 %v6714
    %6830 = vmatprep.subr.bf16.mxu0 0
    %6831 = vmatpush1.bf16.msra.mxu0 %v6715
    %6832 = vmatprep.subr.bf16.mxu0 0
    %6833 = vmatpush1.bf16.msra.mxu0 %v6716
    %6834 = vmatprep.subr.bf16.mxu0 0
    %6835 = vmatpush1.bf16.msra.mxu0 %v6717
    %6836 = vmatprep.subr.bf16.mxu0 0
    %6837 = vmatpush1.bf16.msra.mxu0 %v6718
    %6838 = vmatprep.subr.bf16.mxu0 0
    %6839 = vmatpush1.bf16.msra.mxu0 %v6719
    %6840 = vmatprep.mubr.bf16.mxu0 %v6793
    %6841 = vmatmul.mubr.bf16.gmra.mrb[0].mxu0 %v6792
    %v6842 = vpop.f32.mrb[0].mxu0
    %v6843 = vadd.f32 %v6731, %v6842
    %v6844 = vpop.f32.mrb[0].mxu0
    %v6845 = vpop.f32.mrb[0].mxu0
    %v6846 = vadd.f32 %v6736, %v6845
    %v6847 = vpop.f32.mrb[0].mxu0
    %6848 = vmatprep.mubr.bf16.mxu0 %v6795
    %6849 = vmatmul.mubr.bf16.gmra.mrb[0].mxu0 %v6794
    %v6850 = vpop.f32.mrb[0].mxu0
    %v6851 = vadd.f32 %v6741, %v6850
    %v6852 = vpop.f32.mrb[0].mxu0
    %v6853 = vpop.f32.mrb[0].mxu0
    %v6854 = vadd.f32 %v6746, %v6853
    %v6855 = vpop.f32.mrb[0].mxu0
    %6856 = vmatprep.mubr.bf16.mxu0 %v6797
    %6857 = vmatmul.mubr.bf16.gmra.mrb[0].mxu0 %v6796
    %v6858 = vpop.f32.mrb[0].mxu0
    %v6859 = vadd.f32 %v6751, %v6858
    %v6860 = vpop.f32.mrb[0].mxu0
    %v6861 = vpop.f32.mrb[0].mxu0
    %v6862 = vadd.f32 %v6756, %v6861
    %v6863 = vpop.f32.mrb[0].mxu0
    %6864 = vmatprep.mubr.bf16.mxu0 %v6799
    %6865 = vmatmul.mubr.bf16.gmra.mrb[0].mxu0 %v6798
    %v6866 = vpop.f32.mrb[0].mxu0
    %v6867 = vadd.f32 %v6761, %v6866
    %v6868 = vpop.f32.mrb[0].mxu0
    %v6869 = vpop.f32.mrb[0].mxu0
    %v6870 = vadd.f32 %v6766, %v6869
    %v6871 = vpop.f32.mrb[0].mxu0
    %6872 = vdwg.mxu0
    %vm6873 = vcmp.ge.f32.partialorder %v6843, 0.0
    %vm6874 = vcmp.ge.f32.partialorder %v6846, 0.0
    %vm6875 = vcmp.ge.f32.partialorder %v6851, 0.0
    %vm6876 = vcmp.ge.f32.partialorder %v6854, 0.0
    %vm6877 = vcmp.ge.f32.partialorder %v6859, 0.0
    %vm6878 = vcmp.ge.f32.partialorder %v6862, 0.0
    %vm6879 = vcmp.ge.f32.partialorder %v6867, 0.0
    %vm6880 = vcmp.ge.f32.partialorder %v6870, 0.0
    %v6881 = vstv %s6695
    %v6882 = vmul.f32 %v6881, %v6843
    %v6883 = vmul.f32 %v6881, %v6846
    %v6884 = vmul.f32 %v6881, %v6851
    %v6885 = vmul.f32 %v6881, %v6854
    %v6886 = vmul.f32 %v6881, %v6859
    %v6887 = vmul.f32 %v6881, %v6862
    %v6888 = vmul.f32 %v6881, %v6867
    %v6889 = vmul.f32 %v6881, %v6870
    %v6890 = vsel %vm6873, %v6843, %v6882
    %v6891 = vsel %vm6874, %v6846, %v6883
    %v6892 = vsel %vm6875, %v6851, %v6884
    %v6893 = vsel %vm6876, %v6854, %v6885
    %v6894 = vsel %vm6877, %v6859, %v6886
    %v6895 = vsel %vm6878, %v6862, %v6887
    %v6896 = vsel %vm6879, %v6867, %v6888
    %v6897 = vsel %vm6880, %v6870, %v6889
    %v6898 = vld [vmem:[%s11] sm:$0xf]
    %v6899 = vld [vmem:[%s11 + $0x4] sm:$0x1]
    %v6900 = vpack.c.bf16 %v6891, %v6890
    %v6901 = vpack.c.bf16 %v6893, %v6892
    %v6902 = vpack.c.bf16 %v6895, %v6894
    %v6903 = vpack.c.bf16 %v6897, %v6896
    %v6904 = vld [vmem:[%s12] sm:$0xff]
    %v6905 = vld [vmem:[%s12 + $0x8] sm:$0x3]
    %6907 = vset.pattern.permute.xlu0 0
    %6908 = vperm.xlu0 %6907, %v6904
    %v6909 = vpop.permute.xlu0 %6908
    %6912 = vset.pattern.permute.xlu0 0
    %6913 = vperm.xlu0 %6912, %v6905
    %v6914 = vpop.permute.xlu0 %6913
    %v6918 = vunpack.c.l.b16 %v6898
    %v6919 = vunpack.c.l.b16 %v6899
    %v6920 = vpack.c.b16 %v6919, %v6918
    %v6922 = vsel %vm6066, %v6920, 0
    %6924 = vmatprep.subr.bf16.mxu0 0
    %6925 = vmatpush1.bf16.msra.mxu0 %v6900
    %6926 = vmatprep.subr.bf16.mxu0 0
    %6927 = vmatpush1.bf16.msra.mxu0 %v6901
    %6928 = vmatprep.subr.bf16.mxu0 0
    %6929 = vmatpush1.bf16.msra.mxu0 %v6902
    %6930 = vmatprep.subr.bf16.mxu0 0
    %6931 = vmatpush1.bf16.msra.mxu0 %v6903
    %6932 = vmatprep.subr.bf16.mxu0 0
    %6933 = vmatpush1.bf16.msra.mxu0 0
    %6934 = vmatprep.subr.bf16.mxu0 0
    %6935 = vmatpush1.bf16.msra.mxu0 0
    %6936 = vmatprep.subr.bf16.mxu0 0
    %6937 = vmatpush1.bf16.msra.mxu0 0
    %6938 = vmatprep.subr.bf16.mxu0 0
    %6939 = vmatpush1.bf16.msra.mxu0 0
    %6940 = vmatprep.subr.bf16.mxu0 0
    %6941 = vmatpush1.bf16.msra.mxu0 0
    %6942 = vmatprep.subr.bf16.mxu0 0
    %6943 = vmatpush1.bf16.msra.mxu0 0
    %6944 = vmatprep.subr.bf16.mxu0 0
    %6945 = vmatpush1.bf16.msra.mxu0 0
    %6946 = vmatprep.subr.bf16.mxu0 0
    %6947 = vmatpush1.bf16.msra.mxu0 0
    %6948 = vmatprep.subr.bf16.mxu0 0
    %6949 = vmatpush1.bf16.msra.mxu0 0
    %6950 = vmatprep.subr.bf16.mxu0 0
    %6951 = vmatpush1.bf16.msra.mxu0 0
    %6952 = vmatprep.subr.bf16.mxu0 0
    %6953 = vmatpush1.bf16.msra.mxu0 0
    %6954 = vmatprep.subr.bf16.mxu0 0
    %6955 = vmatpush1.bf16.msra.mxu0 0
    %6956 = vmatprep.mubr.bf16.mxu0 0
    %6957 = vmatmul.mubr.bf16.gmra.mrb[0].mxu0 %v6922
    %v6958 = vpop.f32.mrb[0].mxu0
    %v6959 = vadd.f32 %v6909, %v6958
    %v6960 = vpop.f32.mrb[0].mxu0
    %v6961 = vpop.f32.mrb[0].mxu0
    %v6962 = vadd.f32 %v6914, %v6961
    %v6963 = vpop.f32.mrb[0].mxu0
    %6964 = vdwg.mxu0
    %v6965 = vsel %vm751, %v6962, -inf
    %v6966 = vmax.f32 %v6959, %v6965
    %v6967 = vrot.slane %v6966, 4
    %v6968 = vmax.f32 %v6966, %v6967
    %v6969 = vrot.slane %v6968, 2
    %v6970 = vmax.f32 %v6968, %v6969
    %v6971 = vrot.slane %v6970, 1
    %v6972 = vmax.f32 %v6970, %v6971
    %v6973 = vsub.f32 %v6959, %v6972
    %v6974 = vsub.f32 %v6962, %v6972
    %v6975 = vmul.f32 %v6973, 1.442695
    %v6976 = vpow.pop %v6975
    %v6977 = vmul.f32 %v6974, 1.442695
    %v6978 = vpow.pop %v6977
    %v6979 = vsel %vm751, %v6978, 0.0
    %v6980 = vadd.f32 %v6976, %v6979
    %v6981 = vrot.slane %v6980, 4
    %v6982 = vadd.f32 %v6980, %v6981
    %v6983 = vrot.slane %v6982, 2
    %v6984 = vadd.f32 %v6982, %v6983
    %v6985 = vrot.slane %v6984, 1
    %v6986 = vadd.f32 %v6984, %v6985
    %v6987 = vrcp.pop %v6986
    %v6988 = vmul.f32 %v6976, %v6987
    %v6989 = vmul.f32 %v6978, %v6987
    %6990 = vst [vmem:[%s14] sm:$0xff] %v6988
    %6991 = vst [vmem:[%s14 + $0x8] sm:$0x3] %v6989
    // Predicated region
    $region62: #{digitnet_forward.1} parent=1 // pred_check
      _
    $region63: #{digitnet_forward.1} parent=1 // pred_check_branch
      %6993 = sbr.rel (0) target = $region65
    $region64: #{digitnet_forward.1} parent=1 // pred_region
      _
    $region65: #{digitnet_forward.1} parent=1 // pred_fallthru
      _
    // Predicated region
    $region66: #{digitnet_forward.1} parent=1 // pred_check
      _
    $region67: #{digitnet_forward.1} parent=1 // pred_check_branch
      %6995 = sbr.rel (0) target = $region69
    $region68: #{digitnet_forward.1} parent=1 // pred_region
      _
    $region69: #{digitnet_forward.1} parent=1 // pred_fallthru
      _
    %6996 = vsyncpa [#allocation3], 1

</llo_original>
